<compile_context>
chip_gen: v6e
topology: v6e:2x2x1
jax: 0.10.0
libtpu: 0.0.40
codegen_flags: <defaults>
</compile_context>

<pallas_src>
import functools

import jax
import jax.numpy as jnp
import numpy as np
from jax.experimental import pallas as pl
from jax.experimental.pallas import tpu as pltpu


# ----------------------------------------------------------------------------
# In-kernel loop helper: fully unroll small node counts (LLO visibility),
# fall back to fori_loop for large trees.
# ----------------------------------------------------------------------------
def _foreach(n_steps, body):
    if n_steps <= 64:
        for t in range(n_steps):
            body(t)
    else:
        def wrapped(t, carry):
            body(t)
            return carry
        jax.lax.fori_loop(0, n_steps, wrapped, 0)


# ----------------------------------------------------------------------------
# Pallas kernel: one grid step = one tree, both directions, all nodes.
# ----------------------------------------------------------------------------
def layer_kernel(sfw_ref,      # SMEM (num_trees*num_obj*5,) int32  fw schedule
                 sbw_ref,      # SMEM (num_trees*num_obj*3,) int32  bw schedule
                 feats_ref,    # VMEM (N, F)    features of current tree
                 wx_f_ref,     # VMEM (F, 5H)   fw: x -> gates
                 wl_f_ref,     # VMEM (H, 5H)   fw: left-child h -> gates
                 wr_f_ref,     # VMEM (H, 5H)   fw: right-child h -> gates
                 b_f_ref,      # VMEM (3, 5H)   fw biases [bx; b_left; b_right]
                 wx_b_ref,     # VMEM (F, 4H)   bw: x -> gates
                 wh_b_ref,     # VMEM (H, 4H)   bw: parent h -> gates
                 b_b_ref,      # VMEM (1, 4H)   bw bias (bx + bh, always applied)
                 out_ref,      # VMEM (N, 2H)   [h_fw | h_bw]
                 hf_scr, cf_scr, hb_scr, cb_scr):   # VMEM (N, H) state buffers
    b = pl.program_id(0)
    N, H = hf_scr.shape

    # Fresh tree: zero all recurrent state (also makes the 0*row-0 gating of
    # absent children / the root's missing parent exact, never 0*garbage).
    hf_scr[...] = jnp.zeros_like(hf_scr)
    cf_scr[...] = jnp.zeros_like(cf_scr)
    hb_scr[...] = jnp.zeros_like(hb_scr)
    cb_scr[...] = jnp.zeros_like(cb_scr)

    # ---------------- leaves -> root (BiTreeLSTM_Foreward) ----------------
    def fw_node(t):
        base = (b * N + t) * 5
        n = sfw_ref[base + 0]                         # node row
        li = sfw_ref[base + 1]                        # left child row (0 if none)
        ri = sfw_ref[base + 2]                        # right child row (0 if none)
        hl = sfw_ref[base + 3].astype(jnp.float32)    # has_left
        hr = sfw_ref[base + 4].astype(jnp.float32)    # has_right

        x = feats_ref[pl.ds(n, 1), :]                 # (1, F)
        lh = hf_scr[pl.ds(li, 1), :] * hl             # (1, H) flag-gated
        rh = hf_scr[pl.ds(ri, 1), :] * hr
        lc = cf_scr[pl.ds(li, 1), :] * hl
        rc = cf_scr[pl.ds(ri, 1), :] * hr

        # g = x@Wx + lh@Wl + rh@Wr + bx + hl*bl + hr*br  (PyTorch skips the
        # whole W.h + b term for absent children -> gate bias by the flag too).
        g = (jnp.dot(x, wx_f_ref[...], preferred_element_type=jnp.float32)
             + jnp.dot(lh, wl_f_ref[...], preferred_element_type=jnp.float32)
             + jnp.dot(rh, wr_f_ref[...], preferred_element_type=jnp.float32)
             + b_f_ref[0:1, :] + hl * b_f_ref[1:2, :] + hr * b_f_ref[2:3, :])

        i = jax.nn.sigmoid(g[:, 0 * H:1 * H])
        o = jax.nn.sigmoid(g[:, 1 * H:2 * H])
        f_l = jax.nn.sigmoid(g[:, 2 * H:3 * H])
        f_r = jax.nn.sigmoid(g[:, 3 * H:4 * H])
        u = jnp.tanh(g[:, 4 * H:5 * H])

        c = i * u + f_l * lc + f_r * rc
        h = o * jnp.tanh(c)
        cf_scr[pl.ds(n, 1), :] = c
        hf_scr[pl.ds(n, 1), :] = h

    _foreach(N, fw_node)

    # ---------------- root -> leaves (BiTreeLSTM_Backward) ----------------
    def bw_node(t):
        base = (b * N + t) * 3
        n = sbw_ref[base + 0]                         # node row
        pi = sbw_ref[base + 1]                        # parent row (0 if root)
        hp = sbw_ref[base + 2].astype(jnp.float32)    # has_parent (0.0 at root)

        x = feats_ref[pl.ds(n, 1), :]                 # (1, F)
        ph = hb_scr[pl.ds(pi, 1), :] * hp             # parent h (zeros at root)
        pc = cb_scr[pl.ds(pi, 1), :] * hp             # parent c (zeros at root)

        g = (jnp.dot(x, wx_b_ref[...], preferred_element_type=jnp.float32)
             + jnp.dot(ph, wh_b_ref[...], preferred_element_type=jnp.float32)
             + b_b_ref[...])

        i = jax.nn.sigmoid(g[:, 0 * H:1 * H])
        o = jax.nn.sigmoid(g[:, 1 * H:2 * H])
        f = jax.nn.sigmoid(g[:, 2 * H:3 * H])
        u = jnp.tanh(g[:, 3 * H:4 * H])

        c = i * u + f * pc
        h = o * jnp.tanh(c)
        cb_scr[pl.ds(n, 1), :] = c
        hb_scr[pl.ds(n, 1), :] = h

    _foreach(N, bw_node)

    # Write both halves of the bidirectional output once per tree.
    out_ref[:, 0:H] = hf_scr[...]
    out_ref[:, H:2 * H] = hb_scr[...]


# ----------------------------------------------------------------------------
# pallas_call builder: one call per layer handles the whole forest (both dirs).
# ----------------------------------------------------------------------------
@functools.lru_cache(maxsize=None)
def make_layer_call(num_trees, num_obj, feat_dim, h_dim):
    F, H, N, B = feat_dim, h_dim, num_obj, num_trees
    grid_spec = pltpu.PrefetchScalarGridSpec(
        num_scalar_prefetch=2,
        grid=(B,),
        in_specs=[
            pl.BlockSpec((None, N, F), lambda b, *_: (b, 0, 0)),   # features
            pl.BlockSpec((F, 5 * H), lambda b, *_: (0, 0)),        # fw Wx
            pl.BlockSpec((H, 5 * H), lambda b, *_: (0, 0)),        # fw Wl
            pl.BlockSpec((H, 5 * H), lambda b, *_: (0, 0)),        # fw Wr
            pl.BlockSpec((3, 5 * H), lambda b, *_: (0, 0)),        # fw biases
            pl.BlockSpec((F, 4 * H), lambda b, *_: (0, 0)),        # bw Wx
            pl.BlockSpec((H, 4 * H), lambda b, *_: (0, 0)),        # bw Wh
            pl.BlockSpec((1, 4 * H), lambda b, *_: (0, 0)),        # bw bias
        ],
        out_specs=pl.BlockSpec((None, N, 2 * H), lambda b, *_: (b, 0, 0)),
        scratch_shapes=[pltpu.VMEM((N, H), jnp.float32)] * 4,
    )
    return jax.jit(pl.pallas_call(
        layer_kernel,
        out_shape=jax.ShapeDtypeStruct((B, N, 2 * H), jnp.float32),
        grid_spec=grid_spec,
        compiler_params=pltpu.CompilerParams(
            dimension_semantics=("parallel",)),   # trees independent -> megacore
    ))


# ----------------------------------------------------------------------------
# Trees, host-built topological schedules (flattened 1-D int32 for SMEM)
# ----------------------------------------------------------------------------
class Tree:
    def __init__(self, index, left=None, right=None):
        self.index = index
        self.left_child = left
        self.right_child = right


def build_forward_schedule(tree, num_obj):
    """Post-order: rows (node_idx, left_idx, right_idx, has_l, has_r)."""
    rows = []

    def visit(node):
        li = ri = 0
        hl = hr = 0
        if node.left_child is not None:
            visit(node.left_child)
            li, hl = node.left_child.index, 1
        if node.right_child is not None:
            visit(node.right_child)
            ri, hr = node.right_child.index, 1
        rows.append((node.index, li, ri, hl, hr))

    visit(tree)
    assert len(rows) == num_obj
    return np.array(rows, dtype=np.int32)            # (num_obj, 5)


def build_backward_schedule(tree, num_obj):
    """Pre-order: rows (node_idx, parent_idx, has_parent)."""
    rows = []

    def visit(node, parent_idx, has_parent):
        rows.append((node.index, parent_idx, has_parent))
        if node.left_child is not None:
            visit(node.left_child, node.index, 1)
        if node.right_child is not None:
            visit(node.right_child, node.index, 1)

    visit(tree, 0, 0)
    assert len(rows) == num_obj
    return np.array(rows, dtype=np.int32)            # (num_obj, 3)


# ----------------------------------------------------------------------------
# Parameter init (mirrors block_orthogonal + bias fills of the nn.Module)
# ----------------------------------------------------------------------------
def _orthogonal(key, rows, cols):
    if rows >= cols:
        a = jax.random.normal(key, (rows, cols), dtype=jnp.float32)
        q, _ = jnp.linalg.qr(a)
        return q[:rows, :cols]
    a = jax.random.normal(key, (cols, rows), dtype=jnp.float32)
    q, _ = jnp.linalg.qr(a)
    return q.T[:rows, :cols]


def init_fw_params(key, F, H):
    ks = jax.random.split(key, 15)
    wx = jnp.stack([_orthogonal(ks[g], H, F).T for g in range(5)])        # (5,F,H)
    wl = jnp.stack([_orthogonal(ks[5 + g], H, H).T for g in range(5)])    # (5,H,H)
    wr = jnp.stack([_orthogonal(ks[10 + g], H, H).T for g in range(5)])   # (5,H,H)
    bx = jnp.zeros((5, H), jnp.float32)
    bl = jnp.zeros((5, H), jnp.float32).at[2:4].set(0.5)   # forget-gate biases
    br = jnp.zeros((5, H), jnp.float32).at[2:4].set(0.5)
    raw = dict(wx=wx, wl=wl, wr=wr, bx=bx, bl=bl, br=br)
    wx_m = wx.transpose(1, 0, 2).reshape(F, 5 * H)
    wl_m = wl.transpose(1, 0, 2).reshape(H, 5 * H)
    wr_m = wr.transpose(1, 0, 2).reshape(H, 5 * H)
    b_m = jnp.stack([bx.reshape(5 * H), bl.reshape(5 * H),
                     br.reshape(5 * H)], axis=0)                          # (3,5H)
    return raw, (wx_m, wl_m, wr_m, b_m)


def init_bw_params(key, F, H):
    ks = jax.random.split(key, 8)
    wx = jnp.stack([_orthogonal(ks[g], H, F).T for g in range(4)])        # (4,F,H)
    wh = jnp.stack([_orthogonal(ks[4 + g], H, H).T for g in range(4)])    # (4,H,H)
    bx = jnp.zeros((4, H), jnp.float32)
    bh = jnp.zeros((4, H), jnp.float32).at[2].set(1.0)    # forget-gate bias
    raw = dict(wx=wx, wh=wh, bx=bx, bh=bh)
    wx_m = wx.transpose(1, 0, 2).reshape(F, 4 * H)
    wh_m = wh.transpose(1, 0, 2).reshape(H, 4 * H)
    b_m = (bx + bh).reshape(1, 4 * H)                                     # (1,4H)
    return raw, (wx_m, wh_m, b_m)


# ----------------------------------------------------------------------------
# Full multi-layer bidirectional forward using the Pallas kernel
# ----------------------------------------------------------------------------
def multilayer_btreelstm_forward(features, sched_fw, sched_bw, layer_params,
                                 num_trees, num_obj, in_dim, out_dim):
    h_dim = out_dim // 2
    feats = features
    F = in_dim
    for params in layer_params:                      # params = 7-tuple of arrays
        call = make_layer_call(num_trees, num_obj, F, h_dim)
        feats = call(sched_fw, sched_bw, feats, *params)   # (B, N, 2H)
        F = out_dim
    return feats


# ----------------------------------------------------------------------------
# Pure-JAX reference (mirrors the PyTorch module's recursion & branching)
# ----------------------------------------------------------------------------
def ref_fw_node(p, x, lc, rc, lh, rh, has_l, has_r):
    gates = []
    for g in range(5):
        z = x @ p["wx"][g] + p["bx"][g][None, :]
        if has_l:
            z = z + lh @ p["wl"][g] + p["bl"][g][None, :]
        if has_r:
            z = z + rh @ p["wr"][g] + p["br"][g][None, :]
        gates.append(z)
    i, o, f_l, f_r = [jax.nn.sigmoid(gates[k]) for k in range(4)]
    u = jnp.tanh(gates[4])
    c = i * u + f_l * lc + f_r * rc
    h = o * jnp.tanh(c)
    return c, h


def ref_fw_tree(node, feats, p, H, out):
    if node.left_child is not None:
        lc, lh = ref_fw_tree(node.left_child, feats, p, H, out)
        has_l = True
    else:
        lc = lh = jnp.zeros((1, H), jnp.float32)
        has_l = False
    if node.right_child is not None:
        rc, rh = ref_fw_tree(node.right_child, feats, p, H, out)
        has_r = True
    else:
        rc = rh = jnp.zeros((1, H), jnp.float32)
        has_r = False
    x = feats[node.index][None, :]
    c, h = ref_fw_node(p, x, lc, rc, lh, rh, has_l, has_r)
    out[node.index] = h
    return c, h


def ref_bw_node(p, x, pc, ph):
    gates = [x @ p["wx"][g] + p["bx"][g][None, :]
             + ph @ p["wh"][g] + p["bh"][g][None, :] for g in range(4)]
    i, o, f = [jax.nn.sigmoid(gates[k]) for k in range(3)]
    u = jnp.tanh(gates[3])
    c = i * u + f * pc
    h = o * jnp.tanh(c)
    return c, h


def ref_bw_tree(node, feats, p, H, out, pc, ph):
    x = feats[node.index][None, :]
    c, h = ref_bw_node(p, x, pc, ph)
    out[node.index] = h
    if node.left_child is not None:
        ref_bw_tree(node.left_child, feats, p, H, out, c, h)
    if node.right_child is not None:
        ref_bw_tree(node.right_child, feats, p, H, out, c, h)


def ref_multilayer(forest, features, layer_raw, h_dim):
    feats = features
    B, N, _ = feats.shape
    for fw_raw, bw_raw in layer_raw:
        outs = []
        for b in range(B):
            fw_out = [None] * N
            ref_fw_tree(forest[b], feats[b], fw_raw, h_dim, fw_out)
            bw_out = [None] * N
            zero = jnp.zeros((1, h_dim), jnp.float32)
            ref_bw_tree(forest[b], feats[b], bw_raw, h_dim, bw_out, zero, zero)
            outs.append(jnp.concatenate(
                [jnp.concatenate(fw_out, axis=0),
                 jnp.concatenate(bw_out, axis=0)], axis=-1))
        feats = jnp.stack(outs, axis=0)
    return feats


# ----------------------------------------------------------------------------
if __name__ == "__main__":
    in_dim = 64
    out_dim = 64           # bidirectional -> per-direction hidden = 32
    num_layer = 2
    h_dim = out_dim // 2
    num_obj = 7
    num_trees = 2

    key = jax.random.PRNGKey(0)
    k_feat, k_params = jax.random.split(key)
    features = jax.random.normal(k_feat, (num_trees, num_obj, in_dim),
                                 dtype=jnp.float32)

    # Forest: two different 7-node binary trees covering all child patterns.
    forest = [
        Tree(0,
             left=Tree(1, left=Tree(3), right=Tree(4)),
             right=Tree(2, left=Tree(5, right=Tree(6)))),
        Tree(3,
             left=Tree(5, right=Tree(0, left=Tree(6))),
             right=Tree(1, left=Tree(2), right=Tree(4))),
    ]

    # Flattened 1-D int32 schedules: index = (tree*num_obj + step)*fields + f.
    sched_fw = np.stack([build_forward_schedule(t, num_obj) for t in forest], 0)
    sched_fw = jnp.asarray(sched_fw.reshape(-1), jnp.int32)       # (B*N*5,)
    sched_bw = np.stack([build_backward_schedule(t, num_obj) for t in forest], 0)
    sched_bw = jnp.asarray(sched_bw.reshape(-1), jnp.int32)       # (B*N*3,)

    # Per-layer parameters (layer 0: in_dim -> h_dim; later: out_dim -> h_dim).
    layer_raw, layer_params = [], []
    keys = jax.random.split(k_params, num_layer * 2)
    F = in_dim
    for l in range(num_layer):
        fw_raw, fw_k = init_fw_params(keys[2 * l], F, h_dim)
        bw_raw, bw_k = init_bw_params(keys[2 * l + 1], F, h_dim)
        layer_raw.append((fw_raw, bw_raw))
        layer_params.append(fw_k + bw_k)      # (Wx_f, Wl_f, Wr_f, b_f, Wx_b, Wh_b, b_b)
        F = out_dim

    out = multilayer_btreelstm_forward(features, sched_fw, sched_bw,
                                       layer_params, num_trees, num_obj,
                                       in_dim, out_dim)
    out = jax.block_until_ready(out)

    ref = jax.block_until_ready(ref_multilayer(forest, features, layer_raw, h_dim))

    # Loose-ish tolerance: the kernel's dots run at MXU default precision
    # (bf16 passes) while the reference runs plain f32 jnp math.
    np.testing.assert_allclose(np.asarray(out), np.asarray(ref),
                               rtol=2e-2, atol=2e-2)

    print("KERNEL_OK")
</pallas_src>

<mosaic_0001>
module attributes {stable_mosaic.version = 11 : i64} {
  func.func @layer_kernel(%arg0: i32, %arg1: memref<70xi32, #tpu.memory_space<smem>>, %arg2: memref<42xi32, #tpu.memory_space<smem>>, %arg3: memref<1x7x64xf32, #tpu.memory_space<vmem>>, %arg4: memref<64x160xf32, #tpu.memory_space<vmem>>, %arg5: memref<32x160xf32, #tpu.memory_space<vmem>>, %arg6: memref<32x160xf32, #tpu.memory_space<vmem>>, %arg7: memref<3x160xf32, #tpu.memory_space<vmem>>, %arg8: memref<64x128xf32, #tpu.memory_space<vmem>>, %arg9: memref<32x128xf32, #tpu.memory_space<vmem>>, %arg10: memref<1x128xf32, #tpu.memory_space<vmem>>, %arg11: memref<1x7x64xf32, #tpu.memory_space<vmem>>, %arg12: memref<7x32xf32, #tpu.memory_space<vmem>>, %arg13: memref<7x32xf32, #tpu.memory_space<vmem>>, %arg14: memref<7x32xf32, #tpu.memory_space<vmem>>, %arg15: memref<7x32xf32, #tpu.memory_space<vmem>>) attributes {dimension_semantics = [#tpu.dimension_semantics<parallel>], iteration_bounds = array<i64: 2>, scalar_prefetch = 2 : i64, scratch_operands = 4 : i64, tpu.core_type = #tpu.core_type<tc>, window_params = [{transform_indices = @transform_0, window_bounds = array<i64: 1, 7, 64>}, {pipeline_mode = #tpu.pipeline_mode<synchronous>, transform_indices = @transform_1, window_bounds = array<i64: 64, 160>}, {pipeline_mode = #tpu.pipeline_mode<synchronous>, transform_indices = @transform_2, window_bounds = array<i64: 32, 160>}, {pipeline_mode = #tpu.pipeline_mode<synchronous>, transform_indices = @transform_3, window_bounds = array<i64: 32, 160>}, {pipeline_mode = #tpu.pipeline_mode<synchronous>, transform_indices = @transform_4, window_bounds = array<i64: 3, 160>}, {pipeline_mode = #tpu.pipeline_mode<synchronous>, transform_indices = @transform_5, window_bounds = array<i64: 64, 128>}, {pipeline_mode = #tpu.pipeline_mode<synchronous>, transform_indices = @transform_6, window_bounds = array<i64: 32, 128>}, {pipeline_mode = #tpu.pipeline_mode<synchronous>, transform_indices = @transform_7, window_bounds = array<i64: 1, 128>}, {transform_indices = @transform_8, window_bounds = array<i64: 1, 7, 64>}]} {
    %cst = arith.constant 0.000000e+00 : f32
    %0 = vector.broadcast %cst : f32 to vector<7x32xf32>
    %c0 = arith.constant 0 : index
    %c0_0 = arith.constant 0 : index
    %1 = vector.load %arg12[%c0, %c0_0] : memref<7x32xf32, #tpu.memory_space<vmem>>, vector<7x32xf32>
    tpu.vector_store %arg12[%c0, %c0_0], %0 {strides = array<i32>} : memref<7x32xf32, #tpu.memory_space<vmem>>, vector<7x32xf32>,
    %cst_1 = arith.constant 0.000000e+00 : f32
    %2 = vector.broadcast %cst_1 : f32 to vector<7x32xf32>
    %c0_2 = arith.constant 0 : index
    %c0_3 = arith.constant 0 : index
    %3 = vector.load %arg13[%c0_2, %c0_3] : memref<7x32xf32, #tpu.memory_space<vmem>>, vector<7x32xf32>
    tpu.vector_store %arg13[%c0_2, %c0_3], %2 {strides = array<i32>} : memref<7x32xf32, #tpu.memory_space<vmem>>, vector<7x32xf32>,
    %cst_4 = arith.constant 0.000000e+00 : f32
    %4 = vector.broadcast %cst_4 : f32 to vector<7x32xf32>
    %c0_5 = arith.constant 0 : index
    %c0_6 = arith.constant 0 : index
    %5 = vector.load %arg14[%c0_5, %c0_6] : memref<7x32xf32, #tpu.memory_space<vmem>>, vector<7x32xf32>
    tpu.vector_store %arg14[%c0_5, %c0_6], %4 {strides = array<i32>} : memref<7x32xf32, #tpu.memory_space<vmem>>, vector<7x32xf32>,
    %cst_7 = arith.constant 0.000000e+00 : f32
    %6 = vector.broadcast %cst_7 : f32 to vector<7x32xf32>
    %c0_8 = arith.constant 0 : index
    %c0_9 = arith.constant 0 : index
    %7 = vector.load %arg15[%c0_8, %c0_9] : memref<7x32xf32, #tpu.memory_space<vmem>>, vector<7x32xf32>
    tpu.vector_store %arg15[%c0_8, %c0_9], %6 {strides = array<i32>} : memref<7x32xf32, #tpu.memory_space<vmem>>, vector<7x32xf32>,
    %c7_i32 = arith.constant 7 : i32
    %8 = arith.muli %arg0, %c7_i32 : i32
    %c0_i32 = arith.constant 0 : i32
    %9 = arith.addi %8, %c0_i32 : i32
    %c5_i32 = arith.constant 5 : i32
    %10 = arith.muli %9, %c5_i32 : i32
    %c0_i32_10 = arith.constant 0 : i32
    %11 = arith.addi %10, %c0_i32_10 : i32
    %12 = arith.index_cast %11 : i32 to index
    %13 = memref.load %arg1[%12] : memref<70xi32, #tpu.memory_space<smem>>
    %c1_i32 = arith.constant 1 : i32
    %14 = arith.addi %10, %c1_i32 : i32
    %15 = arith.index_cast %14 : i32 to index
    %16 = memref.load %arg1[%15] : memref<70xi32, #tpu.memory_space<smem>>
    %c2_i32 = arith.constant 2 : i32
    %17 = arith.addi %10, %c2_i32 : i32
    %18 = arith.index_cast %17 : i32 to index
    %19 = memref.load %arg1[%18] : memref<70xi32, #tpu.memory_space<smem>>
    %c3_i32 = arith.constant 3 : i32
    %20 = arith.addi %10, %c3_i32 : i32
    %21 = arith.index_cast %20 : i32 to index
    %22 = memref.load %arg1[%21] : memref<70xi32, #tpu.memory_space<smem>>
    %23 = arith.sitofp %22 : i32 to f32
    %c4_i32 = arith.constant 4 : i32
    %24 = arith.addi %10, %c4_i32 : i32
    %25 = arith.index_cast %24 : i32 to index
    %26 = memref.load %arg1[%25] : memref<70xi32, #tpu.memory_space<smem>>
    %27 = arith.sitofp %26 : i32 to f32
    %c0_11 = arith.constant 0 : index
    %28 = arith.index_cast %13 : i32 to index
    %c0_12 = arith.constant 0 : index
    %29 = vector.load %arg3[%c0_11, %28, %c0_12] : memref<1x7x64xf32, #tpu.memory_space<vmem>>, vector<1x1x64xf32>
    %30 = vector.shape_cast %29 : vector<1x1x64xf32> to vector<1x64xf32>
    %31 = arith.index_cast %16 : i32 to index
    %c0_13 = arith.constant 0 : index
    %32 = vector.load %arg12[%31, %c0_13] : memref<7x32xf32, #tpu.memory_space<vmem>>, vector<1x32xf32>
    %33 = vector.broadcast %23 : f32 to vector<1x32xf32>
    %34 = arith.mulf %32, %33 : vector<1x32xf32>
    %35 = arith.index_cast %19 : i32 to index
    %c0_14 = arith.constant 0 : index
    %36 = vector.load %arg12[%35, %c0_14] : memref<7x32xf32, #tpu.memory_space<vmem>>, vector<1x32xf32>
    %37 = vector.broadcast %27 : f32 to vector<1x32xf32>
    %38 = arith.mulf %36, %37 : vector<1x32xf32>
    %39 = arith.index_cast %16 : i32 to index
    %c0_15 = arith.constant 0 : index
    %40 = vector.load %arg13[%39, %c0_15] : memref<7x32xf32, #tpu.memory_space<vmem>>, vector<1x32xf32>
    %41 = vector.broadcast %23 : f32 to vector<1x32xf32>
    %42 = arith.mulf %40, %41 : vector<1x32xf32>
    %43 = arith.index_cast %19 : i32 to index
    %c0_16 = arith.constant 0 : index
    %44 = vector.load %arg13[%43, %c0_16] : memref<7x32xf32, #tpu.memory_space<vmem>>, vector<1x32xf32>
    %45 = vector.broadcast %27 : f32 to vector<1x32xf32>
    %46 = arith.mulf %44, %45 : vector<1x32xf32>
    %c0_17 = arith.constant 0 : index
    %c0_18 = arith.constant 0 : index
    %47 = vector.load %arg4[%c0_17, %c0_18] : memref<64x160xf32, #tpu.memory_space<vmem>>, vector<64x160xf32>
    %cst_19 = arith.constant dense<0.000000e+00> : vector<1x160xf32>
    %48 = tpu.matmul %30, %47, %cst_19 {dimension_numbers = #tpu.dot_dimension_numbers<[1], [0], [0], [1], [0, 0, 1, 1], [], []>} : vector<1x64xf32>, vector<64x160xf32>, vector<1x160xf32> -> vector<1x160xf32>
    %c0_20 = arith.constant 0 : index
    %c0_21 = arith.constant 0 : index
    %49 = vector.load %arg5[%c0_20, %c0_21] : memref<32x160xf32, #tpu.memory_space<vmem>>, vector<32x160xf32>
    %cst_22 = arith.constant dense<0.000000e+00> : vector<1x160xf32>
    %50 = tpu.matmul %34, %49, %cst_22 {dimension_numbers = #tpu.dot_dimension_numbers<[1], [0], [0], [1], [0, 0, 1, 1], [], []>} : vector<1x32xf32>, vector<32x160xf32>, vector<1x160xf32> -> vector<1x160xf32>
    %51 = arith.addf %48, %50 : vector<1x160xf32>
    %c0_23 = arith.constant 0 : index
    %c0_24 = arith.constant 0 : index
    %52 = vector.load %arg6[%c0_23, %c0_24] : memref<32x160xf32, #tpu.memory_space<vmem>>, vector<32x160xf32>
    %cst_25 = arith.constant dense<0.000000e+00> : vector<1x160xf32>
    %53 = tpu.matmul %38, %52, %cst_25 {dimension_numbers = #tpu.dot_dimension_numbers<[1], [0], [0], [1], [0, 0, 1, 1], [], []>} : vector<1x32xf32>, vector<32x160xf32>, vector<1x160xf32> -> vector<1x160xf32>
    %54 = arith.addf %51, %53 : vector<1x160xf32>
    %c0_26 = arith.constant 0 : index
    %c0_27 = arith.constant 0 : index
    %55 = vector.load %arg7[%c0_26, %c0_27] : memref<3x160xf32, #tpu.memory_space<vmem>>, vector<1x160xf32>
    %56 = arith.addf %54, %55 : vector<1x160xf32>
    %c1 = arith.constant 1 : index
    %c0_28 = arith.constant 0 : index
    %57 = vector.load %arg7[%c1, %c0_28] : memref<3x160xf32, #tpu.memory_space<vmem>>, vector<1x160xf32>
    %58 = vector.broadcast %23 : f32 to vector<1x160xf32>
    %59 = arith.mulf %58, %57 : vector<1x160xf32>
    %60 = arith.addf %56, %59 : vector<1x160xf32>
    %c2 = arith.constant 2 : index
    %c0_29 = arith.constant 0 : index
    %61 = vector.load %arg7[%c2, %c0_29] : memref<3x160xf32, #tpu.memory_space<vmem>>, vector<1x160xf32>
    %62 = vector.broadcast %27 : f32 to vector<1x160xf32>
    %63 = arith.mulf %62, %61 : vector<1x160xf32>
    %64 = arith.addf %60, %63 : vector<1x160xf32>
    %65 = vector.extract_strided_slice %64 {offsets = [0, 0], sizes = [1, 32], strides = [1, 1]} : vector<1x160xf32> to vector<1x32xf32>
    %66 = arith.negf %65 : vector<1x32xf32>
    %67 = math.exp %66 : vector<1x32xf32>
    %cst_30 = arith.constant 1.000000e+00 : f32
    %68 = vector.broadcast %cst_30 : f32 to vector<1x32xf32>
    %69 = arith.addf %68, %67 : vector<1x32xf32>
    %70 = arith.divf %68, %69 : vector<1x32xf32>
    %71 = vector.extract_strided_slice %64 {offsets = [0, 32], sizes = [1, 32], strides = [1, 1]} : vector<1x160xf32> to vector<1x32xf32>
    %72 = arith.negf %71 : vector<1x32xf32>
    %73 = math.exp %72 : vector<1x32xf32>
    %cst_31 = arith.constant 1.000000e+00 : f32
    %74 = vector.broadcast %cst_31 : f32 to vector<1x32xf32>
    %75 = arith.addf %74, %73 : vector<1x32xf32>
    %76 = arith.divf %74, %75 : vector<1x32xf32>
    %77 = vector.extract_strided_slice %64 {offsets = [0, 64], sizes = [1, 32], strides = [1, 1]} : vector<1x160xf32> to vector<1x32xf32>
    %78 = arith.negf %77 : vector<1x32xf32>
    %79 = math.exp %78 : vector<1x32xf32>
    %cst_32 = arith.constant 1.000000e+00 : f32
    %80 = vector.broadcast %cst_32 : f32 to vector<1x32xf32>
    %81 = arith.addf %80, %79 : vector<1x32xf32>
    %82 = arith.divf %80, %81 : vector<1x32xf32>
    %83 = vector.extract_strided_slice %64 {offsets = [0, 96], sizes = [1, 32], strides = [1, 1]} : vector<1x160xf32> to vector<1x32xf32>
    %84 = arith.negf %83 : vector<1x32xf32>
    %85 = math.exp %84 : vector<1x32xf32>
    %cst_33 = arith.constant 1.000000e+00 : f32
    %86 = vector.broadcast %cst_33 : f32 to vector<1x32xf32>
    %87 = arith.addf %86, %85 : vector<1x32xf32>
    %88 = arith.divf %86, %87 : vector<1x32xf32>
    %89 = vector.extract_strided_slice %64 {offsets = [0, 128], sizes = [1, 32], strides = [1, 1]} : vector<1x160xf32> to vector<1x32xf32>
    %90 = math.tanh %89 : vector<1x32xf32>
    %91 = arith.mulf %70, %90 : vector<1x32xf32>
    %92 = arith.mulf %82, %42 : vector<1x32xf32>
    %93 = arith.addf %91, %92 : vector<1x32xf32>
    %94 = arith.mulf %88, %46 : vector<1x32xf32>
    %95 = arith.addf %93, %94 : vector<1x32xf32>
    %96 = math.tanh %95 : vector<1x32xf32>
    %97 = arith.mulf %76, %96 : vector<1x32xf32>
    %98 = arith.index_cast %13 : i32 to index
    %c0_34 = arith.constant 0 : index
    %99 = vector.load %arg13[%98, %c0_34] : memref<7x32xf32, #tpu.memory_space<vmem>>, vector<1x32xf32>
    tpu.vector_store %arg13[%98, %c0_34], %95 {strides = array<i32>} : memref<7x32xf32, #tpu.memory_space<vmem>>, vector<1x32xf32>,
    %100 = arith.index_cast %13 : i32 to index
    %c0_35 = arith.constant 0 : index
    %101 = vector.load %arg12[%100, %c0_35] : memref<7x32xf32, #tpu.memory_space<vmem>>, vector<1x32xf32>
    tpu.vector_store %arg12[%100, %c0_35], %97 {strides = array<i32>} : memref<7x32xf32, #tpu.memory_space<vmem>>, vector<1x32xf32>,
    %c7_i32_36 = arith.constant 7 : i32
    %102 = arith.muli %arg0, %c7_i32_36 : i32
    %c1_i32_37 = arith.constant 1 : i32
    %103 = arith.addi %102, %c1_i32_37 : i32
    %c5_i32_38 = arith.constant 5 : i32
    %104 = arith.muli %103, %c5_i32_38 : i32
    %c0_i32_39 = arith.constant 0 : i32
    %105 = arith.addi %104, %c0_i32_39 : i32
    %106 = arith.index_cast %105 : i32 to index
    %107 = memref.load %arg1[%106] : memref<70xi32, #tpu.memory_space<smem>>
    %c1_i32_40 = arith.constant 1 : i32
    %108 = arith.addi %104, %c1_i32_40 : i32
    %109 = arith.index_cast %108 : i32 to index
    %110 = memref.load %arg1[%109] : memref<70xi32, #tpu.memory_space<smem>>
    %c2_i32_41 = arith.constant 2 : i32
    %111 = arith.addi %104, %c2_i32_41 : i32
    %112 = arith.index_cast %111 : i32 to index
    %113 = memref.load %arg1[%112] : memref<70xi32, #tpu.memory_space<smem>>
    %c3_i32_42 = arith.constant 3 : i32
    %114 = arith.addi %104, %c3_i32_42 : i32
    %115 = arith.index_cast %114 : i32 to index
    %116 = memref.load %arg1[%115] : memref<70xi32, #tpu.memory_space<smem>>
    %117 = arith.sitofp %116 : i32 to f32
    %c4_i32_43 = arith.constant 4 : i32
    %118 = arith.addi %104, %c4_i32_43 : i32
    %119 = arith.index_cast %118 : i32 to index
    %120 = memref.load %arg1[%119] : memref<70xi32, #tpu.memory_space<smem>>
    %121 = arith.sitofp %120 : i32 to f32
    %c0_44 = arith.constant 0 : index
    %122 = arith.index_cast %107 : i32 to index
    %c0_45 = arith.constant 0 : index
    %123 = vector.load %arg3[%c0_44, %122, %c0_45] : memref<1x7x64xf32, #tpu.memory_space<vmem>>, vector<1x1x64xf32>
    %124 = vector.shape_cast %123 : vector<1x1x64xf32> to vector<1x64xf32>
    %125 = arith.index_cast %110 : i32 to index
    %c0_46 = arith.constant 0 : index
    %126 = vector.load %arg12[%125, %c0_46] : memref<7x32xf32, #tpu.memory_space<vmem>>, vector<1x32xf32>
    %127 = vector.broadcast %117 : f32 to vector<1x32xf32>
    %128 = arith.mulf %126, %127 : vector<1x32xf32>
    %129 = arith.index_cast %113 : i32 to index
    %c0_47 = arith.constant 0 : index
    %130 = vector.load %arg12[%129, %c0_47] : memref<7x32xf32, #tpu.memory_space<vmem>>, vector<1x32xf32>
    %131 = vector.broadcast %121 : f32 to vector<1x32xf32>
    %132 = arith.mulf %130, %131 : vector<1x32xf32>
    %133 = arith.index_cast %110 : i32 to index
    %c0_48 = arith.constant 0 : index
    %134 = vector.load %arg13[%133, %c0_48] : memref<7x32xf32, #tpu.memory_space<vmem>>, vector<1x32xf32>
    %135 = vector.broadcast %117 : f32 to vector<1x32xf32>
    %136 = arith.mulf %134, %135 : vector<1x32xf32>
    %137 = arith.index_cast %113 : i32 to index
    %c0_49 = arith.constant 0 : index
    %138 = vector.load %arg13[%137, %c0_49] : memref<7x32xf32, #tpu.memory_space<vmem>>, vector<1x32xf32>
    %139 = vector.broadcast %121 : f32 to vector<1x32xf32>
    %140 = arith.mulf %138, %139 : vector<1x32xf32>
    %c0_50 = arith.constant 0 : index
    %c0_51 = arith.constant 0 : index
    %141 = vector.load %arg4[%c0_50, %c0_51] : memref<64x160xf32, #tpu.memory_space<vmem>>, vector<64x160xf32>
    %cst_52 = arith.constant dense<0.000000e+00> : vector<1x160xf32>
    %142 = tpu.matmul %124, %141, %cst_52 {dimension_numbers = #tpu.dot_dimension_numbers<[1], [0], [0], [1], [0, 0, 1, 1], [], []>} : vector<1x64xf32>, vector<64x160xf32>, vector<1x160xf32> -> vector<1x160xf32>
    %c0_53 = arith.constant 0 : index
    %c0_54 = arith.constant 0 : index
    %143 = vector.load %arg5[%c0_53, %c0_54] : memref<32x160xf32, #tpu.memory_space<vmem>>, vector<32x160xf32>
    %cst_55 = arith.constant dense<0.000000e+00> : vector<1x160xf32>
    %144 = tpu.matmul %128, %143, %cst_55 {dimension_numbers = #tpu.dot_dimension_numbers<[1], [0], [0], [1], [0, 0, 1, 1], [], []>} : vector<1x32xf32>, vector<32x160xf32>, vector<1x160xf32> -> vector<1x160xf32>
    %145 = arith.addf %142, %144 : vector<1x160xf32>
    %c0_56 = arith.constant 0 : index
    %c0_57 = arith.constant 0 : index
    %146 = vector.load %arg6[%c0_56, %c0_57] : memref<32x160xf32, #tpu.memory_space<vmem>>, vector<32x160xf32>
    %cst_58 = arith.constant dense<0.000000e+00> : vector<1x160xf32>
    %147 = tpu.matmul %132, %146, %cst_58 {dimension_numbers = #tpu.dot_dimension_numbers<[1], [0], [0], [1], [0, 0, 1, 1], [], []>} : vector<1x32xf32>, vector<32x160xf32>, vector<1x160xf32> -> vector<1x160xf32>
    %148 = arith.addf %145, %147 : vector<1x160xf32>
    %c0_59 = arith.constant 0 : index
    %c0_60 = arith.constant 0 : index
    %149 = vector.load %arg7[%c0_59, %c0_60] : memref<3x160xf32, #tpu.memory_space<vmem>>, vector<1x160xf32>
    %150 = arith.addf %148, %149 : vector<1x160xf32>
    %c1_61 = arith.constant 1 : index
    %c0_62 = arith.constant 0 : index
    %151 = vector.load %arg7[%c1_61, %c0_62] : memref<3x160xf32, #tpu.memory_space<vmem>>, vector<1x160xf32>
    %152 = vector.broadcast %117 : f32 to vector<1x160xf32>
    %153 = arith.mulf %152, %151 : vector<1x160xf32>
    %154 = arith.addf %150, %153 : vector<1x160xf32>
    %c2_63 = arith.constant 2 : index
    %c0_64 = arith.constant 0 : index
    %155 = vector.load %arg7[%c2_63, %c0_64] : memref<3x160xf32, #tpu.memory_space<vmem>>, vector<1x160xf32>
    %156 = vector.broadcast %121 : f32 to vector<1x160xf32>
    %157 = arith.mulf %156, %155 : vector<1x160xf32>
    %158 = arith.addf %154, %157 : vector<1x160xf32>
    %159 = vector.extract_strided_slice %158 {offsets = [0, 0], sizes = [1, 32], strides = [1, 1]} : vector<1x160xf32> to vector<1x32xf32>
    %160 = arith.negf %159 : vector<1x32xf32>
    %161 = math.exp %160 : vector<1x32xf32>
    %cst_65 = arith.constant 1.000000e+00 : f32
    %162 = vector.broadcast %cst_65 : f32 to vector<1x32xf32>
    %163 = arith.addf %162, %161 : vector<1x32xf32>
    %164 = arith.divf %162, %163 : vector<1x32xf32>
    %165 = vector.extract_strided_slice %158 {offsets = [0, 32], sizes = [1, 32], strides = [1, 1]} : vector<1x160xf32> to vector<1x32xf32>
    %166 = arith.negf %165 : vector<1x32xf32>
    %167 = math.exp %166 : vector<1x32xf32>
    %cst_66 = arith.constant 1.000000e+00 : f32
    %168 = vector.broadcast %cst_66 : f32 to vector<1x32xf32>
    %169 = arith.addf %168, %167 : vector<1x32xf32>
    %170 = arith.divf %168, %169 : vector<1x32xf32>
    %171 = vector.extract_strided_slice %158 {offsets = [0, 64], sizes = [1, 32], strides = [1, 1]} : vector<1x160xf32> to vector<1x32xf32>
    %172 = arith.negf %171 : vector<1x32xf32>
    %173 = math.exp %172 : vector<1x32xf32>
    %cst_67 = arith.constant 1.000000e+00 : f32
    %174 = vector.broadcast %cst_67 : f32 to vector<1x32xf32>
    %175 = arith.addf %174, %173 : vector<1x32xf32>
    %176 = arith.divf %174, %175 : vector<1x32xf32>
    %177 = vector.extract_strided_slice %158 {offsets = [0, 96], sizes = [1, 32], strides = [1, 1]} : vector<1x160xf32> to vector<1x32xf32>
    %178 = arith.negf %177 : vector<1x32xf32>
    %179 = math.exp %178 : vector<1x32xf32>
    %cst_68 = arith.constant 1.000000e+00 : f32
    %180 = vector.broadcast %cst_68 : f32 to vector<1x32xf32>
    %181 = arith.addf %180, %179 : vector<1x32xf32>
    %182 = arith.divf %180, %181 : vector<1x32xf32>
    %183 = vector.extract_strided_slice %158 {offsets = [0, 128], sizes = [1, 32], strides = [1, 1]} : vector<1x160xf32> to vector<1x32xf32>
    %184 = math.tanh %183 : vector<1x32xf32>
    %185 = arith.mulf %164, %184 : vector<1x32xf32>
    %186 = arith.mulf %176, %136 : vector<1x32xf32>
    %187 = arith.addf %185, %186 : vector<1x32xf32>
    %188 = arith.mulf %182, %140 : vector<1x32xf32>
    %189 = arith.addf %187, %188 : vector<1x32xf32>
    %190 = math.tanh %189 : vector<1x32xf32>
    %191 = arith.mulf %170, %190 : vector<1x32xf32>
    %192 = arith.index_cast %107 : i32 to index
    %c0_69 = arith.constant 0 : index
    %193 = vector.load %arg13[%192, %c0_69] : memref<7x32xf32, #tpu.memory_space<vmem>>, vector<1x32xf32>
    tpu.vector_store %arg13[%192, %c0_69], %189 {strides = array<i32>} : memref<7x32xf32, #tpu.memory_space<vmem>>, vector<1x32xf32>,
    %194 = arith.index_cast %107 : i32 to index
    %c0_70 = arith.constant 0 : index
    %195 = vector.load %arg12[%194, %c0_70] : memref<7x32xf32, #tpu.memory_space<vmem>>, vector<1x32xf32>
    tpu.vector_store %arg12[%194, %c0_70], %191 {strides = array<i32>} : memref<7x32xf32, #tpu.memory_space<vmem>>, vector<1x32xf32>,
    %c7_i32_71 = arith.constant 7 : i32
    %196 = arith.muli %arg0, %c7_i32_71 : i32
    %c2_i32_72 = arith.constant 2 : i32
    %197 = arith.addi %196, %c2_i32_72 : i32
    %c5_i32_73 = arith.constant 5 : i32
    %198 = arith.muli %197, %c5_i32_73 : i32
    %c0_i32_74 = arith.constant 0 : i32
    %199 = arith.addi %198, %c0_i32_74 : i32
    %200 = arith.index_cast %199 : i32 to index
    %201 = memref.load %arg1[%200] : memref<70xi32, #tpu.memory_space<smem>>
    %c1_i32_75 = arith.constant 1 : i32
    %202 = arith.addi %198, %c1_i32_75 : i32
    %203 = arith.index_cast %202 : i32 to index
    %204 = memref.load %arg1[%203] : memref<70xi32, #tpu.memory_space<smem>>
    %c2_i32_76 = arith.constant 2 : i32
    %205 = arith.addi %198, %c2_i32_76 : i32
    %206 = arith.index_cast %205 : i32 to index
    %207 = memref.load %arg1[%206] : memref<70xi32, #tpu.memory_space<smem>>
    %c3_i32_77 = arith.constant 3 : i32
    %208 = arith.addi %198, %c3_i32_77 : i32
    %209 = arith.index_cast %208 : i32 to index
    %210 = memref.load %arg1[%209] : memref<70xi32, #tpu.memory_space<smem>>
    %211 = arith.sitofp %210 : i32 to f32
    %c4_i32_78 = arith.constant 4 : i32
    %212 = arith.addi %198, %c4_i32_78 : i32
    %213 = arith.index_cast %212 : i32 to index
    %214 = memref.load %arg1[%213] : memref<70xi32, #tpu.memory_space<smem>>
    %215 = arith.sitofp %214 : i32 to f32
    %c0_79 = arith.constant 0 : index
    %216 = arith.index_cast %201 : i32 to index
    %c0_80 = arith.constant 0 : index
    %217 = vector.load %arg3[%c0_79, %216, %c0_80] : memref<1x7x64xf32, #tpu.memory_space<vmem>>, vector<1x1x64xf32>
    %218 = vector.shape_cast %217 : vector<1x1x64xf32> to vector<1x64xf32>
    %219 = arith.index_cast %204 : i32 to index
    %c0_81 = arith.constant 0 : index
    %220 = vector.load %arg12[%219, %c0_81] : memref<7x32xf32, #tpu.memory_space<vmem>>, vector<1x32xf32>
    %221 = vector.broadcast %211 : f32 to vector<1x32xf32>
    %222 = arith.mulf %220, %221 : vector<1x32xf32>
    %223 = arith.index_cast %207 : i32 to index
    %c0_82 = arith.constant 0 : index
    %224 = vector.load %arg12[%223, %c0_82] : memref<7x32xf32, #tpu.memory_space<vmem>>, vector<1x32xf32>
    %225 = vector.broadcast %215 : f32 to vector<1x32xf32>
    %226 = arith.mulf %224, %225 : vector<1x32xf32>
    %227 = arith.index_cast %204 : i32 to index
    %c0_83 = arith.constant 0 : index
    %228 = vector.load %arg13[%227, %c0_83] : memref<7x32xf32, #tpu.memory_space<vmem>>, vector<1x32xf32>
    %229 = vector.broadcast %211 : f32 to vector<1x32xf32>
    %230 = arith.mulf %228, %229 : vector<1x32xf32>
    %231 = arith.index_cast %207 : i32 to index
    %c0_84 = arith.constant 0 : index
    %232 = vector.load %arg13[%231, %c0_84] : memref<7x32xf32, #tpu.memory_space<vmem>>, vector<1x32xf32>
    %233 = vector.broadcast %215 : f32 to vector<1x32xf32>
    %234 = arith.mulf %232, %233 : vector<1x32xf32>
    %c0_85 = arith.constant 0 : index
    %c0_86 = arith.constant 0 : index
    %235 = vector.load %arg4[%c0_85, %c0_86] : memref<64x160xf32, #tpu.memory_space<vmem>>, vector<64x160xf32>
    %cst_87 = arith.constant dense<0.000000e+00> : vector<1x160xf32>
    %236 = tpu.matmul %218, %235, %cst_87 {dimension_numbers = #tpu.dot_dimension_numbers<[1], [0], [0], [1], [0, 0, 1, 1], [], []>} : vector<1x64xf32>, vector<64x160xf32>, vector<1x160xf32> -> vector<1x160xf32>
    %c0_88 = arith.constant 0 : index
    %c0_89 = arith.constant 0 : index
    %237 = vector.load %arg5[%c0_88, %c0_89] : memref<32x160xf32, #tpu.memory_space<vmem>>, vector<32x160xf32>
    %cst_90 = arith.constant dense<0.000000e+00> : vector<1x160xf32>
    %238 = tpu.matmul %222, %237, %cst_90 {dimension_numbers = #tpu.dot_dimension_numbers<[1], [0], [0], [1], [0, 0, 1, 1], [], []>} : vector<1x32xf32>, vector<32x160xf32>, vector<1x160xf32> -> vector<1x160xf32>
    %239 = arith.addf %236, %238 : vector<1x160xf32>
    %c0_91 = arith.constant 0 : index
    %c0_92 = arith.constant 0 : index
    %240 = vector.load %arg6[%c0_91, %c0_92] : memref<32x160xf32, #tpu.memory_space<vmem>>, vector<32x160xf32>
    %cst_93 = arith.constant dense<0.000000e+00> : vector<1x160xf32>
    %241 = tpu.matmul %226, %240, %cst_93 {dimension_numbers = #tpu.dot_dimension_numbers<[1], [0], [0], [1], [0, 0, 1, 1], [], []>} : vector<1x32xf32>, vector<32x160xf32>, vector<1x160xf32> -> vector<1x160xf32>
    %242 = arith.addf %239, %241 : vector<1x160xf32>
    %c0_94 = arith.constant 0 : index
    %c0_95 = arith.constant 0 : index
    %243 = vector.load %arg7[%c0_94, %c0_95] : memref<3x160xf32, #tpu.memory_space<vmem>>, vector<1x160xf32>
    %244 = arith.addf %242, %243 : vector<1x160xf32>
    %c1_96 = arith.constant 1 : index
    %c0_97 = arith.constant 0 : index
    %245 = vector.load %arg7[%c1_96, %c0_97] : memref<3x160xf32, #tpu.memory_space<vmem>>, vector<1x160xf32>
    %246 = vector.broadcast %211 : f32 to vector<1x160xf32>
    %247 = arith.mulf %246, %245 : vector<1x160xf32>
    %248 = arith.addf %244, %247 : vector<1x160xf32>
    %c2_98 = arith.constant 2 : index
    %c0_99 = arith.constant 0 : index
    %249 = vector.load %arg7[%c2_98, %c0_99] : memref<3x160xf32, #tpu.memory_space<vmem>>, vector<1x160xf32>
    %250 = vector.broadcast %215 : f32 to vector<1x160xf32>
    %251 = arith.mulf %250, %249 : vector<1x160xf32>
    %252 = arith.addf %248, %251 : vector<1x160xf32>
    %253 = vector.extract_strided_slice %252 {offsets = [0, 0], sizes = [1, 32], strides = [1, 1]} : vector<1x160xf32> to vector<1x32xf32>
    %254 = arith.negf %253 : vector<1x32xf32>
    %255 = math.exp %254 : vector<1x32xf32>
    %cst_100 = arith.constant 1.000000e+00 : f32
    %256 = vector.broadcast %cst_100 : f32 to vector<1x32xf32>
    %257 = arith.addf %256, %255 : vector<1x32xf32>
    %258 = arith.divf %256, %257 : vector<1x32xf32>
    %259 = vector.extract_strided_slice %252 {offsets = [0, 32], sizes = [1, 32], strides = [1, 1]} : vector<1x160xf32> to vector<1x32xf32>
    %260 = arith.negf %259 : vector<1x32xf32>
    %261 = math.exp %260 : vector<1x32xf32>
    %cst_101 = arith.constant 1.000000e+00 : f32
    %262 = vector.broadcast %cst_101 : f32 to vector<1x32xf32>
    %263 = arith.addf %262, %261 : vector<1x32xf32>
    %264 = arith.divf %262, %263 : vector<1x32xf32>
    %265 = vector.extract_strided_slice %252 {offsets = [0, 64], sizes = [1, 32], strides = [1, 1]} : vector<1x160xf32> to vector<1x32xf32>
    %266 = arith.negf %265 : vector<1x32xf32>
    %267 = math.exp %266 : vector<1x32xf32>
    %cst_102 = arith.constant 1.000000e+00 : f32
    %268 = vector.broadcast %cst_102 : f32 to vector<1x32xf32>
    %269 = arith.addf %268, %267 : vector<1x32xf32>
    %270 = arith.divf %268, %269 : vector<1x32xf32>
    %271 = vector.extract_strided_slice %252 {offsets = [0, 96], sizes = [1, 32], strides = [1, 1]} : vector<1x160xf32> to vector<1x32xf32>
    %272 = arith.negf %271 : vector<1x32xf32>
    %273 = math.exp %272 : vector<1x32xf32>
    %cst_103 = arith.constant 1.000000e+00 : f32
    %274 = vector.broadcast %cst_103 : f32 to vector<1x32xf32>
    %275 = arith.addf %274, %273 : vector<1x32xf32>
    %276 = arith.divf %274, %275 : vector<1x32xf32>
    %277 = vector.extract_strided_slice %252 {offsets = [0, 128], sizes = [1, 32], strides = [1, 1]} : vector<1x160xf32> to vector<1x32xf32>
    %278 = math.tanh %277 : vector<1x32xf32>
    %279 = arith.mulf %258, %278 : vector<1x32xf32>
    %280 = arith.mulf %270, %230 : vector<1x32xf32>
    %281 = arith.addf %279, %280 : vector<1x32xf32>
    %282 = arith.mulf %276, %234 : vector<1x32xf32>
    %283 = arith.addf %281, %282 : vector<1x32xf32>
    %284 = math.tanh %283 : vector<1x32xf32>
    %285 = arith.mulf %264, %284 : vector<1x32xf32>
    %286 = arith.index_cast %201 : i32 to index
    %c0_104 = arith.constant 0 : index
    %287 = vector.load %arg13[%286, %c0_104] : memref<7x32xf32, #tpu.memory_space<vmem>>, vector<1x32xf32>
    tpu.vector_store %arg13[%286, %c0_104], %283 {strides = array<i32>} : memref<7x32xf32, #tpu.memory_space<vmem>>, vector<1x32xf32>,
    %288 = arith.index_cast %201 : i32 to index
    %c0_105 = arith.constant 0 : index
    %289 = vector.load %arg12[%288, %c0_105] : memref<7x32xf32, #tpu.memory_space<vmem>>, vector<1x32xf32>
    tpu.vector_store %arg12[%288, %c0_105], %285 {strides = array<i32>} : memref<7x32xf32, #tpu.memory_space<vmem>>, vector<1x32xf32>,
    %c7_i32_106 = arith.constant 7 : i32
    %290 = arith.muli %arg0, %c7_i32_106 : i32
    %c3_i32_107 = arith.constant 3 : i32
    %291 = arith.addi %290, %c3_i32_107 : i32
    %c5_i32_108 = arith.constant 5 : i32
    %292 = arith.muli %291, %c5_i32_108 : i32
    %c0_i32_109 = arith.constant 0 : i32
    %293 = arith.addi %292, %c0_i32_109 : i32
    %294 = arith.index_cast %293 : i32 to index
    %295 = memref.load %arg1[%294] : memref<70xi32, #tpu.memory_space<smem>>
    %c1_i32_110 = arith.constant 1 : i32
    %296 = arith.addi %292, %c1_i32_110 : i32
    %297 = arith.index_cast %296 : i32 to index
    %298 = memref.load %arg1[%297] : memref<70xi32, #tpu.memory_space<smem>>
    %c2_i32_111 = arith.constant 2 : i32
    %299 = arith.addi %292, %c2_i32_111 : i32
    %300 = arith.index_cast %299 : i32 to index
    %301 = memref.load %arg1[%300] : memref<70xi32, #tpu.memory_space<smem>>
    %c3_i32_112 = arith.constant 3 : i32
    %302 = arith.addi %292, %c3_i32_112 : i32
    %303 = arith.index_cast %302 : i32 to index
    %304 = memref.load %arg1[%303] : memref<70xi32, #tpu.memory_space<smem>>
    %305 = arith.sitofp %304 : i32 to f32
    %c4_i32_113 = arith.constant 4 : i32
    %306 = arith.addi %292, %c4_i32_113 : i32
    %307 = arith.index_cast %306 : i32 to index
    %308 = memref.load %arg1[%307] : memref<70xi32, #tpu.memory_space<smem>>
    %309 = arith.sitofp %308 : i32 to f32
    %c0_114 = arith.constant 0 : index
    %310 = arith.index_cast %295 : i32 to index
    %c0_115 = arith.constant 0 : index
    %311 = vector.load %arg3[%c0_114, %310, %c0_115] : memref<1x7x64xf32, #tpu.memory_space<vmem>>, vector<1x1x64xf32>
    %312 = vector.shape_cast %311 : vector<1x1x64xf32> to vector<1x64xf32>
    %313 = arith.index_cast %298 : i32 to index
    %c0_116 = arith.constant 0 : index
    %314 = vector.load %arg12[%313, %c0_116] : memref<7x32xf32, #tpu.memory_space<vmem>>, vector<1x32xf32>
    %315 = vector.broadcast %305 : f32 to vector<1x32xf32>
    %316 = arith.mulf %314, %315 : vector<1x32xf32>
    %317 = arith.index_cast %301 : i32 to index
    %c0_117 = arith.constant 0 : index
    %318 = vector.load %arg12[%317, %c0_117] : memref<7x32xf32, #tpu.memory_space<vmem>>, vector<1x32xf32>
    %319 = vector.broadcast %309 : f32 to vector<1x32xf32>
    %320 = arith.mulf %318, %319 : vector<1x32xf32>
    %321 = arith.index_cast %298 : i32 to index
    %c0_118 = arith.constant 0 : index
    %322 = vector.load %arg13[%321, %c0_118] : memref<7x32xf32, #tpu.memory_space<vmem>>, vector<1x32xf32>
    %323 = vector.broadcast %305 : f32 to vector<1x32xf32>
    %324 = arith.mulf %322, %323 : vector<1x32xf32>
    %325 = arith.index_cast %301 : i32 to index
    %c0_119 = arith.constant 0 : index
    %326 = vector.load %arg13[%325, %c0_119] : memref<7x32xf32, #tpu.memory_space<vmem>>, vector<1x32xf32>
    %327 = vector.broadcast %309 : f32 to vector<1x32xf32>
    %328 = arith.mulf %326, %327 : vector<1x32xf32>
    %c0_120 = arith.constant 0 : index
    %c0_121 = arith.constant 0 : index
    %329 = vector.load %arg4[%c0_120, %c0_121] : memref<64x160xf32, #tpu.memory_space<vmem>>, vector<64x160xf32>
    %cst_122 = arith.constant dense<0.000000e+00> : vector<1x160xf32>
    %330 = tpu.matmul %312, %329, %cst_122 {dimension_numbers = #tpu.dot_dimension_numbers<[1], [0], [0], [1], [0, 0, 1, 1], [], []>} : vector<1x64xf32>, vector<64x160xf32>, vector<1x160xf32> -> vector<1x160xf32>
    %c0_123 = arith.constant 0 : index
    %c0_124 = arith.constant 0 : index
    %331 = vector.load %arg5[%c0_123, %c0_124] : memref<32x160xf32, #tpu.memory_space<vmem>>, vector<32x160xf32>
    %cst_125 = arith.constant dense<0.000000e+00> : vector<1x160xf32>
    %332 = tpu.matmul %316, %331, %cst_125 {dimension_numbers = #tpu.dot_dimension_numbers<[1], [0], [0], [1], [0, 0, 1, 1], [], []>} : vector<1x32xf32>, vector<32x160xf32>, vector<1x160xf32> -> vector<1x160xf32>
    %333 = arith.addf %330, %332 : vector<1x160xf32>
    %c0_126 = arith.constant 0 : index
    %c0_127 = arith.constant 0 : index
    %334 = vector.load %arg6[%c0_126, %c0_127] : memref<32x160xf32, #tpu.memory_space<vmem>>, vector<32x160xf32>
    %cst_128 = arith.constant dense<0.000000e+00> : vector<1x160xf32>
    %335 = tpu.matmul %320, %334, %cst_128 {dimension_numbers = #tpu.dot_dimension_numbers<[1], [0], [0], [1], [0, 0, 1, 1], [], []>} : vector<1x32xf32>, vector<32x160xf32>, vector<1x160xf32> -> vector<1x160xf32>
    %336 = arith.addf %333, %335 : vector<1x160xf32>
    %c0_129 = arith.constant 0 : index
    %c0_130 = arith.constant 0 : index
    %337 = vector.load %arg7[%c0_129, %c0_130] : memref<3x160xf32, #tpu.memory_space<vmem>>, vector<1x160xf32>
    %338 = arith.addf %336, %337 : vector<1x160xf32>
    %c1_131 = arith.constant 1 : index
    %c0_132 = arith.constant 0 : index
    %339 = vector.load %arg7[%c1_131, %c0_132] : memref<3x160xf32, #tpu.memory_space<vmem>>, vector<1x160xf32>
    %340 = vector.broadcast %305 : f32 to vector<1x160xf32>
    %341 = arith.mulf %340, %339 : vector<1x160xf32>
    %342 = arith.addf %338, %341 : vector<1x160xf32>
    %c2_133 = arith.constant 2 : index
    %c0_134 = arith.constant 0 : index
    %343 = vector.load %arg7[%c2_133, %c0_134] : memref<3x160xf32, #tpu.memory_space<vmem>>, vector<1x160xf32>
    %344 = vector.broadcast %309 : f32 to vector<1x160xf32>
    %345 = arith.mulf %344, %343 : vector<1x160xf32>
    %346 = arith.addf %342, %345 : vector<1x160xf32>
    %347 = vector.extract_strided_slice %346 {offsets = [0, 0], sizes = [1, 32], strides = [1, 1]} : vector<1x160xf32> to vector<1x32xf32>
    %348 = arith.negf %347 : vector<1x32xf32>
    %349 = math.exp %348 : vector<1x32xf32>
    %cst_135 = arith.constant 1.000000e+00 : f32
    %350 = vector.broadcast %cst_135 : f32 to vector<1x32xf32>
    %351 = arith.addf %350, %349 : vector<1x32xf32>
    %352 = arith.divf %350, %351 : vector<1x32xf32>
    %353 = vector.extract_strided_slice %346 {offsets = [0, 32], sizes = [1, 32], strides = [1, 1]} : vector<1x160xf32> to vector<1x32xf32>
    %354 = arith.negf %353 : vector<1x32xf32>
    %355 = math.exp %354 : vector<1x32xf32>
    %cst_136 = arith.constant 1.000000e+00 : f32
    %356 = vector.broadcast %cst_136 : f32 to vector<1x32xf32>
    %357 = arith.addf %356, %355 : vector<1x32xf32>
    %358 = arith.divf %356, %357 : vector<1x32xf32>
    %359 = vector.extract_strided_slice %346 {offsets = [0, 64], sizes = [1, 32], strides = [1, 1]} : vector<1x160xf32> to vector<1x32xf32>
    %360 = arith.negf %359 : vector<1x32xf32>
    %361 = math.exp %360 : vector<1x32xf32>
    %cst_137 = arith.constant 1.000000e+00 : f32
    %362 = vector.broadcast %cst_137 : f32 to vector<1x32xf32>
    %363 = arith.addf %362, %361 : vector<1x32xf32>
    %364 = arith.divf %362, %363 : vector<1x32xf32>
    %365 = vector.extract_strided_slice %346 {offsets = [0, 96], sizes = [1, 32], strides = [1, 1]} : vector<1x160xf32> to vector<1x32xf32>
    %366 = arith.negf %365 : vector<1x32xf32>
    %367 = math.exp %366 : vector<1x32xf32>
    %cst_138 = arith.constant 1.000000e+00 : f32
    %368 = vector.broadcast %cst_138 : f32 to vector<1x32xf32>
    %369 = arith.addf %368, %367 : vector<1x32xf32>
    %370 = arith.divf %368, %369 : vector<1x32xf32>
    %371 = vector.extract_strided_slice %346 {offsets = [0, 128], sizes = [1, 32], strides = [1, 1]} : vector<1x160xf32> to vector<1x32xf32>
    %372 = math.tanh %371 : vector<1x32xf32>
    %373 = arith.mulf %352, %372 : vector<1x32xf32>
    %374 = arith.mulf %364, %324 : vector<1x32xf32>
    %375 = arith.addf %373, %374 : vector<1x32xf32>
    %376 = arith.mulf %370, %328 : vector<1x32xf32>
    %377 = arith.addf %375, %376 : vector<1x32xf32>
    %378 = math.tanh %377 : vector<1x32xf32>
    %379 = arith.mulf %358, %378 : vector<1x32xf32>
    %380 = arith.index_cast %295 : i32 to index
    %c0_139 = arith.constant 0 : index
    %381 = vector.load %arg13[%380, %c0_139] : memref<7x32xf32, #tpu.memory_space<vmem>>, vector<1x32xf32>
    tpu.vector_store %arg13[%380, %c0_139], %377 {strides = array<i32>} : memref<7x32xf32, #tpu.memory_space<vmem>>, vector<1x32xf32>,
    %382 = arith.index_cast %295 : i32 to index
    %c0_140 = arith.constant 0 : index
    %383 = vector.load %arg12[%382, %c0_140] : memref<7x32xf32, #tpu.memory_space<vmem>>, vector<1x32xf32>
    tpu.vector_store %arg12[%382, %c0_140], %379 {strides = array<i32>} : memref<7x32xf32, #tpu.memory_space<vmem>>, vector<1x32xf32>,
    %c7_i32_141 = arith.constant 7 : i32
    %384 = arith.muli %arg0, %c7_i32_141 : i32
    %c4_i32_142 = arith.constant 4 : i32
    %385 = arith.addi %384, %c4_i32_142 : i32
    %c5_i32_143 = arith.constant 5 : i32
    %386 = arith.muli %385, %c5_i32_143 : i32
    %c0_i32_144 = arith.constant 0 : i32
    %387 = arith.addi %386, %c0_i32_144 : i32
    %388 = arith.index_cast %387 : i32 to index
    %389 = memref.load %arg1[%388] : memref<70xi32, #tpu.memory_space<smem>>
    %c1_i32_145 = arith.constant 1 : i32
    %390 = arith.addi %386, %c1_i32_145 : i32
    %391 = arith.index_cast %390 : i32 to index
    %392 = memref.load %arg1[%391] : memref<70xi32, #tpu.memory_space<smem>>
    %c2_i32_146 = arith.constant 2 : i32
    %393 = arith.addi %386, %c2_i32_146 : i32
    %394 = arith.index_cast %393 : i32 to index
    %395 = memref.load %arg1[%394] : memref<70xi32, #tpu.memory_space<smem>>
    %c3_i32_147 = arith.constant 3 : i32
    %396 = arith.addi %386, %c3_i32_147 : i32
    %397 = arith.index_cast %396 : i32 to index
    %398 = memref.load %arg1[%397] : memref<70xi32, #tpu.memory_space<smem>>
    %399 = arith.sitofp %398 : i32 to f32
    %c4_i32_148 = arith.constant 4 : i32
    %400 = arith.addi %386, %c4_i32_148 : i32
    %401 = arith.index_cast %400 : i32 to index
    %402 = memref.load %arg1[%401] : memref<70xi32, #tpu.memory_space<smem>>
    %403 = arith.sitofp %402 : i32 to f32
    %c0_149 = arith.constant 0 : index
    %404 = arith.index_cast %389 : i32 to index
    %c0_150 = arith.constant 0 : index
    %405 = vector.load %arg3[%c0_149, %404, %c0_150] : memref<1x7x64xf32, #tpu.memory_space<vmem>>, vector<1x1x64xf32>
    %406 = vector.shape_cast %405 : vector<1x1x64xf32> to vector<1x64xf32>
    %407 = arith.index_cast %392 : i32 to index
    %c0_151 = arith.constant 0 : index
    %408 = vector.load %arg12[%407, %c0_151] : memref<7x32xf32, #tpu.memory_space<vmem>>, vector<1x32xf32>
    %409 = vector.broadcast %399 : f32 to vector<1x32xf32>
    %410 = arith.mulf %408, %409 : vector<1x32xf32>
    %411 = arith.index_cast %395 : i32 to index
    %c0_152 = arith.constant 0 : index
    %412 = vector.load %arg12[%411, %c0_152] : memref<7x32xf32, #tpu.memory_space<vmem>>, vector<1x32xf32>
    %413 = vector.broadcast %403 : f32 to vector<1x32xf32>
    %414 = arith.mulf %412, %413 : vector<1x32xf32>
    %415 = arith.index_cast %392 : i32 to index
    %c0_153 = arith.constant 0 : index
    %416 = vector.load %arg13[%415, %c0_153] : memref<7x32xf32, #tpu.memory_space<vmem>>, vector<1x32xf32>
    %417 = vector.broadcast %399 : f32 to vector<1x32xf32>
    %418 = arith.mulf %416, %417 : vector<1x32xf32>
    %419 = arith.index_cast %395 : i32 to index
    %c0_154 = arith.constant 0 : index
    %420 = vector.load %arg13[%419, %c0_154] : memref<7x32xf32, #tpu.memory_space<vmem>>, vector<1x32xf32>
    %421 = vector.broadcast %403 : f32 to vector<1x32xf32>
    %422 = arith.mulf %420, %421 : vector<1x32xf32>
    %c0_155 = arith.constant 0 : index
    %c0_156 = arith.constant 0 : index
    %423 = vector.load %arg4[%c0_155, %c0_156] : memref<64x160xf32, #tpu.memory_space<vmem>>, vector<64x160xf32>
    %cst_157 = arith.constant dense<0.000000e+00> : vector<1x160xf32>
    %424 = tpu.matmul %406, %423, %cst_157 {dimension_numbers = #tpu.dot_dimension_numbers<[1], [0], [0], [1], [0, 0, 1, 1], [], []>} : vector<1x64xf32>, vector<64x160xf32>, vector<1x160xf32> -> vector<1x160xf32>
    %c0_158 = arith.constant 0 : index
    %c0_159 = arith.constant 0 : index
    %425 = vector.load %arg5[%c0_158, %c0_159] : memref<32x160xf32, #tpu.memory_space<vmem>>, vector<32x160xf32>
    %cst_160 = arith.constant dense<0.000000e+00> : vector<1x160xf32>
    %426 = tpu.matmul %410, %425, %cst_160 {dimension_numbers = #tpu.dot_dimension_numbers<[1], [0], [0], [1], [0, 0, 1, 1], [], []>} : vector<1x32xf32>, vector<32x160xf32>, vector<1x160xf32> -> vector<1x160xf32>
    %427 = arith.addf %424, %426 : vector<1x160xf32>
    %c0_161 = arith.constant 0 : index
    %c0_162 = arith.constant 0 : index
    %428 = vector.load %arg6[%c0_161, %c0_162] : memref<32x160xf32, #tpu.memory_space<vmem>>, vector<32x160xf32>
    %cst_163 = arith.constant dense<0.000000e+00> : vector<1x160xf32>
    %429 = tpu.matmul %414, %428, %cst_163 {dimension_numbers = #tpu.dot_dimension_numbers<[1], [0], [0], [1], [0, 0, 1, 1], [], []>} : vector<1x32xf32>, vector<32x160xf32>, vector<1x160xf32> -> vector<1x160xf32>
    %430 = arith.addf %427, %429 : vector<1x160xf32>
    %c0_164 = arith.constant 0 : index
    %c0_165 = arith.constant 0 : index
    %431 = vector.load %arg7[%c0_164, %c0_165] : memref<3x160xf32, #tpu.memory_space<vmem>>, vector<1x160xf32>
    %432 = arith.addf %430, %431 : vector<1x160xf32>
    %c1_166 = arith.constant 1 : index
    %c0_167 = arith.constant 0 : index
    %433 = vector.load %arg7[%c1_166, %c0_167] : memref<3x160xf32, #tpu.memory_space<vmem>>, vector<1x160xf32>
    %434 = vector.broadcast %399 : f32 to vector<1x160xf32>
    %435 = arith.mulf %434, %433 : vector<1x160xf32>
    %436 = arith.addf %432, %435 : vector<1x160xf32>
    %c2_168 = arith.constant 2 : index
    %c0_169 = arith.constant 0 : index
    %437 = vector.load %arg7[%c2_168, %c0_169] : memref<3x160xf32, #tpu.memory_space<vmem>>, vector<1x160xf32>
    %438 = vector.broadcast %403 : f32 to vector<1x160xf32>
    %439 = arith.mulf %438, %437 : vector<1x160xf32>
    %440 = arith.addf %436, %439 : vector<1x160xf32>
    %441 = vector.extract_strided_slice %440 {offsets = [0, 0], sizes = [1, 32], strides = [1, 1]} : vector<1x160xf32> to vector<1x32xf32>
    %442 = arith.negf %441 : vector<1x32xf32>
    %443 = math.exp %442 : vector<1x32xf32>
    %cst_170 = arith.constant 1.000000e+00 : f32
    %444 = vector.broadcast %cst_170 : f32 to vector<1x32xf32>
    %445 = arith.addf %444, %443 : vector<1x32xf32>
    %446 = arith.divf %444, %445 : vector<1x32xf32>
    %447 = vector.extract_strided_slice %440 {offsets = [0, 32], sizes = [1, 32], strides = [1, 1]} : vector<1x160xf32> to vector<1x32xf32>
    %448 = arith.negf %447 : vector<1x32xf32>
    %449 = math.exp %448 : vector<1x32xf32>
    %cst_171 = arith.constant 1.000000e+00 : f32
    %450 = vector.broadcast %cst_171 : f32 to vector<1x32xf32>
    %451 = arith.addf %450, %449 : vector<1x32xf32>
    %452 = arith.divf %450, %451 : vector<1x32xf32>
    %453 = vector.extract_strided_slice %440 {offsets = [0, 64], sizes = [1, 32], strides = [1, 1]} : vector<1x160xf32> to vector<1x32xf32>
    %454 = arith.negf %453 : vector<1x32xf32>
    %455 = math.exp %454 : vector<1x32xf32>
    %cst_172 = arith.constant 1.000000e+00 : f32
    %456 = vector.broadcast %cst_172 : f32 to vector<1x32xf32>
    %457 = arith.addf %456, %455 : vector<1x32xf32>
    %458 = arith.divf %456, %457 : vector<1x32xf32>
    %459 = vector.extract_strided_slice %440 {offsets = [0, 96], sizes = [1, 32], strides = [1, 1]} : vector<1x160xf32> to vector<1x32xf32>
    %460 = arith.negf %459 : vector<1x32xf32>
    %461 = math.exp %460 : vector<1x32xf32>
    %cst_173 = arith.constant 1.000000e+00 : f32
    %462 = vector.broadcast %cst_173 : f32 to vector<1x32xf32>
    %463 = arith.addf %462, %461 : vector<1x32xf32>
    %464 = arith.divf %462, %463 : vector<1x32xf32>
    %465 = vector.extract_strided_slice %440 {offsets = [0, 128], sizes = [1, 32], strides = [1, 1]} : vector<1x160xf32> to vector<1x32xf32>
    %466 = math.tanh %465 : vector<1x32xf32>
    %467 = arith.mulf %446, %466 : vector<1x32xf32>
    %468 = arith.mulf %458, %418 : vector<1x32xf32>
    %469 = arith.addf %467, %468 : vector<1x32xf32>
    %470 = arith.mulf %464, %422 : vector<1x32xf32>
    %471 = arith.addf %469, %470 : vector<1x32xf32>
    %472 = math.tanh %471 : vector<1x32xf32>
    %473 = arith.mulf %452, %472 : vector<1x32xf32>
    %474 = arith.index_cast %389 : i32 to index
    %c0_174 = arith.constant 0 : index
    %475 = vector.load %arg13[%474, %c0_174] : memref<7x32xf32, #tpu.memory_space<vmem>>, vector<1x32xf32>
    tpu.vector_store %arg13[%474, %c0_174], %471 {strides = array<i32>} : memref<7x32xf32, #tpu.memory_space<vmem>>, vector<1x32xf32>,
    %476 = arith.index_cast %389 : i32 to index
    %c0_175 = arith.constant 0 : index
    %477 = vector.load %arg12[%476, %c0_175] : memref<7x32xf32, #tpu.memory_space<vmem>>, vector<1x32xf32>
    tpu.vector_store %arg12[%476, %c0_175], %473 {strides = array<i32>} : memref<7x32xf32, #tpu.memory_space<vmem>>, vector<1x32xf32>,
    %c7_i32_176 = arith.constant 7 : i32
    %478 = arith.muli %arg0, %c7_i32_176 : i32
    %c5_i32_177 = arith.constant 5 : i32
    %479 = arith.addi %478, %c5_i32_177 : i32
    %c5_i32_178 = arith.constant 5 : i32
    %480 = arith.muli %479, %c5_i32_178 : i32
    %c0_i32_179 = arith.constant 0 : i32
    %481 = arith.addi %480, %c0_i32_179 : i32
    %482 = arith.index_cast %481 : i32 to index
    %483 = memref.load %arg1[%482] : memref<70xi32, #tpu.memory_space<smem>>
    %c1_i32_180 = arith.constant 1 : i32
    %484 = arith.addi %480, %c1_i32_180 : i32
    %485 = arith.index_cast %484 : i32 to index
    %486 = memref.load %arg1[%485] : memref<70xi32, #tpu.memory_space<smem>>
    %c2_i32_181 = arith.constant 2 : i32
    %487 = arith.addi %480, %c2_i32_181 : i32
    %488 = arith.index_cast %487 : i32 to index
    %489 = memref.load %arg1[%488] : memref<70xi32, #tpu.memory_space<smem>>
    %c3_i32_182 = arith.constant 3 : i32
    %490 = arith.addi %480, %c3_i32_182 : i32
    %491 = arith.index_cast %490 : i32 to index
    %492 = memref.load %arg1[%491] : memref<70xi32, #tpu.memory_space<smem>>
    %493 = arith.sitofp %492 : i32 to f32
    %c4_i32_183 = arith.constant 4 : i32
    %494 = arith.addi %480, %c4_i32_183 : i32
    %495 = arith.index_cast %494 : i32 to index
    %496 = memref.load %arg1[%495] : memref<70xi32, #tpu.memory_space<smem>>
    %497 = arith.sitofp %496 : i32 to f32
    %c0_184 = arith.constant 0 : index
    %498 = arith.index_cast %483 : i32 to index
    %c0_185 = arith.constant 0 : index
    %499 = vector.load %arg3[%c0_184, %498, %c0_185] : memref<1x7x64xf32, #tpu.memory_space<vmem>>, vector<1x1x64xf32>
    %500 = vector.shape_cast %499 : vector<1x1x64xf32> to vector<1x64xf32>
    %501 = arith.index_cast %486 : i32 to index
    %c0_186 = arith.constant 0 : index
    %502 = vector.load %arg12[%501, %c0_186] : memref<7x32xf32, #tpu.memory_space<vmem>>, vector<1x32xf32>
    %503 = vector.broadcast %493 : f32 to vector<1x32xf32>
    %504 = arith.mulf %502, %503 : vector<1x32xf32>
    %505 = arith.index_cast %489 : i32 to index
    %c0_187 = arith.constant 0 : index
    %506 = vector.load %arg12[%505, %c0_187] : memref<7x32xf32, #tpu.memory_space<vmem>>, vector<1x32xf32>
    %507 = vector.broadcast %497 : f32 to vector<1x32xf32>
    %508 = arith.mulf %506, %507 : vector<1x32xf32>
    %509 = arith.index_cast %486 : i32 to index
    %c0_188 = arith.constant 0 : index
    %510 = vector.load %arg13[%509, %c0_188] : memref<7x32xf32, #tpu.memory_space<vmem>>, vector<1x32xf32>
    %511 = vector.broadcast %493 : f32 to vector<1x32xf32>
    %512 = arith.mulf %510, %511 : vector<1x32xf32>
    %513 = arith.index_cast %489 : i32 to index
    %c0_189 = arith.constant 0 : index
    %514 = vector.load %arg13[%513, %c0_189] : memref<7x32xf32, #tpu.memory_space<vmem>>, vector<1x32xf32>
    %515 = vector.broadcast %497 : f32 to vector<1x32xf32>
    %516 = arith.mulf %514, %515 : vector<1x32xf32>
    %c0_190 = arith.constant 0 : index
    %c0_191 = arith.constant 0 : index
    %517 = vector.load %arg4[%c0_190, %c0_191] : memref<64x160xf32, #tpu.memory_space<vmem>>, vector<64x160xf32>
    %cst_192 = arith.constant dense<0.000000e+00> : vector<1x160xf32>
    %518 = tpu.matmul %500, %517, %cst_192 {dimension_numbers = #tpu.dot_dimension_numbers<[1], [0], [0], [1], [0, 0, 1, 1], [], []>} : vector<1x64xf32>, vector<64x160xf32>, vector<1x160xf32> -> vector<1x160xf32>
    %c0_193 = arith.constant 0 : index
    %c0_194 = arith.constant 0 : index
    %519 = vector.load %arg5[%c0_193, %c0_194] : memref<32x160xf32, #tpu.memory_space<vmem>>, vector<32x160xf32>
    %cst_195 = arith.constant dense<0.000000e+00> : vector<1x160xf32>
    %520 = tpu.matmul %504, %519, %cst_195 {dimension_numbers = #tpu.dot_dimension_numbers<[1], [0], [0], [1], [0, 0, 1, 1], [], []>} : vector<1x32xf32>, vector<32x160xf32>, vector<1x160xf32> -> vector<1x160xf32>
    %521 = arith.addf %518, %520 : vector<1x160xf32>
    %c0_196 = arith.constant 0 : index
    %c0_197 = arith.constant 0 : index
    %522 = vector.load %arg6[%c0_196, %c0_197] : memref<32x160xf32, #tpu.memory_space<vmem>>, vector<32x160xf32>
    %cst_198 = arith.constant dense<0.000000e+00> : vector<1x160xf32>
    %523 = tpu.matmul %508, %522, %cst_198 {dimension_numbers = #tpu.dot_dimension_numbers<[1], [0], [0], [1], [0, 0, 1, 1], [], []>} : vector<1x32xf32>, vector<32x160xf32>, vector<1x160xf32> -> vector<1x160xf32>
    %524 = arith.addf %521, %523 : vector<1x160xf32>
    %c0_199 = arith.constant 0 : index
    %c0_200 = arith.constant 0 : index
    %525 = vector.load %arg7[%c0_199, %c0_200] : memref<3x160xf32, #tpu.memory_space<vmem>>, vector<1x160xf32>
    %526 = arith.addf %524, %525 : vector<1x160xf32>
    %c1_201 = arith.constant 1 : index
    %c0_202 = arith.constant 0 : index
    %527 = vector.load %arg7[%c1_201, %c0_202] : memref<3x160xf32, #tpu.memory_space<vmem>>, vector<1x160xf32>
    %528 = vector.broadcast %493 : f32 to vector<1x160xf32>
    %529 = arith.mulf %528, %527 : vector<1x160xf32>
    %530 = arith.addf %526, %529 : vector<1x160xf32>
    %c2_203 = arith.constant 2 : index
    %c0_204 = arith.constant 0 : index
    %531 = vector.load %arg7[%c2_203, %c0_204] : memref<3x160xf32, #tpu.memory_space<vmem>>, vector<1x160xf32>
    %532 = vector.broadcast %497 : f32 to vector<1x160xf32>
    %533 = arith.mulf %532, %531 : vector<1x160xf32>
    %534 = arith.addf %530, %533 : vector<1x160xf32>
    %535 = vector.extract_strided_slice %534 {offsets = [0, 0], sizes = [1, 32], strides = [1, 1]} : vector<1x160xf32> to vector<1x32xf32>
    %536 = arith.negf %535 : vector<1x32xf32>
    %537 = math.exp %536 : vector<1x32xf32>
    %cst_205 = arith.constant 1.000000e+00 : f32
    %538 = vector.broadcast %cst_205 : f32 to vector<1x32xf32>
    %539 = arith.addf %538, %537 : vector<1x32xf32>
    %540 = arith.divf %538, %539 : vector<1x32xf32>
    %541 = vector.extract_strided_slice %534 {offsets = [0, 32], sizes = [1, 32], strides = [1, 1]} : vector<1x160xf32> to vector<1x32xf32>
    %542 = arith.negf %541 : vector<1x32xf32>
    %543 = math.exp %542 : vector<1x32xf32>
    %cst_206 = arith.constant 1.000000e+00 : f32
    %544 = vector.broadcast %cst_206 : f32 to vector<1x32xf32>
    %545 = arith.addf %544, %543 : vector<1x32xf32>
    %546 = arith.divf %544, %545 : vector<1x32xf32>
    %547 = vector.extract_strided_slice %534 {offsets = [0, 64], sizes = [1, 32], strides = [1, 1]} : vector<1x160xf32> to vector<1x32xf32>
    %548 = arith.negf %547 : vector<1x32xf32>
    %549 = math.exp %548 : vector<1x32xf32>
    %cst_207 = arith.constant 1.000000e+00 : f32
    %550 = vector.broadcast %cst_207 : f32 to vector<1x32xf32>
    %551 = arith.addf %550, %549 : vector<1x32xf32>
    %552 = arith.divf %550, %551 : vector<1x32xf32>
    %553 = vector.extract_strided_slice %534 {offsets = [0, 96], sizes = [1, 32], strides = [1, 1]} : vector<1x160xf32> to vector<1x32xf32>
    %554 = arith.negf %553 : vector<1x32xf32>
    %555 = math.exp %554 : vector<1x32xf32>
    %cst_208 = arith.constant 1.000000e+00 : f32
    %556 = vector.broadcast %cst_208 : f32 to vector<1x32xf32>
    %557 = arith.addf %556, %555 : vector<1x32xf32>
    %558 = arith.divf %556, %557 : vector<1x32xf32>
    %559 = vector.extract_strided_slice %534 {offsets = [0, 128], sizes = [1, 32], strides = [1, 1]} : vector<1x160xf32> to vector<1x32xf32>
    %560 = math.tanh %559 : vector<1x32xf32>
    %561 = arith.mulf %540, %560 : vector<1x32xf32>
    %562 = arith.mulf %552, %512 : vector<1x32xf32>
    %563 = arith.addf %561, %562 : vector<1x32xf32>
    %564 = arith.mulf %558, %516 : vector<1x32xf32>
    %565 = arith.addf %563, %564 : vector<1x32xf32>
    %566 = math.tanh %565 : vector<1x32xf32>
    %567 = arith.mulf %546, %566 : vector<1x32xf32>
    %568 = arith.index_cast %483 : i32 to index
    %c0_209 = arith.constant 0 : index
    %569 = vector.load %arg13[%568, %c0_209] : memref<7x32xf32, #tpu.memory_space<vmem>>, vector<1x32xf32>
    tpu.vector_store %arg13[%568, %c0_209], %565 {strides = array<i32>} : memref<7x32xf32, #tpu.memory_space<vmem>>, vector<1x32xf32>,
    %570 = arith.index_cast %483 : i32 to index
    %c0_210 = arith.constant 0 : index
    %571 = vector.load %arg12[%570, %c0_210] : memref<7x32xf32, #tpu.memory_space<vmem>>, vector<1x32xf32>
    tpu.vector_store %arg12[%570, %c0_210], %567 {strides = array<i32>} : memref<7x32xf32, #tpu.memory_space<vmem>>, vector<1x32xf32>,
    %c7_i32_211 = arith.constant 7 : i32
    %572 = arith.muli %arg0, %c7_i32_211 : i32
    %c6_i32 = arith.constant 6 : i32
    %573 = arith.addi %572, %c6_i32 : i32
    %c5_i32_212 = arith.constant 5 : i32
    %574 = arith.muli %573, %c5_i32_212 : i32
    %c0_i32_213 = arith.constant 0 : i32
    %575 = arith.addi %574, %c0_i32_213 : i32
    %576 = arith.index_cast %575 : i32 to index
    %577 = memref.load %arg1[%576] : memref<70xi32, #tpu.memory_space<smem>>
    %c1_i32_214 = arith.constant 1 : i32
    %578 = arith.addi %574, %c1_i32_214 : i32
    %579 = arith.index_cast %578 : i32 to index
    %580 = memref.load %arg1[%579] : memref<70xi32, #tpu.memory_space<smem>>
    %c2_i32_215 = arith.constant 2 : i32
    %581 = arith.addi %574, %c2_i32_215 : i32
    %582 = arith.index_cast %581 : i32 to index
    %583 = memref.load %arg1[%582] : memref<70xi32, #tpu.memory_space<smem>>
    %c3_i32_216 = arith.constant 3 : i32
    %584 = arith.addi %574, %c3_i32_216 : i32
    %585 = arith.index_cast %584 : i32 to index
    %586 = memref.load %arg1[%585] : memref<70xi32, #tpu.memory_space<smem>>
    %587 = arith.sitofp %586 : i32 to f32
    %c4_i32_217 = arith.constant 4 : i32
    %588 = arith.addi %574, %c4_i32_217 : i32
    %589 = arith.index_cast %588 : i32 to index
    %590 = memref.load %arg1[%589] : memref<70xi32, #tpu.memory_space<smem>>
    %591 = arith.sitofp %590 : i32 to f32
    %c0_218 = arith.constant 0 : index
    %592 = arith.index_cast %577 : i32 to index
    %c0_219 = arith.constant 0 : index
    %593 = vector.load %arg3[%c0_218, %592, %c0_219] : memref<1x7x64xf32, #tpu.memory_space<vmem>>, vector<1x1x64xf32>
    %594 = vector.shape_cast %593 : vector<1x1x64xf32> to vector<1x64xf32>
    %595 = arith.index_cast %580 : i32 to index
    %c0_220 = arith.constant 0 : index
    %596 = vector.load %arg12[%595, %c0_220] : memref<7x32xf32, #tpu.memory_space<vmem>>, vector<1x32xf32>
    %597 = vector.broadcast %587 : f32 to vector<1x32xf32>
    %598 = arith.mulf %596, %597 : vector<1x32xf32>
    %599 = arith.index_cast %583 : i32 to index
    %c0_221 = arith.constant 0 : index
    %600 = vector.load %arg12[%599, %c0_221] : memref<7x32xf32, #tpu.memory_space<vmem>>, vector<1x32xf32>
    %601 = vector.broadcast %591 : f32 to vector<1x32xf32>
    %602 = arith.mulf %600, %601 : vector<1x32xf32>
    %603 = arith.index_cast %580 : i32 to index
    %c0_222 = arith.constant 0 : index
    %604 = vector.load %arg13[%603, %c0_222] : memref<7x32xf32, #tpu.memory_space<vmem>>, vector<1x32xf32>
    %605 = vector.broadcast %587 : f32 to vector<1x32xf32>
    %606 = arith.mulf %604, %605 : vector<1x32xf32>
    %607 = arith.index_cast %583 : i32 to index
    %c0_223 = arith.constant 0 : index
    %608 = vector.load %arg13[%607, %c0_223] : memref<7x32xf32, #tpu.memory_space<vmem>>, vector<1x32xf32>
    %609 = vector.broadcast %591 : f32 to vector<1x32xf32>
    %610 = arith.mulf %608, %609 : vector<1x32xf32>
    %c0_224 = arith.constant 0 : index
    %c0_225 = arith.constant 0 : index
    %611 = vector.load %arg4[%c0_224, %c0_225] : memref<64x160xf32, #tpu.memory_space<vmem>>, vector<64x160xf32>
    %cst_226 = arith.constant dense<0.000000e+00> : vector<1x160xf32>
    %612 = tpu.matmul %594, %611, %cst_226 {dimension_numbers = #tpu.dot_dimension_numbers<[1], [0], [0], [1], [0, 0, 1, 1], [], []>} : vector<1x64xf32>, vector<64x160xf32>, vector<1x160xf32> -> vector<1x160xf32>
    %c0_227 = arith.constant 0 : index
    %c0_228 = arith.constant 0 : index
    %613 = vector.load %arg5[%c0_227, %c0_228] : memref<32x160xf32, #tpu.memory_space<vmem>>, vector<32x160xf32>
    %cst_229 = arith.constant dense<0.000000e+00> : vector<1x160xf32>
    %614 = tpu.matmul %598, %613, %cst_229 {dimension_numbers = #tpu.dot_dimension_numbers<[1], [0], [0], [1], [0, 0, 1, 1], [], []>} : vector<1x32xf32>, vector<32x160xf32>, vector<1x160xf32> -> vector<1x160xf32>
    %615 = arith.addf %612, %614 : vector<1x160xf32>
    %c0_230 = arith.constant 0 : index
    %c0_231 = arith.constant 0 : index
    %616 = vector.load %arg6[%c0_230, %c0_231] : memref<32x160xf32, #tpu.memory_space<vmem>>, vector<32x160xf32>
    %cst_232 = arith.constant dense<0.000000e+00> : vector<1x160xf32>
    %617 = tpu.matmul %602, %616, %cst_232 {dimension_numbers = #tpu.dot_dimension_numbers<[1], [0], [0], [1], [0, 0, 1, 1], [], []>} : vector<1x32xf32>, vector<32x160xf32>, vector<1x160xf32> -> vector<1x160xf32>
    %618 = arith.addf %615, %617 : vector<1x160xf32>
    %c0_233 = arith.constant 0 : index
    %c0_234 = arith.constant 0 : index
    %619 = vector.load %arg7[%c0_233, %c0_234] : memref<3x160xf32, #tpu.memory_space<vmem>>, vector<1x160xf32>
    %620 = arith.addf %618, %619 : vector<1x160xf32>
    %c1_235 = arith.constant 1 : index
    %c0_236 = arith.constant 0 : index
    %621 = vector.load %arg7[%c1_235, %c0_236] : memref<3x160xf32, #tpu.memory_space<vmem>>, vector<1x160xf32>
    %622 = vector.broadcast %587 : f32 to vector<1x160xf32>
    %623 = arith.mulf %622, %621 : vector<1x160xf32>
    %624 = arith.addf %620, %623 : vector<1x160xf32>
    %c2_237 = arith.constant 2 : index
    %c0_238 = arith.constant 0 : index
    %625 = vector.load %arg7[%c2_237, %c0_238] : memref<3x160xf32, #tpu.memory_space<vmem>>, vector<1x160xf32>
    %626 = vector.broadcast %591 : f32 to vector<1x160xf32>
    %627 = arith.mulf %626, %625 : vector<1x160xf32>
    %628 = arith.addf %624, %627 : vector<1x160xf32>
    %629 = vector.extract_strided_slice %628 {offsets = [0, 0], sizes = [1, 32], strides = [1, 1]} : vector<1x160xf32> to vector<1x32xf32>
    %630 = arith.negf %629 : vector<1x32xf32>
    %631 = math.exp %630 : vector<1x32xf32>
    %cst_239 = arith.constant 1.000000e+00 : f32
    %632 = vector.broadcast %cst_239 : f32 to vector<1x32xf32>
    %633 = arith.addf %632, %631 : vector<1x32xf32>
    %634 = arith.divf %632, %633 : vector<1x32xf32>
    %635 = vector.extract_strided_slice %628 {offsets = [0, 32], sizes = [1, 32], strides = [1, 1]} : vector<1x160xf32> to vector<1x32xf32>
    %636 = arith.negf %635 : vector<1x32xf32>
    %637 = math.exp %636 : vector<1x32xf32>
    %cst_240 = arith.constant 1.000000e+00 : f32
    %638 = vector.broadcast %cst_240 : f32 to vector<1x32xf32>
    %639 = arith.addf %638, %637 : vector<1x32xf32>
    %640 = arith.divf %638, %639 : vector<1x32xf32>
    %641 = vector.extract_strided_slice %628 {offsets = [0, 64], sizes = [1, 32], strides = [1, 1]} : vector<1x160xf32> to vector<1x32xf32>
    %642 = arith.negf %641 : vector<1x32xf32>
    %643 = math.exp %642 : vector<1x32xf32>
    %cst_241 = arith.constant 1.000000e+00 : f32
    %644 = vector.broadcast %cst_241 : f32 to vector<1x32xf32>
    %645 = arith.addf %644, %643 : vector<1x32xf32>
    %646 = arith.divf %644, %645 : vector<1x32xf32>
    %647 = vector.extract_strided_slice %628 {offsets = [0, 96], sizes = [1, 32], strides = [1, 1]} : vector<1x160xf32> to vector<1x32xf32>
    %648 = arith.negf %647 : vector<1x32xf32>
    %649 = math.exp %648 : vector<1x32xf32>
    %cst_242 = arith.constant 1.000000e+00 : f32
    %650 = vector.broadcast %cst_242 : f32 to vector<1x32xf32>
    %651 = arith.addf %650, %649 : vector<1x32xf32>
    %652 = arith.divf %650, %651 : vector<1x32xf32>
    %653 = vector.extract_strided_slice %628 {offsets = [0, 128], sizes = [1, 32], strides = [1, 1]} : vector<1x160xf32> to vector<1x32xf32>
    %654 = math.tanh %653 : vector<1x32xf32>
    %655 = arith.mulf %634, %654 : vector<1x32xf32>
    %656 = arith.mulf %646, %606 : vector<1x32xf32>
    %657 = arith.addf %655, %656 : vector<1x32xf32>
    %658 = arith.mulf %652, %610 : vector<1x32xf32>
    %659 = arith.addf %657, %658 : vector<1x32xf32>
    %660 = math.tanh %659 : vector<1x32xf32>
    %661 = arith.mulf %640, %660 : vector<1x32xf32>
    %662 = arith.index_cast %577 : i32 to index
    %c0_243 = arith.constant 0 : index
    %663 = vector.load %arg13[%662, %c0_243] : memref<7x32xf32, #tpu.memory_space<vmem>>, vector<1x32xf32>
    tpu.vector_store %arg13[%662, %c0_243], %659 {strides = array<i32>} : memref<7x32xf32, #tpu.memory_space<vmem>>, vector<1x32xf32>,
    %664 = arith.index_cast %577 : i32 to index
    %c0_244 = arith.constant 0 : index
    %665 = vector.load %arg12[%664, %c0_244] : memref<7x32xf32, #tpu.memory_space<vmem>>, vector<1x32xf32>
    tpu.vector_store %arg12[%664, %c0_244], %661 {strides = array<i32>} : memref<7x32xf32, #tpu.memory_space<vmem>>, vector<1x32xf32>,
    %c7_i32_245 = arith.constant 7 : i32
    %666 = arith.muli %arg0, %c7_i32_245 : i32
    %c0_i32_246 = arith.constant 0 : i32
    %667 = arith.addi %666, %c0_i32_246 : i32
    %c3_i32_247 = arith.constant 3 : i32
    %668 = arith.muli %667, %c3_i32_247 : i32
    %c0_i32_248 = arith.constant 0 : i32
    %669 = arith.addi %668, %c0_i32_248 : i32
    %670 = arith.index_cast %669 : i32 to index
    %671 = memref.load %arg2[%670] : memref<42xi32, #tpu.memory_space<smem>>
    %c1_i32_249 = arith.constant 1 : i32
    %672 = arith.addi %668, %c1_i32_249 : i32
    %673 = arith.index_cast %672 : i32 to index
    %674 = memref.load %arg2[%673] : memref<42xi32, #tpu.memory_space<smem>>
    %c2_i32_250 = arith.constant 2 : i32
    %675 = arith.addi %668, %c2_i32_250 : i32
    %676 = arith.index_cast %675 : i32 to index
    %677 = memref.load %arg2[%676] : memref<42xi32, #tpu.memory_space<smem>>
    %678 = arith.sitofp %677 : i32 to f32
    %c0_251 = arith.constant 0 : index
    %679 = arith.index_cast %671 : i32 to index
    %c0_252 = arith.constant 0 : index
    %680 = vector.load %arg3[%c0_251, %679, %c0_252] : memref<1x7x64xf32, #tpu.memory_space<vmem>>, vector<1x1x64xf32>
    %681 = vector.shape_cast %680 : vector<1x1x64xf32> to vector<1x64xf32>
    %682 = arith.index_cast %674 : i32 to index
    %c0_253 = arith.constant 0 : index
    %683 = vector.load %arg14[%682, %c0_253] : memref<7x32xf32, #tpu.memory_space<vmem>>, vector<1x32xf32>
    %684 = vector.broadcast %678 : f32 to vector<1x32xf32>
    %685 = arith.mulf %683, %684 : vector<1x32xf32>
    %686 = arith.index_cast %674 : i32 to index
    %c0_254 = arith.constant 0 : index
    %687 = vector.load %arg15[%686, %c0_254] : memref<7x32xf32, #tpu.memory_space<vmem>>, vector<1x32xf32>
    %688 = vector.broadcast %678 : f32 to vector<1x32xf32>
    %689 = arith.mulf %687, %688 : vector<1x32xf32>
    %c0_255 = arith.constant 0 : index
    %c0_256 = arith.constant 0 : index
    %690 = vector.load %arg8[%c0_255, %c0_256] : memref<64x128xf32, #tpu.memory_space<vmem>>, vector<64x128xf32>
    %cst_257 = arith.constant dense<0.000000e+00> : vector<1x128xf32>
    %691 = tpu.matmul %681, %690, %cst_257 {dimension_numbers = #tpu.dot_dimension_numbers<[1], [0], [0], [1], [0, 0, 1, 1], [], []>} : vector<1x64xf32>, vector<64x128xf32>, vector<1x128xf32> -> vector<1x128xf32>
    %c0_258 = arith.constant 0 : index
    %c0_259 = arith.constant 0 : index
    %692 = vector.load %arg9[%c0_258, %c0_259] : memref<32x128xf32, #tpu.memory_space<vmem>>, vector<32x128xf32>
    %cst_260 = arith.constant dense<0.000000e+00> : vector<1x128xf32>
    %693 = tpu.matmul %685, %692, %cst_260 {dimension_numbers = #tpu.dot_dimension_numbers<[1], [0], [0], [1], [0, 0, 1, 1], [], []>} : vector<1x32xf32>, vector<32x128xf32>, vector<1x128xf32> -> vector<1x128xf32>
    %694 = arith.addf %691, %693 : vector<1x128xf32>
    %c0_261 = arith.constant 0 : index
    %c0_262 = arith.constant 0 : index
    %695 = vector.load %arg10[%c0_261, %c0_262] : memref<1x128xf32, #tpu.memory_space<vmem>>, vector<1x128xf32>
    %696 = arith.addf %694, %695 : vector<1x128xf32>
    %697 = vector.extract_strided_slice %696 {offsets = [0, 0], sizes = [1, 32], strides = [1, 1]} : vector<1x128xf32> to vector<1x32xf32>
    %698 = arith.negf %697 : vector<1x32xf32>
    %699 = math.exp %698 : vector<1x32xf32>
    %cst_263 = arith.constant 1.000000e+00 : f32
    %700 = vector.broadcast %cst_263 : f32 to vector<1x32xf32>
    %701 = arith.addf %700, %699 : vector<1x32xf32>
    %702 = arith.divf %700, %701 : vector<1x32xf32>
    %703 = vector.extract_strided_slice %696 {offsets = [0, 32], sizes = [1, 32], strides = [1, 1]} : vector<1x128xf32> to vector<1x32xf32>
    %704 = arith.negf %703 : vector<1x32xf32>
    %705 = math.exp %704 : vector<1x32xf32>
    %cst_264 = arith.constant 1.000000e+00 : f32
    %706 = vector.broadcast %cst_264 : f32 to vector<1x32xf32>
    %707 = arith.addf %706, %705 : vector<1x32xf32>
    %708 = arith.divf %706, %707 : vector<1x32xf32>
    %709 = vector.extract_strided_slice %696 {offsets = [0, 64], sizes = [1, 32], strides = [1, 1]} : vector<1x128xf32> to vector<1x32xf32>
    %710 = arith.negf %709 : vector<1x32xf32>
    %711 = math.exp %710 : vector<1x32xf32>
    %cst_265 = arith.constant 1.000000e+00 : f32
    %712 = vector.broadcast %cst_265 : f32 to vector<1x32xf32>
    %713 = arith.addf %712, %711 : vector<1x32xf32>
    %714 = arith.divf %712, %713 : vector<1x32xf32>
    %715 = vector.extract_strided_slice %696 {offsets = [0, 96], sizes = [1, 32], strides = [1, 1]} : vector<1x128xf32> to vector<1x32xf32>
    %716 = math.tanh %715 : vector<1x32xf32>
    %717 = arith.mulf %702, %716 : vector<1x32xf32>
    %718 = arith.mulf %714, %689 : vector<1x32xf32>
    %719 = arith.addf %717, %718 : vector<1x32xf32>
    %720 = math.tanh %719 : vector<1x32xf32>
    %721 = arith.mulf %708, %720 : vector<1x32xf32>
    %722 = arith.index_cast %671 : i32 to index
    %c0_266 = arith.constant 0 : index
    %723 = vector.load %arg15[%722, %c0_266] : memref<7x32xf32, #tpu.memory_space<vmem>>, vector<1x32xf32>
    tpu.vector_store %arg15[%722, %c0_266], %719 {strides = array<i32>} : memref<7x32xf32, #tpu.memory_space<vmem>>, vector<1x32xf32>,
    %724 = arith.index_cast %671 : i32 to index
    %c0_267 = arith.constant 0 : index
    %725 = vector.load %arg14[%724, %c0_267] : memref<7x32xf32, #tpu.memory_space<vmem>>, vector<1x32xf32>
    tpu.vector_store %arg14[%724, %c0_267], %721 {strides = array<i32>} : memref<7x32xf32, #tpu.memory_space<vmem>>, vector<1x32xf32>,
    %c7_i32_268 = arith.constant 7 : i32
    %726 = arith.muli %arg0, %c7_i32_268 : i32
    %c1_i32_269 = arith.constant 1 : i32
    %727 = arith.addi %726, %c1_i32_269 : i32
    %c3_i32_270 = arith.constant 3 : i32
    %728 = arith.muli %727, %c3_i32_270 : i32
    %c0_i32_271 = arith.constant 0 : i32
    %729 = arith.addi %728, %c0_i32_271 : i32
    %730 = arith.index_cast %729 : i32 to index
    %731 = memref.load %arg2[%730] : memref<42xi32, #tpu.memory_space<smem>>
    %c1_i32_272 = arith.constant 1 : i32
    %732 = arith.addi %728, %c1_i32_272 : i32
    %733 = arith.index_cast %732 : i32 to index
    %734 = memref.load %arg2[%733] : memref<42xi32, #tpu.memory_space<smem>>
    %c2_i32_273 = arith.constant 2 : i32
    %735 = arith.addi %728, %c2_i32_273 : i32
    %736 = arith.index_cast %735 : i32 to index
    %737 = memref.load %arg2[%736] : memref<42xi32, #tpu.memory_space<smem>>
    %738 = arith.sitofp %737 : i32 to f32
    %c0_274 = arith.constant 0 : index
    %739 = arith.index_cast %731 : i32 to index
    %c0_275 = arith.constant 0 : index
    %740 = vector.load %arg3[%c0_274, %739, %c0_275] : memref<1x7x64xf32, #tpu.memory_space<vmem>>, vector<1x1x64xf32>
    %741 = vector.shape_cast %740 : vector<1x1x64xf32> to vector<1x64xf32>
    %742 = arith.index_cast %734 : i32 to index
    %c0_276 = arith.constant 0 : index
    %743 = vector.load %arg14[%742, %c0_276] : memref<7x32xf32, #tpu.memory_space<vmem>>, vector<1x32xf32>
    %744 = vector.broadcast %738 : f32 to vector<1x32xf32>
    %745 = arith.mulf %743, %744 : vector<1x32xf32>
    %746 = arith.index_cast %734 : i32 to index
    %c0_277 = arith.constant 0 : index
    %747 = vector.load %arg15[%746, %c0_277] : memref<7x32xf32, #tpu.memory_space<vmem>>, vector<1x32xf32>
    %748 = vector.broadcast %738 : f32 to vector<1x32xf32>
    %749 = arith.mulf %747, %748 : vector<1x32xf32>
    %c0_278 = arith.constant 0 : index
    %c0_279 = arith.constant 0 : index
    %750 = vector.load %arg8[%c0_278, %c0_279] : memref<64x128xf32, #tpu.memory_space<vmem>>, vector<64x128xf32>
    %cst_280 = arith.constant dense<0.000000e+00> : vector<1x128xf32>
    %751 = tpu.matmul %741, %750, %cst_280 {dimension_numbers = #tpu.dot_dimension_numbers<[1], [0], [0], [1], [0, 0, 1, 1], [], []>} : vector<1x64xf32>, vector<64x128xf32>, vector<1x128xf32> -> vector<1x128xf32>
    %c0_281 = arith.constant 0 : index
    %c0_282 = arith.constant 0 : index
    %752 = vector.load %arg9[%c0_281, %c0_282] : memref<32x128xf32, #tpu.memory_space<vmem>>, vector<32x128xf32>
    %cst_283 = arith.constant dense<0.000000e+00> : vector<1x128xf32>
    %753 = tpu.matmul %745, %752, %cst_283 {dimension_numbers = #tpu.dot_dimension_numbers<[1], [0], [0], [1], [0, 0, 1, 1], [], []>} : vector<1x32xf32>, vector<32x128xf32>, vector<1x128xf32> -> vector<1x128xf32>
    %754 = arith.addf %751, %753 : vector<1x128xf32>
    %c0_284 = arith.constant 0 : index
    %c0_285 = arith.constant 0 : index
    %755 = vector.load %arg10[%c0_284, %c0_285] : memref<1x128xf32, #tpu.memory_space<vmem>>, vector<1x128xf32>
    %756 = arith.addf %754, %755 : vector<1x128xf32>
    %757 = vector.extract_strided_slice %756 {offsets = [0, 0], sizes = [1, 32], strides = [1, 1]} : vector<1x128xf32> to vector<1x32xf32>
    %758 = arith.negf %757 : vector<1x32xf32>
    %759 = math.exp %758 : vector<1x32xf32>
    %cst_286 = arith.constant 1.000000e+00 : f32
    %760 = vector.broadcast %cst_286 : f32 to vector<1x32xf32>
    %761 = arith.addf %760, %759 : vector<1x32xf32>
    %762 = arith.divf %760, %761 : vector<1x32xf32>
    %763 = vector.extract_strided_slice %756 {offsets = [0, 32], sizes = [1, 32], strides = [1, 1]} : vector<1x128xf32> to vector<1x32xf32>
    %764 = arith.negf %763 : vector<1x32xf32>
    %765 = math.exp %764 : vector<1x32xf32>
    %cst_287 = arith.constant 1.000000e+00 : f32
    %766 = vector.broadcast %cst_287 : f32 to vector<1x32xf32>
    %767 = arith.addf %766, %765 : vector<1x32xf32>
    %768 = arith.divf %766, %767 : vector<1x32xf32>
    %769 = vector.extract_strided_slice %756 {offsets = [0, 64], sizes = [1, 32], strides = [1, 1]} : vector<1x128xf32> to vector<1x32xf32>
    %770 = arith.negf %769 : vector<1x32xf32>
    %771 = math.exp %770 : vector<1x32xf32>
    %cst_288 = arith.constant 1.000000e+00 : f32
    %772 = vector.broadcast %cst_288 : f32 to vector<1x32xf32>
    %773 = arith.addf %772, %771 : vector<1x32xf32>
    %774 = arith.divf %772, %773 : vector<1x32xf32>
    %775 = vector.extract_strided_slice %756 {offsets = [0, 96], sizes = [1, 32], strides = [1, 1]} : vector<1x128xf32> to vector<1x32xf32>
    %776 = math.tanh %775 : vector<1x32xf32>
    %777 = arith.mulf %762, %776 : vector<1x32xf32>
    %778 = arith.mulf %774, %749 : vector<1x32xf32>
    %779 = arith.addf %777, %778 : vector<1x32xf32>
    %780 = math.tanh %779 : vector<1x32xf32>
    %781 = arith.mulf %768, %780 : vector<1x32xf32>
    %782 = arith.index_cast %731 : i32 to index
    %c0_289 = arith.constant 0 : index
    %783 = vector.load %arg15[%782, %c0_289] : memref<7x32xf32, #tpu.memory_space<vmem>>, vector<1x32xf32>
    tpu.vector_store %arg15[%782, %c0_289], %779 {strides = array<i32>} : memref<7x32xf32, #tpu.memory_space<vmem>>, vector<1x32xf32>,
    %784 = arith.index_cast %731 : i32 to index
    %c0_290 = arith.constant 0 : index
    %785 = vector.load %arg14[%784, %c0_290] : memref<7x32xf32, #tpu.memory_space<vmem>>, vector<1x32xf32>
    tpu.vector_store %arg14[%784, %c0_290], %781 {strides = array<i32>} : memref<7x32xf32, #tpu.memory_space<vmem>>, vector<1x32xf32>,
    %c7_i32_291 = arith.constant 7 : i32
    %786 = arith.muli %arg0, %c7_i32_291 : i32
    %c2_i32_292 = arith.constant 2 : i32
    %787 = arith.addi %786, %c2_i32_292 : i32
    %c3_i32_293 = arith.constant 3 : i32
    %788 = arith.muli %787, %c3_i32_293 : i32
    %c0_i32_294 = arith.constant 0 : i32
    %789 = arith.addi %788, %c0_i32_294 : i32
    %790 = arith.index_cast %789 : i32 to index
    %791 = memref.load %arg2[%790] : memref<42xi32, #tpu.memory_space<smem>>
    %c1_i32_295 = arith.constant 1 : i32
    %792 = arith.addi %788, %c1_i32_295 : i32
    %793 = arith.index_cast %792 : i32 to index
    %794 = memref.load %arg2[%793] : memref<42xi32, #tpu.memory_space<smem>>
    %c2_i32_296 = arith.constant 2 : i32
    %795 = arith.addi %788, %c2_i32_296 : i32
    %796 = arith.index_cast %795 : i32 to index
    %797 = memref.load %arg2[%796] : memref<42xi32, #tpu.memory_space<smem>>
    %798 = arith.sitofp %797 : i32 to f32
    %c0_297 = arith.constant 0 : index
    %799 = arith.index_cast %791 : i32 to index
    %c0_298 = arith.constant 0 : index
    %800 = vector.load %arg3[%c0_297, %799, %c0_298] : memref<1x7x64xf32, #tpu.memory_space<vmem>>, vector<1x1x64xf32>
    %801 = vector.shape_cast %800 : vector<1x1x64xf32> to vector<1x64xf32>
    %802 = arith.index_cast %794 : i32 to index
    %c0_299 = arith.constant 0 : index
    %803 = vector.load %arg14[%802, %c0_299] : memref<7x32xf32, #tpu.memory_space<vmem>>, vector<1x32xf32>
    %804 = vector.broadcast %798 : f32 to vector<1x32xf32>
    %805 = arith.mulf %803, %804 : vector<1x32xf32>
    %806 = arith.index_cast %794 : i32 to index
    %c0_300 = arith.constant 0 : index
    %807 = vector.load %arg15[%806, %c0_300] : memref<7x32xf32, #tpu.memory_space<vmem>>, vector<1x32xf32>
    %808 = vector.broadcast %798 : f32 to vector<1x32xf32>
    %809 = arith.mulf %807, %808 : vector<1x32xf32>
    %c0_301 = arith.constant 0 : index
    %c0_302 = arith.constant 0 : index
    %810 = vector.load %arg8[%c0_301, %c0_302] : memref<64x128xf32, #tpu.memory_space<vmem>>, vector<64x128xf32>
    %cst_303 = arith.constant dense<0.000000e+00> : vector<1x128xf32>
    %811 = tpu.matmul %801, %810, %cst_303 {dimension_numbers = #tpu.dot_dimension_numbers<[1], [0], [0], [1], [0, 0, 1, 1], [], []>} : vector<1x64xf32>, vector<64x128xf32>, vector<1x128xf32> -> vector<1x128xf32>
    %c0_304 = arith.constant 0 : index
    %c0_305 = arith.constant 0 : index
    %812 = vector.load %arg9[%c0_304, %c0_305] : memref<32x128xf32, #tpu.memory_space<vmem>>, vector<32x128xf32>
    %cst_306 = arith.constant dense<0.000000e+00> : vector<1x128xf32>
    %813 = tpu.matmul %805, %812, %cst_306 {dimension_numbers = #tpu.dot_dimension_numbers<[1], [0], [0], [1], [0, 0, 1, 1], [], []>} : vector<1x32xf32>, vector<32x128xf32>, vector<1x128xf32> -> vector<1x128xf32>
    %814 = arith.addf %811, %813 : vector<1x128xf32>
    %c0_307 = arith.constant 0 : index
    %c0_308 = arith.constant 0 : index
    %815 = vector.load %arg10[%c0_307, %c0_308] : memref<1x128xf32, #tpu.memory_space<vmem>>, vector<1x128xf32>
    %816 = arith.addf %814, %815 : vector<1x128xf32>
    %817 = vector.extract_strided_slice %816 {offsets = [0, 0], sizes = [1, 32], strides = [1, 1]} : vector<1x128xf32> to vector<1x32xf32>
    %818 = arith.negf %817 : vector<1x32xf32>
    %819 = math.exp %818 : vector<1x32xf32>
    %cst_309 = arith.constant 1.000000e+00 : f32
    %820 = vector.broadcast %cst_309 : f32 to vector<1x32xf32>
    %821 = arith.addf %820, %819 : vector<1x32xf32>
    %822 = arith.divf %820, %821 : vector<1x32xf32>
    %823 = vector.extract_strided_slice %816 {offsets = [0, 32], sizes = [1, 32], strides = [1, 1]} : vector<1x128xf32> to vector<1x32xf32>
    %824 = arith.negf %823 : vector<1x32xf32>
    %825 = math.exp %824 : vector<1x32xf32>
    %cst_310 = arith.constant 1.000000e+00 : f32
    %826 = vector.broadcast %cst_310 : f32 to vector<1x32xf32>
    %827 = arith.addf %826, %825 : vector<1x32xf32>
    %828 = arith.divf %826, %827 : vector<1x32xf32>
    %829 = vector.extract_strided_slice %816 {offsets = [0, 64], sizes = [1, 32], strides = [1, 1]} : vector<1x128xf32> to vector<1x32xf32>
    %830 = arith.negf %829 : vector<1x32xf32>
    %831 = math.exp %830 : vector<1x32xf32>
    %cst_311 = arith.constant 1.000000e+00 : f32
    %832 = vector.broadcast %cst_311 : f32 to vector<1x32xf32>
    %833 = arith.addf %832, %831 : vector<1x32xf32>
    %834 = arith.divf %832, %833 : vector<1x32xf32>
    %835 = vector.extract_strided_slice %816 {offsets = [0, 96], sizes = [1, 32], strides = [1, 1]} : vector<1x128xf32> to vector<1x32xf32>
    %836 = math.tanh %835 : vector<1x32xf32>
    %837 = arith.mulf %822, %836 : vector<1x32xf32>
    %838 = arith.mulf %834, %809 : vector<1x32xf32>
    %839 = arith.addf %837, %838 : vector<1x32xf32>
    %840 = math.tanh %839 : vector<1x32xf32>
    %841 = arith.mulf %828, %840 : vector<1x32xf32>
    %842 = arith.index_cast %791 : i32 to index
    %c0_312 = arith.constant 0 : index
    %843 = vector.load %arg15[%842, %c0_312] : memref<7x32xf32, #tpu.memory_space<vmem>>, vector<1x32xf32>
    tpu.vector_store %arg15[%842, %c0_312], %839 {strides = array<i32>} : memref<7x32xf32, #tpu.memory_space<vmem>>, vector<1x32xf32>,
    %844 = arith.index_cast %791 : i32 to index
    %c0_313 = arith.constant 0 : index
    %845 = vector.load %arg14[%844, %c0_313] : memref<7x32xf32, #tpu.memory_space<vmem>>, vector<1x32xf32>
    tpu.vector_store %arg14[%844, %c0_313], %841 {strides = array<i32>} : memref<7x32xf32, #tpu.memory_space<vmem>>, vector<1x32xf32>,
    %c7_i32_314 = arith.constant 7 : i32
    %846 = arith.muli %arg0, %c7_i32_314 : i32
    %c3_i32_315 = arith.constant 3 : i32
    %847 = arith.addi %846, %c3_i32_315 : i32
    %c3_i32_316 = arith.constant 3 : i32
    %848 = arith.muli %847, %c3_i32_316 : i32
    %c0_i32_317 = arith.constant 0 : i32
    %849 = arith.addi %848, %c0_i32_317 : i32
    %850 = arith.index_cast %849 : i32 to index
    %851 = memref.load %arg2[%850] : memref<42xi32, #tpu.memory_space<smem>>
    %c1_i32_318 = arith.constant 1 : i32
    %852 = arith.addi %848, %c1_i32_318 : i32
    %853 = arith.index_cast %852 : i32 to index
    %854 = memref.load %arg2[%853] : memref<42xi32, #tpu.memory_space<smem>>
    %c2_i32_319 = arith.constant 2 : i32
    %855 = arith.addi %848, %c2_i32_319 : i32
    %856 = arith.index_cast %855 : i32 to index
    %857 = memref.load %arg2[%856] : memref<42xi32, #tpu.memory_space<smem>>
    %858 = arith.sitofp %857 : i32 to f32
    %c0_320 = arith.constant 0 : index
    %859 = arith.index_cast %851 : i32 to index
    %c0_321 = arith.constant 0 : index
    %860 = vector.load %arg3[%c0_320, %859, %c0_321] : memref<1x7x64xf32, #tpu.memory_space<vmem>>, vector<1x1x64xf32>
    %861 = vector.shape_cast %860 : vector<1x1x64xf32> to vector<1x64xf32>
    %862 = arith.index_cast %854 : i32 to index
    %c0_322 = arith.constant 0 : index
    %863 = vector.load %arg14[%862, %c0_322] : memref<7x32xf32, #tpu.memory_space<vmem>>, vector<1x32xf32>
    %864 = vector.broadcast %858 : f32 to vector<1x32xf32>
    %865 = arith.mulf %863, %864 : vector<1x32xf32>
    %866 = arith.index_cast %854 : i32 to index
    %c0_323 = arith.constant 0 : index
    %867 = vector.load %arg15[%866, %c0_323] : memref<7x32xf32, #tpu.memory_space<vmem>>, vector<1x32xf32>
    %868 = vector.broadcast %858 : f32 to vector<1x32xf32>
    %869 = arith.mulf %867, %868 : vector<1x32xf32>
    %c0_324 = arith.constant 0 : index
    %c0_325 = arith.constant 0 : index
    %870 = vector.load %arg8[%c0_324, %c0_325] : memref<64x128xf32, #tpu.memory_space<vmem>>, vector<64x128xf32>
    %cst_326 = arith.constant dense<0.000000e+00> : vector<1x128xf32>
    %871 = tpu.matmul %861, %870, %cst_326 {dimension_numbers = #tpu.dot_dimension_numbers<[1], [0], [0], [1], [0, 0, 1, 1], [], []>} : vector<1x64xf32>, vector<64x128xf32>, vector<1x128xf32> -> vector<1x128xf32>
    %c0_327 = arith.constant 0 : index
    %c0_328 = arith.constant 0 : index
    %872 = vector.load %arg9[%c0_327, %c0_328] : memref<32x128xf32, #tpu.memory_space<vmem>>, vector<32x128xf32>
    %cst_329 = arith.constant dense<0.000000e+00> : vector<1x128xf32>
    %873 = tpu.matmul %865, %872, %cst_329 {dimension_numbers = #tpu.dot_dimension_numbers<[1], [0], [0], [1], [0, 0, 1, 1], [], []>} : vector<1x32xf32>, vector<32x128xf32>, vector<1x128xf32> -> vector<1x128xf32>
    %874 = arith.addf %871, %873 : vector<1x128xf32>
    %c0_330 = arith.constant 0 : index
    %c0_331 = arith.constant 0 : index
    %875 = vector.load %arg10[%c0_330, %c0_331] : memref<1x128xf32, #tpu.memory_space<vmem>>, vector<1x128xf32>
    %876 = arith.addf %874, %875 : vector<1x128xf32>
    %877 = vector.extract_strided_slice %876 {offsets = [0, 0], sizes = [1, 32], strides = [1, 1]} : vector<1x128xf32> to vector<1x32xf32>
    %878 = arith.negf %877 : vector<1x32xf32>
    %879 = math.exp %878 : vector<1x32xf32>
    %cst_332 = arith.constant 1.000000e+00 : f32
    %880 = vector.broadcast %cst_332 : f32 to vector<1x32xf32>
    %881 = arith.addf %880, %879 : vector<1x32xf32>
    %882 = arith.divf %880, %881 : vector<1x32xf32>
    %883 = vector.extract_strided_slice %876 {offsets = [0, 32], sizes = [1, 32], strides = [1, 1]} : vector<1x128xf32> to vector<1x32xf32>
    %884 = arith.negf %883 : vector<1x32xf32>
    %885 = math.exp %884 : vector<1x32xf32>
    %cst_333 = arith.constant 1.000000e+00 : f32
    %886 = vector.broadcast %cst_333 : f32 to vector<1x32xf32>
    %887 = arith.addf %886, %885 : vector<1x32xf32>
    %888 = arith.divf %886, %887 : vector<1x32xf32>
    %889 = vector.extract_strided_slice %876 {offsets = [0, 64], sizes = [1, 32], strides = [1, 1]} : vector<1x128xf32> to vector<1x32xf32>
    %890 = arith.negf %889 : vector<1x32xf32>
    %891 = math.exp %890 : vector<1x32xf32>
    %cst_334 = arith.constant 1.000000e+00 : f32
    %892 = vector.broadcast %cst_334 : f32 to vector<1x32xf32>
    %893 = arith.addf %892, %891 : vector<1x32xf32>
    %894 = arith.divf %892, %893 : vector<1x32xf32>
    %895 = vector.extract_strided_slice %876 {offsets = [0, 96], sizes = [1, 32], strides = [1, 1]} : vector<1x128xf32> to vector<1x32xf32>
    %896 = math.tanh %895 : vector<1x32xf32>
    %897 = arith.mulf %882, %896 : vector<1x32xf32>
    %898 = arith.mulf %894, %869 : vector<1x32xf32>
    %899 = arith.addf %897, %898 : vector<1x32xf32>
    %900 = math.tanh %899 : vector<1x32xf32>
    %901 = arith.mulf %888, %900 : vector<1x32xf32>
    %902 = arith.index_cast %851 : i32 to index
    %c0_335 = arith.constant 0 : index
    %903 = vector.load %arg15[%902, %c0_335] : memref<7x32xf32, #tpu.memory_space<vmem>>, vector<1x32xf32>
    tpu.vector_store %arg15[%902, %c0_335], %899 {strides = array<i32>} : memref<7x32xf32, #tpu.memory_space<vmem>>, vector<1x32xf32>,
    %904 = arith.index_cast %851 : i32 to index
    %c0_336 = arith.constant 0 : index
    %905 = vector.load %arg14[%904, %c0_336] : memref<7x32xf32, #tpu.memory_space<vmem>>, vector<1x32xf32>
    tpu.vector_store %arg14[%904, %c0_336], %901 {strides = array<i32>} : memref<7x32xf32, #tpu.memory_space<vmem>>, vector<1x32xf32>,
    %c7_i32_337 = arith.constant 7 : i32
    %906 = arith.muli %arg0, %c7_i32_337 : i32
    %c4_i32_338 = arith.constant 4 : i32
    %907 = arith.addi %906, %c4_i32_338 : i32
    %c3_i32_339 = arith.constant 3 : i32
    %908 = arith.muli %907, %c3_i32_339 : i32
    %c0_i32_340 = arith.constant 0 : i32
    %909 = arith.addi %908, %c0_i32_340 : i32
    %910 = arith.index_cast %909 : i32 to index
    %911 = memref.load %arg2[%910] : memref<42xi32, #tpu.memory_space<smem>>
    %c1_i32_341 = arith.constant 1 : i32
    %912 = arith.addi %908, %c1_i32_341 : i32
    %913 = arith.index_cast %912 : i32 to index
    %914 = memref.load %arg2[%913] : memref<42xi32, #tpu.memory_space<smem>>
    %c2_i32_342 = arith.constant 2 : i32
    %915 = arith.addi %908, %c2_i32_342 : i32
    %916 = arith.index_cast %915 : i32 to index
    %917 = memref.load %arg2[%916] : memref<42xi32, #tpu.memory_space<smem>>
    %918 = arith.sitofp %917 : i32 to f32
    %c0_343 = arith.constant 0 : index
    %919 = arith.index_cast %911 : i32 to index
    %c0_344 = arith.constant 0 : index
    %920 = vector.load %arg3[%c0_343, %919, %c0_344] : memref<1x7x64xf32, #tpu.memory_space<vmem>>, vector<1x1x64xf32>
    %921 = vector.shape_cast %920 : vector<1x1x64xf32> to vector<1x64xf32>
    %922 = arith.index_cast %914 : i32 to index
    %c0_345 = arith.constant 0 : index
    %923 = vector.load %arg14[%922, %c0_345] : memref<7x32xf32, #tpu.memory_space<vmem>>, vector<1x32xf32>
    %924 = vector.broadcast %918 : f32 to vector<1x32xf32>
    %925 = arith.mulf %923, %924 : vector<1x32xf32>
    %926 = arith.index_cast %914 : i32 to index
    %c0_346 = arith.constant 0 : index
    %927 = vector.load %arg15[%926, %c0_346] : memref<7x32xf32, #tpu.memory_space<vmem>>, vector<1x32xf32>
    %928 = vector.broadcast %918 : f32 to vector<1x32xf32>
    %929 = arith.mulf %927, %928 : vector<1x32xf32>
    %c0_347 = arith.constant 0 : index
    %c0_348 = arith.constant 0 : index
    %930 = vector.load %arg8[%c0_347, %c0_348] : memref<64x128xf32, #tpu.memory_space<vmem>>, vector<64x128xf32>
    %cst_349 = arith.constant dense<0.000000e+00> : vector<1x128xf32>
    %931 = tpu.matmul %921, %930, %cst_349 {dimension_numbers = #tpu.dot_dimension_numbers<[1], [0], [0], [1], [0, 0, 1, 1], [], []>} : vector<1x64xf32>, vector<64x128xf32>, vector<1x128xf32> -> vector<1x128xf32>
    %c0_350 = arith.constant 0 : index
    %c0_351 = arith.constant 0 : index
    %932 = vector.load %arg9[%c0_350, %c0_351] : memref<32x128xf32, #tpu.memory_space<vmem>>, vector<32x128xf32>
    %cst_352 = arith.constant dense<0.000000e+00> : vector<1x128xf32>
    %933 = tpu.matmul %925, %932, %cst_352 {dimension_numbers = #tpu.dot_dimension_numbers<[1], [0], [0], [1], [0, 0, 1, 1], [], []>} : vector<1x32xf32>, vector<32x128xf32>, vector<1x128xf32> -> vector<1x128xf32>
    %934 = arith.addf %931, %933 : vector<1x128xf32>
    %c0_353 = arith.constant 0 : index
    %c0_354 = arith.constant 0 : index
    %935 = vector.load %arg10[%c0_353, %c0_354] : memref<1x128xf32, #tpu.memory_space<vmem>>, vector<1x128xf32>
    %936 = arith.addf %934, %935 : vector<1x128xf32>
    %937 = vector.extract_strided_slice %936 {offsets = [0, 0], sizes = [1, 32], strides = [1, 1]} : vector<1x128xf32> to vector<1x32xf32>
    %938 = arith.negf %937 : vector<1x32xf32>
    %939 = math.exp %938 : vector<1x32xf32>
    %cst_355 = arith.constant 1.000000e+00 : f32
    %940 = vector.broadcast %cst_355 : f32 to vector<1x32xf32>
    %941 = arith.addf %940, %939 : vector<1x32xf32>
    %942 = arith.divf %940, %941 : vector<1x32xf32>
    %943 = vector.extract_strided_slice %936 {offsets = [0, 32], sizes = [1, 32], strides = [1, 1]} : vector<1x128xf32> to vector<1x32xf32>
    %944 = arith.negf %943 : vector<1x32xf32>
    %945 = math.exp %944 : vector<1x32xf32>
    %cst_356 = arith.constant 1.000000e+00 : f32
    %946 = vector.broadcast %cst_356 : f32 to vector<1x32xf32>
    %947 = arith.addf %946, %945 : vector<1x32xf32>
    %948 = arith.divf %946, %947 : vector<1x32xf32>
    %949 = vector.extract_strided_slice %936 {offsets = [0, 64], sizes = [1, 32], strides = [1, 1]} : vector<1x128xf32> to vector<1x32xf32>
    %950 = arith.negf %949 : vector<1x32xf32>
    %951 = math.exp %950 : vector<1x32xf32>
    %cst_357 = arith.constant 1.000000e+00 : f32
    %952 = vector.broadcast %cst_357 : f32 to vector<1x32xf32>
    %953 = arith.addf %952, %951 : vector<1x32xf32>
    %954 = arith.divf %952, %953 : vector<1x32xf32>
    %955 = vector.extract_strided_slice %936 {offsets = [0, 96], sizes = [1, 32], strides = [1, 1]} : vector<1x128xf32> to vector<1x32xf32>
    %956 = math.tanh %955 : vector<1x32xf32>
    %957 = arith.mulf %942, %956 : vector<1x32xf32>
    %958 = arith.mulf %954, %929 : vector<1x32xf32>
    %959 = arith.addf %957, %958 : vector<1x32xf32>
    %960 = math.tanh %959 : vector<1x32xf32>
    %961 = arith.mulf %948, %960 : vector<1x32xf32>
    %962 = arith.index_cast %911 : i32 to index
    %c0_358 = arith.constant 0 : index
    %963 = vector.load %arg15[%962, %c0_358] : memref<7x32xf32, #tpu.memory_space<vmem>>, vector<1x32xf32>
    tpu.vector_store %arg15[%962, %c0_358], %959 {strides = array<i32>} : memref<7x32xf32, #tpu.memory_space<vmem>>, vector<1x32xf32>,
    %964 = arith.index_cast %911 : i32 to index
    %c0_359 = arith.constant 0 : index
    %965 = vector.load %arg14[%964, %c0_359] : memref<7x32xf32, #tpu.memory_space<vmem>>, vector<1x32xf32>
    tpu.vector_store %arg14[%964, %c0_359], %961 {strides = array<i32>} : memref<7x32xf32, #tpu.memory_space<vmem>>, vector<1x32xf32>,
    %c7_i32_360 = arith.constant 7 : i32
    %966 = arith.muli %arg0, %c7_i32_360 : i32
    %c5_i32_361 = arith.constant 5 : i32
    %967 = arith.addi %966, %c5_i32_361 : i32
    %c3_i32_362 = arith.constant 3 : i32
    %968 = arith.muli %967, %c3_i32_362 : i32
    %c0_i32_363 = arith.constant 0 : i32
    %969 = arith.addi %968, %c0_i32_363 : i32
    %970 = arith.index_cast %969 : i32 to index
    %971 = memref.load %arg2[%970] : memref<42xi32, #tpu.memory_space<smem>>
    %c1_i32_364 = arith.constant 1 : i32
    %972 = arith.addi %968, %c1_i32_364 : i32
    %973 = arith.index_cast %972 : i32 to index
    %974 = memref.load %arg2[%973] : memref<42xi32, #tpu.memory_space<smem>>
    %c2_i32_365 = arith.constant 2 : i32
    %975 = arith.addi %968, %c2_i32_365 : i32
    %976 = arith.index_cast %975 : i32 to index
    %977 = memref.load %arg2[%976] : memref<42xi32, #tpu.memory_space<smem>>
    %978 = arith.sitofp %977 : i32 to f32
    %c0_366 = arith.constant 0 : index
    %979 = arith.index_cast %971 : i32 to index
    %c0_367 = arith.constant 0 : index
    %980 = vector.load %arg3[%c0_366, %979, %c0_367] : memref<1x7x64xf32, #tpu.memory_space<vmem>>, vector<1x1x64xf32>
    %981 = vector.shape_cast %980 : vector<1x1x64xf32> to vector<1x64xf32>
    %982 = arith.index_cast %974 : i32 to index
    %c0_368 = arith.constant 0 : index
    %983 = vector.load %arg14[%982, %c0_368] : memref<7x32xf32, #tpu.memory_space<vmem>>, vector<1x32xf32>
    %984 = vector.broadcast %978 : f32 to vector<1x32xf32>
    %985 = arith.mulf %983, %984 : vector<1x32xf32>
    %986 = arith.index_cast %974 : i32 to index
    %c0_369 = arith.constant 0 : index
    %987 = vector.load %arg15[%986, %c0_369] : memref<7x32xf32, #tpu.memory_space<vmem>>, vector<1x32xf32>
    %988 = vector.broadcast %978 : f32 to vector<1x32xf32>
    %989 = arith.mulf %987, %988 : vector<1x32xf32>
    %c0_370 = arith.constant 0 : index
    %c0_371 = arith.constant 0 : index
    %990 = vector.load %arg8[%c0_370, %c0_371] : memref<64x128xf32, #tpu.memory_space<vmem>>, vector<64x128xf32>
    %cst_372 = arith.constant dense<0.000000e+00> : vector<1x128xf32>
    %991 = tpu.matmul %981, %990, %cst_372 {dimension_numbers = #tpu.dot_dimension_numbers<[1], [0], [0], [1], [0, 0, 1, 1], [], []>} : vector<1x64xf32>, vector<64x128xf32>, vector<1x128xf32> -> vector<1x128xf32>
    %c0_373 = arith.constant 0 : index
    %c0_374 = arith.constant 0 : index
    %992 = vector.load %arg9[%c0_373, %c0_374] : memref<32x128xf32, #tpu.memory_space<vmem>>, vector<32x128xf32>
    %cst_375 = arith.constant dense<0.000000e+00> : vector<1x128xf32>
    %993 = tpu.matmul %985, %992, %cst_375 {dimension_numbers = #tpu.dot_dimension_numbers<[1], [0], [0], [1], [0, 0, 1, 1], [], []>} : vector<1x32xf32>, vector<32x128xf32>, vector<1x128xf32> -> vector<1x128xf32>
    %994 = arith.addf %991, %993 : vector<1x128xf32>
    %c0_376 = arith.constant 0 : index
    %c0_377 = arith.constant 0 : index
    %995 = vector.load %arg10[%c0_376, %c0_377] : memref<1x128xf32, #tpu.memory_space<vmem>>, vector<1x128xf32>
    %996 = arith.addf %994, %995 : vector<1x128xf32>
    %997 = vector.extract_strided_slice %996 {offsets = [0, 0], sizes = [1, 32], strides = [1, 1]} : vector<1x128xf32> to vector<1x32xf32>
    %998 = arith.negf %997 : vector<1x32xf32>
    %999 = math.exp %998 : vector<1x32xf32>
    %cst_378 = arith.constant 1.000000e+00 : f32
    %1000 = vector.broadcast %cst_378 : f32 to vector<1x32xf32>
    %1001 = arith.addf %1000, %999 : vector<1x32xf32>
    %1002 = arith.divf %1000, %1001 : vector<1x32xf32>
    %1003 = vector.extract_strided_slice %996 {offsets = [0, 32], sizes = [1, 32], strides = [1, 1]} : vector<1x128xf32> to vector<1x32xf32>
    %1004 = arith.negf %1003 : vector<1x32xf32>
    %1005 = math.exp %1004 : vector<1x32xf32>
    %cst_379 = arith.constant 1.000000e+00 : f32
    %1006 = vector.broadcast %cst_379 : f32 to vector<1x32xf32>
    %1007 = arith.addf %1006, %1005 : vector<1x32xf32>
    %1008 = arith.divf %1006, %1007 : vector<1x32xf32>
    %1009 = vector.extract_strided_slice %996 {offsets = [0, 64], sizes = [1, 32], strides = [1, 1]} : vector<1x128xf32> to vector<1x32xf32>
    %1010 = arith.negf %1009 : vector<1x32xf32>
    %1011 = math.exp %1010 : vector<1x32xf32>
    %cst_380 = arith.constant 1.000000e+00 : f32
    %1012 = vector.broadcast %cst_380 : f32 to vector<1x32xf32>
    %1013 = arith.addf %1012, %1011 : vector<1x32xf32>
    %1014 = arith.divf %1012, %1013 : vector<1x32xf32>
    %1015 = vector.extract_strided_slice %996 {offsets = [0, 96], sizes = [1, 32], strides = [1, 1]} : vector<1x128xf32> to vector<1x32xf32>
    %1016 = math.tanh %1015 : vector<1x32xf32>
    %1017 = arith.mulf %1002, %1016 : vector<1x32xf32>
    %1018 = arith.mulf %1014, %989 : vector<1x32xf32>
    %1019 = arith.addf %1017, %1018 : vector<1x32xf32>
    %1020 = math.tanh %1019 : vector<1x32xf32>
    %1021 = arith.mulf %1008, %1020 : vector<1x32xf32>
    %1022 = arith.index_cast %971 : i32 to index
    %c0_381 = arith.constant 0 : index
    %1023 = vector.load %arg15[%1022, %c0_381] : memref<7x32xf32, #tpu.memory_space<vmem>>, vector<1x32xf32>
    tpu.vector_store %arg15[%1022, %c0_381], %1019 {strides = array<i32>} : memref<7x32xf32, #tpu.memory_space<vmem>>, vector<1x32xf32>,
    %1024 = arith.index_cast %971 : i32 to index
    %c0_382 = arith.constant 0 : index
    %1025 = vector.load %arg14[%1024, %c0_382] : memref<7x32xf32, #tpu.memory_space<vmem>>, vector<1x32xf32>
    tpu.vector_store %arg14[%1024, %c0_382], %1021 {strides = array<i32>} : memref<7x32xf32, #tpu.memory_space<vmem>>, vector<1x32xf32>,
    %c7_i32_383 = arith.constant 7 : i32
    %1026 = arith.muli %arg0, %c7_i32_383 : i32
    %c6_i32_384 = arith.constant 6 : i32
    %1027 = arith.addi %1026, %c6_i32_384 : i32
    %c3_i32_385 = arith.constant 3 : i32
    %1028 = arith.muli %1027, %c3_i32_385 : i32
    %c0_i32_386 = arith.constant 0 : i32
    %1029 = arith.addi %1028, %c0_i32_386 : i32
    %1030 = arith.index_cast %1029 : i32 to index
    %1031 = memref.load %arg2[%1030] : memref<42xi32, #tpu.memory_space<smem>>
    %c1_i32_387 = arith.constant 1 : i32
    %1032 = arith.addi %1028, %c1_i32_387 : i32
    %1033 = arith.index_cast %1032 : i32 to index
    %1034 = memref.load %arg2[%1033] : memref<42xi32, #tpu.memory_space<smem>>
    %c2_i32_388 = arith.constant 2 : i32
    %1035 = arith.addi %1028, %c2_i32_388 : i32
    %1036 = arith.index_cast %1035 : i32 to index
    %1037 = memref.load %arg2[%1036] : memref<42xi32, #tpu.memory_space<smem>>
    %1038 = arith.sitofp %1037 : i32 to f32
    %c0_389 = arith.constant 0 : index
    %1039 = arith.index_cast %1031 : i32 to index
    %c0_390 = arith.constant 0 : index
    %1040 = vector.load %arg3[%c0_389, %1039, %c0_390] : memref<1x7x64xf32, #tpu.memory_space<vmem>>, vector<1x1x64xf32>
    %1041 = vector.shape_cast %1040 : vector<1x1x64xf32> to vector<1x64xf32>
    %1042 = arith.index_cast %1034 : i32 to index
    %c0_391 = arith.constant 0 : index
    %1043 = vector.load %arg14[%1042, %c0_391] : memref<7x32xf32, #tpu.memory_space<vmem>>, vector<1x32xf32>
    %1044 = vector.broadcast %1038 : f32 to vector<1x32xf32>
    %1045 = arith.mulf %1043, %1044 : vector<1x32xf32>
    %1046 = arith.index_cast %1034 : i32 to index
    %c0_392 = arith.constant 0 : index
    %1047 = vector.load %arg15[%1046, %c0_392] : memref<7x32xf32, #tpu.memory_space<vmem>>, vector<1x32xf32>
    %1048 = vector.broadcast %1038 : f32 to vector<1x32xf32>
    %1049 = arith.mulf %1047, %1048 : vector<1x32xf32>
    %c0_393 = arith.constant 0 : index
    %c0_394 = arith.constant 0 : index
    %1050 = vector.load %arg8[%c0_393, %c0_394] : memref<64x128xf32, #tpu.memory_space<vmem>>, vector<64x128xf32>
    %cst_395 = arith.constant dense<0.000000e+00> : vector<1x128xf32>
    %1051 = tpu.matmul %1041, %1050, %cst_395 {dimension_numbers = #tpu.dot_dimension_numbers<[1], [0], [0], [1], [0, 0, 1, 1], [], []>} : vector<1x64xf32>, vector<64x128xf32>, vector<1x128xf32> -> vector<1x128xf32>
    %c0_396 = arith.constant 0 : index
    %c0_397 = arith.constant 0 : index
    %1052 = vector.load %arg9[%c0_396, %c0_397] : memref<32x128xf32, #tpu.memory_space<vmem>>, vector<32x128xf32>
    %cst_398 = arith.constant dense<0.000000e+00> : vector<1x128xf32>
    %1053 = tpu.matmul %1045, %1052, %cst_398 {dimension_numbers = #tpu.dot_dimension_numbers<[1], [0], [0], [1], [0, 0, 1, 1], [], []>} : vector<1x32xf32>, vector<32x128xf32>, vector<1x128xf32> -> vector<1x128xf32>
    %1054 = arith.addf %1051, %1053 : vector<1x128xf32>
    %c0_399 = arith.constant 0 : index
    %c0_400 = arith.constant 0 : index
    %1055 = vector.load %arg10[%c0_399, %c0_400] : memref<1x128xf32, #tpu.memory_space<vmem>>, vector<1x128xf32>
    %1056 = arith.addf %1054, %1055 : vector<1x128xf32>
    %1057 = vector.extract_strided_slice %1056 {offsets = [0, 0], sizes = [1, 32], strides = [1, 1]} : vector<1x128xf32> to vector<1x32xf32>
    %1058 = arith.negf %1057 : vector<1x32xf32>
    %1059 = math.exp %1058 : vector<1x32xf32>
    %cst_401 = arith.constant 1.000000e+00 : f32
    %1060 = vector.broadcast %cst_401 : f32 to vector<1x32xf32>
    %1061 = arith.addf %1060, %1059 : vector<1x32xf32>
    %1062 = arith.divf %1060, %1061 : vector<1x32xf32>
    %1063 = vector.extract_strided_slice %1056 {offsets = [0, 32], sizes = [1, 32], strides = [1, 1]} : vector<1x128xf32> to vector<1x32xf32>
    %1064 = arith.negf %1063 : vector<1x32xf32>
    %1065 = math.exp %1064 : vector<1x32xf32>
    %cst_402 = arith.constant 1.000000e+00 : f32
    %1066 = vector.broadcast %cst_402 : f32 to vector<1x32xf32>
    %1067 = arith.addf %1066, %1065 : vector<1x32xf32>
    %1068 = arith.divf %1066, %1067 : vector<1x32xf32>
    %1069 = vector.extract_strided_slice %1056 {offsets = [0, 64], sizes = [1, 32], strides = [1, 1]} : vector<1x128xf32> to vector<1x32xf32>
    %1070 = arith.negf %1069 : vector<1x32xf32>
    %1071 = math.exp %1070 : vector<1x32xf32>
    %cst_403 = arith.constant 1.000000e+00 : f32
    %1072 = vector.broadcast %cst_403 : f32 to vector<1x32xf32>
    %1073 = arith.addf %1072, %1071 : vector<1x32xf32>
    %1074 = arith.divf %1072, %1073 : vector<1x32xf32>
    %1075 = vector.extract_strided_slice %1056 {offsets = [0, 96], sizes = [1, 32], strides = [1, 1]} : vector<1x128xf32> to vector<1x32xf32>
    %1076 = math.tanh %1075 : vector<1x32xf32>
    %1077 = arith.mulf %1062, %1076 : vector<1x32xf32>
    %1078 = arith.mulf %1074, %1049 : vector<1x32xf32>
    %1079 = arith.addf %1077, %1078 : vector<1x32xf32>
    %1080 = math.tanh %1079 : vector<1x32xf32>
    %1081 = arith.mulf %1068, %1080 : vector<1x32xf32>
    %1082 = arith.index_cast %1031 : i32 to index
    %c0_404 = arith.constant 0 : index
    %1083 = vector.load %arg15[%1082, %c0_404] : memref<7x32xf32, #tpu.memory_space<vmem>>, vector<1x32xf32>
    tpu.vector_store %arg15[%1082, %c0_404], %1079 {strides = array<i32>} : memref<7x32xf32, #tpu.memory_space<vmem>>, vector<1x32xf32>,
    %1084 = arith.index_cast %1031 : i32 to index
    %c0_405 = arith.constant 0 : index
    %1085 = vector.load %arg14[%1084, %c0_405] : memref<7x32xf32, #tpu.memory_space<vmem>>, vector<1x32xf32>
    tpu.vector_store %arg14[%1084, %c0_405], %1081 {strides = array<i32>} : memref<7x32xf32, #tpu.memory_space<vmem>>, vector<1x32xf32>,
    %c0_406 = arith.constant 0 : index
    %c0_407 = arith.constant 0 : index
    %1086 = vector.load %arg12[%c0_406, %c0_407] : memref<7x32xf32, #tpu.memory_space<vmem>>, vector<7x32xf32>
    %c0_408 = arith.constant 0 : index
    %c0_409 = arith.constant 0 : index
    %c0_410 = arith.constant 0 : index
    %1087 = vector.load %arg11[%c0_408, %c0_409, %c0_410] : memref<1x7x64xf32, #tpu.memory_space<vmem>>, vector<1x7x32xf32>
    %1088 = vector.shape_cast %1087 : vector<1x7x32xf32> to vector<7x32xf32>
    %1089 = vector.shape_cast %1086 : vector<7x32xf32> to vector<1x7x32xf32>
    tpu.vector_store %arg11[%c0_408, %c0_409, %c0_410], %1089 {strides = array<i32>} : memref<1x7x64xf32, #tpu.memory_space<vmem>>, vector<1x7x32xf32>,
    %c0_411 = arith.constant 0 : index
    %c0_412 = arith.constant 0 : index
    %1090 = vector.load %arg14[%c0_411, %c0_412] : memref<7x32xf32, #tpu.memory_space<vmem>>, vector<7x32xf32>
    %c0_413 = arith.constant 0 : index
    %c0_414 = arith.constant 0 : index
    %c32 = arith.constant 32 : index
    %1091 = vector.load %arg11[%c0_413, %c0_414, %c32] : memref<1x7x64xf32, #tpu.memory_space<vmem>>, vector<1x7x32xf32>
    %1092 = vector.shape_cast %1091 : vector<1x7x32xf32> to vector<7x32xf32>
    %1093 = vector.shape_cast %1090 : vector<7x32xf32> to vector<1x7x32xf32>
    tpu.vector_store %arg11[%c0_413, %c0_414, %c32], %1093 {strides = array<i32>} : memref<1x7x64xf32, #tpu.memory_space<vmem>>, vector<1x7x32xf32>,
    return
  }
  func.func @transform_0(%arg0: i32, %arg1: memref<70xi32, #tpu.memory_space<smem>>, %arg2: memref<42xi32, #tpu.memory_space<smem>>) -> (i32, i32, i32) {
    %c0_i32 = arith.constant 0 : i32
    %c0_i32_0 = arith.constant 0 : i32
    %c0_i32_1 = arith.constant 0 : i32
    return %arg0, %c0_i32, %c0_i32_0 : i32, i32, i32
  }
  func.func @transform_1(%arg0: i32, %arg1: memref<70xi32, #tpu.memory_space<smem>>, %arg2: memref<42xi32, #tpu.memory_space<smem>>) -> (i32, i32) {
    %c0_i32 = arith.constant 0 : i32
    %c0_i32_0 = arith.constant 0 : i32
    %c0_i32_1 = arith.constant 0 : i32
    return %c0_i32, %c0_i32_0 : i32, i32
  }
  func.func @transform_2(%arg0: i32, %arg1: memref<70xi32, #tpu.memory_space<smem>>, %arg2: memref<42xi32, #tpu.memory_space<smem>>) -> (i32, i32) {
    %c0_i32 = arith.constant 0 : i32
    %c0_i32_0 = arith.constant 0 : i32
    %c0_i32_1 = arith.constant 0 : i32
    return %c0_i32, %c0_i32_0 : i32, i32
  }
  func.func @transform_3(%arg0: i32, %arg1: memref<70xi32, #tpu.memory_space<smem>>, %arg2: memref<42xi32, #tpu.memory_space<smem>>) -> (i32, i32) {
    %c0_i32 = arith.constant 0 : i32
    %c0_i32_0 = arith.constant 0 : i32
    %c0_i32_1 = arith.constant 0 : i32
    return %c0_i32, %c0_i32_0 : i32, i32
  }
  func.func @transform_4(%arg0: i32, %arg1: memref<70xi32, #tpu.memory_space<smem>>, %arg2: memref<42xi32, #tpu.memory_space<smem>>) -> (i32, i32) {
    %c0_i32 = arith.constant 0 : i32
    %c0_i32_0 = arith.constant 0 : i32
    %c0_i32_1 = arith.constant 0 : i32
    return %c0_i32, %c0_i32_0 : i32, i32
  }
  func.func @transform_5(%arg0: i32, %arg1: memref<70xi32, #tpu.memory_space<smem>>, %arg2: memref<42xi32, #tpu.memory_space<smem>>) -> (i32, i32) {
    %c0_i32 = arith.constant 0 : i32
    %c0_i32_0 = arith.constant 0 : i32
    %c0_i32_1 = arith.constant 0 : i32
    return %c0_i32, %c0_i32_0 : i32, i32
  }
  func.func @transform_6(%arg0: i32, %arg1: memref<70xi32, #tpu.memory_space<smem>>, %arg2: memref<42xi32, #tpu.memory_space<smem>>) -> (i32, i32) {
    %c0_i32 = arith.constant 0 : i32
    %c0_i32_0 = arith.constant 0 : i32
    %c0_i32_1 = arith.constant 0 : i32
    return %c0_i32, %c0_i32_0 : i32, i32
  }
  func.func @transform_7(%arg0: i32, %arg1: memref<70xi32, #tpu.memory_space<smem>>, %arg2: memref<42xi32, #tpu.memory_space<smem>>) -> (i32, i32) {
    %c0_i32 = arith.constant 0 : i32
    %c0_i32_0 = arith.constant 0 : i32
    %c0_i32_1 = arith.constant 0 : i32
    return %c0_i32, %c0_i32_0 : i32, i32
  }
  func.func @transform_8(%arg0: i32, %arg1: memref<70xi32, #tpu.memory_space<smem>>, %arg2: memref<42xi32, #tpu.memory_space<smem>>) -> (i32, i32, i32) {
    %c0_i32 = arith.constant 0 : i32
    %c0_i32_0 = arith.constant 0 : i32
    %c0_i32_1 = arith.constant 0 : i32
    return %arg0, %c0_i32, %c0_i32_0 : i32, i32, i32
  }
}

</mosaic_0001>

<llo_original>
// kernel: tpu_custom_call.1
$region0: #{tpu_custom_call.1}
  #allocation0 [shape = 'u32[]', space=smem, size = 0x4, offset = 0x4, fixed_abs, tag = 'smem constant byte address 0x4 - core index']
  #allocation1 [shape = 'u32[144,128]{1,0:T(1,128)}', space=vmem, size = 0x12000, scoped, tag = 'internal scratch']
  #allocation2 [shape = 'f32[7,32]{1,0:T(8,128)}', space=vmem, size = 0x1000, scoped, tag = 'scratch operand']
  #allocation3 [shape = 'f32[7,32]{1,0:T(8,128)}', space=vmem, size = 0x1000, scoped, tag = 'scratch operand']
  #allocation4 [shape = 'f32[7,32]{1,0:T(8,128)}', space=vmem, size = 0x1000, scoped, tag = 'scratch operand']
  #allocation5 [shape = 'f32[7,32]{1,0:T(8,128)}', space=vmem, size = 0x1000, scoped, tag = 'scratch operand']
  #allocation6 [shape = 's32[1]{0}', space=sflag, size = 0x4, scoped, tag = 'scoped memory for tpu_custom_call.1']
  #allocation7 [shape = 'u8[512]{0}', space=smem, size = 0x200, scoped, tag = 'prefetched SMEM operand 0']
  #allocation8 [shape = 'u8[512]{0}', space=smem, size = 0x200, scoped, tag = 'prefetched SMEM operand 1']
  %s0 = inlined_call_operand.vmem [shape: s32[70], index: 0, kind: input, shape index: {}]
  %s1 = inlined_call_operand.vmem [shape: s32[42], index: 1, kind: input, shape index: {}]
  %s2 = inlined_call_operand.vmem [shape: f32[2,7,64], index: 2, kind: input, shape index: {}]
  %s3 = inlined_call_operand.hbm [shape: f32[64,160], index: 3, kind: input, shape index: {}]
  %s4 = inlined_call_operand.hbm [shape: f32[32,160], index: 4, kind: input, shape index: {}]
  %s5 = inlined_call_operand.hbm [shape: f32[32,160], index: 5, kind: input, shape index: {}]
  %s6 = inlined_call_operand.vmem [shape: f32[3,160], index: 6, kind: input, shape index: {}]
  %s7 = inlined_call_operand.hbm [shape: f32[64,128], index: 7, kind: input, shape index: {}]
  %s8 = inlined_call_operand.vmem [shape: f32[32,128], index: 8, kind: input, shape index: {}]
  %s9 = inlined_call_operand.vmem [shape: f32[1,128], index: 9, kind: input, shape index: {}]
  %s10 = inlined_call_operand.vmem [shape: f32[2,7,64], index: 10, kind: output, shape index: {}]
  %s11 = sld [smem:[#allocation0]]
  $region81: #{tpu_custom_call.1} parent=0
    _
  %s13 = ssub.s32 1, %s11
  %s14 = scalar_select 0, %s13, %s11
  %s15 = sshll.u32 %s0, 4
  %s16 = int_to_ptr.vmem [resolvable:$true] %s15
  %18 = dma.vmem_to_smem %s16, 16, [#allocation7], [#allocation6]
  %s19 = sshll.u32 %s1, 4
  %s20 = int_to_ptr.vmem [resolvable:$true] %s19
  %22 = dma.vmem_to_smem %s20, 16, [#allocation8], [#allocation6]
  %23 = dma.done [#allocation6], 32
  %24 = sfence
  $region1: #{tpu_custom_call.1} parent=0
    #allocation9 [shape = 'u8[65536]{0}', space=vmem, size = 0x10000, scoped, tag = 'input window, operand 3, single buffered']
    #allocation10 [shape = 's32[2]{0}', space=sflag, size = 0x8, scoped, tag = 'scoped memory for tpu_custom_call.1']
    #allocation11 [shape = 'u8[32768]{0}', space=vmem, size = 0x8000, scoped, tag = 'input window, operand 4, single buffered']
    #allocation12 [shape = 's32[1]{0}', space=sflag, size = 0x4, scoped, tag = 'scoped memory for tpu_custom_call.1']
    #allocation13 [shape = 'u8[32768]{0}', space=vmem, size = 0x8000, scoped, tag = 'input window, operand 5, single buffered']
    #allocation14 [shape = 'u8[32768]{0}', space=vmem, size = 0x8000, scoped, tag = 'input window, operand 7, single buffered']
    #allocation15 [shape = 's32[1]{0}', space=sflag, size = 0x4, scoped, tag = 'scoped memory for tpu_custom_call.1']
    %25 = vsyncpa [#allocation10], 0
    %26 = vsyncpa [#allocation12], 0
    %27 = vsyncpa [#allocation15], 0
    loop: start=0, step=1, limit=4
    $region2: #{tpu_custom_call.1} parent=1 // loop_pre_header
      _
    $region3: #{tpu_custom_call.1} parent=1 // loop_header
      %s29 = sphi 0, %s33
      %p30 = scmp.ge.s32.totalorder %s29, 4
      %s39 = sphi 0, %s41
      %s42 = sphi 0, %s39
      %s43 = sphi 0, %s42
      %s59 = sphi 0, %s43
      %s63 = sphi 0, %s63
      %s65 = sphi 0, %s63
      %s66 = sphi 0, %s65
      %s80 = sphi 0, %s66
      %s84 = sphi 0, %s84
      %s86 = sphi 0, %s84
      %s87 = sphi 0, %s86
      %s101 = sphi 0, %s87
      %s105 = sphi 0, %s105
      %s107 = sphi 0, %s105
      %s108 = sphi 0, %s107
      %s122 = sphi 0, %s108
      %s126 = sphi 0, %s126
      %s128 = sphi 0, %s126
      %s129 = sphi 0, %s128
      %s143 = sphi 0, %s129
      %s147 = sphi 0, %s147
      %s149 = sphi 0, %s147
      %s150 = sphi 0, %s149
      %s164 = sphi 0, %s150
      %s168 = sphi 0, %s168
      %s170 = sphi 0, %s168
      %s171 = sphi 0, %s170
      %s185 = sphi 0, %s171
      %s189 = sphi 0, %s189
      %s191 = sphi 0, %s189
      %s192 = sphi 0, %s191
      %s206 = sphi 0, %s192
      %s212 = sphi 0, %s214
      %s215 = sphi 0, %s212
      %s216 = sphi 0, %s215
      %s232 = sphi 0, %s216
    $region4: #{tpu_custom_call.1} parent=1 // loop_header_branch
      %32 = sbr.rel (%p30) target = $region8
    $region5: #{tpu_custom_call.1} parent=1 // loop_body
      %s34 = ssub.s32 %s29, 1
      %s35 = ssub.s32 %s29, 2
      %s36 = sadd.s32 %s29, 1
      %s37 = ssub.s32 %s29, %s36
      %p38 = scmp.eq.s32.totalorder %s37, 0
      %s40 = sadd.s32 %s39, 1
      %s41 = scalar_select %p38, %s39, %s40
      %p44 = pneg %p38
      %p45 = scmp.eq.s32.totalorder %s29, 1
      %p46 = por %p44, %p45
      %p47 = scmp.ne.s32.totalorder %s39, %s42
      %p48 = scmp.eq.s32.totalorder %s29, 0
      %p49 = por %p47, %p48
      %p50 = scmp.ne.s32.totalorder %s39, %s42
      %p51 = scmp.eq.s32.totalorder %s34, 1
      %p52 = por %p50, %p51
      %p53 = scmp.ne.s32.totalorder %s42, %s43
      %p54 = scmp.eq.s32.totalorder %s34, 0
      %p55 = por %p53, %p54
      %p56 = scmp.ne.s32.totalorder %s42, %s43
      %p57 = scmp.eq.s32.totalorder %s35, 1
      %p58 = por %p56, %p57
      %p60 = scmp.ne.s32.totalorder %s43, %s59
      %p61 = scmp.eq.s32.totalorder %s35, 0
      %p62 = por %p60, %p61
      %s64 = sadd.s32 %s63, 1
      %p67 = scmp.eq.s32.totalorder %s29, 1
      %p68 = scmp.ne.s32.totalorder %s63, %s65
      %p69 = scmp.eq.s32.totalorder %s29, 0
      %p70 = por %p68, %p69
      %p71 = scmp.ne.s32.totalorder %s63, %s65
      %p72 = scmp.eq.s32.totalorder %s34, 1
      %p73 = por %p71, %p72
      %p74 = scmp.ne.s32.totalorder %s65, %s66
      %p75 = scmp.eq.s32.totalorder %s34, 0
      %p76 = por %p74, %p75
      %p77 = scmp.ne.s32.totalorder %s65, %s66
      %p78 = scmp.eq.s32.totalorder %s35, 1
      %p79 = por %p77, %p78
      %p81 = scmp.ne.s32.totalorder %s66, %s80
      %p82 = scmp.eq.s32.totalorder %s35, 0
      %p83 = por %p81, %p82
      %s85 = sadd.s32 %s84, 1
      %p88 = scmp.eq.s32.totalorder %s29, 1
      %p89 = scmp.ne.s32.totalorder %s84, %s86
      %p90 = scmp.eq.s32.totalorder %s29, 0
      %p91 = por %p89, %p90
      %p92 = scmp.ne.s32.totalorder %s84, %s86
      %p93 = scmp.eq.s32.totalorder %s34, 1
      %p94 = por %p92, %p93
      %p95 = scmp.ne.s32.totalorder %s86, %s87
      %p96 = scmp.eq.s32.totalorder %s34, 0
      %p97 = por %p95, %p96
      %p98 = scmp.ne.s32.totalorder %s86, %s87
      %p99 = scmp.eq.s32.totalorder %s35, 1
      %p100 = por %p98, %p99
      %p102 = scmp.ne.s32.totalorder %s87, %s101
      %p103 = scmp.eq.s32.totalorder %s35, 0
      %p104 = por %p102, %p103
      %s106 = sadd.s32 %s105, 1
      %p109 = scmp.eq.s32.totalorder %s29, 1
      %p110 = scmp.ne.s32.totalorder %s105, %s107
      %p111 = scmp.eq.s32.totalorder %s29, 0
      %p112 = por %p110, %p111
      %p113 = scmp.ne.s32.totalorder %s105, %s107
      %p114 = scmp.eq.s32.totalorder %s34, 1
      %p115 = por %p113, %p114
      %p116 = scmp.ne.s32.totalorder %s107, %s108
      %p117 = scmp.eq.s32.totalorder %s34, 0
      %p118 = por %p116, %p117
      %p119 = scmp.ne.s32.totalorder %s107, %s108
      %p120 = scmp.eq.s32.totalorder %s35, 1
      %p121 = por %p119, %p120
      %p123 = scmp.ne.s32.totalorder %s108, %s122
      %p124 = scmp.eq.s32.totalorder %s35, 0
      %p125 = por %p123, %p124
      %s127 = sadd.s32 %s126, 1
      %p130 = scmp.eq.s32.totalorder %s29, 1
      %p131 = scmp.ne.s32.totalorder %s126, %s128
      %p132 = scmp.eq.s32.totalorder %s29, 0
      %p133 = por %p131, %p132
      %p134 = scmp.ne.s32.totalorder %s126, %s128
      %p135 = scmp.eq.s32.totalorder %s34, 1
      %p136 = por %p134, %p135
      %p137 = scmp.ne.s32.totalorder %s128, %s129
      %p138 = scmp.eq.s32.totalorder %s34, 0
      %p139 = por %p137, %p138
      %p140 = scmp.ne.s32.totalorder %s128, %s129
      %p141 = scmp.eq.s32.totalorder %s35, 1
      %p142 = por %p140, %p141
      %p144 = scmp.ne.s32.totalorder %s129, %s143
      %p145 = scmp.eq.s32.totalorder %s35, 0
      %p146 = por %p144, %p145
      %s148 = sadd.s32 %s147, 1
      %p151 = scmp.eq.s32.totalorder %s29, 1
      %p152 = scmp.ne.s32.totalorder %s147, %s149
      %p153 = scmp.eq.s32.totalorder %s29, 0
      %p154 = por %p152, %p153
      %p155 = scmp.ne.s32.totalorder %s147, %s149
      %p156 = scmp.eq.s32.totalorder %s34, 1
      %p157 = por %p155, %p156
      %p158 = scmp.ne.s32.totalorder %s149, %s150
      %p159 = scmp.eq.s32.totalorder %s34, 0
      %p160 = por %p158, %p159
      %p161 = scmp.ne.s32.totalorder %s149, %s150
      %p162 = scmp.eq.s32.totalorder %s35, 1
      %p163 = por %p161, %p162
      %p165 = scmp.ne.s32.totalorder %s150, %s164
      %p166 = scmp.eq.s32.totalorder %s35, 0
      %p167 = por %p165, %p166
      %s169 = sadd.s32 %s168, 1
      %p172 = scmp.eq.s32.totalorder %s29, 1
      %p173 = scmp.ne.s32.totalorder %s168, %s170
      %p174 = scmp.eq.s32.totalorder %s29, 0
      %p175 = por %p173, %p174
      %p176 = scmp.ne.s32.totalorder %s168, %s170
      %p177 = scmp.eq.s32.totalorder %s34, 1
      %p178 = por %p176, %p177
      %p179 = scmp.ne.s32.totalorder %s170, %s171
      %p180 = scmp.eq.s32.totalorder %s34, 0
      %p181 = por %p179, %p180
      %p182 = scmp.ne.s32.totalorder %s170, %s171
      %p183 = scmp.eq.s32.totalorder %s35, 1
      %p184 = por %p182, %p183
      %p186 = scmp.ne.s32.totalorder %s171, %s185
      %p187 = scmp.eq.s32.totalorder %s35, 0
      %p188 = por %p186, %p187
      %s190 = sadd.s32 %s189, 1
      %p193 = scmp.eq.s32.totalorder %s29, 1
      %p194 = scmp.ne.s32.totalorder %s189, %s191
      %p195 = scmp.eq.s32.totalorder %s29, 0
      %p196 = por %p194, %p195
      %p197 = scmp.ne.s32.totalorder %s189, %s191
      %p198 = scmp.eq.s32.totalorder %s34, 1
      %p199 = por %p197, %p198
      %p200 = scmp.ne.s32.totalorder %s191, %s192
      %p201 = scmp.eq.s32.totalorder %s34, 0
      %p202 = por %p200, %p201
      %p203 = scmp.ne.s32.totalorder %s191, %s192
      %p204 = scmp.eq.s32.totalorder %s35, 1
      %p205 = por %p203, %p204
      %p207 = scmp.ne.s32.totalorder %s192, %s206
      %p208 = scmp.eq.s32.totalorder %s35, 0
      %p209 = por %p207, %p208
      %s210 = ssub.s32 %s29, %s36
      %p211 = scmp.eq.s32.totalorder %s210, 0
      %s213 = sadd.s32 %s212, 1
      %s214 = scalar_select %p211, %s212, %s213
      %p217 = pneg %p211
      %p218 = scmp.eq.s32.totalorder %s29, 1
      %p219 = por %p217, %p218
      %p220 = scmp.ne.s32.totalorder %s212, %s215
      %p221 = scmp.eq.s32.totalorder %s29, 0
      %p222 = por %p220, %p221
      %p223 = scmp.ne.s32.totalorder %s212, %s215
      %p224 = scmp.eq.s32.totalorder %s34, 1
      %p225 = por %p223, %p224
      %p226 = scmp.ne.s32.totalorder %s215, %s216
      %p227 = scmp.eq.s32.totalorder %s34, 0
      %p228 = por %p226, %p227
      %p229 = scmp.ne.s32.totalorder %s215, %s216
      %p230 = scmp.eq.s32.totalorder %s35, 1
      %p231 = por %p229, %p230
      %p233 = scmp.ne.s32.totalorder %s216, %s232
      %p234 = scmp.eq.s32.totalorder %s35, 0
      %p235 = por %p233, %p234
      %p236 = scmp.le.s32.totalorder 1, %s29
      %p237 = scmp.lt.s32.totalorder %s29, 3
      %p238 = pnand %p236, %p237
      %p239 = pneg %p238
      // Predicated region
      $region9: #{tpu_custom_call.1} parent=5 // pred_check
        _
      $region10: #{tpu_custom_call.1} parent=5 // pred_check_branch
        %241 = sbr.rel (%p238) target = $region12
      $region11: #{tpu_custom_call.1} parent=5 // pred_region
        %s242 = ssub.s32 %s29, 1
        // Predicated region
        $region13: #{tpu_custom_call.1} parent=11 // pred_check
          %p243 = pneg %p76
        $region14: #{tpu_custom_call.1} parent=11 // pred_check_branch
          %245 = sbr.rel (%p243) target = $region16
        $region15: #{tpu_custom_call.1} parent=11 // pred_region
          %s247 = ssub.s32 2048, 2048
          %248 = vsyncadd [#allocation10], %s247
          %s249 = sshll.u32 [#allocation9], 4
          %s250 = int_to_ptr.vmem [resolvable:$true] %s249
          %255 = dma.hbm_to_vmem [thread:$0]  %s3, 2048, %s250, [#allocation10], 256, 256, 16
        $region16: #{tpu_custom_call.1} parent=11 // pred_fallthru
          _
        // Predicated region
        $region17: #{tpu_custom_call.1} parent=11 // pred_check
          %p256 = pneg %p97
        $region18: #{tpu_custom_call.1} parent=11 // pred_check_branch
          %258 = sbr.rel (%p256) target = $region20
        $region19: #{tpu_custom_call.1} parent=11 // pred_region
          %s260 = ssub.s32 1024, 1024
          %261 = vsyncadd [#allocation12], %s260
          %s262 = sshll.u32 [#allocation11], 4
          %s263 = int_to_ptr.vmem [resolvable:$true] %s262
          %268 = dma.hbm_to_vmem [thread:$0]  %s4, 1024, %s263, [#allocation12], 256, 256, 16
        $region20: #{tpu_custom_call.1} parent=11 // pred_fallthru
          _
        // Predicated region
        $region21: #{tpu_custom_call.1} parent=11 // pred_check
          %p269 = pneg %p118
        $region22: #{tpu_custom_call.1} parent=11 // pred_check_branch
          %271 = sbr.rel (%p269) target = $region24
        $region23: #{tpu_custom_call.1} parent=11 // pred_region
          %s273 = ssub.s32 1024, 1024
          %274 = vsyncadd [#allocation12], %s273
          %s275 = sshll.u32 [#allocation13], 4
          %s276 = int_to_ptr.vmem [resolvable:$true] %s275
          %281 = dma.hbm_to_vmem [thread:$0]  %s5, 1024, %s276, [#allocation12], 256, 256, 16
        $region24: #{tpu_custom_call.1} parent=11 // pred_fallthru
          _
        // Predicated region
        $region25: #{tpu_custom_call.1} parent=11 // pred_check
          %p282 = pneg %p139
        $region26: #{tpu_custom_call.1} parent=11 // pred_check_branch
          %284 = sbr.rel (%p282) target = $region28
        $region27: #{tpu_custom_call.1} parent=11 // pred_region
          _
        $region28: #{tpu_custom_call.1} parent=11 // pred_fallthru
          _
        // Predicated region
        $region29: #{tpu_custom_call.1} parent=11 // pred_check
          %p285 = pneg %p160
        $region30: #{tpu_custom_call.1} parent=11 // pred_check_branch
          %287 = sbr.rel (%p285) target = $region32
        $region31: #{tpu_custom_call.1} parent=11 // pred_region
          %s289 = ssub.s32 1024, 1024
          %290 = vsyncadd [#allocation15], %s289
          %s291 = sshll.u32 [#allocation14], 4
          %s292 = int_to_ptr.vmem [resolvable:$true] %s291
          %297 = dma.hbm_to_vmem [thread:$0]  %s7, 1024, %s292, [#allocation15], 128, 128, 8
        $region32: #{tpu_custom_call.1} parent=11 // pred_fallthru
          _
        // Predicated region
        $region33: #{tpu_custom_call.1} parent=11 // pred_check
          %p298 = pneg %p181
        $region34: #{tpu_custom_call.1} parent=11 // pred_check_branch
          %300 = sbr.rel (%p298) target = $region36
        $region35: #{tpu_custom_call.1} parent=11 // pred_region
          _
        $region36: #{tpu_custom_call.1} parent=11 // pred_fallthru
          _
        // Predicated region
        $region37: #{tpu_custom_call.1} parent=11 // pred_check
          %p301 = pneg %p202
        $region38: #{tpu_custom_call.1} parent=11 // pred_check_branch
          %303 = sbr.rel (%p301) target = $region40
        $region39: #{tpu_custom_call.1} parent=11 // pred_region
          _
        $region40: #{tpu_custom_call.1} parent=11 // pred_fallthru
          _
      $region12: #{tpu_custom_call.1} parent=5 // pred_fallthru
        _
      %p304 = scmp.lt.s32.totalorder %s29, 2
      // Predicated region
      $region41: #{tpu_custom_call.1} parent=5 // pred_check
        %p305 = pneg %p304
      $region42: #{tpu_custom_call.1} parent=5 // pred_check_branch
        %307 = sbr.rel (%p305) target = $region44
      $region43: #{tpu_custom_call.1} parent=5 // pred_region
        // Predicated region
        $region45: #{tpu_custom_call.1} parent=43 // pred_check
          %p308 = pneg %p49
        $region46: #{tpu_custom_call.1} parent=43 // pred_check_branch
          %310 = sbr.rel (%p308) target = $region48
        $region47: #{tpu_custom_call.1} parent=43 // pred_region
          %p311 = scmp.lt.s32.totalorder %s29, 1
          %s312 = scalar_select %p311, %s29, 1
          %s313 = smul.addr %s312, 8
          %s314 = scalar_lea.vmem %s2, %s313
        $region48: #{tpu_custom_call.1} parent=43 // pred_fallthru
          _
      $region44: #{tpu_custom_call.1} parent=5 // pred_fallthru
        _
      %p315 = scmp.le.s32.totalorder 1, %s29
      %p316 = scmp.lt.s32.totalorder %s29, 3
      %p317 = pnand %p315, %p316
      %p318 = pneg %p317
      // Predicated region
      $region49: #{tpu_custom_call.1} parent=5 // pred_check
        _
      $region50: #{tpu_custom_call.1} parent=5 // pred_check_branch
        %320 = sbr.rel (%p317) target = $region52
      $region51: #{tpu_custom_call.1} parent=5 // pred_region
        %s321 = ssub.s32 %s29, 1
        // Predicated region
        $region53: #{tpu_custom_call.1} parent=51 // pred_check
          %p322 = pneg %p76
        $region54: #{tpu_custom_call.1} parent=51 // pred_check_branch
          %324 = sbr.rel (%p322) target = $region56
        $region55: #{tpu_custom_call.1} parent=51 // pred_region
          %325 = dma.done [#allocation10], 2048
        $region56: #{tpu_custom_call.1} parent=51 // pred_fallthru
          _
        // Predicated region
        $region57: #{tpu_custom_call.1} parent=51 // pred_check
          %p326 = pneg %p97
        $region58: #{tpu_custom_call.1} parent=51 // pred_check_branch
          %328 = sbr.rel (%p326) target = $region60
        $region59: #{tpu_custom_call.1} parent=51 // pred_region
          %329 = dma.done [#allocation12], 1024
        $region60: #{tpu_custom_call.1} parent=51 // pred_fallthru
          _
        // Predicated region
        $region61: #{tpu_custom_call.1} parent=51 // pred_check
          %p330 = pneg %p118
        $region62: #{tpu_custom_call.1} parent=51 // pred_check_branch
          %332 = sbr.rel (%p330) target = $region64
        $region63: #{tpu_custom_call.1} parent=51 // pred_region
          %333 = dma.done [#allocation12], 1024
        $region64: #{tpu_custom_call.1} parent=51 // pred_fallthru
          _
        // Predicated region
        $region65: #{tpu_custom_call.1} parent=51 // pred_check
          %p334 = pneg %p160
        $region66: #{tpu_custom_call.1} parent=51 // pred_check_branch
          %336 = sbr.rel (%p334) target = $region68
        $region67: #{tpu_custom_call.1} parent=51 // pred_region
          %337 = dma.done [#allocation15], 1024
        $region68: #{tpu_custom_call.1} parent=51 // pred_fallthru
          _
        %p338 = scmp.lt.s32.totalorder %s34, 1
        %s339 = scalar_select %p338, %s34, 1
        %s340 = smul.addr %s339, 8
        %s341 = scalar_lea.vmem %s2, %s340
        %p342 = pneg %p55
        %p343 = pneg %p52
        %p344 = pneg %p76
        %p345 = pneg %p73
        %p346 = pneg %p97
        %p347 = pneg %p94
        %p348 = pneg %p118
        %p349 = pneg %p115
        %p350 = pneg %p139
        %p351 = pneg %p136
        %p352 = pneg %p160
        %p353 = pneg %p157
        %p354 = pneg %p181
        %p355 = pneg %p178
        %p356 = pneg %p202
        %p357 = pneg %p199
        %p358 = pneg %p228
        %p359 = pneg %p225
        %p360 = scmp.lt.s32.totalorder %s34, 1
        %s361 = scalar_select %p360, %s34, 1
        %s362 = smul.addr %s361, 8
        %s363 = scalar_lea.vmem %s10, %s362
        %p364 = scmp.lt.s32.totalorder %s34, 1
        %s365 = scalar_select %p364, %s34, 1
        %s366 = smul.addr %s365, 8
        %s367 = scalar_lea.vmem %s2, %s366
        %p368 = scmp.lt.s32.totalorder %s34, 1
        %s369 = scalar_select %p368, %s34, 1
        %s370 = smul.addr %s369, 8
        %s371 = scalar_lea.vmem %s10, %s370
        %vm372 = vcmask 260096
        %373 = vst.msk [vmem:[#allocation2] sm:$0x7f] %vm372, 0.0
        %374 = vst.msk [vmem:[#allocation3] sm:$0x7f] %vm372, 0.0
        %375 = vst.msk [vmem:[#allocation4] sm:$0x7f] %vm372, 0.0
        %376 = vst.msk [vmem:[#allocation5] sm:$0x7f] %vm372, 0.0
        %s377 = smul.u32 %s34, 35
        %s378 = sld [smem:[#allocation7 + %s377]]
        %s379 = sadd.s32 %s377, 1
        %s380 = sld [smem:[#allocation7 + %s379]]
        %s381 = sadd.s32 %s377, 2
        %s382 = sld [smem:[#allocation7 + %s381]]
        %s383 = sadd.s32 %s377, 3
        %s384 = sld [smem:[#allocation7 + %s383]]
        %s385 = scvt.s32.f32 %s384
        %s386 = sadd.s32 %s377, 4
        %s387 = sld [smem:[#allocation7 + %s386]]
        %s388 = scvt.s32.f32 %s387
        %s389 = scalar_lea.vmem %s367, %s378
        %v390 = vld [vmem:[%s389] sm:$0x1]
        %s391 = scalar_lea.vmem [#allocation2], %s380
        %v392 = vld [vmem:[%s391] sm:$0x1]
        %v393 = vstv %s385
        %v394 = vmul.f32 %v392, %v393
        %s395 = scalar_lea.vmem [#allocation2], %s382
        %v396 = vld [vmem:[%s395] sm:$0x1]
        %v397 = vstv %s388
        %v398 = vmul.f32 %v396, %v397
        %s399 = scalar_lea.vmem [#allocation3], %s380
        %v400 = vld [vmem:[%s399] sm:$0x1]
        %v401 = vmul.f32 %v400, %v393
        %s402 = scalar_lea.vmem [#allocation3], %s382
        %v403 = vld [vmem:[%s402] sm:$0x1]
        %v404 = vmul.f32 %v403, %v397
        %v405 = vld [vmem:[#allocation9] sm:$0xff]
        %v406 = vld [vmem:[#allocation9 + $0x8] sm:$0xff]
        %v407 = vld [vmem:[#allocation9 + $0x10] sm:$0xff]
        %v408 = vld [vmem:[#allocation9 + $0x18] sm:$0xff]
        %v409 = vld [vmem:[#allocation9 + $0x20] sm:$0xff]
        %v410 = vld [vmem:[#allocation9 + $0x28] sm:$0xff]
        %v411 = vld [vmem:[#allocation9 + $0x30] sm:$0xff]
        %v412 = vld [vmem:[#allocation9 + $0x38] sm:$0xff]
        %v413 = vld [vmem:[#allocation9 + $0x40] sm:$0xff]
        %v414 = vld [vmem:[#allocation9 + $0x48] sm:$0xff]
        %v415 = vld [vmem:[#allocation9 + $0x50] sm:$0xff]
        %v416 = vld [vmem:[#allocation9 + $0x58] sm:$0xff]
        %v417 = vld [vmem:[#allocation9 + $0x60] sm:$0xff]
        %v418 = vld [vmem:[#allocation9 + $0x68] sm:$0xff]
        %v419 = vld [vmem:[#allocation9 + $0x70] sm:$0xff]
        %v420 = vld [vmem:[#allocation9 + $0x78] sm:$0xff]
        %v421 = vld [vmem:[#allocation11] sm:$0xff]
        %v422 = vld [vmem:[#allocation11 + $0x8] sm:$0xff]
        %v423 = vld [vmem:[#allocation11 + $0x10] sm:$0xff]
        %v424 = vld [vmem:[#allocation11 + $0x18] sm:$0xff]
        %v425 = vld [vmem:[#allocation11 + $0x20] sm:$0xff]
        %v426 = vld [vmem:[#allocation11 + $0x28] sm:$0xff]
        %v427 = vld [vmem:[#allocation11 + $0x30] sm:$0xff]
        %v428 = vld [vmem:[#allocation11 + $0x38] sm:$0xff]
        %vm429 = vcmask 261120
        %v431 = vsel %vm429, %v394, 0
        %433 = vmatprep.subr.mxu0 0.0
        %434 = vmatpush1.msra.mxu0 0.0
        %435 = vmatprep.subr.mxu0 0.0
        %436 = vmatpush1.msra.mxu0 0.0
        %437 = vmatprep.subr.mxu0 0.0
        %438 = vmatpush1.msra.mxu0 0.0
        %439 = vmatprep.subr.mxu0 0.0
        %440 = vmatpush1.msra.mxu0 0.0
        %441 = vmatprep.subr.mxu0 0.0
        %442 = vmatpush1.msra.mxu0 0.0
        %443 = vmatprep.subr.mxu0 0.0
        %444 = vmatpush1.msra.mxu0 0.0
        %445 = vmatprep.subr.mxu0 0.0
        %446 = vmatpush1.msra.mxu0 0.0
        %447 = vmatprep.subr.mxu0 0.0
        %448 = vmatpush1.msra.mxu0 0.0
        %449 = vmatprep.subr.mxu0 0.0
        %450 = vmatpush1.msra.mxu0 0.0
        %451 = vmatprep.subr.mxu0 0.0
        %452 = vmatpush1.msra.mxu0 0.0
        %453 = vmatprep.subr.mxu0 0.0
        %454 = vmatpush1.msra.mxu0 0.0
        %455 = vmatprep.subr.mxu0 0.0
        %456 = vmatpush1.msra.mxu0 0.0
        %457 = vmatprep.subr.mxu0 %v428
        %458 = vmatpush1.msra.mxu0 %v427
        %459 = vmatprep.subr.mxu0 %v426
        %460 = vmatpush1.msra.mxu0 %v425
        %461 = vmatprep.subr.mxu0 %v424
        %462 = vmatpush1.msra.mxu0 %v423
        %463 = vmatprep.subr.mxu0 %v422
        %464 = vmatpush1.msra.mxu0 %v421
        %465 = vmatprep.subr.mxu0 0.0
        %466 = vmatpush2.msra.mxu0 0.0
        %467 = vmatprep.subr.mxu0 0.0
        %468 = vmatpush2.msra.mxu0 0.0
        %469 = vmatprep.subr.mxu0 0.0
        %470 = vmatpush2.msra.mxu0 0.0
        %471 = vmatprep.subr.mxu0 0.0
        %472 = vmatpush2.msra.mxu0 0.0
        %473 = vmatprep.subr.mxu0 0.0
        %474 = vmatpush2.msra.mxu0 0.0
        %475 = vmatprep.subr.mxu0 0.0
        %476 = vmatpush2.msra.mxu0 0.0
        %477 = vmatprep.subr.mxu0 0.0
        %478 = vmatpush2.msra.mxu0 0.0
        %479 = vmatprep.subr.mxu0 0.0
        %480 = vmatpush2.msra.mxu0 0.0
        %481 = vmatprep.subr.mxu0 0.0
        %482 = vmatpush2.msra.mxu0 0.0
        %483 = vmatprep.subr.mxu0 0.0
        %484 = vmatpush2.msra.mxu0 0.0
        %485 = vmatprep.subr.mxu0 0.0
        %486 = vmatpush2.msra.mxu0 0.0
        %487 = vmatprep.subr.mxu0 0.0
        %488 = vmatpush2.msra.mxu0 0.0
        %489 = vmatprep.subr.mxu0 0.0
        %490 = vmatpush2.msra.mxu0 0.0
        %491 = vmatprep.subr.mxu0 0.0
        %492 = vmatpush2.msra.mxu0 0.0
        %493 = vmatprep.subr.mxu0 0.0
        %494 = vmatpush2.msra.mxu0 0.0
        %495 = vmatprep.subr.mxu0 0.0
        %496 = vmatpush2.msra.mxu0 0.0
        %497 = vmatprep.mubr.f32.mxu0 0.0
        %498 = vmatmul.mubr.f32.gmra.mxu0 %v431
        %v499 = vpop.f32.mrf.mxu0
        %v500 = vadd.f32 0.0, %v499
        %v501 = vpop.f32.mrf.mxu0
        %v502 = vadd.f32 0.0, %v501
        %503 = vdwg.mxu0
        %vm504 = vcmask 523264
        %v506 = vsel %vm504, %v390, 0
        %508 = vmatprep.subr.mxu0 0.0
        %509 = vmatpush1.msra.mxu0 0.0
        %510 = vmatprep.subr.mxu0 0.0
        %511 = vmatpush1.msra.mxu0 0.0
        %512 = vmatprep.subr.mxu0 0.0
        %513 = vmatpush1.msra.mxu0 0.0
        %514 = vmatprep.subr.mxu0 0.0
        %515 = vmatpush1.msra.mxu0 0.0
        %516 = vmatprep.subr.mxu0 0.0
        %517 = vmatpush1.msra.mxu0 0.0
        %518 = vmatprep.subr.mxu0 0.0
        %519 = vmatpush1.msra.mxu0 0.0
        %520 = vmatprep.subr.mxu0 0.0
        %521 = vmatpush1.msra.mxu0 0.0
        %522 = vmatprep.subr.mxu0 0.0
        %523 = vmatpush1.msra.mxu0 0.0
        %524 = vmatprep.subr.mxu0 %v420
        %525 = vmatpush1.msra.mxu0 %v419
        %526 = vmatprep.subr.mxu0 %v418
        %527 = vmatpush1.msra.mxu0 %v417
        %528 = vmatprep.subr.mxu0 %v416
        %529 = vmatpush1.msra.mxu0 %v415
        %530 = vmatprep.subr.mxu0 %v414
        %531 = vmatpush1.msra.mxu0 %v413
        %532 = vmatprep.subr.mxu0 %v412
        %533 = vmatpush1.msra.mxu0 %v411
        %534 = vmatprep.subr.mxu0 %v410
        %535 = vmatpush1.msra.mxu0 %v409
        %536 = vmatprep.subr.mxu0 %v408
        %537 = vmatpush1.msra.mxu0 %v407
        %538 = vmatprep.subr.mxu0 %v406
        %539 = vmatpush1.msra.mxu0 %v405
        %540 = vmatprep.subr.mxu0 0.0
        %541 = vmatpush2.msra.mxu0 0.0
        %542 = vmatprep.subr.mxu0 0.0
        %543 = vmatpush2.msra.mxu0 0.0
        %544 = vmatprep.subr.mxu0 0.0
        %545 = vmatpush2.msra.mxu0 0.0
        %546 = vmatprep.subr.mxu0 0.0
        %547 = vmatpush2.msra.mxu0 0.0
        %548 = vmatprep.subr.mxu0 0.0
        %549 = vmatpush2.msra.mxu0 0.0
        %550 = vmatprep.subr.mxu0 0.0
        %551 = vmatpush2.msra.mxu0 0.0
        %552 = vmatprep.subr.mxu0 0.0
        %553 = vmatpush2.msra.mxu0 0.0
        %554 = vmatprep.subr.mxu0 0.0
        %555 = vmatpush2.msra.mxu0 0.0
        %556 = vmatprep.subr.mxu0 0.0
        %557 = vmatpush2.msra.mxu0 0.0
        %558 = vmatprep.subr.mxu0 0.0
        %559 = vmatpush2.msra.mxu0 0.0
        %560 = vmatprep.subr.mxu0 0.0
        %561 = vmatpush2.msra.mxu0 0.0
        %562 = vmatprep.subr.mxu0 0.0
        %563 = vmatpush2.msra.mxu0 0.0
        %564 = vmatprep.subr.mxu0 0.0
        %565 = vmatpush2.msra.mxu0 0.0
        %566 = vmatprep.subr.mxu0 0.0
        %567 = vmatpush2.msra.mxu0 0.0
        %568 = vmatprep.subr.mxu0 0.0
        %569 = vmatpush2.msra.mxu0 0.0
        %570 = vmatprep.subr.mxu0 0.0
        %571 = vmatpush2.msra.mxu0 0.0
        %572 = vmatprep.mubr.f32.mxu0 0.0
        %573 = vmatmul.mubr.f32.gmra.mxu0 %v506
        %v574 = vpop.f32.mrf.mxu0
        %v575 = vadd.f32 %v500, %v574
        %v576 = vpop.f32.mrf.mxu0
        %v577 = vadd.f32 %v502, %v576
        %578 = vdwg.mxu0
        %v579 = vld [vmem:[#allocation13] sm:$0xff]
        %v580 = vld [vmem:[#allocation13 + $0x8] sm:$0xff]
        %v581 = vld [vmem:[#allocation13 + $0x10] sm:$0xff]
        %v582 = vld [vmem:[#allocation13 + $0x18] sm:$0xff]
        %v583 = vld [vmem:[#allocation13 + $0x20] sm:$0xff]
        %v584 = vld [vmem:[#allocation13 + $0x28] sm:$0xff]
        %v585 = vld [vmem:[#allocation13 + $0x30] sm:$0xff]
        %v586 = vld [vmem:[#allocation13 + $0x38] sm:$0xff]
        %v588 = vsel %vm429, %v398, 0
        %590 = vmatprep.subr.mxu0 0.0
        %591 = vmatpush1.msra.mxu0 0.0
        %592 = vmatprep.subr.mxu0 0.0
        %593 = vmatpush1.msra.mxu0 0.0
        %594 = vmatprep.subr.mxu0 0.0
        %595 = vmatpush1.msra.mxu0 0.0
        %596 = vmatprep.subr.mxu0 0.0
        %597 = vmatpush1.msra.mxu0 0.0
        %598 = vmatprep.subr.mxu0 0.0
        %599 = vmatpush1.msra.mxu0 0.0
        %600 = vmatprep.subr.mxu0 0.0
        %601 = vmatpush1.msra.mxu0 0.0
        %602 = vmatprep.subr.mxu0 0.0
        %603 = vmatpush1.msra.mxu0 0.0
        %604 = vmatprep.subr.mxu0 0.0
        %605 = vmatpush1.msra.mxu0 0.0
        %606 = vmatprep.subr.mxu0 0.0
        %607 = vmatpush1.msra.mxu0 0.0
        %608 = vmatprep.subr.mxu0 0.0
        %609 = vmatpush1.msra.mxu0 0.0
        %610 = vmatprep.subr.mxu0 0.0
        %611 = vmatpush1.msra.mxu0 0.0
        %612 = vmatprep.subr.mxu0 0.0
        %613 = vmatpush1.msra.mxu0 0.0
        %614 = vmatprep.subr.mxu0 %v586
        %615 = vmatpush1.msra.mxu0 %v585
        %616 = vmatprep.subr.mxu0 %v584
        %617 = vmatpush1.msra.mxu0 %v583
        %618 = vmatprep.subr.mxu0 %v582
        %619 = vmatpush1.msra.mxu0 %v581
        %620 = vmatprep.subr.mxu0 %v580
        %621 = vmatpush1.msra.mxu0 %v579
        %622 = vmatprep.subr.mxu0 0.0
        %623 = vmatpush2.msra.mxu0 0.0
        %624 = vmatprep.subr.mxu0 0.0
        %625 = vmatpush2.msra.mxu0 0.0
        %626 = vmatprep.subr.mxu0 0.0
        %627 = vmatpush2.msra.mxu0 0.0
        %628 = vmatprep.subr.mxu0 0.0
        %629 = vmatpush2.msra.mxu0 0.0
        %630 = vmatprep.subr.mxu0 0.0
        %631 = vmatpush2.msra.mxu0 0.0
        %632 = vmatprep.subr.mxu0 0.0
        %633 = vmatpush2.msra.mxu0 0.0
        %634 = vmatprep.subr.mxu0 0.0
        %635 = vmatpush2.msra.mxu0 0.0
        %636 = vmatprep.subr.mxu0 0.0
        %637 = vmatpush2.msra.mxu0 0.0
        %638 = vmatprep.subr.mxu0 0.0
        %639 = vmatpush2.msra.mxu0 0.0
        %640 = vmatprep.subr.mxu0 0.0
        %641 = vmatpush2.msra.mxu0 0.0
        %642 = vmatprep.subr.mxu0 0.0
        %643 = vmatpush2.msra.mxu0 0.0
        %644 = vmatprep.subr.mxu0 0.0
        %645 = vmatpush2.msra.mxu0 0.0
        %646 = vmatprep.subr.mxu0 0.0
        %647 = vmatpush2.msra.mxu0 0.0
        %648 = vmatprep.subr.mxu0 0.0
        %649 = vmatpush2.msra.mxu0 0.0
        %650 = vmatprep.subr.mxu0 0.0
        %651 = vmatpush2.msra.mxu0 0.0
        %652 = vmatprep.subr.mxu0 0.0
        %653 = vmatpush2.msra.mxu0 0.0
        %654 = vmatprep.mubr.f32.mxu0 0.0
        %655 = vmatmul.mubr.f32.gmra.mxu0 %v588
        %v656 = vpop.f32.mrf.mxu0
        %v657 = vadd.f32 0.0, %v656
        %v658 = vpop.f32.mrf.mxu0
        %v659 = vadd.f32 0.0, %v658
        %660 = vdwg.mxu0
        %v661 = vadd.f32 %v575, %v657
        %v662 = vadd.f32 %v577, %v659
        %v663 = vld [vmem:[%s6] ss:$4 sm:$0x3]
        %v665 = vlaneseq
        %v666 = vshrl.u32 %v665, 7
        %v667 = vsub.s32 0, %v666
        %v668 = vrot.slane %v663, %v667
        %v669 = vlaneseq
        %v670 = vshrl.u32 %v669, 7
        %v671 = vsub.s32 1, %v670
        %v672 = vrot.slane %v663, %v671
        %v675 = vadd.f32 %v661, %v668
        %v676 = vadd.f32 %v662, %v672
        %s677 = scalar_lea.vmem %s6, 1
        %v678 = vld [vmem:[%s677] ss:$4 sm:$0x3]
        %v679 = vmul.f32 %v393, %v678
        %v681 = vlaneseq
        %v682 = vshrl.u32 %v681, 7
        %v683 = vsub.s32 0, %v682
        %v684 = vrot.slane %v679, %v683
        %v685 = vlaneseq
        %v686 = vshrl.u32 %v685, 7
        %v687 = vsub.s32 1, %v686
        %v688 = vrot.slane %v679, %v687
        %v691 = vadd.f32 %v675, %v684
        %v692 = vadd.f32 %v676, %v688
        %s693 = scalar_lea.vmem %s6, 2
        %v694 = vld [vmem:[%s693] ss:$4 sm:$0x3]
        %v695 = vmul.f32 %v397, %v694
        %v697 = vlaneseq
        %v698 = vshrl.u32 %v697, 7
        %v699 = vsub.s32 0, %v698
        %v700 = vrot.slane %v695, %v699
        %v701 = vlaneseq
        %v702 = vshrl.u32 %v701, 7
        %v703 = vsub.s32 1, %v702
        %v704 = vrot.slane %v695, %v703
        %v707 = vadd.f32 %v691, %v700
        %v708 = vadd.f32 %v692, %v704
        %v709 = vxor.u32 %v707, 2147483648
        %v710 = vmul.f32 %v709, 1.442695
        %v711 = vpow.pop %v710
        %v712 = vadd.f32 %v711, 1.0
        %v713 = vrcp.pop %v712
        %v714 = vmul.f32 1.0, %v713
        %v715 = vtanh.pop %v708
        %v716 = vmul.f32 %v714, %v715
        %718 = vrot.lane.b32.xlu0 %v401, 64
        %v719 = vpop.permute.xlu0 %718
        %v721 = vmul.f32 %v714, %v719
        %723 = vrot.lane.b32.xlu0 %v721, 64
        %v724 = vpop.permute.xlu0 %723
        %v726 = vadd.f32 %v716, %v724
        %728 = vrot.lane.b32.xlu0 %v404, 96
        %v729 = vpop.permute.xlu0 %728
        %v731 = vmul.f32 %v714, %v729
        %733 = vrot.lane.b32.xlu0 %v731, 32
        %v734 = vpop.permute.xlu0 %733
        %v736 = vadd.f32 %v726, %v734
        %v737 = vtanh.pop %v736
        %739 = vrot.lane.b32.xlu0 %v737, 32
        %v740 = vpop.permute.xlu0 %739
        %v742 = vmul.f32 %v714, %v740
        %s743 = scalar_lea.vmem [#allocation3], %s378
        %vm744 = vcmask 253952
        %745 = vst.msk [vmem:[%s743] sm:$0x1] %vm744, %v736
        %747 = vrot.lane.b32.xlu0 %v742, 96
        %v748 = vpop.permute.xlu0 %747
        %s750 = scalar_lea.vmem [#allocation2], %s378
        %751 = vst.msk [vmem:[%s750] sm:$0x1] %vm744, %v748
        %s752 = smul.u32 %s34, 7
        %s753 = sadd.s32 %s752, 1
        %s754 = smul.u32 %s753, 5
        %s755 = sld [smem:[#allocation7 + %s754]]
        %s756 = sadd.s32 %s754, 1
        %s757 = sld [smem:[#allocation7 + %s756]]
        %s758 = sadd.s32 %s754, 2
        %s759 = sld [smem:[#allocation7 + %s758]]
        %s760 = sadd.s32 %s754, 3
        %s761 = sld [smem:[#allocation7 + %s760]]
        %s762 = scvt.s32.f32 %s761
        %s763 = sadd.s32 %s754, 4
        %s764 = sld [smem:[#allocation7 + %s763]]
        %s765 = scvt.s32.f32 %s764
        %s766 = scalar_lea.vmem %s367, %s755
        %v767 = vld [vmem:[%s766] sm:$0x1]
        %s768 = scalar_lea.vmem [#allocation2], %s757
        %v769 = vld [vmem:[%s768] sm:$0x1]
        %v770 = vstv %s762
        %v771 = vmul.f32 %v769, %v770
        %s772 = scalar_lea.vmem [#allocation2], %s759
        %v773 = vld [vmem:[%s772] sm:$0x1]
        %v774 = vstv %s765
        %v775 = vmul.f32 %v773, %v774
        %s776 = scalar_lea.vmem [#allocation3], %s757
        %v777 = vld [vmem:[%s776] sm:$0x1]
        %v778 = vmul.f32 %v777, %v770
        %s779 = scalar_lea.vmem [#allocation3], %s759
        %v780 = vld [vmem:[%s779] sm:$0x1]
        %v781 = vmul.f32 %v780, %v774
        %v782 = vld [vmem:[#allocation9] sm:$0xff]
        %v783 = vld [vmem:[#allocation9 + $0x8] sm:$0xff]
        %v784 = vld [vmem:[#allocation9 + $0x10] sm:$0xff]
        %v785 = vld [vmem:[#allocation9 + $0x18] sm:$0xff]
        %v786 = vld [vmem:[#allocation9 + $0x20] sm:$0xff]
        %v787 = vld [vmem:[#allocation9 + $0x28] sm:$0xff]
        %v788 = vld [vmem:[#allocation9 + $0x30] sm:$0xff]
        %v789 = vld [vmem:[#allocation9 + $0x38] sm:$0xff]
        %v790 = vld [vmem:[#allocation9 + $0x40] sm:$0xff]
        %v791 = vld [vmem:[#allocation9 + $0x48] sm:$0xff]
        %v792 = vld [vmem:[#allocation9 + $0x50] sm:$0xff]
        %v793 = vld [vmem:[#allocation9 + $0x58] sm:$0xff]
        %v794 = vld [vmem:[#allocation9 + $0x60] sm:$0xff]
        %v795 = vld [vmem:[#allocation9 + $0x68] sm:$0xff]
        %v796 = vld [vmem:[#allocation9 + $0x70] sm:$0xff]
        %v797 = vld [vmem:[#allocation9 + $0x78] sm:$0xff]
        %v798 = vld [vmem:[#allocation11] sm:$0xff]
        %v799 = vld [vmem:[#allocation11 + $0x8] sm:$0xff]
        %v800 = vld [vmem:[#allocation11 + $0x10] sm:$0xff]
        %v801 = vld [vmem:[#allocation11 + $0x18] sm:$0xff]
        %v802 = vld [vmem:[#allocation11 + $0x20] sm:$0xff]
        %v803 = vld [vmem:[#allocation11 + $0x28] sm:$0xff]
        %v804 = vld [vmem:[#allocation11 + $0x30] sm:$0xff]
        %v805 = vld [vmem:[#allocation11 + $0x38] sm:$0xff]
        %v807 = vsel %vm429, %v771, 0
        %809 = vmatprep.subr.mxu0 0.0
        %810 = vmatpush1.msra.mxu0 0.0
        %811 = vmatprep.subr.mxu0 0.0
        %812 = vmatpush1.msra.mxu0 0.0
        %813 = vmatprep.subr.mxu0 0.0
        %814 = vmatpush1.msra.mxu0 0.0
        %815 = vmatprep.subr.mxu0 0.0
        %816 = vmatpush1.msra.mxu0 0.0
        %817 = vmatprep.subr.mxu0 0.0
        %818 = vmatpush1.msra.mxu0 0.0
        %819 = vmatprep.subr.mxu0 0.0
        %820 = vmatpush1.msra.mxu0 0.0
        %821 = vmatprep.subr.mxu0 0.0
        %822 = vmatpush1.msra.mxu0 0.0
        %823 = vmatprep.subr.mxu0 0.0
        %824 = vmatpush1.msra.mxu0 0.0
        %825 = vmatprep.subr.mxu0 0.0
        %826 = vmatpush1.msra.mxu0 0.0
        %827 = vmatprep.subr.mxu0 0.0
        %828 = vmatpush1.msra.mxu0 0.0
        %829 = vmatprep.subr.mxu0 0.0
        %830 = vmatpush1.msra.mxu0 0.0
        %831 = vmatprep.subr.mxu0 0.0
        %832 = vmatpush1.msra.mxu0 0.0
        %833 = vmatprep.subr.mxu0 %v805
        %834 = vmatpush1.msra.mxu0 %v804
        %835 = vmatprep.subr.mxu0 %v803
        %836 = vmatpush1.msra.mxu0 %v802
        %837 = vmatprep.subr.mxu0 %v801
        %838 = vmatpush1.msra.mxu0 %v800
        %839 = vmatprep.subr.mxu0 %v799
        %840 = vmatpush1.msra.mxu0 %v798
        %841 = vmatprep.subr.mxu0 0.0
        %842 = vmatpush2.msra.mxu0 0.0
        %843 = vmatprep.subr.mxu0 0.0
        %844 = vmatpush2.msra.mxu0 0.0
        %845 = vmatprep.subr.mxu0 0.0
        %846 = vmatpush2.msra.mxu0 0.0
        %847 = vmatprep.subr.mxu0 0.0
        %848 = vmatpush2.msra.mxu0 0.0
        %849 = vmatprep.subr.mxu0 0.0
        %850 = vmatpush2.msra.mxu0 0.0
        %851 = vmatprep.subr.mxu0 0.0
        %852 = vmatpush2.msra.mxu0 0.0
        %853 = vmatprep.subr.mxu0 0.0
        %854 = vmatpush2.msra.mxu0 0.0
        %855 = vmatprep.subr.mxu0 0.0
        %856 = vmatpush2.msra.mxu0 0.0
        %857 = vmatprep.subr.mxu0 0.0
        %858 = vmatpush2.msra.mxu0 0.0
        %859 = vmatprep.subr.mxu0 0.0
        %860 = vmatpush2.msra.mxu0 0.0
        %861 = vmatprep.subr.mxu0 0.0
        %862 = vmatpush2.msra.mxu0 0.0
        %863 = vmatprep.subr.mxu0 0.0
        %864 = vmatpush2.msra.mxu0 0.0
        %865 = vmatprep.subr.mxu0 0.0
        %866 = vmatpush2.msra.mxu0 0.0
        %867 = vmatprep.subr.mxu0 0.0
        %868 = vmatpush2.msra.mxu0 0.0
        %869 = vmatprep.subr.mxu0 0.0
        %870 = vmatpush2.msra.mxu0 0.0
        %871 = vmatprep.subr.mxu0 0.0
        %872 = vmatpush2.msra.mxu0 0.0
        %873 = vmatprep.mubr.f32.mxu0 0.0
        %874 = vmatmul.mubr.f32.gmra.mxu0 %v807
        %v875 = vpop.f32.mrf.mxu0
        %v876 = vadd.f32 0.0, %v875
        %v877 = vpop.f32.mrf.mxu0
        %v878 = vadd.f32 0.0, %v877
        %879 = vdwg.mxu0
        %v881 = vsel %vm504, %v767, 0
        %883 = vmatprep.subr.mxu0 0.0
        %884 = vmatpush1.msra.mxu0 0.0
        %885 = vmatprep.subr.mxu0 0.0
        %886 = vmatpush1.msra.mxu0 0.0
        %887 = vmatprep.subr.mxu0 0.0
        %888 = vmatpush1.msra.mxu0 0.0
        %889 = vmatprep.subr.mxu0 0.0
        %890 = vmatpush1.msra.mxu0 0.0
        %891 = vmatprep.subr.mxu0 0.0
        %892 = vmatpush1.msra.mxu0 0.0
        %893 = vmatprep.subr.mxu0 0.0
        %894 = vmatpush1.msra.mxu0 0.0
        %895 = vmatprep.subr.mxu0 0.0
        %896 = vmatpush1.msra.mxu0 0.0
        %897 = vmatprep.subr.mxu0 0.0
        %898 = vmatpush1.msra.mxu0 0.0
        %899 = vmatprep.subr.mxu0 %v797
        %900 = vmatpush1.msra.mxu0 %v796
        %901 = vmatprep.subr.mxu0 %v795
        %902 = vmatpush1.msra.mxu0 %v794
        %903 = vmatprep.subr.mxu0 %v793
        %904 = vmatpush1.msra.mxu0 %v792
        %905 = vmatprep.subr.mxu0 %v791
        %906 = vmatpush1.msra.mxu0 %v790
        %907 = vmatprep.subr.mxu0 %v789
        %908 = vmatpush1.msra.mxu0 %v788
        %909 = vmatprep.subr.mxu0 %v787
        %910 = vmatpush1.msra.mxu0 %v786
        %911 = vmatprep.subr.mxu0 %v785
        %912 = vmatpush1.msra.mxu0 %v784
        %913 = vmatprep.subr.mxu0 %v783
        %914 = vmatpush1.msra.mxu0 %v782
        %915 = vmatprep.subr.mxu0 0.0
        %916 = vmatpush2.msra.mxu0 0.0
        %917 = vmatprep.subr.mxu0 0.0
        %918 = vmatpush2.msra.mxu0 0.0
        %919 = vmatprep.subr.mxu0 0.0
        %920 = vmatpush2.msra.mxu0 0.0
        %921 = vmatprep.subr.mxu0 0.0
        %922 = vmatpush2.msra.mxu0 0.0
        %923 = vmatprep.subr.mxu0 0.0
        %924 = vmatpush2.msra.mxu0 0.0
        %925 = vmatprep.subr.mxu0 0.0
        %926 = vmatpush2.msra.mxu0 0.0
        %927 = vmatprep.subr.mxu0 0.0
        %928 = vmatpush2.msra.mxu0 0.0
        %929 = vmatprep.subr.mxu0 0.0
        %930 = vmatpush2.msra.mxu0 0.0
        %931 = vmatprep.subr.mxu0 0.0
        %932 = vmatpush2.msra.mxu0 0.0
        %933 = vmatprep.subr.mxu0 0.0
        %934 = vmatpush2.msra.mxu0 0.0
        %935 = vmatprep.subr.mxu0 0.0
        %936 = vmatpush2.msra.mxu0 0.0
        %937 = vmatprep.subr.mxu0 0.0
        %938 = vmatpush2.msra.mxu0 0.0
        %939 = vmatprep.subr.mxu0 0.0
        %940 = vmatpush2.msra.mxu0 0.0
        %941 = vmatprep.subr.mxu0 0.0
        %942 = vmatpush2.msra.mxu0 0.0
        %943 = vmatprep.subr.mxu0 0.0
        %944 = vmatpush2.msra.mxu0 0.0
        %945 = vmatprep.subr.mxu0 0.0
        %946 = vmatpush2.msra.mxu0 0.0
        %947 = vmatprep.mubr.f32.mxu0 0.0
        %948 = vmatmul.mubr.f32.gmra.mxu0 %v881
        %v949 = vpop.f32.mrf.mxu0
        %v950 = vadd.f32 %v876, %v949
        %v951 = vpop.f32.mrf.mxu0
        %v952 = vadd.f32 %v878, %v951
        %953 = vdwg.mxu0
        %v954 = vld [vmem:[#allocation13] sm:$0xff]
        %v955 = vld [vmem:[#allocation13 + $0x8] sm:$0xff]
        %v956 = vld [vmem:[#allocation13 + $0x10] sm:$0xff]
        %v957 = vld [vmem:[#allocation13 + $0x18] sm:$0xff]
        %v958 = vld [vmem:[#allocation13 + $0x20] sm:$0xff]
        %v959 = vld [vmem:[#allocation13 + $0x28] sm:$0xff]
        %v960 = vld [vmem:[#allocation13 + $0x30] sm:$0xff]
        %v961 = vld [vmem:[#allocation13 + $0x38] sm:$0xff]
        %v963 = vsel %vm429, %v775, 0
        %965 = vmatprep.subr.mxu0 0.0
        %966 = vmatpush1.msra.mxu0 0.0
        %967 = vmatprep.subr.mxu0 0.0
        %968 = vmatpush1.msra.mxu0 0.0
        %969 = vmatprep.subr.mxu0 0.0
        %970 = vmatpush1.msra.mxu0 0.0
        %971 = vmatprep.subr.mxu0 0.0
        %972 = vmatpush1.msra.mxu0 0.0
        %973 = vmatprep.subr.mxu0 0.0
        %974 = vmatpush1.msra.mxu0 0.0
        %975 = vmatprep.subr.mxu0 0.0
        %976 = vmatpush1.msra.mxu0 0.0
        %977 = vmatprep.subr.mxu0 0.0
        %978 = vmatpush1.msra.mxu0 0.0
        %979 = vmatprep.subr.mxu0 0.0
        %980 = vmatpush1.msra.mxu0 0.0
        %981 = vmatprep.subr.mxu0 0.0
        %982 = vmatpush1.msra.mxu0 0.0
        %983 = vmatprep.subr.mxu0 0.0
        %984 = vmatpush1.msra.mxu0 0.0
        %985 = vmatprep.subr.mxu0 0.0
        %986 = vmatpush1.msra.mxu0 0.0
        %987 = vmatprep.subr.mxu0 0.0
        %988 = vmatpush1.msra.mxu0 0.0
        %989 = vmatprep.subr.mxu0 %v961
        %990 = vmatpush1.msra.mxu0 %v960
        %991 = vmatprep.subr.mxu0 %v959
        %992 = vmatpush1.msra.mxu0 %v958
        %993 = vmatprep.subr.mxu0 %v957
        %994 = vmatpush1.msra.mxu0 %v956
        %995 = vmatprep.subr.mxu0 %v955
        %996 = vmatpush1.msra.mxu0 %v954
        %997 = vmatprep.subr.mxu0 0.0
        %998 = vmatpush2.msra.mxu0 0.0
        %999 = vmatprep.subr.mxu0 0.0
        %1000 = vmatpush2.msra.mxu0 0.0
        %1001 = vmatprep.subr.mxu0 0.0
        %1002 = vmatpush2.msra.mxu0 0.0
        %1003 = vmatprep.subr.mxu0 0.0
        %1004 = vmatpush2.msra.mxu0 0.0
        %1005 = vmatprep.subr.mxu0 0.0
        %1006 = vmatpush2.msra.mxu0 0.0
        %1007 = vmatprep.subr.mxu0 0.0
        %1008 = vmatpush2.msra.mxu0 0.0
        %1009 = vmatprep.subr.mxu0 0.0
        %1010 = vmatpush2.msra.mxu0 0.0
        %1011 = vmatprep.subr.mxu0 0.0
        %1012 = vmatpush2.msra.mxu0 0.0
        %1013 = vmatprep.subr.mxu0 0.0
        %1014 = vmatpush2.msra.mxu0 0.0
        %1015 = vmatprep.subr.mxu0 0.0
        %1016 = vmatpush2.msra.mxu0 0.0
        %1017 = vmatprep.subr.mxu0 0.0
        %1018 = vmatpush2.msra.mxu0 0.0
        %1019 = vmatprep.subr.mxu0 0.0
        %1020 = vmatpush2.msra.mxu0 0.0
        %1021 = vmatprep.subr.mxu0 0.0
        %1022 = vmatpush2.msra.mxu0 0.0
        %1023 = vmatprep.subr.mxu0 0.0
        %1024 = vmatpush2.msra.mxu0 0.0
        %1025 = vmatprep.subr.mxu0 0.0
        %1026 = vmatpush2.msra.mxu0 0.0
        %1027 = vmatprep.subr.mxu0 0.0
        %1028 = vmatpush2.msra.mxu0 0.0
        %1029 = vmatprep.mubr.f32.mxu0 0.0
        %1030 = vmatmul.mubr.f32.gmra.mxu0 %v963
        %v1031 = vpop.f32.mrf.mxu0
        %v1032 = vadd.f32 0.0, %v1031
        %v1033 = vpop.f32.mrf.mxu0
        %v1034 = vadd.f32 0.0, %v1033
        %1035 = vdwg.mxu0
        %v1036 = vadd.f32 %v950, %v1032
        %v1037 = vadd.f32 %v952, %v1034
        %v1038 = vld [vmem:[%s6] ss:$4 sm:$0x3]
        %v1040 = vlaneseq
        %v1041 = vshrl.u32 %v1040, 7
        %v1042 = vsub.s32 0, %v1041
        %v1043 = vrot.slane %v1038, %v1042
        %v1044 = vlaneseq
        %v1045 = vshrl.u32 %v1044, 7
        %v1046 = vsub.s32 1, %v1045
        %v1047 = vrot.slane %v1038, %v1046
        %v1050 = vadd.f32 %v1036, %v1043
        %v1051 = vadd.f32 %v1037, %v1047
        %v1052 = vld [vmem:[%s677] ss:$4 sm:$0x3]
        %v1053 = vmul.f32 %v770, %v1052
        %v1055 = vlaneseq
        %v1056 = vshrl.u32 %v1055, 7
        %v1057 = vsub.s32 0, %v1056
        %v1058 = vrot.slane %v1053, %v1057
        %v1059 = vlaneseq
        %v1060 = vshrl.u32 %v1059, 7
        %v1061 = vsub.s32 1, %v1060
        %v1062 = vrot.slane %v1053, %v1061
        %v1065 = vadd.f32 %v1050, %v1058
        %v1066 = vadd.f32 %v1051, %v1062
        %v1067 = vld [vmem:[%s693] ss:$4 sm:$0x3]
        %v1068 = vmul.f32 %v774, %v1067
        %v1070 = vlaneseq
        %v1071 = vshrl.u32 %v1070, 7
        %v1072 = vsub.s32 0, %v1071
        %v1073 = vrot.slane %v1068, %v1072
        %v1074 = vlaneseq
        %v1075 = vshrl.u32 %v1074, 7
        %v1076 = vsub.s32 1, %v1075
        %v1077 = vrot.slane %v1068, %v1076
        %v1080 = vadd.f32 %v1065, %v1073
        %v1081 = vadd.f32 %v1066, %v1077
        %v1082 = vxor.u32 %v1080, 2147483648
        %v1083 = vmul.f32 %v1082, 1.442695
        %v1084 = vpow.pop %v1083
        %v1085 = vadd.f32 %v1084, 1.0
        %v1086 = vrcp.pop %v1085
        %v1087 = vmul.f32 1.0, %v1086
        %v1088 = vtanh.pop %v1081
        %v1089 = vmul.f32 %v1087, %v1088
        %1091 = vrot.lane.b32.xlu0 %v778, 64
        %v1092 = vpop.permute.xlu0 %1091
        %v1094 = vmul.f32 %v1087, %v1092
        %1096 = vrot.lane.b32.xlu0 %v1094, 64
        %v1097 = vpop.permute.xlu0 %1096
        %v1099 = vadd.f32 %v1089, %v1097
        %1101 = vrot.lane.b32.xlu0 %v781, 96
        %v1102 = vpop.permute.xlu0 %1101
        %v1104 = vmul.f32 %v1087, %v1102
        %1106 = vrot.lane.b32.xlu0 %v1104, 32
        %v1107 = vpop.permute.xlu0 %1106
        %v1109 = vadd.f32 %v1099, %v1107
        %v1110 = vtanh.pop %v1109
        %1112 = vrot.lane.b32.xlu0 %v1110, 32
        %v1113 = vpop.permute.xlu0 %1112
        %v1115 = vmul.f32 %v1087, %v1113
        %s1116 = scalar_lea.vmem [#allocation3], %s755
        %1117 = vst.msk [vmem:[%s1116] sm:$0x1] %vm744, %v1109
        %1119 = vrot.lane.b32.xlu0 %v1115, 96
        %v1120 = vpop.permute.xlu0 %1119
        %s1122 = scalar_lea.vmem [#allocation2], %s755
        %1123 = vst.msk [vmem:[%s1122] sm:$0x1] %vm744, %v1120
        %s1124 = sadd.s32 %s752, 2
        %s1125 = smul.u32 %s1124, 5
        %s1126 = sld [smem:[#allocation7 + %s1125]]
        %s1127 = sadd.s32 %s1125, 1
        %s1128 = sld [smem:[#allocation7 + %s1127]]
        %s1129 = sadd.s32 %s1125, 2
        %s1130 = sld [smem:[#allocation7 + %s1129]]
        %s1131 = sadd.s32 %s1125, 3
        %s1132 = sld [smem:[#allocation7 + %s1131]]
        %s1133 = scvt.s32.f32 %s1132
        %s1134 = sadd.s32 %s1125, 4
        %s1135 = sld [smem:[#allocation7 + %s1134]]
        %s1136 = scvt.s32.f32 %s1135
        %s1137 = scalar_lea.vmem %s367, %s1126
        %v1138 = vld [vmem:[%s1137] sm:$0x1]
        %s1139 = scalar_lea.vmem [#allocation2], %s1128
        %v1140 = vld [vmem:[%s1139] sm:$0x1]
        %v1141 = vstv %s1133
        %v1142 = vmul.f32 %v1140, %v1141
        %s1143 = scalar_lea.vmem [#allocation2], %s1130
        %v1144 = vld [vmem:[%s1143] sm:$0x1]
        %v1145 = vstv %s1136
        %v1146 = vmul.f32 %v1144, %v1145
        %s1147 = scalar_lea.vmem [#allocation3], %s1128
        %v1148 = vld [vmem:[%s1147] sm:$0x1]
        %v1149 = vmul.f32 %v1148, %v1141
        %s1150 = scalar_lea.vmem [#allocation3], %s1130
        %v1151 = vld [vmem:[%s1150] sm:$0x1]
        %v1152 = vmul.f32 %v1151, %v1145
        %v1153 = vld [vmem:[#allocation9] sm:$0xff]
        %v1154 = vld [vmem:[#allocation9 + $0x8] sm:$0xff]
        %v1155 = vld [vmem:[#allocation9 + $0x10] sm:$0xff]
        %v1156 = vld [vmem:[#allocation9 + $0x18] sm:$0xff]
        %v1157 = vld [vmem:[#allocation9 + $0x20] sm:$0xff]
        %v1158 = vld [vmem:[#allocation9 + $0x28] sm:$0xff]
        %v1159 = vld [vmem:[#allocation9 + $0x30] sm:$0xff]
        %v1160 = vld [vmem:[#allocation9 + $0x38] sm:$0xff]
        %v1161 = vld [vmem:[#allocation9 + $0x40] sm:$0xff]
        %v1162 = vld [vmem:[#allocation9 + $0x48] sm:$0xff]
        %v1163 = vld [vmem:[#allocation9 + $0x50] sm:$0xff]
        %v1164 = vld [vmem:[#allocation9 + $0x58] sm:$0xff]
        %v1165 = vld [vmem:[#allocation9 + $0x60] sm:$0xff]
        %v1166 = vld [vmem:[#allocation9 + $0x68] sm:$0xff]
        %v1167 = vld [vmem:[#allocation9 + $0x70] sm:$0xff]
        %v1168 = vld [vmem:[#allocation9 + $0x78] sm:$0xff]
        %v1169 = vld [vmem:[#allocation11] sm:$0xff]
        %v1170 = vld [vmem:[#allocation11 + $0x8] sm:$0xff]
        %v1171 = vld [vmem:[#allocation11 + $0x10] sm:$0xff]
        %v1172 = vld [vmem:[#allocation11 + $0x18] sm:$0xff]
        %v1173 = vld [vmem:[#allocation11 + $0x20] sm:$0xff]
        %v1174 = vld [vmem:[#allocation11 + $0x28] sm:$0xff]
        %v1175 = vld [vmem:[#allocation11 + $0x30] sm:$0xff]
        %v1176 = vld [vmem:[#allocation11 + $0x38] sm:$0xff]
        %v1178 = vsel %vm429, %v1142, 0
        %1180 = vmatprep.subr.mxu0 0.0
        %1181 = vmatpush1.msra.mxu0 0.0
        %1182 = vmatprep.subr.mxu0 0.0
        %1183 = vmatpush1.msra.mxu0 0.0
        %1184 = vmatprep.subr.mxu0 0.0
        %1185 = vmatpush1.msra.mxu0 0.0
        %1186 = vmatprep.subr.mxu0 0.0
        %1187 = vmatpush1.msra.mxu0 0.0
        %1188 = vmatprep.subr.mxu0 0.0
        %1189 = vmatpush1.msra.mxu0 0.0
        %1190 = vmatprep.subr.mxu0 0.0
        %1191 = vmatpush1.msra.mxu0 0.0
        %1192 = vmatprep.subr.mxu0 0.0
        %1193 = vmatpush1.msra.mxu0 0.0
        %1194 = vmatprep.subr.mxu0 0.0
        %1195 = vmatpush1.msra.mxu0 0.0
        %1196 = vmatprep.subr.mxu0 0.0
        %1197 = vmatpush1.msra.mxu0 0.0
        %1198 = vmatprep.subr.mxu0 0.0
        %1199 = vmatpush1.msra.mxu0 0.0
        %1200 = vmatprep.subr.mxu0 0.0
        %1201 = vmatpush1.msra.mxu0 0.0
        %1202 = vmatprep.subr.mxu0 0.0
        %1203 = vmatpush1.msra.mxu0 0.0
        %1204 = vmatprep.subr.mxu0 %v1176
        %1205 = vmatpush1.msra.mxu0 %v1175
        %1206 = vmatprep.subr.mxu0 %v1174
        %1207 = vmatpush1.msra.mxu0 %v1173
        %1208 = vmatprep.subr.mxu0 %v1172
        %1209 = vmatpush1.msra.mxu0 %v1171
        %1210 = vmatprep.subr.mxu0 %v1170
        %1211 = vmatpush1.msra.mxu0 %v1169
        %1212 = vmatprep.subr.mxu0 0.0
        %1213 = vmatpush2.msra.mxu0 0.0
        %1214 = vmatprep.subr.mxu0 0.0
        %1215 = vmatpush2.msra.mxu0 0.0
        %1216 = vmatprep.subr.mxu0 0.0
        %1217 = vmatpush2.msra.mxu0 0.0
        %1218 = vmatprep.subr.mxu0 0.0
        %1219 = vmatpush2.msra.mxu0 0.0
        %1220 = vmatprep.subr.mxu0 0.0
        %1221 = vmatpush2.msra.mxu0 0.0
        %1222 = vmatprep.subr.mxu0 0.0
        %1223 = vmatpush2.msra.mxu0 0.0
        %1224 = vmatprep.subr.mxu0 0.0
        %1225 = vmatpush2.msra.mxu0 0.0
        %1226 = vmatprep.subr.mxu0 0.0
        %1227 = vmatpush2.msra.mxu0 0.0
        %1228 = vmatprep.subr.mxu0 0.0
        %1229 = vmatpush2.msra.mxu0 0.0
        %1230 = vmatprep.subr.mxu0 0.0
        %1231 = vmatpush2.msra.mxu0 0.0
        %1232 = vmatprep.subr.mxu0 0.0
        %1233 = vmatpush2.msra.mxu0 0.0
        %1234 = vmatprep.subr.mxu0 0.0
        %1235 = vmatpush2.msra.mxu0 0.0
        %1236 = vmatprep.subr.mxu0 0.0
        %1237 = vmatpush2.msra.mxu0 0.0
        %1238 = vmatprep.subr.mxu0 0.0
        %1239 = vmatpush2.msra.mxu0 0.0
        %1240 = vmatprep.subr.mxu0 0.0
        %1241 = vmatpush2.msra.mxu0 0.0
        %1242 = vmatprep.subr.mxu0 0.0
        %1243 = vmatpush2.msra.mxu0 0.0
        %1244 = vmatprep.mubr.f32.mxu0 0.0
        %1245 = vmatmul.mubr.f32.gmra.mxu0 %v1178
        %v1246 = vpop.f32.mrf.mxu0
        %v1247 = vadd.f32 0.0, %v1246
        %v1248 = vpop.f32.mrf.mxu0
        %v1249 = vadd.f32 0.0, %v1248
        %1250 = vdwg.mxu0
        %v1252 = vsel %vm504, %v1138, 0
        %1254 = vmatprep.subr.mxu0 0.0
        %1255 = vmatpush1.msra.mxu0 0.0
        %1256 = vmatprep.subr.mxu0 0.0
        %1257 = vmatpush1.msra.mxu0 0.0
        %1258 = vmatprep.subr.mxu0 0.0
        %1259 = vmatpush1.msra.mxu0 0.0
        %1260 = vmatprep.subr.mxu0 0.0
        %1261 = vmatpush1.msra.mxu0 0.0
        %1262 = vmatprep.subr.mxu0 0.0
        %1263 = vmatpush1.msra.mxu0 0.0
        %1264 = vmatprep.subr.mxu0 0.0
        %1265 = vmatpush1.msra.mxu0 0.0
        %1266 = vmatprep.subr.mxu0 0.0
        %1267 = vmatpush1.msra.mxu0 0.0
        %1268 = vmatprep.subr.mxu0 0.0
        %1269 = vmatpush1.msra.mxu0 0.0
        %1270 = vmatprep.subr.mxu0 %v1168
        %1271 = vmatpush1.msra.mxu0 %v1167
        %1272 = vmatprep.subr.mxu0 %v1166
        %1273 = vmatpush1.msra.mxu0 %v1165
        %1274 = vmatprep.subr.mxu0 %v1164
        %1275 = vmatpush1.msra.mxu0 %v1163
        %1276 = vmatprep.subr.mxu0 %v1162
        %1277 = vmatpush1.msra.mxu0 %v1161
        %1278 = vmatprep.subr.mxu0 %v1160
        %1279 = vmatpush1.msra.mxu0 %v1159
        %1280 = vmatprep.subr.mxu0 %v1158
        %1281 = vmatpush1.msra.mxu0 %v1157
        %1282 = vmatprep.subr.mxu0 %v1156
        %1283 = vmatpush1.msra.mxu0 %v1155
        %1284 = vmatprep.subr.mxu0 %v1154
        %1285 = vmatpush1.msra.mxu0 %v1153
        %1286 = vmatprep.subr.mxu0 0.0
        %1287 = vmatpush2.msra.mxu0 0.0
        %1288 = vmatprep.subr.mxu0 0.0
        %1289 = vmatpush2.msra.mxu0 0.0
        %1290 = vmatprep.subr.mxu0 0.0
        %1291 = vmatpush2.msra.mxu0 0.0
        %1292 = vmatprep.subr.mxu0 0.0
        %1293 = vmatpush2.msra.mxu0 0.0
        %1294 = vmatprep.subr.mxu0 0.0
        %1295 = vmatpush2.msra.mxu0 0.0
        %1296 = vmatprep.subr.mxu0 0.0
        %1297 = vmatpush2.msra.mxu0 0.0
        %1298 = vmatprep.subr.mxu0 0.0
        %1299 = vmatpush2.msra.mxu0 0.0
        %1300 = vmatprep.subr.mxu0 0.0
        %1301 = vmatpush2.msra.mxu0 0.0
        %1302 = vmatprep.subr.mxu0 0.0
        %1303 = vmatpush2.msra.mxu0 0.0
        %1304 = vmatprep.subr.mxu0 0.0
        %1305 = vmatpush2.msra.mxu0 0.0
        %1306 = vmatprep.subr.mxu0 0.0
        %1307 = vmatpush2.msra.mxu0 0.0
        %1308 = vmatprep.subr.mxu0 0.0
        %1309 = vmatpush2.msra.mxu0 0.0
        %1310 = vmatprep.subr.mxu0 0.0
        %1311 = vmatpush2.msra.mxu0 0.0
        %1312 = vmatprep.subr.mxu0 0.0
        %1313 = vmatpush2.msra.mxu0 0.0
        %1314 = vmatprep.subr.mxu0 0.0
        %1315 = vmatpush2.msra.mxu0 0.0
        %1316 = vmatprep.subr.mxu0 0.0
        %1317 = vmatpush2.msra.mxu0 0.0
        %1318 = vmatprep.mubr.f32.mxu0 0.0
        %1319 = vmatmul.mubr.f32.gmra.mxu0 %v1252
        %v1320 = vpop.f32.mrf.mxu0
        %v1321 = vadd.f32 %v1247, %v1320
        %v1322 = vpop.f32.mrf.mxu0
        %v1323 = vadd.f32 %v1249, %v1322
        %1324 = vdwg.mxu0
        %v1325 = vld [vmem:[#allocation13] sm:$0xff]
        %v1326 = vld [vmem:[#allocation13 + $0x8] sm:$0xff]
        %v1327 = vld [vmem:[#allocation13 + $0x10] sm:$0xff]
        %v1328 = vld [vmem:[#allocation13 + $0x18] sm:$0xff]
        %v1329 = vld [vmem:[#allocation13 + $0x20] sm:$0xff]
        %v1330 = vld [vmem:[#allocation13 + $0x28] sm:$0xff]
        %v1331 = vld [vmem:[#allocation13 + $0x30] sm:$0xff]
        %v1332 = vld [vmem:[#allocation13 + $0x38] sm:$0xff]
        %v1334 = vsel %vm429, %v1146, 0
        %1336 = vmatprep.subr.mxu0 0.0
        %1337 = vmatpush1.msra.mxu0 0.0
        %1338 = vmatprep.subr.mxu0 0.0
        %1339 = vmatpush1.msra.mxu0 0.0
        %1340 = vmatprep.subr.mxu0 0.0
        %1341 = vmatpush1.msra.mxu0 0.0
        %1342 = vmatprep.subr.mxu0 0.0
        %1343 = vmatpush1.msra.mxu0 0.0
        %1344 = vmatprep.subr.mxu0 0.0
        %1345 = vmatpush1.msra.mxu0 0.0
        %1346 = vmatprep.subr.mxu0 0.0
        %1347 = vmatpush1.msra.mxu0 0.0
        %1348 = vmatprep.subr.mxu0 0.0
        %1349 = vmatpush1.msra.mxu0 0.0
        %1350 = vmatprep.subr.mxu0 0.0
        %1351 = vmatpush1.msra.mxu0 0.0
        %1352 = vmatprep.subr.mxu0 0.0
        %1353 = vmatpush1.msra.mxu0 0.0
        %1354 = vmatprep.subr.mxu0 0.0
        %1355 = vmatpush1.msra.mxu0 0.0
        %1356 = vmatprep.subr.mxu0 0.0
        %1357 = vmatpush1.msra.mxu0 0.0
        %1358 = vmatprep.subr.mxu0 0.0
        %1359 = vmatpush1.msra.mxu0 0.0
        %1360 = vmatprep.subr.mxu0 %v1332
        %1361 = vmatpush1.msra.mxu0 %v1331
        %1362 = vmatprep.subr.mxu0 %v1330
        %1363 = vmatpush1.msra.mxu0 %v1329
        %1364 = vmatprep.subr.mxu0 %v1328
        %1365 = vmatpush1.msra.mxu0 %v1327
        %1366 = vmatprep.subr.mxu0 %v1326
        %1367 = vmatpush1.msra.mxu0 %v1325
        %1368 = vmatprep.subr.mxu0 0.0
        %1369 = vmatpush2.msra.mxu0 0.0
        %1370 = vmatprep.subr.mxu0 0.0
        %1371 = vmatpush2.msra.mxu0 0.0
        %1372 = vmatprep.subr.mxu0 0.0
        %1373 = vmatpush2.msra.mxu0 0.0
        %1374 = vmatprep.subr.mxu0 0.0
        %1375 = vmatpush2.msra.mxu0 0.0
        %1376 = vmatprep.subr.mxu0 0.0
        %1377 = vmatpush2.msra.mxu0 0.0
        %1378 = vmatprep.subr.mxu0 0.0
        %1379 = vmatpush2.msra.mxu0 0.0
        %1380 = vmatprep.subr.mxu0 0.0
        %1381 = vmatpush2.msra.mxu0 0.0
        %1382 = vmatprep.subr.mxu0 0.0
        %1383 = vmatpush2.msra.mxu0 0.0
        %1384 = vmatprep.subr.mxu0 0.0
        %1385 = vmatpush2.msra.mxu0 0.0
        %1386 = vmatprep.subr.mxu0 0.0
        %1387 = vmatpush2.msra.mxu0 0.0
        %1388 = vmatprep.subr.mxu0 0.0
        %1389 = vmatpush2.msra.mxu0 0.0
        %1390 = vmatprep.subr.mxu0 0.0
        %1391 = vmatpush2.msra.mxu0 0.0
        %1392 = vmatprep.subr.mxu0 0.0
        %1393 = vmatpush2.msra.mxu0 0.0
        %1394 = vmatprep.subr.mxu0 0.0
        %1395 = vmatpush2.msra.mxu0 0.0
        %1396 = vmatprep.subr.mxu0 0.0
        %1397 = vmatpush2.msra.mxu0 0.0
        %1398 = vmatprep.subr.mxu0 0.0
        %1399 = vmatpush2.msra.mxu0 0.0
        %1400 = vmatprep.mubr.f32.mxu0 0.0
        %1401 = vmatmul.mubr.f32.gmra.mxu0 %v1334
        %v1402 = vpop.f32.mrf.mxu0
        %v1403 = vadd.f32 0.0, %v1402
        %v1404 = vpop.f32.mrf.mxu0
        %v1405 = vadd.f32 0.0, %v1404
        %1406 = vdwg.mxu0
        %v1407 = vadd.f32 %v1321, %v1403
        %v1408 = vadd.f32 %v1323, %v1405
        %v1409 = vld [vmem:[%s6] ss:$4 sm:$0x3]
        %v1411 = vlaneseq
        %v1412 = vshrl.u32 %v1411, 7
        %v1413 = vsub.s32 0, %v1412
        %v1414 = vrot.slane %v1409, %v1413
        %v1415 = vlaneseq
        %v1416 = vshrl.u32 %v1415, 7
        %v1417 = vsub.s32 1, %v1416
        %v1418 = vrot.slane %v1409, %v1417
        %v1421 = vadd.f32 %v1407, %v1414
        %v1422 = vadd.f32 %v1408, %v1418
        %v1423 = vld [vmem:[%s677] ss:$4 sm:$0x3]
        %v1424 = vmul.f32 %v1141, %v1423
        %v1426 = vlaneseq
        %v1427 = vshrl.u32 %v1426, 7
        %v1428 = vsub.s32 0, %v1427
        %v1429 = vrot.slane %v1424, %v1428
        %v1430 = vlaneseq
        %v1431 = vshrl.u32 %v1430, 7
        %v1432 = vsub.s32 1, %v1431
        %v1433 = vrot.slane %v1424, %v1432
        %v1436 = vadd.f32 %v1421, %v1429
        %v1437 = vadd.f32 %v1422, %v1433
        %v1438 = vld [vmem:[%s693] ss:$4 sm:$0x3]
        %v1439 = vmul.f32 %v1145, %v1438
        %v1441 = vlaneseq
        %v1442 = vshrl.u32 %v1441, 7
        %v1443 = vsub.s32 0, %v1442
        %v1444 = vrot.slane %v1439, %v1443
        %v1445 = vlaneseq
        %v1446 = vshrl.u32 %v1445, 7
        %v1447 = vsub.s32 1, %v1446
        %v1448 = vrot.slane %v1439, %v1447
        %v1451 = vadd.f32 %v1436, %v1444
        %v1452 = vadd.f32 %v1437, %v1448
        %v1453 = vxor.u32 %v1451, 2147483648
        %v1454 = vmul.f32 %v1453, 1.442695
        %v1455 = vpow.pop %v1454
        %v1456 = vadd.f32 %v1455, 1.0
        %v1457 = vrcp.pop %v1456
        %v1458 = vmul.f32 1.0, %v1457
        %v1459 = vtanh.pop %v1452
        %v1460 = vmul.f32 %v1458, %v1459
        %1462 = vrot.lane.b32.xlu0 %v1149, 64
        %v1463 = vpop.permute.xlu0 %1462
        %v1465 = vmul.f32 %v1458, %v1463
        %1467 = vrot.lane.b32.xlu0 %v1465, 64
        %v1468 = vpop.permute.xlu0 %1467
        %v1470 = vadd.f32 %v1460, %v1468
        %1472 = vrot.lane.b32.xlu0 %v1152, 96
        %v1473 = vpop.permute.xlu0 %1472
        %v1475 = vmul.f32 %v1458, %v1473
        %1477 = vrot.lane.b32.xlu0 %v1475, 32
        %v1478 = vpop.permute.xlu0 %1477
        %v1480 = vadd.f32 %v1470, %v1478
        %v1481 = vtanh.pop %v1480
        %1483 = vrot.lane.b32.xlu0 %v1481, 32
        %v1484 = vpop.permute.xlu0 %1483
        %v1486 = vmul.f32 %v1458, %v1484
        %s1487 = scalar_lea.vmem [#allocation3], %s1126
        %1488 = vst.msk [vmem:[%s1487] sm:$0x1] %vm744, %v1480
        %1490 = vrot.lane.b32.xlu0 %v1486, 96
        %v1491 = vpop.permute.xlu0 %1490
        %s1493 = scalar_lea.vmem [#allocation2], %s1126
        %1494 = vst.msk [vmem:[%s1493] sm:$0x1] %vm744, %v1491
        %s1495 = sadd.s32 %s752, 3
        %s1496 = smul.u32 %s1495, 5
        %s1497 = sld [smem:[#allocation7 + %s1496]]
        %s1498 = sadd.s32 %s1496, 1
        %s1499 = sld [smem:[#allocation7 + %s1498]]
        %s1500 = sadd.s32 %s1496, 2
        %s1501 = sld [smem:[#allocation7 + %s1500]]
        %s1502 = sadd.s32 %s1496, 3
        %s1503 = sld [smem:[#allocation7 + %s1502]]
        %s1504 = scvt.s32.f32 %s1503
        %s1505 = sadd.s32 %s1496, 4
        %s1506 = sld [smem:[#allocation7 + %s1505]]
        %s1507 = scvt.s32.f32 %s1506
        %s1508 = scalar_lea.vmem %s367, %s1497
        %v1509 = vld [vmem:[%s1508] sm:$0x1]
        %s1510 = scalar_lea.vmem [#allocation2], %s1499
        %v1511 = vld [vmem:[%s1510] sm:$0x1]
        %v1512 = vstv %s1504
        %v1513 = vmul.f32 %v1511, %v1512
        %s1514 = scalar_lea.vmem [#allocation2], %s1501
        %v1515 = vld [vmem:[%s1514] sm:$0x1]
        %v1516 = vstv %s1507
        %v1517 = vmul.f32 %v1515, %v1516
        %s1518 = scalar_lea.vmem [#allocation3], %s1499
        %v1519 = vld [vmem:[%s1518] sm:$0x1]
        %v1520 = vmul.f32 %v1519, %v1512
        %s1521 = scalar_lea.vmem [#allocation3], %s1501
        %v1522 = vld [vmem:[%s1521] sm:$0x1]
        %v1523 = vmul.f32 %v1522, %v1516
        %v1524 = vld [vmem:[#allocation9] sm:$0xff]
        %v1525 = vld [vmem:[#allocation9 + $0x8] sm:$0xff]
        %v1526 = vld [vmem:[#allocation9 + $0x10] sm:$0xff]
        %v1527 = vld [vmem:[#allocation9 + $0x18] sm:$0xff]
        %v1528 = vld [vmem:[#allocation9 + $0x20] sm:$0xff]
        %v1529 = vld [vmem:[#allocation9 + $0x28] sm:$0xff]
        %v1530 = vld [vmem:[#allocation9 + $0x30] sm:$0xff]
        %v1531 = vld [vmem:[#allocation9 + $0x38] sm:$0xff]
        %v1532 = vld [vmem:[#allocation9 + $0x40] sm:$0xff]
        %v1533 = vld [vmem:[#allocation9 + $0x48] sm:$0xff]
        %v1534 = vld [vmem:[#allocation9 + $0x50] sm:$0xff]
        %v1535 = vld [vmem:[#allocation9 + $0x58] sm:$0xff]
        %v1536 = vld [vmem:[#allocation9 + $0x60] sm:$0xff]
        %v1537 = vld [vmem:[#allocation9 + $0x68] sm:$0xff]
        %v1538 = vld [vmem:[#allocation9 + $0x70] sm:$0xff]
        %v1539 = vld [vmem:[#allocation9 + $0x78] sm:$0xff]
        %v1540 = vld [vmem:[#allocation11] sm:$0xff]
        %v1541 = vld [vmem:[#allocation11 + $0x8] sm:$0xff]
        %v1542 = vld [vmem:[#allocation11 + $0x10] sm:$0xff]
        %v1543 = vld [vmem:[#allocation11 + $0x18] sm:$0xff]
        %v1544 = vld [vmem:[#allocation11 + $0x20] sm:$0xff]
        %v1545 = vld [vmem:[#allocation11 + $0x28] sm:$0xff]
        %v1546 = vld [vmem:[#allocation11 + $0x30] sm:$0xff]
        %v1547 = vld [vmem:[#allocation11 + $0x38] sm:$0xff]
        %v1549 = vsel %vm429, %v1513, 0
        %1551 = vmatprep.subr.mxu0 0.0
        %1552 = vmatpush1.msra.mxu0 0.0
        %1553 = vmatprep.subr.mxu0 0.0
        %1554 = vmatpush1.msra.mxu0 0.0
        %1555 = vmatprep.subr.mxu0 0.0
        %1556 = vmatpush1.msra.mxu0 0.0
        %1557 = vmatprep.subr.mxu0 0.0
        %1558 = vmatpush1.msra.mxu0 0.0
        %1559 = vmatprep.subr.mxu0 0.0
        %1560 = vmatpush1.msra.mxu0 0.0
        %1561 = vmatprep.subr.mxu0 0.0
        %1562 = vmatpush1.msra.mxu0 0.0
        %1563 = vmatprep.subr.mxu0 0.0
        %1564 = vmatpush1.msra.mxu0 0.0
        %1565 = vmatprep.subr.mxu0 0.0
        %1566 = vmatpush1.msra.mxu0 0.0
        %1567 = vmatprep.subr.mxu0 0.0
        %1568 = vmatpush1.msra.mxu0 0.0
        %1569 = vmatprep.subr.mxu0 0.0
        %1570 = vmatpush1.msra.mxu0 0.0
        %1571 = vmatprep.subr.mxu0 0.0
        %1572 = vmatpush1.msra.mxu0 0.0
        %1573 = vmatprep.subr.mxu0 0.0
        %1574 = vmatpush1.msra.mxu0 0.0
        %1575 = vmatprep.subr.mxu0 %v1547
        %1576 = vmatpush1.msra.mxu0 %v1546
        %1577 = vmatprep.subr.mxu0 %v1545
        %1578 = vmatpush1.msra.mxu0 %v1544
        %1579 = vmatprep.subr.mxu0 %v1543
        %1580 = vmatpush1.msra.mxu0 %v1542
        %1581 = vmatprep.subr.mxu0 %v1541
        %1582 = vmatpush1.msra.mxu0 %v1540
        %1583 = vmatprep.subr.mxu0 0.0
        %1584 = vmatpush2.msra.mxu0 0.0
        %1585 = vmatprep.subr.mxu0 0.0
        %1586 = vmatpush2.msra.mxu0 0.0
        %1587 = vmatprep.subr.mxu0 0.0
        %1588 = vmatpush2.msra.mxu0 0.0
        %1589 = vmatprep.subr.mxu0 0.0
        %1590 = vmatpush2.msra.mxu0 0.0
        %1591 = vmatprep.subr.mxu0 0.0
        %1592 = vmatpush2.msra.mxu0 0.0
        %1593 = vmatprep.subr.mxu0 0.0
        %1594 = vmatpush2.msra.mxu0 0.0
        %1595 = vmatprep.subr.mxu0 0.0
        %1596 = vmatpush2.msra.mxu0 0.0
        %1597 = vmatprep.subr.mxu0 0.0
        %1598 = vmatpush2.msra.mxu0 0.0
        %1599 = vmatprep.subr.mxu0 0.0
        %1600 = vmatpush2.msra.mxu0 0.0
        %1601 = vmatprep.subr.mxu0 0.0
        %1602 = vmatpush2.msra.mxu0 0.0
        %1603 = vmatprep.subr.mxu0 0.0
        %1604 = vmatpush2.msra.mxu0 0.0
        %1605 = vmatprep.subr.mxu0 0.0
        %1606 = vmatpush2.msra.mxu0 0.0
        %1607 = vmatprep.subr.mxu0 0.0
        %1608 = vmatpush2.msra.mxu0 0.0
        %1609 = vmatprep.subr.mxu0 0.0
        %1610 = vmatpush2.msra.mxu0 0.0
        %1611 = vmatprep.subr.mxu0 0.0
        %1612 = vmatpush2.msra.mxu0 0.0
        %1613 = vmatprep.subr.mxu0 0.0
        %1614 = vmatpush2.msra.mxu0 0.0
        %1615 = vmatprep.mubr.f32.mxu0 0.0
        %1616 = vmatmul.mubr.f32.gmra.mxu0 %v1549
        %v1617 = vpop.f32.mrf.mxu0
        %v1618 = vadd.f32 0.0, %v1617
        %v1619 = vpop.f32.mrf.mxu0
        %v1620 = vadd.f32 0.0, %v1619
        %1621 = vdwg.mxu0
        %v1623 = vsel %vm504, %v1509, 0
        %1625 = vmatprep.subr.mxu0 0.0
        %1626 = vmatpush1.msra.mxu0 0.0
        %1627 = vmatprep.subr.mxu0 0.0
        %1628 = vmatpush1.msra.mxu0 0.0
        %1629 = vmatprep.subr.mxu0 0.0
        %1630 = vmatpush1.msra.mxu0 0.0
        %1631 = vmatprep.subr.mxu0 0.0
        %1632 = vmatpush1.msra.mxu0 0.0
        %1633 = vmatprep.subr.mxu0 0.0
        %1634 = vmatpush1.msra.mxu0 0.0
        %1635 = vmatprep.subr.mxu0 0.0
        %1636 = vmatpush1.msra.mxu0 0.0
        %1637 = vmatprep.subr.mxu0 0.0
        %1638 = vmatpush1.msra.mxu0 0.0
        %1639 = vmatprep.subr.mxu0 0.0
        %1640 = vmatpush1.msra.mxu0 0.0
        %1641 = vmatprep.subr.mxu0 %v1539
        %1642 = vmatpush1.msra.mxu0 %v1538
        %1643 = vmatprep.subr.mxu0 %v1537
        %1644 = vmatpush1.msra.mxu0 %v1536
        %1645 = vmatprep.subr.mxu0 %v1535
        %1646 = vmatpush1.msra.mxu0 %v1534
        %1647 = vmatprep.subr.mxu0 %v1533
        %1648 = vmatpush1.msra.mxu0 %v1532
        %1649 = vmatprep.subr.mxu0 %v1531
        %1650 = vmatpush1.msra.mxu0 %v1530
        %1651 = vmatprep.subr.mxu0 %v1529
        %1652 = vmatpush1.msra.mxu0 %v1528
        %1653 = vmatprep.subr.mxu0 %v1527
        %1654 = vmatpush1.msra.mxu0 %v1526
        %1655 = vmatprep.subr.mxu0 %v1525
        %1656 = vmatpush1.msra.mxu0 %v1524
        %1657 = vmatprep.subr.mxu0 0.0
        %1658 = vmatpush2.msra.mxu0 0.0
        %1659 = vmatprep.subr.mxu0 0.0
        %1660 = vmatpush2.msra.mxu0 0.0
        %1661 = vmatprep.subr.mxu0 0.0
        %1662 = vmatpush2.msra.mxu0 0.0
        %1663 = vmatprep.subr.mxu0 0.0
        %1664 = vmatpush2.msra.mxu0 0.0
        %1665 = vmatprep.subr.mxu0 0.0
        %1666 = vmatpush2.msra.mxu0 0.0
        %1667 = vmatprep.subr.mxu0 0.0
        %1668 = vmatpush2.msra.mxu0 0.0
        %1669 = vmatprep.subr.mxu0 0.0
        %1670 = vmatpush2.msra.mxu0 0.0
        %1671 = vmatprep.subr.mxu0 0.0
        %1672 = vmatpush2.msra.mxu0 0.0
        %1673 = vmatprep.subr.mxu0 0.0
        %1674 = vmatpush2.msra.mxu0 0.0
        %1675 = vmatprep.subr.mxu0 0.0
        %1676 = vmatpush2.msra.mxu0 0.0
        %1677 = vmatprep.subr.mxu0 0.0
        %1678 = vmatpush2.msra.mxu0 0.0
        %1679 = vmatprep.subr.mxu0 0.0
        %1680 = vmatpush2.msra.mxu0 0.0
        %1681 = vmatprep.subr.mxu0 0.0
        %1682 = vmatpush2.msra.mxu0 0.0
        %1683 = vmatprep.subr.mxu0 0.0
        %1684 = vmatpush2.msra.mxu0 0.0
        %1685 = vmatprep.subr.mxu0 0.0
        %1686 = vmatpush2.msra.mxu0 0.0
        %1687 = vmatprep.subr.mxu0 0.0
        %1688 = vmatpush2.msra.mxu0 0.0
        %1689 = vmatprep.mubr.f32.mxu0 0.0
        %1690 = vmatmul.mubr.f32.gmra.mxu0 %v1623
        %v1691 = vpop.f32.mrf.mxu0
        %v1692 = vadd.f32 %v1618, %v1691
        %v1693 = vpop.f32.mrf.mxu0
        %v1694 = vadd.f32 %v1620, %v1693
        %1695 = vdwg.mxu0
        %v1696 = vld [vmem:[#allocation13] sm:$0xff]
        %v1697 = vld [vmem:[#allocation13 + $0x8] sm:$0xff]
        %v1698 = vld [vmem:[#allocation13 + $0x10] sm:$0xff]
        %v1699 = vld [vmem:[#allocation13 + $0x18] sm:$0xff]
        %v1700 = vld [vmem:[#allocation13 + $0x20] sm:$0xff]
        %v1701 = vld [vmem:[#allocation13 + $0x28] sm:$0xff]
        %v1702 = vld [vmem:[#allocation13 + $0x30] sm:$0xff]
        %v1703 = vld [vmem:[#allocation13 + $0x38] sm:$0xff]
        %v1705 = vsel %vm429, %v1517, 0
        %1707 = vmatprep.subr.mxu0 0.0
        %1708 = vmatpush1.msra.mxu0 0.0
        %1709 = vmatprep.subr.mxu0 0.0
        %1710 = vmatpush1.msra.mxu0 0.0
        %1711 = vmatprep.subr.mxu0 0.0
        %1712 = vmatpush1.msra.mxu0 0.0
        %1713 = vmatprep.subr.mxu0 0.0
        %1714 = vmatpush1.msra.mxu0 0.0
        %1715 = vmatprep.subr.mxu0 0.0
        %1716 = vmatpush1.msra.mxu0 0.0
        %1717 = vmatprep.subr.mxu0 0.0
        %1718 = vmatpush1.msra.mxu0 0.0
        %1719 = vmatprep.subr.mxu0 0.0
        %1720 = vmatpush1.msra.mxu0 0.0
        %1721 = vmatprep.subr.mxu0 0.0
        %1722 = vmatpush1.msra.mxu0 0.0
        %1723 = vmatprep.subr.mxu0 0.0
        %1724 = vmatpush1.msra.mxu0 0.0
        %1725 = vmatprep.subr.mxu0 0.0
        %1726 = vmatpush1.msra.mxu0 0.0
        %1727 = vmatprep.subr.mxu0 0.0
        %1728 = vmatpush1.msra.mxu0 0.0
        %1729 = vmatprep.subr.mxu0 0.0
        %1730 = vmatpush1.msra.mxu0 0.0
        %1731 = vmatprep.subr.mxu0 %v1703
        %1732 = vmatpush1.msra.mxu0 %v1702
        %1733 = vmatprep.subr.mxu0 %v1701
        %1734 = vmatpush1.msra.mxu0 %v1700
        %1735 = vmatprep.subr.mxu0 %v1699
        %1736 = vmatpush1.msra.mxu0 %v1698
        %1737 = vmatprep.subr.mxu0 %v1697
        %1738 = vmatpush1.msra.mxu0 %v1696
        %1739 = vmatprep.subr.mxu0 0.0
        %1740 = vmatpush2.msra.mxu0 0.0
        %1741 = vmatprep.subr.mxu0 0.0
        %1742 = vmatpush2.msra.mxu0 0.0
        %1743 = vmatprep.subr.mxu0 0.0
        %1744 = vmatpush2.msra.mxu0 0.0
        %1745 = vmatprep.subr.mxu0 0.0
        %1746 = vmatpush2.msra.mxu0 0.0
        %1747 = vmatprep.subr.mxu0 0.0
        %1748 = vmatpush2.msra.mxu0 0.0
        %1749 = vmatprep.subr.mxu0 0.0
        %1750 = vmatpush2.msra.mxu0 0.0
        %1751 = vmatprep.subr.mxu0 0.0
        %1752 = vmatpush2.msra.mxu0 0.0
        %1753 = vmatprep.subr.mxu0 0.0
        %1754 = vmatpush2.msra.mxu0 0.0
        %1755 = vmatprep.subr.mxu0 0.0
        %1756 = vmatpush2.msra.mxu0 0.0
        %1757 = vmatprep.subr.mxu0 0.0
        %1758 = vmatpush2.msra.mxu0 0.0
        %1759 = vmatprep.subr.mxu0 0.0
        %1760 = vmatpush2.msra.mxu0 0.0
        %1761 = vmatprep.subr.mxu0 0.0
        %1762 = vmatpush2.msra.mxu0 0.0
        %1763 = vmatprep.subr.mxu0 0.0
        %1764 = vmatpush2.msra.mxu0 0.0
        %1765 = vmatprep.subr.mxu0 0.0
        %1766 = vmatpush2.msra.mxu0 0.0
        %1767 = vmatprep.subr.mxu0 0.0
        %1768 = vmatpush2.msra.mxu0 0.0
        %1769 = vmatprep.subr.mxu0 0.0
        %1770 = vmatpush2.msra.mxu0 0.0
        %1771 = vmatprep.mubr.f32.mxu0 0.0
        %1772 = vmatmul.mubr.f32.gmra.mxu0 %v1705
        %v1773 = vpop.f32.mrf.mxu0
        %v1774 = vadd.f32 0.0, %v1773
        %v1775 = vpop.f32.mrf.mxu0
        %v1776 = vadd.f32 0.0, %v1775
        %1777 = vdwg.mxu0
        %v1778 = vadd.f32 %v1692, %v1774
        %v1779 = vadd.f32 %v1694, %v1776
        %v1780 = vld [vmem:[%s6] ss:$4 sm:$0x3]
        %v1782 = vlaneseq
        %v1783 = vshrl.u32 %v1782, 7
        %v1784 = vsub.s32 0, %v1783
        %v1785 = vrot.slane %v1780, %v1784
        %v1786 = vlaneseq
        %v1787 = vshrl.u32 %v1786, 7
        %v1788 = vsub.s32 1, %v1787
        %v1789 = vrot.slane %v1780, %v1788
        %v1792 = vadd.f32 %v1778, %v1785
        %v1793 = vadd.f32 %v1779, %v1789
        %v1794 = vld [vmem:[%s677] ss:$4 sm:$0x3]
        %v1795 = vmul.f32 %v1512, %v1794
        %v1797 = vlaneseq
        %v1798 = vshrl.u32 %v1797, 7
        %v1799 = vsub.s32 0, %v1798
        %v1800 = vrot.slane %v1795, %v1799
        %v1801 = vlaneseq
        %v1802 = vshrl.u32 %v1801, 7
        %v1803 = vsub.s32 1, %v1802
        %v1804 = vrot.slane %v1795, %v1803
        %v1807 = vadd.f32 %v1792, %v1800
        %v1808 = vadd.f32 %v1793, %v1804
        %v1809 = vld [vmem:[%s693] ss:$4 sm:$0x3]
        %v1810 = vmul.f32 %v1516, %v1809
        %v1812 = vlaneseq
        %v1813 = vshrl.u32 %v1812, 7
        %v1814 = vsub.s32 0, %v1813
        %v1815 = vrot.slane %v1810, %v1814
        %v1816 = vlaneseq
        %v1817 = vshrl.u32 %v1816, 7
        %v1818 = vsub.s32 1, %v1817
        %v1819 = vrot.slane %v1810, %v1818
        %v1822 = vadd.f32 %v1807, %v1815
        %v1823 = vadd.f32 %v1808, %v1819
        %v1824 = vxor.u32 %v1822, 2147483648
        %v1825 = vmul.f32 %v1824, 1.442695
        %v1826 = vpow.pop %v1825
        %v1827 = vadd.f32 %v1826, 1.0
        %v1828 = vrcp.pop %v1827
        %v1829 = vmul.f32 1.0, %v1828
        %v1830 = vtanh.pop %v1823
        %v1831 = vmul.f32 %v1829, %v1830
        %1833 = vrot.lane.b32.xlu0 %v1520, 64
        %v1834 = vpop.permute.xlu0 %1833
        %v1836 = vmul.f32 %v1829, %v1834
        %1838 = vrot.lane.b32.xlu0 %v1836, 64
        %v1839 = vpop.permute.xlu0 %1838
        %v1841 = vadd.f32 %v1831, %v1839
        %1843 = vrot.lane.b32.xlu0 %v1523, 96
        %v1844 = vpop.permute.xlu0 %1843
        %v1846 = vmul.f32 %v1829, %v1844
        %1848 = vrot.lane.b32.xlu0 %v1846, 32
        %v1849 = vpop.permute.xlu0 %1848
        %v1851 = vadd.f32 %v1841, %v1849
        %v1852 = vtanh.pop %v1851
        %1854 = vrot.lane.b32.xlu0 %v1852, 32
        %v1855 = vpop.permute.xlu0 %1854
        %v1857 = vmul.f32 %v1829, %v1855
        %s1858 = scalar_lea.vmem [#allocation3], %s1497
        %1859 = vst.msk [vmem:[%s1858] sm:$0x1] %vm744, %v1851
        %1861 = vrot.lane.b32.xlu0 %v1857, 96
        %v1862 = vpop.permute.xlu0 %1861
        %s1864 = scalar_lea.vmem [#allocation2], %s1497
        %1865 = vst.msk [vmem:[%s1864] sm:$0x1] %vm744, %v1862
        %s1866 = sadd.s32 %s752, 4
        %s1867 = smul.u32 %s1866, 5
        %s1868 = sld [smem:[#allocation7 + %s1867]]
        %s1869 = sadd.s32 %s1867, 1
        %s1870 = sld [smem:[#allocation7 + %s1869]]
        %s1871 = sadd.s32 %s1867, 2
        %s1872 = sld [smem:[#allocation7 + %s1871]]
        %s1873 = sadd.s32 %s1867, 3
        %s1874 = sld [smem:[#allocation7 + %s1873]]
        %s1875 = scvt.s32.f32 %s1874
        %s1876 = sadd.s32 %s1867, 4
        %s1877 = sld [smem:[#allocation7 + %s1876]]
        %s1878 = scvt.s32.f32 %s1877
        %s1879 = scalar_lea.vmem %s367, %s1868
        %v1880 = vld [vmem:[%s1879] sm:$0x1]
        %s1881 = scalar_lea.vmem [#allocation2], %s1870
        %v1882 = vld [vmem:[%s1881] sm:$0x1]
        %v1883 = vstv %s1875
        %v1884 = vmul.f32 %v1882, %v1883
        %s1885 = scalar_lea.vmem [#allocation2], %s1872
        %v1886 = vld [vmem:[%s1885] sm:$0x1]
        %v1887 = vstv %s1878
        %v1888 = vmul.f32 %v1886, %v1887
        %s1889 = scalar_lea.vmem [#allocation3], %s1870
        %v1890 = vld [vmem:[%s1889] sm:$0x1]
        %v1891 = vmul.f32 %v1890, %v1883
        %s1892 = scalar_lea.vmem [#allocation3], %s1872
        %v1893 = vld [vmem:[%s1892] sm:$0x1]
        %v1894 = vmul.f32 %v1893, %v1887
        %v1895 = vld [vmem:[#allocation9] sm:$0xff]
        %v1896 = vld [vmem:[#allocation9 + $0x8] sm:$0xff]
        %v1897 = vld [vmem:[#allocation9 + $0x10] sm:$0xff]
        %v1898 = vld [vmem:[#allocation9 + $0x18] sm:$0xff]
        %v1899 = vld [vmem:[#allocation9 + $0x20] sm:$0xff]
        %v1900 = vld [vmem:[#allocation9 + $0x28] sm:$0xff]
        %v1901 = vld [vmem:[#allocation9 + $0x30] sm:$0xff]
        %v1902 = vld [vmem:[#allocation9 + $0x38] sm:$0xff]
        %v1903 = vld [vmem:[#allocation9 + $0x40] sm:$0xff]
        %v1904 = vld [vmem:[#allocation9 + $0x48] sm:$0xff]
        %v1905 = vld [vmem:[#allocation9 + $0x50] sm:$0xff]
        %v1906 = vld [vmem:[#allocation9 + $0x58] sm:$0xff]
        %v1907 = vld [vmem:[#allocation9 + $0x60] sm:$0xff]
        %v1908 = vld [vmem:[#allocation9 + $0x68] sm:$0xff]
        %v1909 = vld [vmem:[#allocation9 + $0x70] sm:$0xff]
        %v1910 = vld [vmem:[#allocation9 + $0x78] sm:$0xff]
        %v1911 = vld [vmem:[#allocation11] sm:$0xff]
        %v1912 = vld [vmem:[#allocation11 + $0x8] sm:$0xff]
        %v1913 = vld [vmem:[#allocation11 + $0x10] sm:$0xff]
        %v1914 = vld [vmem:[#allocation11 + $0x18] sm:$0xff]
        %v1915 = vld [vmem:[#allocation11 + $0x20] sm:$0xff]
        %v1916 = vld [vmem:[#allocation11 + $0x28] sm:$0xff]
        %v1917 = vld [vmem:[#allocation11 + $0x30] sm:$0xff]
        %v1918 = vld [vmem:[#allocation11 + $0x38] sm:$0xff]
        %v1920 = vsel %vm429, %v1884, 0
        %1922 = vmatprep.subr.mxu0 0.0
        %1923 = vmatpush1.msra.mxu0 0.0
        %1924 = vmatprep.subr.mxu0 0.0
        %1925 = vmatpush1.msra.mxu0 0.0
        %1926 = vmatprep.subr.mxu0 0.0
        %1927 = vmatpush1.msra.mxu0 0.0
        %1928 = vmatprep.subr.mxu0 0.0
        %1929 = vmatpush1.msra.mxu0 0.0
        %1930 = vmatprep.subr.mxu0 0.0
        %1931 = vmatpush1.msra.mxu0 0.0
        %1932 = vmatprep.subr.mxu0 0.0
        %1933 = vmatpush1.msra.mxu0 0.0
        %1934 = vmatprep.subr.mxu0 0.0
        %1935 = vmatpush1.msra.mxu0 0.0
        %1936 = vmatprep.subr.mxu0 0.0
        %1937 = vmatpush1.msra.mxu0 0.0
        %1938 = vmatprep.subr.mxu0 0.0
        %1939 = vmatpush1.msra.mxu0 0.0
        %1940 = vmatprep.subr.mxu0 0.0
        %1941 = vmatpush1.msra.mxu0 0.0
        %1942 = vmatprep.subr.mxu0 0.0
        %1943 = vmatpush1.msra.mxu0 0.0
        %1944 = vmatprep.subr.mxu0 0.0
        %1945 = vmatpush1.msra.mxu0 0.0
        %1946 = vmatprep.subr.mxu0 %v1918
        %1947 = vmatpush1.msra.mxu0 %v1917
        %1948 = vmatprep.subr.mxu0 %v1916
        %1949 = vmatpush1.msra.mxu0 %v1915
        %1950 = vmatprep.subr.mxu0 %v1914
        %1951 = vmatpush1.msra.mxu0 %v1913
        %1952 = vmatprep.subr.mxu0 %v1912
        %1953 = vmatpush1.msra.mxu0 %v1911
        %1954 = vmatprep.subr.mxu0 0.0
        %1955 = vmatpush2.msra.mxu0 0.0
        %1956 = vmatprep.subr.mxu0 0.0
        %1957 = vmatpush2.msra.mxu0 0.0
        %1958 = vmatprep.subr.mxu0 0.0
        %1959 = vmatpush2.msra.mxu0 0.0
        %1960 = vmatprep.subr.mxu0 0.0
        %1961 = vmatpush2.msra.mxu0 0.0
        %1962 = vmatprep.subr.mxu0 0.0
        %1963 = vmatpush2.msra.mxu0 0.0
        %1964 = vmatprep.subr.mxu0 0.0
        %1965 = vmatpush2.msra.mxu0 0.0
        %1966 = vmatprep.subr.mxu0 0.0
        %1967 = vmatpush2.msra.mxu0 0.0
        %1968 = vmatprep.subr.mxu0 0.0
        %1969 = vmatpush2.msra.mxu0 0.0
        %1970 = vmatprep.subr.mxu0 0.0
        %1971 = vmatpush2.msra.mxu0 0.0
        %1972 = vmatprep.subr.mxu0 0.0
        %1973 = vmatpush2.msra.mxu0 0.0
        %1974 = vmatprep.subr.mxu0 0.0
        %1975 = vmatpush2.msra.mxu0 0.0
        %1976 = vmatprep.subr.mxu0 0.0
        %1977 = vmatpush2.msra.mxu0 0.0
        %1978 = vmatprep.subr.mxu0 0.0
        %1979 = vmatpush2.msra.mxu0 0.0
        %1980 = vmatprep.subr.mxu0 0.0
        %1981 = vmatpush2.msra.mxu0 0.0
        %1982 = vmatprep.subr.mxu0 0.0
        %1983 = vmatpush2.msra.mxu0 0.0
        %1984 = vmatprep.subr.mxu0 0.0
        %1985 = vmatpush2.msra.mxu0 0.0
        %1986 = vmatprep.mubr.f32.mxu0 0.0
        %1987 = vmatmul.mubr.f32.gmra.mxu0 %v1920
        %v1988 = vpop.f32.mrf.mxu0
        %v1989 = vadd.f32 0.0, %v1988
        %v1990 = vpop.f32.mrf.mxu0
        %v1991 = vadd.f32 0.0, %v1990
        %1992 = vdwg.mxu0
        %v1994 = vsel %vm504, %v1880, 0
        %1996 = vmatprep.subr.mxu0 0.0
        %1997 = vmatpush1.msra.mxu0 0.0
        %1998 = vmatprep.subr.mxu0 0.0
        %1999 = vmatpush1.msra.mxu0 0.0
        %2000 = vmatprep.subr.mxu0 0.0
        %2001 = vmatpush1.msra.mxu0 0.0
        %2002 = vmatprep.subr.mxu0 0.0
        %2003 = vmatpush1.msra.mxu0 0.0
        %2004 = vmatprep.subr.mxu0 0.0
        %2005 = vmatpush1.msra.mxu0 0.0
        %2006 = vmatprep.subr.mxu0 0.0
        %2007 = vmatpush1.msra.mxu0 0.0
        %2008 = vmatprep.subr.mxu0 0.0
        %2009 = vmatpush1.msra.mxu0 0.0
        %2010 = vmatprep.subr.mxu0 0.0
        %2011 = vmatpush1.msra.mxu0 0.0
        %2012 = vmatprep.subr.mxu0 %v1910
        %2013 = vmatpush1.msra.mxu0 %v1909
        %2014 = vmatprep.subr.mxu0 %v1908
        %2015 = vmatpush1.msra.mxu0 %v1907
        %2016 = vmatprep.subr.mxu0 %v1906
        %2017 = vmatpush1.msra.mxu0 %v1905
        %2018 = vmatprep.subr.mxu0 %v1904
        %2019 = vmatpush1.msra.mxu0 %v1903
        %2020 = vmatprep.subr.mxu0 %v1902
        %2021 = vmatpush1.msra.mxu0 %v1901
        %2022 = vmatprep.subr.mxu0 %v1900
        %2023 = vmatpush1.msra.mxu0 %v1899
        %2024 = vmatprep.subr.mxu0 %v1898
        %2025 = vmatpush1.msra.mxu0 %v1897
        %2026 = vmatprep.subr.mxu0 %v1896
        %2027 = vmatpush1.msra.mxu0 %v1895
        %2028 = vmatprep.subr.mxu0 0.0
        %2029 = vmatpush2.msra.mxu0 0.0
        %2030 = vmatprep.subr.mxu0 0.0
        %2031 = vmatpush2.msra.mxu0 0.0
        %2032 = vmatprep.subr.mxu0 0.0
        %2033 = vmatpush2.msra.mxu0 0.0
        %2034 = vmatprep.subr.mxu0 0.0
        %2035 = vmatpush2.msra.mxu0 0.0
        %2036 = vmatprep.subr.mxu0 0.0
        %2037 = vmatpush2.msra.mxu0 0.0
        %2038 = vmatprep.subr.mxu0 0.0
        %2039 = vmatpush2.msra.mxu0 0.0
        %2040 = vmatprep.subr.mxu0 0.0
        %2041 = vmatpush2.msra.mxu0 0.0
        %2042 = vmatprep.subr.mxu0 0.0
        %2043 = vmatpush2.msra.mxu0 0.0
        %2044 = vmatprep.subr.mxu0 0.0
        %2045 = vmatpush2.msra.mxu0 0.0
        %2046 = vmatprep.subr.mxu0 0.0
        %2047 = vmatpush2.msra.mxu0 0.0
        %2048 = vmatprep.subr.mxu0 0.0
        %2049 = vmatpush2.msra.mxu0 0.0
        %2050 = vmatprep.subr.mxu0 0.0
        %2051 = vmatpush2.msra.mxu0 0.0
        %2052 = vmatprep.subr.mxu0 0.0
        %2053 = vmatpush2.msra.mxu0 0.0
        %2054 = vmatprep.subr.mxu0 0.0
        %2055 = vmatpush2.msra.mxu0 0.0
        %2056 = vmatprep.subr.mxu0 0.0
        %2057 = vmatpush2.msra.mxu0 0.0
        %2058 = vmatprep.subr.mxu0 0.0
        %2059 = vmatpush2.msra.mxu0 0.0
        %2060 = vmatprep.mubr.f32.mxu0 0.0
        %2061 = vmatmul.mubr.f32.gmra.mxu0 %v1994
        %v2062 = vpop.f32.mrf.mxu0
        %v2063 = vadd.f32 %v1989, %v2062
        %v2064 = vpop.f32.mrf.mxu0
        %v2065 = vadd.f32 %v1991, %v2064
        %2066 = vdwg.mxu0
        %v2067 = vld [vmem:[#allocation13] sm:$0xff]
        %v2068 = vld [vmem:[#allocation13 + $0x8] sm:$0xff]
        %v2069 = vld [vmem:[#allocation13 + $0x10] sm:$0xff]
        %v2070 = vld [vmem:[#allocation13 + $0x18] sm:$0xff]
        %v2071 = vld [vmem:[#allocation13 + $0x20] sm:$0xff]
        %v2072 = vld [vmem:[#allocation13 + $0x28] sm:$0xff]
        %v2073 = vld [vmem:[#allocation13 + $0x30] sm:$0xff]
        %v2074 = vld [vmem:[#allocation13 + $0x38] sm:$0xff]
        %v2076 = vsel %vm429, %v1888, 0
        %2078 = vmatprep.subr.mxu0 0.0
        %2079 = vmatpush1.msra.mxu0 0.0
        %2080 = vmatprep.subr.mxu0 0.0
        %2081 = vmatpush1.msra.mxu0 0.0
        %2082 = vmatprep.subr.mxu0 0.0
        %2083 = vmatpush1.msra.mxu0 0.0
        %2084 = vmatprep.subr.mxu0 0.0
        %2085 = vmatpush1.msra.mxu0 0.0
        %2086 = vmatprep.subr.mxu0 0.0
        %2087 = vmatpush1.msra.mxu0 0.0
        %2088 = vmatprep.subr.mxu0 0.0
        %2089 = vmatpush1.msra.mxu0 0.0
        %2090 = vmatprep.subr.mxu0 0.0
        %2091 = vmatpush1.msra.mxu0 0.0
        %2092 = vmatprep.subr.mxu0 0.0
        %2093 = vmatpush1.msra.mxu0 0.0
        %2094 = vmatprep.subr.mxu0 0.0
        %2095 = vmatpush1.msra.mxu0 0.0
        %2096 = vmatprep.subr.mxu0 0.0
        %2097 = vmatpush1.msra.mxu0 0.0
        %2098 = vmatprep.subr.mxu0 0.0
        %2099 = vmatpush1.msra.mxu0 0.0
        %2100 = vmatprep.subr.mxu0 0.0
        %2101 = vmatpush1.msra.mxu0 0.0
        %2102 = vmatprep.subr.mxu0 %v2074
        %2103 = vmatpush1.msra.mxu0 %v2073
        %2104 = vmatprep.subr.mxu0 %v2072
        %2105 = vmatpush1.msra.mxu0 %v2071
        %2106 = vmatprep.subr.mxu0 %v2070
        %2107 = vmatpush1.msra.mxu0 %v2069
        %2108 = vmatprep.subr.mxu0 %v2068
        %2109 = vmatpush1.msra.mxu0 %v2067
        %2110 = vmatprep.subr.mxu0 0.0
        %2111 = vmatpush2.msra.mxu0 0.0
        %2112 = vmatprep.subr.mxu0 0.0
        %2113 = vmatpush2.msra.mxu0 0.0
        %2114 = vmatprep.subr.mxu0 0.0
        %2115 = vmatpush2.msra.mxu0 0.0
        %2116 = vmatprep.subr.mxu0 0.0
        %2117 = vmatpush2.msra.mxu0 0.0
        %2118 = vmatprep.subr.mxu0 0.0
        %2119 = vmatpush2.msra.mxu0 0.0
        %2120 = vmatprep.subr.mxu0 0.0
        %2121 = vmatpush2.msra.mxu0 0.0
        %2122 = vmatprep.subr.mxu0 0.0
        %2123 = vmatpush2.msra.mxu0 0.0
        %2124 = vmatprep.subr.mxu0 0.0
        %2125 = vmatpush2.msra.mxu0 0.0
        %2126 = vmatprep.subr.mxu0 0.0
        %2127 = vmatpush2.msra.mxu0 0.0
        %2128 = vmatprep.subr.mxu0 0.0
        %2129 = vmatpush2.msra.mxu0 0.0
        %2130 = vmatprep.subr.mxu0 0.0
        %2131 = vmatpush2.msra.mxu0 0.0
        %2132 = vmatprep.subr.mxu0 0.0
        %2133 = vmatpush2.msra.mxu0 0.0
        %2134 = vmatprep.subr.mxu0 0.0
        %2135 = vmatpush2.msra.mxu0 0.0
        %2136 = vmatprep.subr.mxu0 0.0
        %2137 = vmatpush2.msra.mxu0 0.0
        %2138 = vmatprep.subr.mxu0 0.0
        %2139 = vmatpush2.msra.mxu0 0.0
        %2140 = vmatprep.subr.mxu0 0.0
        %2141 = vmatpush2.msra.mxu0 0.0
        %2142 = vmatprep.mubr.f32.mxu0 0.0
        %2143 = vmatmul.mubr.f32.gmra.mxu0 %v2076
        %v2144 = vpop.f32.mrf.mxu0
        %v2145 = vadd.f32 0.0, %v2144
        %v2146 = vpop.f32.mrf.mxu0
        %v2147 = vadd.f32 0.0, %v2146
        %2148 = vdwg.mxu0
        %v2149 = vadd.f32 %v2063, %v2145
        %v2150 = vadd.f32 %v2065, %v2147
        %v2151 = vld [vmem:[%s6] ss:$4 sm:$0x3]
        %v2153 = vlaneseq
        %v2154 = vshrl.u32 %v2153, 7
        %v2155 = vsub.s32 0, %v2154
        %v2156 = vrot.slane %v2151, %v2155
        %v2157 = vlaneseq
        %v2158 = vshrl.u32 %v2157, 7
        %v2159 = vsub.s32 1, %v2158
        %v2160 = vrot.slane %v2151, %v2159
        %v2163 = vadd.f32 %v2149, %v2156
        %v2164 = vadd.f32 %v2150, %v2160
        %v2165 = vld [vmem:[%s677] ss:$4 sm:$0x3]
        %v2166 = vmul.f32 %v1883, %v2165
        %v2168 = vlaneseq
        %v2169 = vshrl.u32 %v2168, 7
        %v2170 = vsub.s32 0, %v2169
        %v2171 = vrot.slane %v2166, %v2170
        %v2172 = vlaneseq
        %v2173 = vshrl.u32 %v2172, 7
        %v2174 = vsub.s32 1, %v2173
        %v2175 = vrot.slane %v2166, %v2174
        %v2178 = vadd.f32 %v2163, %v2171
        %v2179 = vadd.f32 %v2164, %v2175
        %v2180 = vld [vmem:[%s693] ss:$4 sm:$0x3]
        %v2181 = vmul.f32 %v1887, %v2180
        %v2183 = vlaneseq
        %v2184 = vshrl.u32 %v2183, 7
        %v2185 = vsub.s32 0, %v2184
        %v2186 = vrot.slane %v2181, %v2185
        %v2187 = vlaneseq
        %v2188 = vshrl.u32 %v2187, 7
        %v2189 = vsub.s32 1, %v2188
        %v2190 = vrot.slane %v2181, %v2189
        %v2193 = vadd.f32 %v2178, %v2186
        %v2194 = vadd.f32 %v2179, %v2190
        %v2195 = vxor.u32 %v2193, 2147483648
        %v2196 = vmul.f32 %v2195, 1.442695
        %v2197 = vpow.pop %v2196
        %v2198 = vadd.f32 %v2197, 1.0
        %v2199 = vrcp.pop %v2198
        %v2200 = vmul.f32 1.0, %v2199
        %v2201 = vtanh.pop %v2194
        %v2202 = vmul.f32 %v2200, %v2201
        %2204 = vrot.lane.b32.xlu0 %v1891, 64
        %v2205 = vpop.permute.xlu0 %2204
        %v2207 = vmul.f32 %v2200, %v2205
        %2209 = vrot.lane.b32.xlu0 %v2207, 64
        %v2210 = vpop.permute.xlu0 %2209
        %v2212 = vadd.f32 %v2202, %v2210
        %2214 = vrot.lane.b32.xlu0 %v1894, 96
        %v2215 = vpop.permute.xlu0 %2214
        %v2217 = vmul.f32 %v2200, %v2215
        %2219 = vrot.lane.b32.xlu0 %v2217, 32
        %v2220 = vpop.permute.xlu0 %2219
        %v2222 = vadd.f32 %v2212, %v2220
        %v2223 = vtanh.pop %v2222
        %2225 = vrot.lane.b32.xlu0 %v2223, 32
        %v2226 = vpop.permute.xlu0 %2225
        %v2228 = vmul.f32 %v2200, %v2226
        %s2229 = scalar_lea.vmem [#allocation3], %s1868
        %2230 = vst.msk [vmem:[%s2229] sm:$0x1] %vm744, %v2222
        %2232 = vrot.lane.b32.xlu0 %v2228, 96
        %v2233 = vpop.permute.xlu0 %2232
        %s2235 = scalar_lea.vmem [#allocation2], %s1868
        %2236 = vst.msk [vmem:[%s2235] sm:$0x1] %vm744, %v2233
        %s2237 = sadd.s32 %s752, 5
        %s2238 = smul.u32 %s2237, 5
        %s2239 = sld [smem:[#allocation7 + %s2238]]
        %s2240 = sadd.s32 %s2238, 1
        %s2241 = sld [smem:[#allocation7 + %s2240]]
        %s2242 = sadd.s32 %s2238, 2
        %s2243 = sld [smem:[#allocation7 + %s2242]]
        %s2244 = sadd.s32 %s2238, 3
        %s2245 = sld [smem:[#allocation7 + %s2244]]
        %s2246 = scvt.s32.f32 %s2245
        %s2247 = sadd.s32 %s2238, 4
        %s2248 = sld [smem:[#allocation7 + %s2247]]
        %s2249 = scvt.s32.f32 %s2248
        %s2250 = scalar_lea.vmem %s367, %s2239
        %v2251 = vld [vmem:[%s2250] sm:$0x1]
        %s2252 = scalar_lea.vmem [#allocation2], %s2241
        %v2253 = vld [vmem:[%s2252] sm:$0x1]
        %v2254 = vstv %s2246
        %v2255 = vmul.f32 %v2253, %v2254
        %s2256 = scalar_lea.vmem [#allocation2], %s2243
        %v2257 = vld [vmem:[%s2256] sm:$0x1]
        %v2258 = vstv %s2249
        %v2259 = vmul.f32 %v2257, %v2258
        %s2260 = scalar_lea.vmem [#allocation3], %s2241
        %v2261 = vld [vmem:[%s2260] sm:$0x1]
        %v2262 = vmul.f32 %v2261, %v2254
        %s2263 = scalar_lea.vmem [#allocation3], %s2243
        %v2264 = vld [vmem:[%s2263] sm:$0x1]
        %v2265 = vmul.f32 %v2264, %v2258
        %v2266 = vld [vmem:[#allocation9] sm:$0xff]
        %v2267 = vld [vmem:[#allocation9 + $0x8] sm:$0xff]
        %v2268 = vld [vmem:[#allocation9 + $0x10] sm:$0xff]
        %v2269 = vld [vmem:[#allocation9 + $0x18] sm:$0xff]
        %v2270 = vld [vmem:[#allocation9 + $0x20] sm:$0xff]
        %v2271 = vld [vmem:[#allocation9 + $0x28] sm:$0xff]
        %v2272 = vld [vmem:[#allocation9 + $0x30] sm:$0xff]
        %v2273 = vld [vmem:[#allocation9 + $0x38] sm:$0xff]
        %v2274 = vld [vmem:[#allocation9 + $0x40] sm:$0xff]
        %v2275 = vld [vmem:[#allocation9 + $0x48] sm:$0xff]
        %v2276 = vld [vmem:[#allocation9 + $0x50] sm:$0xff]
        %v2277 = vld [vmem:[#allocation9 + $0x58] sm:$0xff]
        %v2278 = vld [vmem:[#allocation9 + $0x60] sm:$0xff]
        %v2279 = vld [vmem:[#allocation9 + $0x68] sm:$0xff]
        %v2280 = vld [vmem:[#allocation9 + $0x70] sm:$0xff]
        %v2281 = vld [vmem:[#allocation9 + $0x78] sm:$0xff]
        %v2282 = vld [vmem:[#allocation11] sm:$0xff]
        %v2283 = vld [vmem:[#allocation11 + $0x8] sm:$0xff]
        %v2284 = vld [vmem:[#allocation11 + $0x10] sm:$0xff]
        %v2285 = vld [vmem:[#allocation11 + $0x18] sm:$0xff]
        %v2286 = vld [vmem:[#allocation11 + $0x20] sm:$0xff]
        %v2287 = vld [vmem:[#allocation11 + $0x28] sm:$0xff]
        %v2288 = vld [vmem:[#allocation11 + $0x30] sm:$0xff]
        %v2289 = vld [vmem:[#allocation11 + $0x38] sm:$0xff]
        %v2291 = vsel %vm429, %v2255, 0
        %2293 = vmatprep.subr.mxu0 0.0
        %2294 = vmatpush1.msra.mxu0 0.0
        %2295 = vmatprep.subr.mxu0 0.0
        %2296 = vmatpush1.msra.mxu0 0.0
        %2297 = vmatprep.subr.mxu0 0.0
        %2298 = vmatpush1.msra.mxu0 0.0
        %2299 = vmatprep.subr.mxu0 0.0
        %2300 = vmatpush1.msra.mxu0 0.0
        %2301 = vmatprep.subr.mxu0 0.0
        %2302 = vmatpush1.msra.mxu0 0.0
        %2303 = vmatprep.subr.mxu0 0.0
        %2304 = vmatpush1.msra.mxu0 0.0
        %2305 = vmatprep.subr.mxu0 0.0
        %2306 = vmatpush1.msra.mxu0 0.0
        %2307 = vmatprep.subr.mxu0 0.0
        %2308 = vmatpush1.msra.mxu0 0.0
        %2309 = vmatprep.subr.mxu0 0.0
        %2310 = vmatpush1.msra.mxu0 0.0
        %2311 = vmatprep.subr.mxu0 0.0
        %2312 = vmatpush1.msra.mxu0 0.0
        %2313 = vmatprep.subr.mxu0 0.0
        %2314 = vmatpush1.msra.mxu0 0.0
        %2315 = vmatprep.subr.mxu0 0.0
        %2316 = vmatpush1.msra.mxu0 0.0
        %2317 = vmatprep.subr.mxu0 %v2289
        %2318 = vmatpush1.msra.mxu0 %v2288
        %2319 = vmatprep.subr.mxu0 %v2287
        %2320 = vmatpush1.msra.mxu0 %v2286
        %2321 = vmatprep.subr.mxu0 %v2285
        %2322 = vmatpush1.msra.mxu0 %v2284
        %2323 = vmatprep.subr.mxu0 %v2283
        %2324 = vmatpush1.msra.mxu0 %v2282
        %2325 = vmatprep.subr.mxu0 0.0
        %2326 = vmatpush2.msra.mxu0 0.0
        %2327 = vmatprep.subr.mxu0 0.0
        %2328 = vmatpush2.msra.mxu0 0.0
        %2329 = vmatprep.subr.mxu0 0.0
        %2330 = vmatpush2.msra.mxu0 0.0
        %2331 = vmatprep.subr.mxu0 0.0
        %2332 = vmatpush2.msra.mxu0 0.0
        %2333 = vmatprep.subr.mxu0 0.0
        %2334 = vmatpush2.msra.mxu0 0.0
        %2335 = vmatprep.subr.mxu0 0.0
        %2336 = vmatpush2.msra.mxu0 0.0
        %2337 = vmatprep.subr.mxu0 0.0
        %2338 = vmatpush2.msra.mxu0 0.0
        %2339 = vmatprep.subr.mxu0 0.0
        %2340 = vmatpush2.msra.mxu0 0.0
        %2341 = vmatprep.subr.mxu0 0.0
        %2342 = vmatpush2.msra.mxu0 0.0
        %2343 = vmatprep.subr.mxu0 0.0
        %2344 = vmatpush2.msra.mxu0 0.0
        %2345 = vmatprep.subr.mxu0 0.0
        %2346 = vmatpush2.msra.mxu0 0.0
        %2347 = vmatprep.subr.mxu0 0.0
        %2348 = vmatpush2.msra.mxu0 0.0
        %2349 = vmatprep.subr.mxu0 0.0
        %2350 = vmatpush2.msra.mxu0 0.0
        %2351 = vmatprep.subr.mxu0 0.0
        %2352 = vmatpush2.msra.mxu0 0.0
        %2353 = vmatprep.subr.mxu0 0.0
        %2354 = vmatpush2.msra.mxu0 0.0
        %2355 = vmatprep.subr.mxu0 0.0
        %2356 = vmatpush2.msra.mxu0 0.0
        %2357 = vmatprep.mubr.f32.mxu0 0.0
        %2358 = vmatmul.mubr.f32.gmra.mxu0 %v2291
        %v2359 = vpop.f32.mrf.mxu0
        %v2360 = vadd.f32 0.0, %v2359
        %v2361 = vpop.f32.mrf.mxu0
        %v2362 = vadd.f32 0.0, %v2361
        %2363 = vdwg.mxu0
        %v2365 = vsel %vm504, %v2251, 0
        %2367 = vmatprep.subr.mxu0 0.0
        %2368 = vmatpush1.msra.mxu0 0.0
        %2369 = vmatprep.subr.mxu0 0.0
        %2370 = vmatpush1.msra.mxu0 0.0
        %2371 = vmatprep.subr.mxu0 0.0
        %2372 = vmatpush1.msra.mxu0 0.0
        %2373 = vmatprep.subr.mxu0 0.0
        %2374 = vmatpush1.msra.mxu0 0.0
        %2375 = vmatprep.subr.mxu0 0.0
        %2376 = vmatpush1.msra.mxu0 0.0
        %2377 = vmatprep.subr.mxu0 0.0
        %2378 = vmatpush1.msra.mxu0 0.0
        %2379 = vmatprep.subr.mxu0 0.0
        %2380 = vmatpush1.msra.mxu0 0.0
        %2381 = vmatprep.subr.mxu0 0.0
        %2382 = vmatpush1.msra.mxu0 0.0
        %2383 = vmatprep.subr.mxu0 %v2281
        %2384 = vmatpush1.msra.mxu0 %v2280
        %2385 = vmatprep.subr.mxu0 %v2279
        %2386 = vmatpush1.msra.mxu0 %v2278
        %2387 = vmatprep.subr.mxu0 %v2277
        %2388 = vmatpush1.msra.mxu0 %v2276
        %2389 = vmatprep.subr.mxu0 %v2275
        %2390 = vmatpush1.msra.mxu0 %v2274
        %2391 = vmatprep.subr.mxu0 %v2273
        %2392 = vmatpush1.msra.mxu0 %v2272
        %2393 = vmatprep.subr.mxu0 %v2271
        %2394 = vmatpush1.msra.mxu0 %v2270
        %2395 = vmatprep.subr.mxu0 %v2269
        %2396 = vmatpush1.msra.mxu0 %v2268
        %2397 = vmatprep.subr.mxu0 %v2267
        %2398 = vmatpush1.msra.mxu0 %v2266
        %2399 = vmatprep.subr.mxu0 0.0
        %2400 = vmatpush2.msra.mxu0 0.0
        %2401 = vmatprep.subr.mxu0 0.0
        %2402 = vmatpush2.msra.mxu0 0.0
        %2403 = vmatprep.subr.mxu0 0.0
        %2404 = vmatpush2.msra.mxu0 0.0
        %2405 = vmatprep.subr.mxu0 0.0
        %2406 = vmatpush2.msra.mxu0 0.0
        %2407 = vmatprep.subr.mxu0 0.0
        %2408 = vmatpush2.msra.mxu0 0.0
        %2409 = vmatprep.subr.mxu0 0.0
        %2410 = vmatpush2.msra.mxu0 0.0
        %2411 = vmatprep.subr.mxu0 0.0
        %2412 = vmatpush2.msra.mxu0 0.0
        %2413 = vmatprep.subr.mxu0 0.0
        %2414 = vmatpush2.msra.mxu0 0.0
        %2415 = vmatprep.subr.mxu0 0.0
        %2416 = vmatpush2.msra.mxu0 0.0
        %2417 = vmatprep.subr.mxu0 0.0
        %2418 = vmatpush2.msra.mxu0 0.0
        %2419 = vmatprep.subr.mxu0 0.0
        %2420 = vmatpush2.msra.mxu0 0.0
        %2421 = vmatprep.subr.mxu0 0.0
        %2422 = vmatpush2.msra.mxu0 0.0
        %2423 = vmatprep.subr.mxu0 0.0
        %2424 = vmatpush2.msra.mxu0 0.0
        %2425 = vmatprep.subr.mxu0 0.0
        %2426 = vmatpush2.msra.mxu0 0.0
        %2427 = vmatprep.subr.mxu0 0.0
        %2428 = vmatpush2.msra.mxu0 0.0
        %2429 = vmatprep.subr.mxu0 0.0
        %2430 = vmatpush2.msra.mxu0 0.0
        %2431 = vmatprep.mubr.f32.mxu0 0.0
        %2432 = vmatmul.mubr.f32.gmra.mxu0 %v2365
        %v2433 = vpop.f32.mrf.mxu0
        %v2434 = vadd.f32 %v2360, %v2433
        %v2435 = vpop.f32.mrf.mxu0
        %v2436 = vadd.f32 %v2362, %v2435
        %2437 = vdwg.mxu0
        %v2438 = vld [vmem:[#allocation13] sm:$0xff]
        %v2439 = vld [vmem:[#allocation13 + $0x8] sm:$0xff]
        %v2440 = vld [vmem:[#allocation13 + $0x10] sm:$0xff]
        %v2441 = vld [vmem:[#allocation13 + $0x18] sm:$0xff]
        %v2442 = vld [vmem:[#allocation13 + $0x20] sm:$0xff]
        %v2443 = vld [vmem:[#allocation13 + $0x28] sm:$0xff]
        %v2444 = vld [vmem:[#allocation13 + $0x30] sm:$0xff]
        %v2445 = vld [vmem:[#allocation13 + $0x38] sm:$0xff]
        %v2447 = vsel %vm429, %v2259, 0
        %2449 = vmatprep.subr.mxu0 0.0
        %2450 = vmatpush1.msra.mxu0 0.0
        %2451 = vmatprep.subr.mxu0 0.0
        %2452 = vmatpush1.msra.mxu0 0.0
        %2453 = vmatprep.subr.mxu0 0.0
        %2454 = vmatpush1.msra.mxu0 0.0
        %2455 = vmatprep.subr.mxu0 0.0
        %2456 = vmatpush1.msra.mxu0 0.0
        %2457 = vmatprep.subr.mxu0 0.0
        %2458 = vmatpush1.msra.mxu0 0.0
        %2459 = vmatprep.subr.mxu0 0.0
        %2460 = vmatpush1.msra.mxu0 0.0
        %2461 = vmatprep.subr.mxu0 0.0
        %2462 = vmatpush1.msra.mxu0 0.0
        %2463 = vmatprep.subr.mxu0 0.0
        %2464 = vmatpush1.msra.mxu0 0.0
        %2465 = vmatprep.subr.mxu0 0.0
        %2466 = vmatpush1.msra.mxu0 0.0
        %2467 = vmatprep.subr.mxu0 0.0
        %2468 = vmatpush1.msra.mxu0 0.0
        %2469 = vmatprep.subr.mxu0 0.0
        %2470 = vmatpush1.msra.mxu0 0.0
        %2471 = vmatprep.subr.mxu0 0.0
        %2472 = vmatpush1.msra.mxu0 0.0
        %2473 = vmatprep.subr.mxu0 %v2445
        %2474 = vmatpush1.msra.mxu0 %v2444
        %2475 = vmatprep.subr.mxu0 %v2443
        %2476 = vmatpush1.msra.mxu0 %v2442
        %2477 = vmatprep.subr.mxu0 %v2441
        %2478 = vmatpush1.msra.mxu0 %v2440
        %2479 = vmatprep.subr.mxu0 %v2439
        %2480 = vmatpush1.msra.mxu0 %v2438
        %2481 = vmatprep.subr.mxu0 0.0
        %2482 = vmatpush2.msra.mxu0 0.0
        %2483 = vmatprep.subr.mxu0 0.0
        %2484 = vmatpush2.msra.mxu0 0.0
        %2485 = vmatprep.subr.mxu0 0.0
        %2486 = vmatpush2.msra.mxu0 0.0
        %2487 = vmatprep.subr.mxu0 0.0
        %2488 = vmatpush2.msra.mxu0 0.0
        %2489 = vmatprep.subr.mxu0 0.0
        %2490 = vmatpush2.msra.mxu0 0.0
        %2491 = vmatprep.subr.mxu0 0.0
        %2492 = vmatpush2.msra.mxu0 0.0
        %2493 = vmatprep.subr.mxu0 0.0
        %2494 = vmatpush2.msra.mxu0 0.0
        %2495 = vmatprep.subr.mxu0 0.0
        %2496 = vmatpush2.msra.mxu0 0.0
        %2497 = vmatprep.subr.mxu0 0.0
        %2498 = vmatpush2.msra.mxu0 0.0
        %2499 = vmatprep.subr.mxu0 0.0
        %2500 = vmatpush2.msra.mxu0 0.0
        %2501 = vmatprep.subr.mxu0 0.0
        %2502 = vmatpush2.msra.mxu0 0.0
        %2503 = vmatprep.subr.mxu0 0.0
        %2504 = vmatpush2.msra.mxu0 0.0
        %2505 = vmatprep.subr.mxu0 0.0
        %2506 = vmatpush2.msra.mxu0 0.0
        %2507 = vmatprep.subr.mxu0 0.0
        %2508 = vmatpush2.msra.mxu0 0.0
        %2509 = vmatprep.subr.mxu0 0.0
        %2510 = vmatpush2.msra.mxu0 0.0
        %2511 = vmatprep.subr.mxu0 0.0
        %2512 = vmatpush2.msra.mxu0 0.0
        %2513 = vmatprep.mubr.f32.mxu0 0.0
        %2514 = vmatmul.mubr.f32.gmra.mxu0 %v2447
        %v2515 = vpop.f32.mrf.mxu0
        %v2516 = vadd.f32 0.0, %v2515
        %v2517 = vpop.f32.mrf.mxu0
        %v2518 = vadd.f32 0.0, %v2517
        %2519 = vdwg.mxu0
        %v2520 = vadd.f32 %v2434, %v2516
        %v2521 = vadd.f32 %v2436, %v2518
        %v2522 = vld [vmem:[%s6] ss:$4 sm:$0x3]
        %v2524 = vlaneseq
        %v2525 = vshrl.u32 %v2524, 7
        %v2526 = vsub.s32 0, %v2525
        %v2527 = vrot.slane %v2522, %v2526
        %v2528 = vlaneseq
        %v2529 = vshrl.u32 %v2528, 7
        %v2530 = vsub.s32 1, %v2529
        %v2531 = vrot.slane %v2522, %v2530
        %v2534 = vadd.f32 %v2520, %v2527
        %v2535 = vadd.f32 %v2521, %v2531
        %v2536 = vld [vmem:[%s677] ss:$4 sm:$0x3]
        %v2537 = vmul.f32 %v2254, %v2536
        %v2539 = vlaneseq
        %v2540 = vshrl.u32 %v2539, 7
        %v2541 = vsub.s32 0, %v2540
        %v2542 = vrot.slane %v2537, %v2541
        %v2543 = vlaneseq
        %v2544 = vshrl.u32 %v2543, 7
        %v2545 = vsub.s32 1, %v2544
        %v2546 = vrot.slane %v2537, %v2545
        %v2549 = vadd.f32 %v2534, %v2542
        %v2550 = vadd.f32 %v2535, %v2546
        %v2551 = vld [vmem:[%s693] ss:$4 sm:$0x3]
        %v2552 = vmul.f32 %v2258, %v2551
        %v2554 = vlaneseq
        %v2555 = vshrl.u32 %v2554, 7
        %v2556 = vsub.s32 0, %v2555
        %v2557 = vrot.slane %v2552, %v2556
        %v2558 = vlaneseq
        %v2559 = vshrl.u32 %v2558, 7
        %v2560 = vsub.s32 1, %v2559
        %v2561 = vrot.slane %v2552, %v2560
        %v2564 = vadd.f32 %v2549, %v2557
        %v2565 = vadd.f32 %v2550, %v2561
        %v2566 = vxor.u32 %v2564, 2147483648
        %v2567 = vmul.f32 %v2566, 1.442695
        %v2568 = vpow.pop %v2567
        %v2569 = vadd.f32 %v2568, 1.0
        %v2570 = vrcp.pop %v2569
        %v2571 = vmul.f32 1.0, %v2570
        %v2572 = vtanh.pop %v2565
        %v2573 = vmul.f32 %v2571, %v2572
        %2575 = vrot.lane.b32.xlu0 %v2262, 64
        %v2576 = vpop.permute.xlu0 %2575
        %v2578 = vmul.f32 %v2571, %v2576
        %2580 = vrot.lane.b32.xlu0 %v2578, 64
        %v2581 = vpop.permute.xlu0 %2580
        %v2583 = vadd.f32 %v2573, %v2581
        %2585 = vrot.lane.b32.xlu0 %v2265, 96
        %v2586 = vpop.permute.xlu0 %2585
        %v2588 = vmul.f32 %v2571, %v2586
        %2590 = vrot.lane.b32.xlu0 %v2588, 32
        %v2591 = vpop.permute.xlu0 %2590
        %v2593 = vadd.f32 %v2583, %v2591
        %v2594 = vtanh.pop %v2593
        %2596 = vrot.lane.b32.xlu0 %v2594, 32
        %v2597 = vpop.permute.xlu0 %2596
        %v2599 = vmul.f32 %v2571, %v2597
        %s2600 = scalar_lea.vmem [#allocation3], %s2239
        %2601 = vst.msk [vmem:[%s2600] sm:$0x1] %vm744, %v2593
        %2603 = vrot.lane.b32.xlu0 %v2599, 96
        %v2604 = vpop.permute.xlu0 %2603
        %s2606 = scalar_lea.vmem [#allocation2], %s2239
        %2607 = vst.msk [vmem:[%s2606] sm:$0x1] %vm744, %v2604
        %s2608 = sadd.s32 %s752, 6
        %s2609 = smul.u32 %s2608, 5
        %s2610 = sld [smem:[#allocation7 + %s2609]]
        %s2611 = sadd.s32 %s2609, 1
        %s2612 = sld [smem:[#allocation7 + %s2611]]
        %s2613 = sadd.s32 %s2609, 2
        %s2614 = sld [smem:[#allocation7 + %s2613]]
        %s2615 = sadd.s32 %s2609, 3
        %s2616 = sld [smem:[#allocation7 + %s2615]]
        %s2617 = scvt.s32.f32 %s2616
        %s2618 = sadd.s32 %s2609, 4
        %s2619 = sld [smem:[#allocation7 + %s2618]]
        %s2620 = scvt.s32.f32 %s2619
        %s2621 = scalar_lea.vmem %s367, %s2610
        %v2622 = vld [vmem:[%s2621] sm:$0x1]
        %s2623 = scalar_lea.vmem [#allocation2], %s2612
        %v2624 = vld [vmem:[%s2623] sm:$0x1]
        %v2625 = vstv %s2617
        %v2626 = vmul.f32 %v2624, %v2625
        %s2627 = scalar_lea.vmem [#allocation2], %s2614
        %v2628 = vld [vmem:[%s2627] sm:$0x1]
        %v2629 = vstv %s2620
        %v2630 = vmul.f32 %v2628, %v2629
        %s2631 = scalar_lea.vmem [#allocation3], %s2612
        %v2632 = vld [vmem:[%s2631] sm:$0x1]
        %v2633 = vmul.f32 %v2632, %v2625
        %s2634 = scalar_lea.vmem [#allocation3], %s2614
        %v2635 = vld [vmem:[%s2634] sm:$0x1]
        %v2636 = vmul.f32 %v2635, %v2629
        %v2637 = vld [vmem:[#allocation9] sm:$0xff]
        %v2638 = vld [vmem:[#allocation9 + $0x8] sm:$0xff]
        %v2639 = vld [vmem:[#allocation9 + $0x10] sm:$0xff]
        %v2640 = vld [vmem:[#allocation9 + $0x18] sm:$0xff]
        %v2641 = vld [vmem:[#allocation9 + $0x20] sm:$0xff]
        %v2642 = vld [vmem:[#allocation9 + $0x28] sm:$0xff]
        %v2643 = vld [vmem:[#allocation9 + $0x30] sm:$0xff]
        %v2644 = vld [vmem:[#allocation9 + $0x38] sm:$0xff]
        %v2645 = vld [vmem:[#allocation9 + $0x40] sm:$0xff]
        %v2646 = vld [vmem:[#allocation9 + $0x48] sm:$0xff]
        %v2647 = vld [vmem:[#allocation9 + $0x50] sm:$0xff]
        %v2648 = vld [vmem:[#allocation9 + $0x58] sm:$0xff]
        %v2649 = vld [vmem:[#allocation9 + $0x60] sm:$0xff]
        %v2650 = vld [vmem:[#allocation9 + $0x68] sm:$0xff]
        %v2651 = vld [vmem:[#allocation9 + $0x70] sm:$0xff]
        %v2652 = vld [vmem:[#allocation9 + $0x78] sm:$0xff]
        %v2653 = vld [vmem:[#allocation11] sm:$0xff]
        %v2654 = vld [vmem:[#allocation11 + $0x8] sm:$0xff]
        %v2655 = vld [vmem:[#allocation11 + $0x10] sm:$0xff]
        %v2656 = vld [vmem:[#allocation11 + $0x18] sm:$0xff]
        %v2657 = vld [vmem:[#allocation11 + $0x20] sm:$0xff]
        %v2658 = vld [vmem:[#allocation11 + $0x28] sm:$0xff]
        %v2659 = vld [vmem:[#allocation11 + $0x30] sm:$0xff]
        %v2660 = vld [vmem:[#allocation11 + $0x38] sm:$0xff]
        %v2662 = vsel %vm429, %v2626, 0
        %2664 = vmatprep.subr.mxu0 0.0
        %2665 = vmatpush1.msra.mxu0 0.0
        %2666 = vmatprep.subr.mxu0 0.0
        %2667 = vmatpush1.msra.mxu0 0.0
        %2668 = vmatprep.subr.mxu0 0.0
        %2669 = vmatpush1.msra.mxu0 0.0
        %2670 = vmatprep.subr.mxu0 0.0
        %2671 = vmatpush1.msra.mxu0 0.0
        %2672 = vmatprep.subr.mxu0 0.0
        %2673 = vmatpush1.msra.mxu0 0.0
        %2674 = vmatprep.subr.mxu0 0.0
        %2675 = vmatpush1.msra.mxu0 0.0
        %2676 = vmatprep.subr.mxu0 0.0
        %2677 = vmatpush1.msra.mxu0 0.0
        %2678 = vmatprep.subr.mxu0 0.0
        %2679 = vmatpush1.msra.mxu0 0.0
        %2680 = vmatprep.subr.mxu0 0.0
        %2681 = vmatpush1.msra.mxu0 0.0
        %2682 = vmatprep.subr.mxu0 0.0
        %2683 = vmatpush1.msra.mxu0 0.0
        %2684 = vmatprep.subr.mxu0 0.0
        %2685 = vmatpush1.msra.mxu0 0.0
        %2686 = vmatprep.subr.mxu0 0.0
        %2687 = vmatpush1.msra.mxu0 0.0
        %2688 = vmatprep.subr.mxu0 %v2660
        %2689 = vmatpush1.msra.mxu0 %v2659
        %2690 = vmatprep.subr.mxu0 %v2658
        %2691 = vmatpush1.msra.mxu0 %v2657
        %2692 = vmatprep.subr.mxu0 %v2656
        %2693 = vmatpush1.msra.mxu0 %v2655
        %2694 = vmatprep.subr.mxu0 %v2654
        %2695 = vmatpush1.msra.mxu0 %v2653
        %2696 = vmatprep.subr.mxu0 0.0
        %2697 = vmatpush2.msra.mxu0 0.0
        %2698 = vmatprep.subr.mxu0 0.0
        %2699 = vmatpush2.msra.mxu0 0.0
        %2700 = vmatprep.subr.mxu0 0.0
        %2701 = vmatpush2.msra.mxu0 0.0
        %2702 = vmatprep.subr.mxu0 0.0
        %2703 = vmatpush2.msra.mxu0 0.0
        %2704 = vmatprep.subr.mxu0 0.0
        %2705 = vmatpush2.msra.mxu0 0.0
        %2706 = vmatprep.subr.mxu0 0.0
        %2707 = vmatpush2.msra.mxu0 0.0
        %2708 = vmatprep.subr.mxu0 0.0
        %2709 = vmatpush2.msra.mxu0 0.0
        %2710 = vmatprep.subr.mxu0 0.0
        %2711 = vmatpush2.msra.mxu0 0.0
        %2712 = vmatprep.subr.mxu0 0.0
        %2713 = vmatpush2.msra.mxu0 0.0
        %2714 = vmatprep.subr.mxu0 0.0
        %2715 = vmatpush2.msra.mxu0 0.0
        %2716 = vmatprep.subr.mxu0 0.0
        %2717 = vmatpush2.msra.mxu0 0.0
        %2718 = vmatprep.subr.mxu0 0.0
        %2719 = vmatpush2.msra.mxu0 0.0
        %2720 = vmatprep.subr.mxu0 0.0
        %2721 = vmatpush2.msra.mxu0 0.0
        %2722 = vmatprep.subr.mxu0 0.0
        %2723 = vmatpush2.msra.mxu0 0.0
        %2724 = vmatprep.subr.mxu0 0.0
        %2725 = vmatpush2.msra.mxu0 0.0
        %2726 = vmatprep.subr.mxu0 0.0
        %2727 = vmatpush2.msra.mxu0 0.0
        %2728 = vmatprep.mubr.f32.mxu0 0.0
        %2729 = vmatmul.mubr.f32.gmra.mxu0 %v2662
        %v2730 = vpop.f32.mrf.mxu0
        %v2731 = vadd.f32 0.0, %v2730
        %v2732 = vpop.f32.mrf.mxu0
        %v2733 = vadd.f32 0.0, %v2732
        %2734 = vdwg.mxu0
        %v2736 = vsel %vm504, %v2622, 0
        %2738 = vmatprep.subr.mxu0 0.0
        %2739 = vmatpush1.msra.mxu0 0.0
        %2740 = vmatprep.subr.mxu0 0.0
        %2741 = vmatpush1.msra.mxu0 0.0
        %2742 = vmatprep.subr.mxu0 0.0
        %2743 = vmatpush1.msra.mxu0 0.0
        %2744 = vmatprep.subr.mxu0 0.0
        %2745 = vmatpush1.msra.mxu0 0.0
        %2746 = vmatprep.subr.mxu0 0.0
        %2747 = vmatpush1.msra.mxu0 0.0
        %2748 = vmatprep.subr.mxu0 0.0
        %2749 = vmatpush1.msra.mxu0 0.0
        %2750 = vmatprep.subr.mxu0 0.0
        %2751 = vmatpush1.msra.mxu0 0.0
        %2752 = vmatprep.subr.mxu0 0.0
        %2753 = vmatpush1.msra.mxu0 0.0
        %2754 = vmatprep.subr.mxu0 %v2652
        %2755 = vmatpush1.msra.mxu0 %v2651
        %2756 = vmatprep.subr.mxu0 %v2650
        %2757 = vmatpush1.msra.mxu0 %v2649
        %2758 = vmatprep.subr.mxu0 %v2648
        %2759 = vmatpush1.msra.mxu0 %v2647
        %2760 = vmatprep.subr.mxu0 %v2646
        %2761 = vmatpush1.msra.mxu0 %v2645
        %2762 = vmatprep.subr.mxu0 %v2644
        %2763 = vmatpush1.msra.mxu0 %v2643
        %2764 = vmatprep.subr.mxu0 %v2642
        %2765 = vmatpush1.msra.mxu0 %v2641
        %2766 = vmatprep.subr.mxu0 %v2640
        %2767 = vmatpush1.msra.mxu0 %v2639
        %2768 = vmatprep.subr.mxu0 %v2638
        %2769 = vmatpush1.msra.mxu0 %v2637
        %2770 = vmatprep.subr.mxu0 0.0
        %2771 = vmatpush2.msra.mxu0 0.0
        %2772 = vmatprep.subr.mxu0 0.0
        %2773 = vmatpush2.msra.mxu0 0.0
        %2774 = vmatprep.subr.mxu0 0.0
        %2775 = vmatpush2.msra.mxu0 0.0
        %2776 = vmatprep.subr.mxu0 0.0
        %2777 = vmatpush2.msra.mxu0 0.0
        %2778 = vmatprep.subr.mxu0 0.0
        %2779 = vmatpush2.msra.mxu0 0.0
        %2780 = vmatprep.subr.mxu0 0.0
        %2781 = vmatpush2.msra.mxu0 0.0
        %2782 = vmatprep.subr.mxu0 0.0
        %2783 = vmatpush2.msra.mxu0 0.0
        %2784 = vmatprep.subr.mxu0 0.0
        %2785 = vmatpush2.msra.mxu0 0.0
        %2786 = vmatprep.subr.mxu0 0.0
        %2787 = vmatpush2.msra.mxu0 0.0
        %2788 = vmatprep.subr.mxu0 0.0
        %2789 = vmatpush2.msra.mxu0 0.0
        %2790 = vmatprep.subr.mxu0 0.0
        %2791 = vmatpush2.msra.mxu0 0.0
        %2792 = vmatprep.subr.mxu0 0.0
        %2793 = vmatpush2.msra.mxu0 0.0
        %2794 = vmatprep.subr.mxu0 0.0
        %2795 = vmatpush2.msra.mxu0 0.0
        %2796 = vmatprep.subr.mxu0 0.0
        %2797 = vmatpush2.msra.mxu0 0.0
        %2798 = vmatprep.subr.mxu0 0.0
        %2799 = vmatpush2.msra.mxu0 0.0
        %2800 = vmatprep.subr.mxu0 0.0
        %2801 = vmatpush2.msra.mxu0 0.0
        %2802 = vmatprep.mubr.f32.mxu0 0.0
        %2803 = vmatmul.mubr.f32.gmra.mxu0 %v2736
        %v2804 = vpop.f32.mrf.mxu0
        %v2805 = vadd.f32 %v2731, %v2804
        %v2806 = vpop.f32.mrf.mxu0
        %v2807 = vadd.f32 %v2733, %v2806
        %2808 = vdwg.mxu0
        %v2809 = vld [vmem:[#allocation13] sm:$0xff]
        %v2810 = vld [vmem:[#allocation13 + $0x8] sm:$0xff]
        %v2811 = vld [vmem:[#allocation13 + $0x10] sm:$0xff]
        %v2812 = vld [vmem:[#allocation13 + $0x18] sm:$0xff]
        %v2813 = vld [vmem:[#allocation13 + $0x20] sm:$0xff]
        %v2814 = vld [vmem:[#allocation13 + $0x28] sm:$0xff]
        %v2815 = vld [vmem:[#allocation13 + $0x30] sm:$0xff]
        %v2816 = vld [vmem:[#allocation13 + $0x38] sm:$0xff]
        %v2818 = vsel %vm429, %v2630, 0
        %2820 = vmatprep.subr.mxu0 0.0
        %2821 = vmatpush1.msra.mxu0 0.0
        %2822 = vmatprep.subr.mxu0 0.0
        %2823 = vmatpush1.msra.mxu0 0.0
        %2824 = vmatprep.subr.mxu0 0.0
        %2825 = vmatpush1.msra.mxu0 0.0
        %2826 = vmatprep.subr.mxu0 0.0
        %2827 = vmatpush1.msra.mxu0 0.0
        %2828 = vmatprep.subr.mxu0 0.0
        %2829 = vmatpush1.msra.mxu0 0.0
        %2830 = vmatprep.subr.mxu0 0.0
        %2831 = vmatpush1.msra.mxu0 0.0
        %2832 = vmatprep.subr.mxu0 0.0
        %2833 = vmatpush1.msra.mxu0 0.0
        %2834 = vmatprep.subr.mxu0 0.0
        %2835 = vmatpush1.msra.mxu0 0.0
        %2836 = vmatprep.subr.mxu0 0.0
        %2837 = vmatpush1.msra.mxu0 0.0
        %2838 = vmatprep.subr.mxu0 0.0
        %2839 = vmatpush1.msra.mxu0 0.0
        %2840 = vmatprep.subr.mxu0 0.0
        %2841 = vmatpush1.msra.mxu0 0.0
        %2842 = vmatprep.subr.mxu0 0.0
        %2843 = vmatpush1.msra.mxu0 0.0
        %2844 = vmatprep.subr.mxu0 %v2816
        %2845 = vmatpush1.msra.mxu0 %v2815
        %2846 = vmatprep.subr.mxu0 %v2814
        %2847 = vmatpush1.msra.mxu0 %v2813
        %2848 = vmatprep.subr.mxu0 %v2812
        %2849 = vmatpush1.msra.mxu0 %v2811
        %2850 = vmatprep.subr.mxu0 %v2810
        %2851 = vmatpush1.msra.mxu0 %v2809
        %2852 = vmatprep.subr.mxu0 0.0
        %2853 = vmatpush2.msra.mxu0 0.0
        %2854 = vmatprep.subr.mxu0 0.0
        %2855 = vmatpush2.msra.mxu0 0.0
        %2856 = vmatprep.subr.mxu0 0.0
        %2857 = vmatpush2.msra.mxu0 0.0
        %2858 = vmatprep.subr.mxu0 0.0
        %2859 = vmatpush2.msra.mxu0 0.0
        %2860 = vmatprep.subr.mxu0 0.0
        %2861 = vmatpush2.msra.mxu0 0.0
        %2862 = vmatprep.subr.mxu0 0.0
        %2863 = vmatpush2.msra.mxu0 0.0
        %2864 = vmatprep.subr.mxu0 0.0
        %2865 = vmatpush2.msra.mxu0 0.0
        %2866 = vmatprep.subr.mxu0 0.0
        %2867 = vmatpush2.msra.mxu0 0.0
        %2868 = vmatprep.subr.mxu0 0.0
        %2869 = vmatpush2.msra.mxu0 0.0
        %2870 = vmatprep.subr.mxu0 0.0
        %2871 = vmatpush2.msra.mxu0 0.0
        %2872 = vmatprep.subr.mxu0 0.0
        %2873 = vmatpush2.msra.mxu0 0.0
        %2874 = vmatprep.subr.mxu0 0.0
        %2875 = vmatpush2.msra.mxu0 0.0
        %2876 = vmatprep.subr.mxu0 0.0
        %2877 = vmatpush2.msra.mxu0 0.0
        %2878 = vmatprep.subr.mxu0 0.0
        %2879 = vmatpush2.msra.mxu0 0.0
        %2880 = vmatprep.subr.mxu0 0.0
        %2881 = vmatpush2.msra.mxu0 0.0
        %2882 = vmatprep.subr.mxu0 0.0
        %2883 = vmatpush2.msra.mxu0 0.0
        %2884 = vmatprep.mubr.f32.mxu0 0.0
        %2885 = vmatmul.mubr.f32.gmra.mxu0 %v2818
        %v2886 = vpop.f32.mrf.mxu0
        %v2887 = vadd.f32 0.0, %v2886
        %v2888 = vpop.f32.mrf.mxu0
        %v2889 = vadd.f32 0.0, %v2888
        %2890 = vdwg.mxu0
        %v2891 = vadd.f32 %v2805, %v2887
        %v2892 = vadd.f32 %v2807, %v2889
        %v2893 = vld [vmem:[%s6] ss:$4 sm:$0x3]
        %v2895 = vlaneseq
        %v2896 = vshrl.u32 %v2895, 7
        %v2897 = vsub.s32 0, %v2896
        %v2898 = vrot.slane %v2893, %v2897
        %v2899 = vlaneseq
        %v2900 = vshrl.u32 %v2899, 7
        %v2901 = vsub.s32 1, %v2900
        %v2902 = vrot.slane %v2893, %v2901
        %v2905 = vadd.f32 %v2891, %v2898
        %v2906 = vadd.f32 %v2892, %v2902
        %v2907 = vld [vmem:[%s677] ss:$4 sm:$0x3]
        %v2908 = vmul.f32 %v2625, %v2907
        %v2910 = vlaneseq
        %v2911 = vshrl.u32 %v2910, 7
        %v2912 = vsub.s32 0, %v2911
        %v2913 = vrot.slane %v2908, %v2912
        %v2914 = vlaneseq
        %v2915 = vshrl.u32 %v2914, 7
        %v2916 = vsub.s32 1, %v2915
        %v2917 = vrot.slane %v2908, %v2916
        %v2920 = vadd.f32 %v2905, %v2913
        %v2921 = vadd.f32 %v2906, %v2917
        %v2922 = vld [vmem:[%s693] ss:$4 sm:$0x3]
        %v2923 = vmul.f32 %v2629, %v2922
        %v2925 = vlaneseq
        %v2926 = vshrl.u32 %v2925, 7
        %v2927 = vsub.s32 0, %v2926
        %v2928 = vrot.slane %v2923, %v2927
        %v2929 = vlaneseq
        %v2930 = vshrl.u32 %v2929, 7
        %v2931 = vsub.s32 1, %v2930
        %v2932 = vrot.slane %v2923, %v2931
        %v2935 = vadd.f32 %v2920, %v2928
        %v2936 = vadd.f32 %v2921, %v2932
        %v2937 = vxor.u32 %v2935, 2147483648
        %v2938 = vmul.f32 %v2937, 1.442695
        %v2939 = vpow.pop %v2938
        %v2940 = vadd.f32 %v2939, 1.0
        %v2941 = vrcp.pop %v2940
        %v2942 = vmul.f32 1.0, %v2941
        %v2943 = vtanh.pop %v2936
        %v2944 = vmul.f32 %v2942, %v2943
        %2946 = vrot.lane.b32.xlu0 %v2633, 64
        %v2947 = vpop.permute.xlu0 %2946
        %v2949 = vmul.f32 %v2942, %v2947
        %2951 = vrot.lane.b32.xlu0 %v2949, 64
        %v2952 = vpop.permute.xlu0 %2951
        %v2954 = vadd.f32 %v2944, %v2952
        %2956 = vrot.lane.b32.xlu0 %v2636, 96
        %v2957 = vpop.permute.xlu0 %2956
        %v2959 = vmul.f32 %v2942, %v2957
        %2961 = vrot.lane.b32.xlu0 %v2959, 32
        %v2962 = vpop.permute.xlu0 %2961
        %v2964 = vadd.f32 %v2954, %v2962
        %v2965 = vtanh.pop %v2964
        %2967 = vrot.lane.b32.xlu0 %v2965, 32
        %v2968 = vpop.permute.xlu0 %2967
        %v2970 = vmul.f32 %v2942, %v2968
        %s2971 = scalar_lea.vmem [#allocation3], %s2610
        %2972 = vst.msk [vmem:[%s2971] sm:$0x1] %vm744, %v2964
        %2974 = vrot.lane.b32.xlu0 %v2970, 96
        %v2975 = vpop.permute.xlu0 %2974
        %s2977 = scalar_lea.vmem [#allocation2], %s2610
        %2978 = vst.msk [vmem:[%s2977] sm:$0x1] %vm744, %v2975
        %s2979 = smul.u32 %s34, 21
        %s2980 = sld [smem:[#allocation8 + %s2979]]
        %s2981 = sadd.s32 %s2979, 1
        %s2982 = sld [smem:[#allocation8 + %s2981]]
        %s2983 = sadd.s32 %s2979, 2
        %s2984 = sld [smem:[#allocation8 + %s2983]]
        %s2985 = scvt.s32.f32 %s2984
        %s2986 = scalar_lea.vmem %s367, %s2980
        %v2987 = vld [vmem:[%s2986] sm:$0x1]
        %s2988 = scalar_lea.vmem [#allocation4], %s2982
        %v2989 = vld [vmem:[%s2988] sm:$0x1]
        %v2990 = vstv %s2985
        %v2991 = vmul.f32 %v2989, %v2990
        %s2992 = scalar_lea.vmem [#allocation5], %s2982
        %v2993 = vld [vmem:[%s2992] sm:$0x1]
        %v2994 = vmul.f32 %v2993, %v2990
        %v2995 = vld [vmem:[#allocation14] sm:$0xff]
        %v2996 = vld [vmem:[#allocation14 + $0x8] sm:$0xff]
        %v2997 = vld [vmem:[#allocation14 + $0x10] sm:$0xff]
        %v2998 = vld [vmem:[#allocation14 + $0x18] sm:$0xff]
        %v2999 = vld [vmem:[#allocation14 + $0x20] sm:$0xff]
        %v3000 = vld [vmem:[#allocation14 + $0x28] sm:$0xff]
        %v3001 = vld [vmem:[#allocation14 + $0x30] sm:$0xff]
        %v3002 = vld [vmem:[#allocation14 + $0x38] sm:$0xff]
        %v3003 = vld [vmem:[%s8] sm:$0xff]
        %v3004 = vld [vmem:[%s8 + $0x8] sm:$0xff]
        %v3005 = vld [vmem:[%s8 + $0x10] sm:$0xff]
        %v3006 = vld [vmem:[%s8 + $0x18] sm:$0xff]
        %v3008 = vsel %vm429, %v2991, 0
        %3010 = vmatprep.subr.mxu0 0.0
        %3011 = vmatpush1.msra.mxu0 0.0
        %3012 = vmatprep.subr.mxu0 0.0
        %3013 = vmatpush1.msra.mxu0 0.0
        %3014 = vmatprep.subr.mxu0 0.0
        %3015 = vmatpush1.msra.mxu0 0.0
        %3016 = vmatprep.subr.mxu0 0.0
        %3017 = vmatpush1.msra.mxu0 0.0
        %3018 = vmatprep.subr.mxu0 0.0
        %3019 = vmatpush1.msra.mxu0 0.0
        %3020 = vmatprep.subr.mxu0 0.0
        %3021 = vmatpush1.msra.mxu0 0.0
        %3022 = vmatprep.subr.mxu0 0.0
        %3023 = vmatpush1.msra.mxu0 0.0
        %3024 = vmatprep.subr.mxu0 0.0
        %3025 = vmatpush1.msra.mxu0 0.0
        %3026 = vmatprep.subr.mxu0 0.0
        %3027 = vmatpush1.msra.mxu0 0.0
        %3028 = vmatprep.subr.mxu0 0.0
        %3029 = vmatpush1.msra.mxu0 0.0
        %3030 = vmatprep.subr.mxu0 0.0
        %3031 = vmatpush1.msra.mxu0 0.0
        %3032 = vmatprep.subr.mxu0 0.0
        %3033 = vmatpush1.msra.mxu0 0.0
        %3034 = vmatprep.subr.mxu0 0.0
        %3035 = vmatpush1.msra.mxu0 %v3006
        %3036 = vmatprep.subr.mxu0 0.0
        %3037 = vmatpush1.msra.mxu0 %v3005
        %3038 = vmatprep.subr.mxu0 0.0
        %3039 = vmatpush1.msra.mxu0 %v3004
        %3040 = vmatprep.subr.mxu0 0.0
        %3041 = vmatpush1.msra.mxu0 %v3003
        %3042 = vmatprep.subr.mxu0 0.0
        %3043 = vmatpush2.msra.mxu0 0.0
        %3044 = vmatprep.subr.mxu0 0.0
        %3045 = vmatpush2.msra.mxu0 0.0
        %3046 = vmatprep.subr.mxu0 0.0
        %3047 = vmatpush2.msra.mxu0 0.0
        %3048 = vmatprep.subr.mxu0 0.0
        %3049 = vmatpush2.msra.mxu0 0.0
        %3050 = vmatprep.subr.mxu0 0.0
        %3051 = vmatpush2.msra.mxu0 0.0
        %3052 = vmatprep.subr.mxu0 0.0
        %3053 = vmatpush2.msra.mxu0 0.0
        %3054 = vmatprep.subr.mxu0 0.0
        %3055 = vmatpush2.msra.mxu0 0.0
        %3056 = vmatprep.subr.mxu0 0.0
        %3057 = vmatpush2.msra.mxu0 0.0
        %3058 = vmatprep.subr.mxu0 0.0
        %3059 = vmatpush2.msra.mxu0 0.0
        %3060 = vmatprep.subr.mxu0 0.0
        %3061 = vmatpush2.msra.mxu0 0.0
        %3062 = vmatprep.subr.mxu0 0.0
        %3063 = vmatpush2.msra.mxu0 0.0
        %3064 = vmatprep.subr.mxu0 0.0
        %3065 = vmatpush2.msra.mxu0 0.0
        %3066 = vmatprep.subr.mxu0 0.0
        %3067 = vmatpush2.msra.mxu0 0.0
        %3068 = vmatprep.subr.mxu0 0.0
        %3069 = vmatpush2.msra.mxu0 0.0
        %3070 = vmatprep.subr.mxu0 0.0
        %3071 = vmatpush2.msra.mxu0 0.0
        %3072 = vmatprep.subr.mxu0 0.0
        %3073 = vmatpush2.msra.mxu0 0.0
        %3074 = vmatprep.mubr.f32.mxu0 0.0
        %3075 = vmatmul.mubr.f32.gmra.mxu0 %v3008
        %v3076 = vpop.f32.mrf.mxu0
        %v3077 = vadd.f32 0.0, %v3076
        %v3078 = vpop.f32.mrf.mxu0
        %3079 = vdwg.mxu0
        %v3081 = vsel %vm504, %v2987, 0
        %3083 = vmatprep.subr.mxu0 0.0
        %3084 = vmatpush1.msra.mxu0 0.0
        %3085 = vmatprep.subr.mxu0 0.0
        %3086 = vmatpush1.msra.mxu0 0.0
        %3087 = vmatprep.subr.mxu0 0.0
        %3088 = vmatpush1.msra.mxu0 0.0
        %3089 = vmatprep.subr.mxu0 0.0
        %3090 = vmatpush1.msra.mxu0 0.0
        %3091 = vmatprep.subr.mxu0 0.0
        %3092 = vmatpush1.msra.mxu0 0.0
        %3093 = vmatprep.subr.mxu0 0.0
        %3094 = vmatpush1.msra.mxu0 0.0
        %3095 = vmatprep.subr.mxu0 0.0
        %3096 = vmatpush1.msra.mxu0 0.0
        %3097 = vmatprep.subr.mxu0 0.0
        %3098 = vmatpush1.msra.mxu0 0.0
        %3099 = vmatprep.subr.mxu0 0.0
        %3100 = vmatpush1.msra.mxu0 %v3002
        %3101 = vmatprep.subr.mxu0 0.0
        %3102 = vmatpush1.msra.mxu0 %v3001
        %3103 = vmatprep.subr.mxu0 0.0
        %3104 = vmatpush1.msra.mxu0 %v3000
        %3105 = vmatprep.subr.mxu0 0.0
        %3106 = vmatpush1.msra.mxu0 %v2999
        %3107 = vmatprep.subr.mxu0 0.0
        %3108 = vmatpush1.msra.mxu0 %v2998
        %3109 = vmatprep.subr.mxu0 0.0
        %3110 = vmatpush1.msra.mxu0 %v2997
        %3111 = vmatprep.subr.mxu0 0.0
        %3112 = vmatpush1.msra.mxu0 %v2996
        %3113 = vmatprep.subr.mxu0 0.0
        %3114 = vmatpush1.msra.mxu0 %v2995
        %3115 = vmatprep.subr.mxu0 0.0
        %3116 = vmatpush2.msra.mxu0 0.0
        %3117 = vmatprep.subr.mxu0 0.0
        %3118 = vmatpush2.msra.mxu0 0.0
        %3119 = vmatprep.subr.mxu0 0.0
        %3120 = vmatpush2.msra.mxu0 0.0
        %3121 = vmatprep.subr.mxu0 0.0
        %3122 = vmatpush2.msra.mxu0 0.0
        %3123 = vmatprep.subr.mxu0 0.0
        %3124 = vmatpush2.msra.mxu0 0.0
        %3125 = vmatprep.subr.mxu0 0.0
        %3126 = vmatpush2.msra.mxu0 0.0
        %3127 = vmatprep.subr.mxu0 0.0
        %3128 = vmatpush2.msra.mxu0 0.0
        %3129 = vmatprep.subr.mxu0 0.0
        %3130 = vmatpush2.msra.mxu0 0.0
        %3131 = vmatprep.subr.mxu0 0.0
        %3132 = vmatpush2.msra.mxu0 0.0
        %3133 = vmatprep.subr.mxu0 0.0
        %3134 = vmatpush2.msra.mxu0 0.0
        %3135 = vmatprep.subr.mxu0 0.0
        %3136 = vmatpush2.msra.mxu0 0.0
        %3137 = vmatprep.subr.mxu0 0.0
        %3138 = vmatpush2.msra.mxu0 0.0
        %3139 = vmatprep.subr.mxu0 0.0
        %3140 = vmatpush2.msra.mxu0 0.0
        %3141 = vmatprep.subr.mxu0 0.0
        %3142 = vmatpush2.msra.mxu0 0.0
        %3143 = vmatprep.subr.mxu0 0.0
        %3144 = vmatpush2.msra.mxu0 0.0
        %3145 = vmatprep.subr.mxu0 0.0
        %3146 = vmatpush2.msra.mxu0 0.0
        %3147 = vmatprep.mubr.f32.mxu0 0.0
        %3148 = vmatmul.mubr.f32.gmra.mxu0 %v3081
        %v3149 = vpop.f32.mrf.mxu0
        %v3150 = vadd.f32 %v3077, %v3149
        %v3151 = vpop.f32.mrf.mxu0
        %3152 = vdwg.mxu0
        %v3153 = vld [vmem:[%s9] sm:$0x1]
        %v3154 = vadd.f32 %v3150, %v3153
        %v3155 = vxor.u32 %v3154, 2147483648
        %v3156 = vmul.f32 %v3155, 1.442695
        %v3157 = vpow.pop %v3156
        %v3158 = vadd.f32 %v3157, 1.0
        %v3159 = vrcp.pop %v3158
        %v3160 = vmul.f32 1.0, %v3159
        %v3161 = vtanh.pop %v3154
        %3163 = vrot.lane.b32.xlu0 %v3161, 32
        %v3164 = vpop.permute.xlu0 %3163
        %v3166 = vmul.f32 %v3160, %v3164
        %3168 = vrot.lane.b32.xlu0 %v2994, 64
        %v3169 = vpop.permute.xlu0 %3168
        %v3171 = vmul.f32 %v3160, %v3169
        %3173 = vrot.lane.b32.xlu0 %v3171, 64
        %v3174 = vpop.permute.xlu0 %3173
        %v3176 = vadd.f32 %v3166, %v3174
        %v3177 = vtanh.pop %v3176
        %3179 = vrot.lane.b32.xlu0 %v3177, 32
        %v3180 = vpop.permute.xlu0 %3179
        %v3182 = vmul.f32 %v3160, %v3180
        %s3183 = scalar_lea.vmem [#allocation5], %s2980
        %3184 = vst.msk [vmem:[%s3183] sm:$0x1] %vm744, %v3176
        %3186 = vrot.lane.b32.xlu0 %v3182, 96
        %v3187 = vpop.permute.xlu0 %3186
        %s3189 = scalar_lea.vmem [#allocation4], %s2980
        %3190 = vst.msk [vmem:[%s3189] sm:$0x1] %vm744, %v3187
        %s3191 = smul.u32 %s753, 3
        %s3192 = sld [smem:[#allocation8 + %s3191]]
        %s3193 = sadd.s32 %s3191, 1
        %s3194 = sld [smem:[#allocation8 + %s3193]]
        %s3195 = sadd.s32 %s3191, 2
        %s3196 = sld [smem:[#allocation8 + %s3195]]
        %s3197 = scvt.s32.f32 %s3196
        %s3198 = scalar_lea.vmem %s367, %s3192
        %v3199 = vld [vmem:[%s3198] sm:$0x1]
        %s3200 = scalar_lea.vmem [#allocation4], %s3194
        %v3201 = vld [vmem:[%s3200] sm:$0x1]
        %v3202 = vstv %s3197
        %v3203 = vmul.f32 %v3201, %v3202
        %s3204 = scalar_lea.vmem [#allocation5], %s3194
        %v3205 = vld [vmem:[%s3204] sm:$0x1]
        %v3206 = vmul.f32 %v3205, %v3202
        %v3207 = vld [vmem:[#allocation14] sm:$0xff]
        %v3208 = vld [vmem:[#allocation14 + $0x8] sm:$0xff]
        %v3209 = vld [vmem:[#allocation14 + $0x10] sm:$0xff]
        %v3210 = vld [vmem:[#allocation14 + $0x18] sm:$0xff]
        %v3211 = vld [vmem:[#allocation14 + $0x20] sm:$0xff]
        %v3212 = vld [vmem:[#allocation14 + $0x28] sm:$0xff]
        %v3213 = vld [vmem:[#allocation14 + $0x30] sm:$0xff]
        %v3214 = vld [vmem:[#allocation14 + $0x38] sm:$0xff]
        %v3215 = vld [vmem:[%s8] sm:$0xff]
        %v3216 = vld [vmem:[%s8 + $0x8] sm:$0xff]
        %v3217 = vld [vmem:[%s8 + $0x10] sm:$0xff]
        %v3218 = vld [vmem:[%s8 + $0x18] sm:$0xff]
        %v3220 = vsel %vm429, %v3203, 0
        %3222 = vmatprep.subr.mxu0 0.0
        %3223 = vmatpush1.msra.mxu0 0.0
        %3224 = vmatprep.subr.mxu0 0.0
        %3225 = vmatpush1.msra.mxu0 0.0
        %3226 = vmatprep.subr.mxu0 0.0
        %3227 = vmatpush1.msra.mxu0 0.0
        %3228 = vmatprep.subr.mxu0 0.0
        %3229 = vmatpush1.msra.mxu0 0.0
        %3230 = vmatprep.subr.mxu0 0.0
        %3231 = vmatpush1.msra.mxu0 0.0
        %3232 = vmatprep.subr.mxu0 0.0
        %3233 = vmatpush1.msra.mxu0 0.0
        %3234 = vmatprep.subr.mxu0 0.0
        %3235 = vmatpush1.msra.mxu0 0.0
        %3236 = vmatprep.subr.mxu0 0.0
        %3237 = vmatpush1.msra.mxu0 0.0
        %3238 = vmatprep.subr.mxu0 0.0
        %3239 = vmatpush1.msra.mxu0 0.0
        %3240 = vmatprep.subr.mxu0 0.0
        %3241 = vmatpush1.msra.mxu0 0.0
        %3242 = vmatprep.subr.mxu0 0.0
        %3243 = vmatpush1.msra.mxu0 0.0
        %3244 = vmatprep.subr.mxu0 0.0
        %3245 = vmatpush1.msra.mxu0 0.0
        %3246 = vmatprep.subr.mxu0 0.0
        %3247 = vmatpush1.msra.mxu0 %v3218
        %3248 = vmatprep.subr.mxu0 0.0
        %3249 = vmatpush1.msra.mxu0 %v3217
        %3250 = vmatprep.subr.mxu0 0.0
        %3251 = vmatpush1.msra.mxu0 %v3216
        %3252 = vmatprep.subr.mxu0 0.0
        %3253 = vmatpush1.msra.mxu0 %v3215
        %3254 = vmatprep.subr.mxu0 0.0
        %3255 = vmatpush2.msra.mxu0 0.0
        %3256 = vmatprep.subr.mxu0 0.0
        %3257 = vmatpush2.msra.mxu0 0.0
        %3258 = vmatprep.subr.mxu0 0.0
        %3259 = vmatpush2.msra.mxu0 0.0
        %3260 = vmatprep.subr.mxu0 0.0
        %3261 = vmatpush2.msra.mxu0 0.0
        %3262 = vmatprep.subr.mxu0 0.0
        %3263 = vmatpush2.msra.mxu0 0.0
        %3264 = vmatprep.subr.mxu0 0.0
        %3265 = vmatpush2.msra.mxu0 0.0
        %3266 = vmatprep.subr.mxu0 0.0
        %3267 = vmatpush2.msra.mxu0 0.0
        %3268 = vmatprep.subr.mxu0 0.0
        %3269 = vmatpush2.msra.mxu0 0.0
        %3270 = vmatprep.subr.mxu0 0.0
        %3271 = vmatpush2.msra.mxu0 0.0
        %3272 = vmatprep.subr.mxu0 0.0
        %3273 = vmatpush2.msra.mxu0 0.0
        %3274 = vmatprep.subr.mxu0 0.0
        %3275 = vmatpush2.msra.mxu0 0.0
        %3276 = vmatprep.subr.mxu0 0.0
        %3277 = vmatpush2.msra.mxu0 0.0
        %3278 = vmatprep.subr.mxu0 0.0
        %3279 = vmatpush2.msra.mxu0 0.0
        %3280 = vmatprep.subr.mxu0 0.0
        %3281 = vmatpush2.msra.mxu0 0.0
        %3282 = vmatprep.subr.mxu0 0.0
        %3283 = vmatpush2.msra.mxu0 0.0
        %3284 = vmatprep.subr.mxu0 0.0
        %3285 = vmatpush2.msra.mxu0 0.0
        %3286 = vmatprep.mubr.f32.mxu0 0.0
        %3287 = vmatmul.mubr.f32.gmra.mxu0 %v3220
        %v3288 = vpop.f32.mrf.mxu0
        %v3289 = vadd.f32 0.0, %v3288
        %v3290 = vpop.f32.mrf.mxu0
        %3291 = vdwg.mxu0
        %v3293 = vsel %vm504, %v3199, 0
        %3295 = vmatprep.subr.mxu0 0.0
        %3296 = vmatpush1.msra.mxu0 0.0
        %3297 = vmatprep.subr.mxu0 0.0
        %3298 = vmatpush1.msra.mxu0 0.0
        %3299 = vmatprep.subr.mxu0 0.0
        %3300 = vmatpush1.msra.mxu0 0.0
        %3301 = vmatprep.subr.mxu0 0.0
        %3302 = vmatpush1.msra.mxu0 0.0
        %3303 = vmatprep.subr.mxu0 0.0
        %3304 = vmatpush1.msra.mxu0 0.0
        %3305 = vmatprep.subr.mxu0 0.0
        %3306 = vmatpush1.msra.mxu0 0.0
        %3307 = vmatprep.subr.mxu0 0.0
        %3308 = vmatpush1.msra.mxu0 0.0
        %3309 = vmatprep.subr.mxu0 0.0
        %3310 = vmatpush1.msra.mxu0 0.0
        %3311 = vmatprep.subr.mxu0 0.0
        %3312 = vmatpush1.msra.mxu0 %v3214
        %3313 = vmatprep.subr.mxu0 0.0
        %3314 = vmatpush1.msra.mxu0 %v3213
        %3315 = vmatprep.subr.mxu0 0.0
        %3316 = vmatpush1.msra.mxu0 %v3212
        %3317 = vmatprep.subr.mxu0 0.0
        %3318 = vmatpush1.msra.mxu0 %v3211
        %3319 = vmatprep.subr.mxu0 0.0
        %3320 = vmatpush1.msra.mxu0 %v3210
        %3321 = vmatprep.subr.mxu0 0.0
        %3322 = vmatpush1.msra.mxu0 %v3209
        %3323 = vmatprep.subr.mxu0 0.0
        %3324 = vmatpush1.msra.mxu0 %v3208
        %3325 = vmatprep.subr.mxu0 0.0
        %3326 = vmatpush1.msra.mxu0 %v3207
        %3327 = vmatprep.subr.mxu0 0.0
        %3328 = vmatpush2.msra.mxu0 0.0
        %3329 = vmatprep.subr.mxu0 0.0
        %3330 = vmatpush2.msra.mxu0 0.0
        %3331 = vmatprep.subr.mxu0 0.0
        %3332 = vmatpush2.msra.mxu0 0.0
        %3333 = vmatprep.subr.mxu0 0.0
        %3334 = vmatpush2.msra.mxu0 0.0
        %3335 = vmatprep.subr.mxu0 0.0
        %3336 = vmatpush2.msra.mxu0 0.0
        %3337 = vmatprep.subr.mxu0 0.0
        %3338 = vmatpush2.msra.mxu0 0.0
        %3339 = vmatprep.subr.mxu0 0.0
        %3340 = vmatpush2.msra.mxu0 0.0
        %3341 = vmatprep.subr.mxu0 0.0
        %3342 = vmatpush2.msra.mxu0 0.0
        %3343 = vmatprep.subr.mxu0 0.0
        %3344 = vmatpush2.msra.mxu0 0.0
        %3345 = vmatprep.subr.mxu0 0.0
        %3346 = vmatpush2.msra.mxu0 0.0
        %3347 = vmatprep.subr.mxu0 0.0
        %3348 = vmatpush2.msra.mxu0 0.0
        %3349 = vmatprep.subr.mxu0 0.0
        %3350 = vmatpush2.msra.mxu0 0.0
        %3351 = vmatprep.subr.mxu0 0.0
        %3352 = vmatpush2.msra.mxu0 0.0
        %3353 = vmatprep.subr.mxu0 0.0
        %3354 = vmatpush2.msra.mxu0 0.0
        %3355 = vmatprep.subr.mxu0 0.0
        %3356 = vmatpush2.msra.mxu0 0.0
        %3357 = vmatprep.subr.mxu0 0.0
        %3358 = vmatpush2.msra.mxu0 0.0
        %3359 = vmatprep.mubr.f32.mxu0 0.0
        %3360 = vmatmul.mubr.f32.gmra.mxu0 %v3293
        %v3361 = vpop.f32.mrf.mxu0
        %v3362 = vadd.f32 %v3289, %v3361
        %v3363 = vpop.f32.mrf.mxu0
        %3364 = vdwg.mxu0
        %v3365 = vld [vmem:[%s9] sm:$0x1]
        %v3366 = vadd.f32 %v3362, %v3365
        %v3367 = vxor.u32 %v3366, 2147483648
        %v3368 = vmul.f32 %v3367, 1.442695
        %v3369 = vpow.pop %v3368
        %v3370 = vadd.f32 %v3369, 1.0
        %v3371 = vrcp.pop %v3370
        %v3372 = vmul.f32 1.0, %v3371
        %v3373 = vtanh.pop %v3366
        %3375 = vrot.lane.b32.xlu0 %v3373, 32
        %v3376 = vpop.permute.xlu0 %3375
        %v3378 = vmul.f32 %v3372, %v3376
        %3380 = vrot.lane.b32.xlu0 %v3206, 64
        %v3381 = vpop.permute.xlu0 %3380
        %v3383 = vmul.f32 %v3372, %v3381
        %3385 = vrot.lane.b32.xlu0 %v3383, 64
        %v3386 = vpop.permute.xlu0 %3385
        %v3388 = vadd.f32 %v3378, %v3386
        %v3389 = vtanh.pop %v3388
        %3391 = vrot.lane.b32.xlu0 %v3389, 32
        %v3392 = vpop.permute.xlu0 %3391
        %v3394 = vmul.f32 %v3372, %v3392
        %s3395 = scalar_lea.vmem [#allocation5], %s3192
        %3396 = vst.msk [vmem:[%s3395] sm:$0x1] %vm744, %v3388
        %3398 = vrot.lane.b32.xlu0 %v3394, 96
        %v3399 = vpop.permute.xlu0 %3398
        %s3401 = scalar_lea.vmem [#allocation4], %s3192
        %3402 = vst.msk [vmem:[%s3401] sm:$0x1] %vm744, %v3399
        %s3403 = smul.u32 %s1124, 3
        %s3404 = sld [smem:[#allocation8 + %s3403]]
        %s3405 = sadd.s32 %s3403, 1
        %s3406 = sld [smem:[#allocation8 + %s3405]]
        %s3407 = sadd.s32 %s3403, 2
        %s3408 = sld [smem:[#allocation8 + %s3407]]
        %s3409 = scvt.s32.f32 %s3408
        %s3410 = scalar_lea.vmem %s367, %s3404
        %v3411 = vld [vmem:[%s3410] sm:$0x1]
        %s3412 = scalar_lea.vmem [#allocation4], %s3406
        %v3413 = vld [vmem:[%s3412] sm:$0x1]
        %v3414 = vstv %s3409
        %v3415 = vmul.f32 %v3413, %v3414
        %s3416 = scalar_lea.vmem [#allocation5], %s3406
        %v3417 = vld [vmem:[%s3416] sm:$0x1]
        %v3418 = vmul.f32 %v3417, %v3414
        %v3419 = vld [vmem:[#allocation14] sm:$0xff]
        %v3420 = vld [vmem:[#allocation14 + $0x8] sm:$0xff]
        %v3421 = vld [vmem:[#allocation14 + $0x10] sm:$0xff]
        %v3422 = vld [vmem:[#allocation14 + $0x18] sm:$0xff]
        %v3423 = vld [vmem:[#allocation14 + $0x20] sm:$0xff]
        %v3424 = vld [vmem:[#allocation14 + $0x28] sm:$0xff]
        %v3425 = vld [vmem:[#allocation14 + $0x30] sm:$0xff]
        %v3426 = vld [vmem:[#allocation14 + $0x38] sm:$0xff]
        %v3427 = vld [vmem:[%s8] sm:$0xff]
        %v3428 = vld [vmem:[%s8 + $0x8] sm:$0xff]
        %v3429 = vld [vmem:[%s8 + $0x10] sm:$0xff]
        %v3430 = vld [vmem:[%s8 + $0x18] sm:$0xff]
        %v3432 = vsel %vm429, %v3415, 0
        %3434 = vmatprep.subr.mxu0 0.0
        %3435 = vmatpush1.msra.mxu0 0.0
        %3436 = vmatprep.subr.mxu0 0.0
        %3437 = vmatpush1.msra.mxu0 0.0
        %3438 = vmatprep.subr.mxu0 0.0
        %3439 = vmatpush1.msra.mxu0 0.0
        %3440 = vmatprep.subr.mxu0 0.0
        %3441 = vmatpush1.msra.mxu0 0.0
        %3442 = vmatprep.subr.mxu0 0.0
        %3443 = vmatpush1.msra.mxu0 0.0
        %3444 = vmatprep.subr.mxu0 0.0
        %3445 = vmatpush1.msra.mxu0 0.0
        %3446 = vmatprep.subr.mxu0 0.0
        %3447 = vmatpush1.msra.mxu0 0.0
        %3448 = vmatprep.subr.mxu0 0.0
        %3449 = vmatpush1.msra.mxu0 0.0
        %3450 = vmatprep.subr.mxu0 0.0
        %3451 = vmatpush1.msra.mxu0 0.0
        %3452 = vmatprep.subr.mxu0 0.0
        %3453 = vmatpush1.msra.mxu0 0.0
        %3454 = vmatprep.subr.mxu0 0.0
        %3455 = vmatpush1.msra.mxu0 0.0
        %3456 = vmatprep.subr.mxu0 0.0
        %3457 = vmatpush1.msra.mxu0 0.0
        %3458 = vmatprep.subr.mxu0 0.0
        %3459 = vmatpush1.msra.mxu0 %v3430
        %3460 = vmatprep.subr.mxu0 0.0
        %3461 = vmatpush1.msra.mxu0 %v3429
        %3462 = vmatprep.subr.mxu0 0.0
        %3463 = vmatpush1.msra.mxu0 %v3428
        %3464 = vmatprep.subr.mxu0 0.0
        %3465 = vmatpush1.msra.mxu0 %v3427
        %3466 = vmatprep.subr.mxu0 0.0
        %3467 = vmatpush2.msra.mxu0 0.0
        %3468 = vmatprep.subr.mxu0 0.0
        %3469 = vmatpush2.msra.mxu0 0.0
        %3470 = vmatprep.subr.mxu0 0.0
        %3471 = vmatpush2.msra.mxu0 0.0
        %3472 = vmatprep.subr.mxu0 0.0
        %3473 = vmatpush2.msra.mxu0 0.0
        %3474 = vmatprep.subr.mxu0 0.0
        %3475 = vmatpush2.msra.mxu0 0.0
        %3476 = vmatprep.subr.mxu0 0.0
        %3477 = vmatpush2.msra.mxu0 0.0
        %3478 = vmatprep.subr.mxu0 0.0
        %3479 = vmatpush2.msra.mxu0 0.0
        %3480 = vmatprep.subr.mxu0 0.0
        %3481 = vmatpush2.msra.mxu0 0.0
        %3482 = vmatprep.subr.mxu0 0.0
        %3483 = vmatpush2.msra.mxu0 0.0
        %3484 = vmatprep.subr.mxu0 0.0
        %3485 = vmatpush2.msra.mxu0 0.0
        %3486 = vmatprep.subr.mxu0 0.0
        %3487 = vmatpush2.msra.mxu0 0.0
        %3488 = vmatprep.subr.mxu0 0.0
        %3489 = vmatpush2.msra.mxu0 0.0
        %3490 = vmatprep.subr.mxu0 0.0
        %3491 = vmatpush2.msra.mxu0 0.0
        %3492 = vmatprep.subr.mxu0 0.0
        %3493 = vmatpush2.msra.mxu0 0.0
        %3494 = vmatprep.subr.mxu0 0.0
        %3495 = vmatpush2.msra.mxu0 0.0
        %3496 = vmatprep.subr.mxu0 0.0
        %3497 = vmatpush2.msra.mxu0 0.0
        %3498 = vmatprep.mubr.f32.mxu0 0.0
        %3499 = vmatmul.mubr.f32.gmra.mxu0 %v3432
        %v3500 = vpop.f32.mrf.mxu0
        %v3501 = vadd.f32 0.0, %v3500
        %v3502 = vpop.f32.mrf.mxu0
        %3503 = vdwg.mxu0
        %v3505 = vsel %vm504, %v3411, 0
        %3507 = vmatprep.subr.mxu0 0.0
        %3508 = vmatpush1.msra.mxu0 0.0
        %3509 = vmatprep.subr.mxu0 0.0
        %3510 = vmatpush1.msra.mxu0 0.0
        %3511 = vmatprep.subr.mxu0 0.0
        %3512 = vmatpush1.msra.mxu0 0.0
        %3513 = vmatprep.subr.mxu0 0.0
        %3514 = vmatpush1.msra.mxu0 0.0
        %3515 = vmatprep.subr.mxu0 0.0
        %3516 = vmatpush1.msra.mxu0 0.0
        %3517 = vmatprep.subr.mxu0 0.0
        %3518 = vmatpush1.msra.mxu0 0.0
        %3519 = vmatprep.subr.mxu0 0.0
        %3520 = vmatpush1.msra.mxu0 0.0
        %3521 = vmatprep.subr.mxu0 0.0
        %3522 = vmatpush1.msra.mxu0 0.0
        %3523 = vmatprep.subr.mxu0 0.0
        %3524 = vmatpush1.msra.mxu0 %v3426
        %3525 = vmatprep.subr.mxu0 0.0
        %3526 = vmatpush1.msra.mxu0 %v3425
        %3527 = vmatprep.subr.mxu0 0.0
        %3528 = vmatpush1.msra.mxu0 %v3424
        %3529 = vmatprep.subr.mxu0 0.0
        %3530 = vmatpush1.msra.mxu0 %v3423
        %3531 = vmatprep.subr.mxu0 0.0
        %3532 = vmatpush1.msra.mxu0 %v3422
        %3533 = vmatprep.subr.mxu0 0.0
        %3534 = vmatpush1.msra.mxu0 %v3421
        %3535 = vmatprep.subr.mxu0 0.0
        %3536 = vmatpush1.msra.mxu0 %v3420
        %3537 = vmatprep.subr.mxu0 0.0
        %3538 = vmatpush1.msra.mxu0 %v3419
        %3539 = vmatprep.subr.mxu0 0.0
        %3540 = vmatpush2.msra.mxu0 0.0
        %3541 = vmatprep.subr.mxu0 0.0
        %3542 = vmatpush2.msra.mxu0 0.0
        %3543 = vmatprep.subr.mxu0 0.0
        %3544 = vmatpush2.msra.mxu0 0.0
        %3545 = vmatprep.subr.mxu0 0.0
        %3546 = vmatpush2.msra.mxu0 0.0
        %3547 = vmatprep.subr.mxu0 0.0
        %3548 = vmatpush2.msra.mxu0 0.0
        %3549 = vmatprep.subr.mxu0 0.0
        %3550 = vmatpush2.msra.mxu0 0.0
        %3551 = vmatprep.subr.mxu0 0.0
        %3552 = vmatpush2.msra.mxu0 0.0
        %3553 = vmatprep.subr.mxu0 0.0
        %3554 = vmatpush2.msra.mxu0 0.0
        %3555 = vmatprep.subr.mxu0 0.0
        %3556 = vmatpush2.msra.mxu0 0.0
        %3557 = vmatprep.subr.mxu0 0.0
        %3558 = vmatpush2.msra.mxu0 0.0
        %3559 = vmatprep.subr.mxu0 0.0
        %3560 = vmatpush2.msra.mxu0 0.0
        %3561 = vmatprep.subr.mxu0 0.0
        %3562 = vmatpush2.msra.mxu0 0.0
        %3563 = vmatprep.subr.mxu0 0.0
        %3564 = vmatpush2.msra.mxu0 0.0
        %3565 = vmatprep.subr.mxu0 0.0
        %3566 = vmatpush2.msra.mxu0 0.0
        %3567 = vmatprep.subr.mxu0 0.0
        %3568 = vmatpush2.msra.mxu0 0.0
        %3569 = vmatprep.subr.mxu0 0.0
        %3570 = vmatpush2.msra.mxu0 0.0
        %3571 = vmatprep.mubr.f32.mxu0 0.0
        %3572 = vmatmul.mubr.f32.gmra.mxu0 %v3505
        %v3573 = vpop.f32.mrf.mxu0
        %v3574 = vadd.f32 %v3501, %v3573
        %v3575 = vpop.f32.mrf.mxu0
        %3576 = vdwg.mxu0
        %v3577 = vld [vmem:[%s9] sm:$0x1]
        %v3578 = vadd.f32 %v3574, %v3577
        %v3579 = vxor.u32 %v3578, 2147483648
        %v3580 = vmul.f32 %v3579, 1.442695
        %v3581 = vpow.pop %v3580
        %v3582 = vadd.f32 %v3581, 1.0
        %v3583 = vrcp.pop %v3582
        %v3584 = vmul.f32 1.0, %v3583
        %v3585 = vtanh.pop %v3578
        %3587 = vrot.lane.b32.xlu0 %v3585, 32
        %v3588 = vpop.permute.xlu0 %3587
        %v3590 = vmul.f32 %v3584, %v3588
        %3592 = vrot.lane.b32.xlu0 %v3418, 64
        %v3593 = vpop.permute.xlu0 %3592
        %v3595 = vmul.f32 %v3584, %v3593
        %3597 = vrot.lane.b32.xlu0 %v3595, 64
        %v3598 = vpop.permute.xlu0 %3597
        %v3600 = vadd.f32 %v3590, %v3598
        %v3601 = vtanh.pop %v3600
        %3603 = vrot.lane.b32.xlu0 %v3601, 32
        %v3604 = vpop.permute.xlu0 %3603
        %v3606 = vmul.f32 %v3584, %v3604
        %s3607 = scalar_lea.vmem [#allocation5], %s3404
        %3608 = vst.msk [vmem:[%s3607] sm:$0x1] %vm744, %v3600
        %3610 = vrot.lane.b32.xlu0 %v3606, 96
        %v3611 = vpop.permute.xlu0 %3610
        %s3613 = scalar_lea.vmem [#allocation4], %s3404
        %3614 = vst.msk [vmem:[%s3613] sm:$0x1] %vm744, %v3611
        %s3615 = smul.u32 %s1495, 3
        %s3616 = sld [smem:[#allocation8 + %s3615]]
        %s3617 = sadd.s32 %s3615, 1
        %s3618 = sld [smem:[#allocation8 + %s3617]]
        %s3619 = sadd.s32 %s3615, 2
        %s3620 = sld [smem:[#allocation8 + %s3619]]
        %s3621 = scvt.s32.f32 %s3620
        %s3622 = scalar_lea.vmem %s367, %s3616
        %v3623 = vld [vmem:[%s3622] sm:$0x1]
        %s3624 = scalar_lea.vmem [#allocation4], %s3618
        %v3625 = vld [vmem:[%s3624] sm:$0x1]
        %v3626 = vstv %s3621
        %v3627 = vmul.f32 %v3625, %v3626
        %s3628 = scalar_lea.vmem [#allocation5], %s3618
        %v3629 = vld [vmem:[%s3628] sm:$0x1]
        %v3630 = vmul.f32 %v3629, %v3626
        %v3631 = vld [vmem:[#allocation14] sm:$0xff]
        %v3632 = vld [vmem:[#allocation14 + $0x8] sm:$0xff]
        %v3633 = vld [vmem:[#allocation14 + $0x10] sm:$0xff]
        %v3634 = vld [vmem:[#allocation14 + $0x18] sm:$0xff]
        %v3635 = vld [vmem:[#allocation14 + $0x20] sm:$0xff]
        %v3636 = vld [vmem:[#allocation14 + $0x28] sm:$0xff]
        %v3637 = vld [vmem:[#allocation14 + $0x30] sm:$0xff]
        %v3638 = vld [vmem:[#allocation14 + $0x38] sm:$0xff]
        %v3639 = vld [vmem:[%s8] sm:$0xff]
        %v3640 = vld [vmem:[%s8 + $0x8] sm:$0xff]
        %v3641 = vld [vmem:[%s8 + $0x10] sm:$0xff]
        %v3642 = vld [vmem:[%s8 + $0x18] sm:$0xff]
        %v3644 = vsel %vm429, %v3627, 0
        %3646 = vmatprep.subr.mxu0 0.0
        %3647 = vmatpush1.msra.mxu0 0.0
        %3648 = vmatprep.subr.mxu0 0.0
        %3649 = vmatpush1.msra.mxu0 0.0
        %3650 = vmatprep.subr.mxu0 0.0
        %3651 = vmatpush1.msra.mxu0 0.0
        %3652 = vmatprep.subr.mxu0 0.0
        %3653 = vmatpush1.msra.mxu0 0.0
        %3654 = vmatprep.subr.mxu0 0.0
        %3655 = vmatpush1.msra.mxu0 0.0
        %3656 = vmatprep.subr.mxu0 0.0
        %3657 = vmatpush1.msra.mxu0 0.0
        %3658 = vmatprep.subr.mxu0 0.0
        %3659 = vmatpush1.msra.mxu0 0.0
        %3660 = vmatprep.subr.mxu0 0.0
        %3661 = vmatpush1.msra.mxu0 0.0
        %3662 = vmatprep.subr.mxu0 0.0
        %3663 = vmatpush1.msra.mxu0 0.0
        %3664 = vmatprep.subr.mxu0 0.0
        %3665 = vmatpush1.msra.mxu0 0.0
        %3666 = vmatprep.subr.mxu0 0.0
        %3667 = vmatpush1.msra.mxu0 0.0
        %3668 = vmatprep.subr.mxu0 0.0
        %3669 = vmatpush1.msra.mxu0 0.0
        %3670 = vmatprep.subr.mxu0 0.0
        %3671 = vmatpush1.msra.mxu0 %v3642
        %3672 = vmatprep.subr.mxu0 0.0
        %3673 = vmatpush1.msra.mxu0 %v3641
        %3674 = vmatprep.subr.mxu0 0.0
        %3675 = vmatpush1.msra.mxu0 %v3640
        %3676 = vmatprep.subr.mxu0 0.0
        %3677 = vmatpush1.msra.mxu0 %v3639
        %3678 = vmatprep.subr.mxu0 0.0
        %3679 = vmatpush2.msra.mxu0 0.0
        %3680 = vmatprep.subr.mxu0 0.0
        %3681 = vmatpush2.msra.mxu0 0.0
        %3682 = vmatprep.subr.mxu0 0.0
        %3683 = vmatpush2.msra.mxu0 0.0
        %3684 = vmatprep.subr.mxu0 0.0
        %3685 = vmatpush2.msra.mxu0 0.0
        %3686 = vmatprep.subr.mxu0 0.0
        %3687 = vmatpush2.msra.mxu0 0.0
        %3688 = vmatprep.subr.mxu0 0.0
        %3689 = vmatpush2.msra.mxu0 0.0
        %3690 = vmatprep.subr.mxu0 0.0
        %3691 = vmatpush2.msra.mxu0 0.0
        %3692 = vmatprep.subr.mxu0 0.0
        %3693 = vmatpush2.msra.mxu0 0.0
        %3694 = vmatprep.subr.mxu0 0.0
        %3695 = vmatpush2.msra.mxu0 0.0
        %3696 = vmatprep.subr.mxu0 0.0
        %3697 = vmatpush2.msra.mxu0 0.0
        %3698 = vmatprep.subr.mxu0 0.0
        %3699 = vmatpush2.msra.mxu0 0.0
        %3700 = vmatprep.subr.mxu0 0.0
        %3701 = vmatpush2.msra.mxu0 0.0
        %3702 = vmatprep.subr.mxu0 0.0
        %3703 = vmatpush2.msra.mxu0 0.0
        %3704 = vmatprep.subr.mxu0 0.0
        %3705 = vmatpush2.msra.mxu0 0.0
        %3706 = vmatprep.subr.mxu0 0.0
        %3707 = vmatpush2.msra.mxu0 0.0
        %3708 = vmatprep.subr.mxu0 0.0
        %3709 = vmatpush2.msra.mxu0 0.0
        %3710 = vmatprep.mubr.f32.mxu0 0.0
        %3711 = vmatmul.mubr.f32.gmra.mxu0 %v3644
        %v3712 = vpop.f32.mrf.mxu0
        %v3713 = vadd.f32 0.0, %v3712
        %v3714 = vpop.f32.mrf.mxu0
        %3715 = vdwg.mxu0
        %v3717 = vsel %vm504, %v3623, 0
        %3719 = vmatprep.subr.mxu0 0.0
        %3720 = vmatpush1.msra.mxu0 0.0
        %3721 = vmatprep.subr.mxu0 0.0
        %3722 = vmatpush1.msra.mxu0 0.0
        %3723 = vmatprep.subr.mxu0 0.0
        %3724 = vmatpush1.msra.mxu0 0.0
        %3725 = vmatprep.subr.mxu0 0.0
        %3726 = vmatpush1.msra.mxu0 0.0
        %3727 = vmatprep.subr.mxu0 0.0
        %3728 = vmatpush1.msra.mxu0 0.0
        %3729 = vmatprep.subr.mxu0 0.0
        %3730 = vmatpush1.msra.mxu0 0.0
        %3731 = vmatprep.subr.mxu0 0.0
        %3732 = vmatpush1.msra.mxu0 0.0
        %3733 = vmatprep.subr.mxu0 0.0
        %3734 = vmatpush1.msra.mxu0 0.0
        %3735 = vmatprep.subr.mxu0 0.0
        %3736 = vmatpush1.msra.mxu0 %v3638
        %3737 = vmatprep.subr.mxu0 0.0
        %3738 = vmatpush1.msra.mxu0 %v3637
        %3739 = vmatprep.subr.mxu0 0.0
        %3740 = vmatpush1.msra.mxu0 %v3636
        %3741 = vmatprep.subr.mxu0 0.0
        %3742 = vmatpush1.msra.mxu0 %v3635
        %3743 = vmatprep.subr.mxu0 0.0
        %3744 = vmatpush1.msra.mxu0 %v3634
        %3745 = vmatprep.subr.mxu0 0.0
        %3746 = vmatpush1.msra.mxu0 %v3633
        %3747 = vmatprep.subr.mxu0 0.0
        %3748 = vmatpush1.msra.mxu0 %v3632
        %3749 = vmatprep.subr.mxu0 0.0
        %3750 = vmatpush1.msra.mxu0 %v3631
        %3751 = vmatprep.subr.mxu0 0.0
        %3752 = vmatpush2.msra.mxu0 0.0
        %3753 = vmatprep.subr.mxu0 0.0
        %3754 = vmatpush2.msra.mxu0 0.0
        %3755 = vmatprep.subr.mxu0 0.0
        %3756 = vmatpush2.msra.mxu0 0.0
        %3757 = vmatprep.subr.mxu0 0.0
        %3758 = vmatpush2.msra.mxu0 0.0
        %3759 = vmatprep.subr.mxu0 0.0
        %3760 = vmatpush2.msra.mxu0 0.0
        %3761 = vmatprep.subr.mxu0 0.0
        %3762 = vmatpush2.msra.mxu0 0.0
        %3763 = vmatprep.subr.mxu0 0.0
        %3764 = vmatpush2.msra.mxu0 0.0
        %3765 = vmatprep.subr.mxu0 0.0
        %3766 = vmatpush2.msra.mxu0 0.0
        %3767 = vmatprep.subr.mxu0 0.0
        %3768 = vmatpush2.msra.mxu0 0.0
        %3769 = vmatprep.subr.mxu0 0.0
        %3770 = vmatpush2.msra.mxu0 0.0
        %3771 = vmatprep.subr.mxu0 0.0
        %3772 = vmatpush2.msra.mxu0 0.0
        %3773 = vmatprep.subr.mxu0 0.0
        %3774 = vmatpush2.msra.mxu0 0.0
        %3775 = vmatprep.subr.mxu0 0.0
        %3776 = vmatpush2.msra.mxu0 0.0
        %3777 = vmatprep.subr.mxu0 0.0
        %3778 = vmatpush2.msra.mxu0 0.0
        %3779 = vmatprep.subr.mxu0 0.0
        %3780 = vmatpush2.msra.mxu0 0.0
        %3781 = vmatprep.subr.mxu0 0.0
        %3782 = vmatpush2.msra.mxu0 0.0
        %3783 = vmatprep.mubr.f32.mxu0 0.0
        %3784 = vmatmul.mubr.f32.gmra.mxu0 %v3717
        %v3785 = vpop.f32.mrf.mxu0
        %v3786 = vadd.f32 %v3713, %v3785
        %v3787 = vpop.f32.mrf.mxu0
        %3788 = vdwg.mxu0
        %v3789 = vld [vmem:[%s9] sm:$0x1]
        %v3790 = vadd.f32 %v3786, %v3789
        %v3791 = vxor.u32 %v3790, 2147483648
        %v3792 = vmul.f32 %v3791, 1.442695
        %v3793 = vpow.pop %v3792
        %v3794 = vadd.f32 %v3793, 1.0
        %v3795 = vrcp.pop %v3794
        %v3796 = vmul.f32 1.0, %v3795
        %v3797 = vtanh.pop %v3790
        %3799 = vrot.lane.b32.xlu0 %v3797, 32
        %v3800 = vpop.permute.xlu0 %3799
        %v3802 = vmul.f32 %v3796, %v3800
        %3804 = vrot.lane.b32.xlu0 %v3630, 64
        %v3805 = vpop.permute.xlu0 %3804
        %v3807 = vmul.f32 %v3796, %v3805
        %3809 = vrot.lane.b32.xlu0 %v3807, 64
        %v3810 = vpop.permute.xlu0 %3809
        %v3812 = vadd.f32 %v3802, %v3810
        %v3813 = vtanh.pop %v3812
        %3815 = vrot.lane.b32.xlu0 %v3813, 32
        %v3816 = vpop.permute.xlu0 %3815
        %v3818 = vmul.f32 %v3796, %v3816
        %s3819 = scalar_lea.vmem [#allocation5], %s3616
        %3820 = vst.msk [vmem:[%s3819] sm:$0x1] %vm744, %v3812
        %3822 = vrot.lane.b32.xlu0 %v3818, 96
        %v3823 = vpop.permute.xlu0 %3822
        %s3825 = scalar_lea.vmem [#allocation4], %s3616
        %3826 = vst.msk [vmem:[%s3825] sm:$0x1] %vm744, %v3823
        %s3827 = smul.u32 %s1866, 3
        %s3828 = sld [smem:[#allocation8 + %s3827]]
        %s3829 = sadd.s32 %s3827, 1
        %s3830 = sld [smem:[#allocation8 + %s3829]]
        %s3831 = sadd.s32 %s3827, 2
        %s3832 = sld [smem:[#allocation8 + %s3831]]
        %s3833 = scvt.s32.f32 %s3832
        %s3834 = scalar_lea.vmem %s367, %s3828
        %v3835 = vld [vmem:[%s3834] sm:$0x1]
        %s3836 = scalar_lea.vmem [#allocation4], %s3830
        %v3837 = vld [vmem:[%s3836] sm:$0x1]
        %v3838 = vstv %s3833
        %v3839 = vmul.f32 %v3837, %v3838
        %s3840 = scalar_lea.vmem [#allocation5], %s3830
        %v3841 = vld [vmem:[%s3840] sm:$0x1]
        %v3842 = vmul.f32 %v3841, %v3838
        %v3843 = vld [vmem:[#allocation14] sm:$0xff]
        %v3844 = vld [vmem:[#allocation14 + $0x8] sm:$0xff]
        %v3845 = vld [vmem:[#allocation14 + $0x10] sm:$0xff]
        %v3846 = vld [vmem:[#allocation14 + $0x18] sm:$0xff]
        %v3847 = vld [vmem:[#allocation14 + $0x20] sm:$0xff]
        %v3848 = vld [vmem:[#allocation14 + $0x28] sm:$0xff]
        %v3849 = vld [vmem:[#allocation14 + $0x30] sm:$0xff]
        %v3850 = vld [vmem:[#allocation14 + $0x38] sm:$0xff]
        %v3851 = vld [vmem:[%s8] sm:$0xff]
        %v3852 = vld [vmem:[%s8 + $0x8] sm:$0xff]
        %v3853 = vld [vmem:[%s8 + $0x10] sm:$0xff]
        %v3854 = vld [vmem:[%s8 + $0x18] sm:$0xff]
        %v3856 = vsel %vm429, %v3839, 0
        %3858 = vmatprep.subr.mxu0 0.0
        %3859 = vmatpush1.msra.mxu0 0.0
        %3860 = vmatprep.subr.mxu0 0.0
        %3861 = vmatpush1.msra.mxu0 0.0
        %3862 = vmatprep.subr.mxu0 0.0
        %3863 = vmatpush1.msra.mxu0 0.0
        %3864 = vmatprep.subr.mxu0 0.0
        %3865 = vmatpush1.msra.mxu0 0.0
        %3866 = vmatprep.subr.mxu0 0.0
        %3867 = vmatpush1.msra.mxu0 0.0
        %3868 = vmatprep.subr.mxu0 0.0
        %3869 = vmatpush1.msra.mxu0 0.0
        %3870 = vmatprep.subr.mxu0 0.0
        %3871 = vmatpush1.msra.mxu0 0.0
        %3872 = vmatprep.subr.mxu0 0.0
        %3873 = vmatpush1.msra.mxu0 0.0
        %3874 = vmatprep.subr.mxu0 0.0
        %3875 = vmatpush1.msra.mxu0 0.0
        %3876 = vmatprep.subr.mxu0 0.0
        %3877 = vmatpush1.msra.mxu0 0.0
        %3878 = vmatprep.subr.mxu0 0.0
        %3879 = vmatpush1.msra.mxu0 0.0
        %3880 = vmatprep.subr.mxu0 0.0
        %3881 = vmatpush1.msra.mxu0 0.0
        %3882 = vmatprep.subr.mxu0 0.0
        %3883 = vmatpush1.msra.mxu0 %v3854
        %3884 = vmatprep.subr.mxu0 0.0
        %3885 = vmatpush1.msra.mxu0 %v3853
        %3886 = vmatprep.subr.mxu0 0.0
        %3887 = vmatpush1.msra.mxu0 %v3852
        %3888 = vmatprep.subr.mxu0 0.0
        %3889 = vmatpush1.msra.mxu0 %v3851
        %3890 = vmatprep.subr.mxu0 0.0
        %3891 = vmatpush2.msra.mxu0 0.0
        %3892 = vmatprep.subr.mxu0 0.0
        %3893 = vmatpush2.msra.mxu0 0.0
        %3894 = vmatprep.subr.mxu0 0.0
        %3895 = vmatpush2.msra.mxu0 0.0
        %3896 = vmatprep.subr.mxu0 0.0
        %3897 = vmatpush2.msra.mxu0 0.0
        %3898 = vmatprep.subr.mxu0 0.0
        %3899 = vmatpush2.msra.mxu0 0.0
        %3900 = vmatprep.subr.mxu0 0.0
        %3901 = vmatpush2.msra.mxu0 0.0
        %3902 = vmatprep.subr.mxu0 0.0
        %3903 = vmatpush2.msra.mxu0 0.0
        %3904 = vmatprep.subr.mxu0 0.0
        %3905 = vmatpush2.msra.mxu0 0.0
        %3906 = vmatprep.subr.mxu0 0.0
        %3907 = vmatpush2.msra.mxu0 0.0
        %3908 = vmatprep.subr.mxu0 0.0
        %3909 = vmatpush2.msra.mxu0 0.0
        %3910 = vmatprep.subr.mxu0 0.0
        %3911 = vmatpush2.msra.mxu0 0.0
        %3912 = vmatprep.subr.mxu0 0.0
        %3913 = vmatpush2.msra.mxu0 0.0
        %3914 = vmatprep.subr.mxu0 0.0
        %3915 = vmatpush2.msra.mxu0 0.0
        %3916 = vmatprep.subr.mxu0 0.0
        %3917 = vmatpush2.msra.mxu0 0.0
        %3918 = vmatprep.subr.mxu0 0.0
        %3919 = vmatpush2.msra.mxu0 0.0
        %3920 = vmatprep.subr.mxu0 0.0
        %3921 = vmatpush2.msra.mxu0 0.0
        %3922 = vmatprep.mubr.f32.mxu0 0.0
        %3923 = vmatmul.mubr.f32.gmra.mxu0 %v3856
        %v3924 = vpop.f32.mrf.mxu0
        %v3925 = vadd.f32 0.0, %v3924
        %v3926 = vpop.f32.mrf.mxu0
        %3927 = vdwg.mxu0
        %v3929 = vsel %vm504, %v3835, 0
        %3931 = vmatprep.subr.mxu0 0.0
        %3932 = vmatpush1.msra.mxu0 0.0
        %3933 = vmatprep.subr.mxu0 0.0
        %3934 = vmatpush1.msra.mxu0 0.0
        %3935 = vmatprep.subr.mxu0 0.0
        %3936 = vmatpush1.msra.mxu0 0.0
        %3937 = vmatprep.subr.mxu0 0.0
        %3938 = vmatpush1.msra.mxu0 0.0
        %3939 = vmatprep.subr.mxu0 0.0
        %3940 = vmatpush1.msra.mxu0 0.0
        %3941 = vmatprep.subr.mxu0 0.0
        %3942 = vmatpush1.msra.mxu0 0.0
        %3943 = vmatprep.subr.mxu0 0.0
        %3944 = vmatpush1.msra.mxu0 0.0
        %3945 = vmatprep.subr.mxu0 0.0
        %3946 = vmatpush1.msra.mxu0 0.0
        %3947 = vmatprep.subr.mxu0 0.0
        %3948 = vmatpush1.msra.mxu0 %v3850
        %3949 = vmatprep.subr.mxu0 0.0
        %3950 = vmatpush1.msra.mxu0 %v3849
        %3951 = vmatprep.subr.mxu0 0.0
        %3952 = vmatpush1.msra.mxu0 %v3848
        %3953 = vmatprep.subr.mxu0 0.0
        %3954 = vmatpush1.msra.mxu0 %v3847
        %3955 = vmatprep.subr.mxu0 0.0
        %3956 = vmatpush1.msra.mxu0 %v3846
        %3957 = vmatprep.subr.mxu0 0.0
        %3958 = vmatpush1.msra.mxu0 %v3845
        %3959 = vmatprep.subr.mxu0 0.0
        %3960 = vmatpush1.msra.mxu0 %v3844
        %3961 = vmatprep.subr.mxu0 0.0
        %3962 = vmatpush1.msra.mxu0 %v3843
        %3963 = vmatprep.subr.mxu0 0.0
        %3964 = vmatpush2.msra.mxu0 0.0
        %3965 = vmatprep.subr.mxu0 0.0
        %3966 = vmatpush2.msra.mxu0 0.0
        %3967 = vmatprep.subr.mxu0 0.0
        %3968 = vmatpush2.msra.mxu0 0.0
        %3969 = vmatprep.subr.mxu0 0.0
        %3970 = vmatpush2.msra.mxu0 0.0
        %3971 = vmatprep.subr.mxu0 0.0
        %3972 = vmatpush2.msra.mxu0 0.0
        %3973 = vmatprep.subr.mxu0 0.0
        %3974 = vmatpush2.msra.mxu0 0.0
        %3975 = vmatprep.subr.mxu0 0.0
        %3976 = vmatpush2.msra.mxu0 0.0
        %3977 = vmatprep.subr.mxu0 0.0
        %3978 = vmatpush2.msra.mxu0 0.0
        %3979 = vmatprep.subr.mxu0 0.0
        %3980 = vmatpush2.msra.mxu0 0.0
        %3981 = vmatprep.subr.mxu0 0.0
        %3982 = vmatpush2.msra.mxu0 0.0
        %3983 = vmatprep.subr.mxu0 0.0
        %3984 = vmatpush2.msra.mxu0 0.0
        %3985 = vmatprep.subr.mxu0 0.0
        %3986 = vmatpush2.msra.mxu0 0.0
        %3987 = vmatprep.subr.mxu0 0.0
        %3988 = vmatpush2.msra.mxu0 0.0
        %3989 = vmatprep.subr.mxu0 0.0
        %3990 = vmatpush2.msra.mxu0 0.0
        %3991 = vmatprep.subr.mxu0 0.0
        %3992 = vmatpush2.msra.mxu0 0.0
        %3993 = vmatprep.subr.mxu0 0.0
        %3994 = vmatpush2.msra.mxu0 0.0
        %3995 = vmatprep.mubr.f32.mxu0 0.0
        %3996 = vmatmul.mubr.f32.gmra.mxu0 %v3929
        %v3997 = vpop.f32.mrf.mxu0
        %v3998 = vadd.f32 %v3925, %v3997
        %v3999 = vpop.f32.mrf.mxu0
        %4000 = vdwg.mxu0
        %v4001 = vld [vmem:[%s9] sm:$0x1]
        %v4002 = vadd.f32 %v3998, %v4001
        %v4003 = vxor.u32 %v4002, 2147483648
        %v4004 = vmul.f32 %v4003, 1.442695
        %v4005 = vpow.pop %v4004
        %v4006 = vadd.f32 %v4005, 1.0
        %v4007 = vrcp.pop %v4006
        %v4008 = vmul.f32 1.0, %v4007
        %v4009 = vtanh.pop %v4002
        %4011 = vrot.lane.b32.xlu0 %v4009, 32
        %v4012 = vpop.permute.xlu0 %4011
        %v4014 = vmul.f32 %v4008, %v4012
        %4016 = vrot.lane.b32.xlu0 %v3842, 64
        %v4017 = vpop.permute.xlu0 %4016
        %v4019 = vmul.f32 %v4008, %v4017
        %4021 = vrot.lane.b32.xlu0 %v4019, 64
        %v4022 = vpop.permute.xlu0 %4021
        %v4024 = vadd.f32 %v4014, %v4022
        %v4025 = vtanh.pop %v4024
        %4027 = vrot.lane.b32.xlu0 %v4025, 32
        %v4028 = vpop.permute.xlu0 %4027
        %v4030 = vmul.f32 %v4008, %v4028
        %s4031 = scalar_lea.vmem [#allocation5], %s3828
        %4032 = vst.msk [vmem:[%s4031] sm:$0x1] %vm744, %v4024
        %4034 = vrot.lane.b32.xlu0 %v4030, 96
        %v4035 = vpop.permute.xlu0 %4034
        %s4037 = scalar_lea.vmem [#allocation4], %s3828
        %4038 = vst.msk [vmem:[%s4037] sm:$0x1] %vm744, %v4035
        %s4039 = smul.u32 %s2237, 3
        %s4040 = sld [smem:[#allocation8 + %s4039]]
        %s4041 = sadd.s32 %s4039, 1
        %s4042 = sld [smem:[#allocation8 + %s4041]]
        %s4043 = sadd.s32 %s4039, 2
        %s4044 = sld [smem:[#allocation8 + %s4043]]
        %s4045 = scvt.s32.f32 %s4044
        %s4046 = scalar_lea.vmem %s367, %s4040
        %v4047 = vld [vmem:[%s4046] sm:$0x1]
        %s4048 = scalar_lea.vmem [#allocation4], %s4042
        %v4049 = vld [vmem:[%s4048] sm:$0x1]
        %v4050 = vstv %s4045
        %v4051 = vmul.f32 %v4049, %v4050
        %s4052 = scalar_lea.vmem [#allocation5], %s4042
        %v4053 = vld [vmem:[%s4052] sm:$0x1]
        %v4054 = vmul.f32 %v4053, %v4050
        %v4055 = vld [vmem:[#allocation14] sm:$0xff]
        %v4056 = vld [vmem:[#allocation14 + $0x8] sm:$0xff]
        %v4057 = vld [vmem:[#allocation14 + $0x10] sm:$0xff]
        %v4058 = vld [vmem:[#allocation14 + $0x18] sm:$0xff]
        %v4059 = vld [vmem:[#allocation14 + $0x20] sm:$0xff]
        %v4060 = vld [vmem:[#allocation14 + $0x28] sm:$0xff]
        %v4061 = vld [vmem:[#allocation14 + $0x30] sm:$0xff]
        %v4062 = vld [vmem:[#allocation14 + $0x38] sm:$0xff]
        %v4063 = vld [vmem:[%s8] sm:$0xff]
        %v4064 = vld [vmem:[%s8 + $0x8] sm:$0xff]
        %v4065 = vld [vmem:[%s8 + $0x10] sm:$0xff]
        %v4066 = vld [vmem:[%s8 + $0x18] sm:$0xff]
        %v4068 = vsel %vm429, %v4051, 0
        %4070 = vmatprep.subr.mxu0 0.0
        %4071 = vmatpush1.msra.mxu0 0.0
        %4072 = vmatprep.subr.mxu0 0.0
        %4073 = vmatpush1.msra.mxu0 0.0
        %4074 = vmatprep.subr.mxu0 0.0
        %4075 = vmatpush1.msra.mxu0 0.0
        %4076 = vmatprep.subr.mxu0 0.0
        %4077 = vmatpush1.msra.mxu0 0.0
        %4078 = vmatprep.subr.mxu0 0.0
        %4079 = vmatpush1.msra.mxu0 0.0
        %4080 = vmatprep.subr.mxu0 0.0
        %4081 = vmatpush1.msra.mxu0 0.0
        %4082 = vmatprep.subr.mxu0 0.0
        %4083 = vmatpush1.msra.mxu0 0.0
        %4084 = vmatprep.subr.mxu0 0.0
        %4085 = vmatpush1.msra.mxu0 0.0
        %4086 = vmatprep.subr.mxu0 0.0
        %4087 = vmatpush1.msra.mxu0 0.0
        %4088 = vmatprep.subr.mxu0 0.0
        %4089 = vmatpush1.msra.mxu0 0.0
        %4090 = vmatprep.subr.mxu0 0.0
        %4091 = vmatpush1.msra.mxu0 0.0
        %4092 = vmatprep.subr.mxu0 0.0
        %4093 = vmatpush1.msra.mxu0 0.0
        %4094 = vmatprep.subr.mxu0 0.0
        %4095 = vmatpush1.msra.mxu0 %v4066
        %4096 = vmatprep.subr.mxu0 0.0
        %4097 = vmatpush1.msra.mxu0 %v4065
        %4098 = vmatprep.subr.mxu0 0.0
        %4099 = vmatpush1.msra.mxu0 %v4064
        %4100 = vmatprep.subr.mxu0 0.0
        %4101 = vmatpush1.msra.mxu0 %v4063
        %4102 = vmatprep.subr.mxu0 0.0
        %4103 = vmatpush2.msra.mxu0 0.0
        %4104 = vmatprep.subr.mxu0 0.0
        %4105 = vmatpush2.msra.mxu0 0.0
        %4106 = vmatprep.subr.mxu0 0.0
        %4107 = vmatpush2.msra.mxu0 0.0
        %4108 = vmatprep.subr.mxu0 0.0
        %4109 = vmatpush2.msra.mxu0 0.0
        %4110 = vmatprep.subr.mxu0 0.0
        %4111 = vmatpush2.msra.mxu0 0.0
        %4112 = vmatprep.subr.mxu0 0.0
        %4113 = vmatpush2.msra.mxu0 0.0
        %4114 = vmatprep.subr.mxu0 0.0
        %4115 = vmatpush2.msra.mxu0 0.0
        %4116 = vmatprep.subr.mxu0 0.0
        %4117 = vmatpush2.msra.mxu0 0.0
        %4118 = vmatprep.subr.mxu0 0.0
        %4119 = vmatpush2.msra.mxu0 0.0
        %4120 = vmatprep.subr.mxu0 0.0
        %4121 = vmatpush2.msra.mxu0 0.0
        %4122 = vmatprep.subr.mxu0 0.0
        %4123 = vmatpush2.msra.mxu0 0.0
        %4124 = vmatprep.subr.mxu0 0.0
        %4125 = vmatpush2.msra.mxu0 0.0
        %4126 = vmatprep.subr.mxu0 0.0
        %4127 = vmatpush2.msra.mxu0 0.0
        %4128 = vmatprep.subr.mxu0 0.0
        %4129 = vmatpush2.msra.mxu0 0.0
        %4130 = vmatprep.subr.mxu0 0.0
        %4131 = vmatpush2.msra.mxu0 0.0
        %4132 = vmatprep.subr.mxu0 0.0
        %4133 = vmatpush2.msra.mxu0 0.0
        %4134 = vmatprep.mubr.f32.mxu0 0.0
        %4135 = vmatmul.mubr.f32.gmra.mxu0 %v4068
        %v4136 = vpop.f32.mrf.mxu0
        %v4137 = vadd.f32 0.0, %v4136
        %v4138 = vpop.f32.mrf.mxu0
        %4139 = vdwg.mxu0
        %v4141 = vsel %vm504, %v4047, 0
        %4143 = vmatprep.subr.mxu0 0.0
        %4144 = vmatpush1.msra.mxu0 0.0
        %4145 = vmatprep.subr.mxu0 0.0
        %4146 = vmatpush1.msra.mxu0 0.0
        %4147 = vmatprep.subr.mxu0 0.0
        %4148 = vmatpush1.msra.mxu0 0.0
        %4149 = vmatprep.subr.mxu0 0.0
        %4150 = vmatpush1.msra.mxu0 0.0
        %4151 = vmatprep.subr.mxu0 0.0
        %4152 = vmatpush1.msra.mxu0 0.0
        %4153 = vmatprep.subr.mxu0 0.0
        %4154 = vmatpush1.msra.mxu0 0.0
        %4155 = vmatprep.subr.mxu0 0.0
        %4156 = vmatpush1.msra.mxu0 0.0
        %4157 = vmatprep.subr.mxu0 0.0
        %4158 = vmatpush1.msra.mxu0 0.0
        %4159 = vmatprep.subr.mxu0 0.0
        %4160 = vmatpush1.msra.mxu0 %v4062
        %4161 = vmatprep.subr.mxu0 0.0
        %4162 = vmatpush1.msra.mxu0 %v4061
        %4163 = vmatprep.subr.mxu0 0.0
        %4164 = vmatpush1.msra.mxu0 %v4060
        %4165 = vmatprep.subr.mxu0 0.0
        %4166 = vmatpush1.msra.mxu0 %v4059
        %4167 = vmatprep.subr.mxu0 0.0
        %4168 = vmatpush1.msra.mxu0 %v4058
        %4169 = vmatprep.subr.mxu0 0.0
        %4170 = vmatpush1.msra.mxu0 %v4057
        %4171 = vmatprep.subr.mxu0 0.0
        %4172 = vmatpush1.msra.mxu0 %v4056
        %4173 = vmatprep.subr.mxu0 0.0
        %4174 = vmatpush1.msra.mxu0 %v4055
        %4175 = vmatprep.subr.mxu0 0.0
        %4176 = vmatpush2.msra.mxu0 0.0
        %4177 = vmatprep.subr.mxu0 0.0
        %4178 = vmatpush2.msra.mxu0 0.0
        %4179 = vmatprep.subr.mxu0 0.0
        %4180 = vmatpush2.msra.mxu0 0.0
        %4181 = vmatprep.subr.mxu0 0.0
        %4182 = vmatpush2.msra.mxu0 0.0
        %4183 = vmatprep.subr.mxu0 0.0
        %4184 = vmatpush2.msra.mxu0 0.0
        %4185 = vmatprep.subr.mxu0 0.0
        %4186 = vmatpush2.msra.mxu0 0.0
        %4187 = vmatprep.subr.mxu0 0.0
        %4188 = vmatpush2.msra.mxu0 0.0
        %4189 = vmatprep.subr.mxu0 0.0
        %4190 = vmatpush2.msra.mxu0 0.0
        %4191 = vmatprep.subr.mxu0 0.0
        %4192 = vmatpush2.msra.mxu0 0.0
        %4193 = vmatprep.subr.mxu0 0.0
        %4194 = vmatpush2.msra.mxu0 0.0
        %4195 = vmatprep.subr.mxu0 0.0
        %4196 = vmatpush2.msra.mxu0 0.0
        %4197 = vmatprep.subr.mxu0 0.0
        %4198 = vmatpush2.msra.mxu0 0.0
        %4199 = vmatprep.subr.mxu0 0.0
        %4200 = vmatpush2.msra.mxu0 0.0
        %4201 = vmatprep.subr.mxu0 0.0
        %4202 = vmatpush2.msra.mxu0 0.0
        %4203 = vmatprep.subr.mxu0 0.0
        %4204 = vmatpush2.msra.mxu0 0.0
        %4205 = vmatprep.subr.mxu0 0.0
        %4206 = vmatpush2.msra.mxu0 0.0
        %4207 = vmatprep.mubr.f32.mxu0 0.0
        %4208 = vmatmul.mubr.f32.gmra.mxu0 %v4141
        %v4209 = vpop.f32.mrf.mxu0
        %v4210 = vadd.f32 %v4137, %v4209
        %v4211 = vpop.f32.mrf.mxu0
        %4212 = vdwg.mxu0
        %v4213 = vld [vmem:[%s9] sm:$0x1]
        %v4214 = vadd.f32 %v4210, %v4213
        %v4215 = vxor.u32 %v4214, 2147483648
        %v4216 = vmul.f32 %v4215, 1.442695
        %v4217 = vpow.pop %v4216
        %v4218 = vadd.f32 %v4217, 1.0
        %v4219 = vrcp.pop %v4218
        %v4220 = vmul.f32 1.0, %v4219
        %v4221 = vtanh.pop %v4214
        %4223 = vrot.lane.b32.xlu0 %v4221, 32
        %v4224 = vpop.permute.xlu0 %4223
        %v4226 = vmul.f32 %v4220, %v4224
        %4228 = vrot.lane.b32.xlu0 %v4054, 64
        %v4229 = vpop.permute.xlu0 %4228
        %v4231 = vmul.f32 %v4220, %v4229
        %4233 = vrot.lane.b32.xlu0 %v4231, 64
        %v4234 = vpop.permute.xlu0 %4233
        %v4236 = vadd.f32 %v4226, %v4234
        %v4237 = vtanh.pop %v4236
        %4239 = vrot.lane.b32.xlu0 %v4237, 32
        %v4240 = vpop.permute.xlu0 %4239
        %v4242 = vmul.f32 %v4220, %v4240
        %s4243 = scalar_lea.vmem [#allocation5], %s4040
        %4244 = vst.msk [vmem:[%s4243] sm:$0x1] %vm744, %v4236
        %4246 = vrot.lane.b32.xlu0 %v4242, 96
        %v4247 = vpop.permute.xlu0 %4246
        %s4249 = scalar_lea.vmem [#allocation4], %s4040
        %4250 = vst.msk [vmem:[%s4249] sm:$0x1] %vm744, %v4247
        %s4251 = smul.u32 %s2608, 3
        %s4252 = sld [smem:[#allocation8 + %s4251]]
        %s4253 = sadd.s32 %s4251, 1
        %s4254 = sld [smem:[#allocation8 + %s4253]]
        %s4255 = sadd.s32 %s4251, 2
        %s4256 = sld [smem:[#allocation8 + %s4255]]
        %s4257 = scvt.s32.f32 %s4256
        %s4258 = scalar_lea.vmem %s367, %s4252
        %v4259 = vld [vmem:[%s4258] sm:$0x1]
        %s4260 = scalar_lea.vmem [#allocation4], %s4254
        %v4261 = vld [vmem:[%s4260] sm:$0x1]
        %v4262 = vstv %s4257
        %v4263 = vmul.f32 %v4261, %v4262
        %s4264 = scalar_lea.vmem [#allocation5], %s4254
        %v4265 = vld [vmem:[%s4264] sm:$0x1]
        %v4266 = vmul.f32 %v4265, %v4262
        %v4267 = vld [vmem:[#allocation14] sm:$0xff]
        %v4268 = vld [vmem:[#allocation14 + $0x8] sm:$0xff]
        %v4269 = vld [vmem:[#allocation14 + $0x10] sm:$0xff]
        %v4270 = vld [vmem:[#allocation14 + $0x18] sm:$0xff]
        %v4271 = vld [vmem:[#allocation14 + $0x20] sm:$0xff]
        %v4272 = vld [vmem:[#allocation14 + $0x28] sm:$0xff]
        %v4273 = vld [vmem:[#allocation14 + $0x30] sm:$0xff]
        %v4274 = vld [vmem:[#allocation14 + $0x38] sm:$0xff]
        %v4275 = vld [vmem:[%s8] sm:$0xff]
        %v4276 = vld [vmem:[%s8 + $0x8] sm:$0xff]
        %v4277 = vld [vmem:[%s8 + $0x10] sm:$0xff]
        %v4278 = vld [vmem:[%s8 + $0x18] sm:$0xff]
        %v4280 = vsel %vm429, %v4263, 0
        %4282 = vmatprep.subr.mxu0 0.0
        %4283 = vmatpush1.msra.mxu0 0.0
        %4284 = vmatprep.subr.mxu0 0.0
        %4285 = vmatpush1.msra.mxu0 0.0
        %4286 = vmatprep.subr.mxu0 0.0
        %4287 = vmatpush1.msra.mxu0 0.0
        %4288 = vmatprep.subr.mxu0 0.0
        %4289 = vmatpush1.msra.mxu0 0.0
        %4290 = vmatprep.subr.mxu0 0.0
        %4291 = vmatpush1.msra.mxu0 0.0
        %4292 = vmatprep.subr.mxu0 0.0
        %4293 = vmatpush1.msra.mxu0 0.0
        %4294 = vmatprep.subr.mxu0 0.0
        %4295 = vmatpush1.msra.mxu0 0.0
        %4296 = vmatprep.subr.mxu0 0.0
        %4297 = vmatpush1.msra.mxu0 0.0
        %4298 = vmatprep.subr.mxu0 0.0
        %4299 = vmatpush1.msra.mxu0 0.0
        %4300 = vmatprep.subr.mxu0 0.0
        %4301 = vmatpush1.msra.mxu0 0.0
        %4302 = vmatprep.subr.mxu0 0.0
        %4303 = vmatpush1.msra.mxu0 0.0
        %4304 = vmatprep.subr.mxu0 0.0
        %4305 = vmatpush1.msra.mxu0 0.0
        %4306 = vmatprep.subr.mxu0 0.0
        %4307 = vmatpush1.msra.mxu0 %v4278
        %4308 = vmatprep.subr.mxu0 0.0
        %4309 = vmatpush1.msra.mxu0 %v4277
        %4310 = vmatprep.subr.mxu0 0.0
        %4311 = vmatpush1.msra.mxu0 %v4276
        %4312 = vmatprep.subr.mxu0 0.0
        %4313 = vmatpush1.msra.mxu0 %v4275
        %4314 = vmatprep.subr.mxu0 0.0
        %4315 = vmatpush2.msra.mxu0 0.0
        %4316 = vmatprep.subr.mxu0 0.0
        %4317 = vmatpush2.msra.mxu0 0.0
        %4318 = vmatprep.subr.mxu0 0.0
        %4319 = vmatpush2.msra.mxu0 0.0
        %4320 = vmatprep.subr.mxu0 0.0
        %4321 = vmatpush2.msra.mxu0 0.0
        %4322 = vmatprep.subr.mxu0 0.0
        %4323 = vmatpush2.msra.mxu0 0.0
        %4324 = vmatprep.subr.mxu0 0.0
        %4325 = vmatpush2.msra.mxu0 0.0
        %4326 = vmatprep.subr.mxu0 0.0
        %4327 = vmatpush2.msra.mxu0 0.0
        %4328 = vmatprep.subr.mxu0 0.0
        %4329 = vmatpush2.msra.mxu0 0.0
        %4330 = vmatprep.subr.mxu0 0.0
        %4331 = vmatpush2.msra.mxu0 0.0
        %4332 = vmatprep.subr.mxu0 0.0
        %4333 = vmatpush2.msra.mxu0 0.0
        %4334 = vmatprep.subr.mxu0 0.0
        %4335 = vmatpush2.msra.mxu0 0.0
        %4336 = vmatprep.subr.mxu0 0.0
        %4337 = vmatpush2.msra.mxu0 0.0
        %4338 = vmatprep.subr.mxu0 0.0
        %4339 = vmatpush2.msra.mxu0 0.0
        %4340 = vmatprep.subr.mxu0 0.0
        %4341 = vmatpush2.msra.mxu0 0.0
        %4342 = vmatprep.subr.mxu0 0.0
        %4343 = vmatpush2.msra.mxu0 0.0
        %4344 = vmatprep.subr.mxu0 0.0
        %4345 = vmatpush2.msra.mxu0 0.0
        %4346 = vmatprep.mubr.f32.mxu0 0.0
        %4347 = vmatmul.mubr.f32.gmra.mxu0 %v4280
        %v4348 = vpop.f32.mrf.mxu0
        %v4349 = vadd.f32 0.0, %v4348
        %v4350 = vpop.f32.mrf.mxu0
        %4351 = vdwg.mxu0
        %v4353 = vsel %vm504, %v4259, 0
        %4355 = vmatprep.subr.mxu0 0.0
        %4356 = vmatpush1.msra.mxu0 0.0
        %4357 = vmatprep.subr.mxu0 0.0
        %4358 = vmatpush1.msra.mxu0 0.0
        %4359 = vmatprep.subr.mxu0 0.0
        %4360 = vmatpush1.msra.mxu0 0.0
        %4361 = vmatprep.subr.mxu0 0.0
        %4362 = vmatpush1.msra.mxu0 0.0
        %4363 = vmatprep.subr.mxu0 0.0
        %4364 = vmatpush1.msra.mxu0 0.0
        %4365 = vmatprep.subr.mxu0 0.0
        %4366 = vmatpush1.msra.mxu0 0.0
        %4367 = vmatprep.subr.mxu0 0.0
        %4368 = vmatpush1.msra.mxu0 0.0
        %4369 = vmatprep.subr.mxu0 0.0
        %4370 = vmatpush1.msra.mxu0 0.0
        %4371 = vmatprep.subr.mxu0 0.0
        %4372 = vmatpush1.msra.mxu0 %v4274
        %4373 = vmatprep.subr.mxu0 0.0
        %4374 = vmatpush1.msra.mxu0 %v4273
        %4375 = vmatprep.subr.mxu0 0.0
        %4376 = vmatpush1.msra.mxu0 %v4272
        %4377 = vmatprep.subr.mxu0 0.0
        %4378 = vmatpush1.msra.mxu0 %v4271
        %4379 = vmatprep.subr.mxu0 0.0
        %4380 = vmatpush1.msra.mxu0 %v4270
        %4381 = vmatprep.subr.mxu0 0.0
        %4382 = vmatpush1.msra.mxu0 %v4269
        %4383 = vmatprep.subr.mxu0 0.0
        %4384 = vmatpush1.msra.mxu0 %v4268
        %4385 = vmatprep.subr.mxu0 0.0
        %4386 = vmatpush1.msra.mxu0 %v4267
        %4387 = vmatprep.subr.mxu0 0.0
        %4388 = vmatpush2.msra.mxu0 0.0
        %4389 = vmatprep.subr.mxu0 0.0
        %4390 = vmatpush2.msra.mxu0 0.0
        %4391 = vmatprep.subr.mxu0 0.0
        %4392 = vmatpush2.msra.mxu0 0.0
        %4393 = vmatprep.subr.mxu0 0.0
        %4394 = vmatpush2.msra.mxu0 0.0
        %4395 = vmatprep.subr.mxu0 0.0
        %4396 = vmatpush2.msra.mxu0 0.0
        %4397 = vmatprep.subr.mxu0 0.0
        %4398 = vmatpush2.msra.mxu0 0.0
        %4399 = vmatprep.subr.mxu0 0.0
        %4400 = vmatpush2.msra.mxu0 0.0
        %4401 = vmatprep.subr.mxu0 0.0
        %4402 = vmatpush2.msra.mxu0 0.0
        %4403 = vmatprep.subr.mxu0 0.0
        %4404 = vmatpush2.msra.mxu0 0.0
        %4405 = vmatprep.subr.mxu0 0.0
        %4406 = vmatpush2.msra.mxu0 0.0
        %4407 = vmatprep.subr.mxu0 0.0
        %4408 = vmatpush2.msra.mxu0 0.0
        %4409 = vmatprep.subr.mxu0 0.0
        %4410 = vmatpush2.msra.mxu0 0.0
        %4411 = vmatprep.subr.mxu0 0.0
        %4412 = vmatpush2.msra.mxu0 0.0
        %4413 = vmatprep.subr.mxu0 0.0
        %4414 = vmatpush2.msra.mxu0 0.0
        %4415 = vmatprep.subr.mxu0 0.0
        %4416 = vmatpush2.msra.mxu0 0.0
        %4417 = vmatprep.subr.mxu0 0.0
        %4418 = vmatpush2.msra.mxu0 0.0
        %4419 = vmatprep.mubr.f32.mxu0 0.0
        %4420 = vmatmul.mubr.f32.gmra.mxu0 %v4353
        %v4421 = vpop.f32.mrf.mxu0
        %v4422 = vadd.f32 %v4349, %v4421
        %v4423 = vpop.f32.mrf.mxu0
        %4424 = vdwg.mxu0
        %v4425 = vld [vmem:[%s9] sm:$0x1]
        %v4426 = vadd.f32 %v4422, %v4425
        %v4427 = vxor.u32 %v4426, 2147483648
        %v4428 = vmul.f32 %v4427, 1.442695
        %v4429 = vpow.pop %v4428
        %v4430 = vadd.f32 %v4429, 1.0
        %v4431 = vrcp.pop %v4430
        %v4432 = vmul.f32 1.0, %v4431
        %v4433 = vtanh.pop %v4426
        %4435 = vrot.lane.b32.xlu0 %v4433, 32
        %v4436 = vpop.permute.xlu0 %4435
        %v4438 = vmul.f32 %v4432, %v4436
        %4440 = vrot.lane.b32.xlu0 %v4266, 64
        %v4441 = vpop.permute.xlu0 %4440
        %v4443 = vmul.f32 %v4432, %v4441
        %4445 = vrot.lane.b32.xlu0 %v4443, 64
        %v4446 = vpop.permute.xlu0 %4445
        %v4448 = vadd.f32 %v4438, %v4446
        %v4449 = vtanh.pop %v4448
        %4451 = vrot.lane.b32.xlu0 %v4449, 32
        %v4452 = vpop.permute.xlu0 %4451
        %v4454 = vmul.f32 %v4432, %v4452
        %s4455 = scalar_lea.vmem [#allocation5], %s4252
        %4456 = vst.msk [vmem:[%s4455] sm:$0x1] %vm744, %v4448
        %4458 = vrot.lane.b32.xlu0 %v4454, 96
        %v4459 = vpop.permute.xlu0 %4458
        %s4461 = scalar_lea.vmem [#allocation4], %s4252
        %4462 = vst.msk [vmem:[%s4461] sm:$0x1] %vm744, %v4459
        %v4463 = vld [vmem:[#allocation2] sm:$0x7f]
        %4464 = vst.msk [vmem:[%s371] sm:$0x7f] %vm372, %v4463
        %v4465 = vld [vmem:[#allocation4] sm:$0x7f]
        %4467 = vrot.lane.b32.xlu0 %v4465, 32
        %v4468 = vpop.permute.xlu0 %4467
        %vm4470 = vcmask 522496
        %4471 = vst.msk [vmem:[%s371] sm:$0x7f] %vm4470, %v4468
        %p4472 = scmp.lt.s32.totalorder %s34, 1
        %s4473 = scalar_select %p4472, %s34, 1
        %s4474 = smul.addr %s4473, 8
        %s4475 = scalar_lea.vmem %s10, %s4474
        // Predicated region
        $region69: #{tpu_custom_call.1} parent=51 // pred_check
          %p4476 = pneg %p225
        $region70: #{tpu_custom_call.1} parent=51 // pred_check_branch
          %4478 = sbr.rel (%p4476) target = $region72
        $region71: #{tpu_custom_call.1} parent=51 // pred_region
          _
        $region72: #{tpu_custom_call.1} parent=51 // pred_fallthru
          _
      $region52: #{tpu_custom_call.1} parent=5 // pred_fallthru
        _
      %p4479 = scmp.le.s32.totalorder 2, %s29
      // Predicated region
      $region73: #{tpu_custom_call.1} parent=5 // pred_check
        %p4480 = pneg %p4479
      $region74: #{tpu_custom_call.1} parent=5 // pred_check_branch
        %4482 = sbr.rel (%p4480) target = $region76
      $region75: #{tpu_custom_call.1} parent=5 // pred_region
        %s4483 = ssub.s32 %s29, 2
        // Predicated region
        $region77: #{tpu_custom_call.1} parent=75 // pred_check
          %p4484 = pneg %p231
        $region78: #{tpu_custom_call.1} parent=75 // pred_check_branch
          %4486 = sbr.rel (%p4484) target = $region80
        $region79: #{tpu_custom_call.1} parent=75 // pred_region
          %p4487 = scmp.lt.s32.totalorder %s35, 1
          %s4488 = scalar_select %p4487, %s35, 1
          %s4489 = smul.addr %s4488, 8
          %s4490 = scalar_lea.vmem %s10, %s4489
        $region80: #{tpu_custom_call.1} parent=75 // pred_fallthru
          _
      $region76: #{tpu_custom_call.1} parent=5 // pred_fallthru
        _
    $region6: #{tpu_custom_call.1} parent=1 // loop_footer
      %s33 = sadd.s32 1, %s29
    $region7: #{tpu_custom_call.1} parent=1 // loop_footer_branch
      %28 = sbr.rel target = $region3
    $region8: #{tpu_custom_call.1} parent=1 // loop_exit
      _
    %4491 = vsyncpa [#allocation10], 1
    %s4492 = scalar_lea.sflag [#allocation10], 1
    %4493 = vsyncpa %s4492, 1
    %4494 = vsyncpa [#allocation12], 1
    %4495 = vsyncpa [#allocation15], 1

</llo_original>
